<compile_context>
chip_gen: v5e
topology: v5e:2x2
jax: 0.10.0
libtpu: 0.0.40
codegen_flags: <defaults>
</compile_context>

<pallas_src>
import functools

import jax
import jax.numpy as jnp
from jax.experimental import pallas as pl
from jax.experimental.pallas import tpu as pltpu


# ----------------------------- in-kernel helpers -----------------------------
def _elu(x):
    # ELU(alpha=1), f32
    return jnp.where(x > 0, x, jnp.exp(jnp.minimum(x, 0.0)) - 1.0)


def _gat_attention(xw, asrc, adst, adj):
    """One GAT head. xw:[N,C] f32, asrc/adst:[1,C] f32, adj:[N,N]. Returns P @ xw."""
    s_src = jnp.sum(xw * asrc, axis=1, keepdims=True)            # [N,1]
    s_dst = jnp.sum(xw * adst, axis=1, keepdims=True)            # [N,1]
    e = s_dst + s_src.T                                          # e[i,j] = dst_i + src_j
    e = jnp.where(e > 0, e, 0.2 * e)                             # LeakyReLU(0.2)
    e = jnp.where(adj > 0, e, jnp.float32(-1e30))                # mask non-edges
    e = e - jnp.max(e, axis=1, keepdims=True)                    # softmax over neighbors j
    p = jnp.where(adj > 0, jnp.exp(e), 0.0)
    p = p * pl.reciprocal(jnp.sum(p, axis=1, keepdims=True), approx=True)
    return jnp.dot(p, xw, preferred_element_type=jnp.float32)    # [N,C]


# ------------------------- K1: embed + conv1 (fused) --------------------------
def _block1_kernel(x_ref, ew_ref, eb_ref, w1_ref, asrc_ref, adst_ref, b1_ref,
                   adj_ref, o_ref):
    # embed: h0 = x @ We + be.  Recomputed per head step (16x32x512, trivial);
    # We/x have constant block indices so they are only DMA'd once per core.
    h0 = jnp.dot(x_ref[...].astype(jnp.bfloat16), ew_ref[...],
                 preferred_element_type=jnp.float32) + eb_ref[...]        # [N, C1]
    # conv1 projection for this head (PyG GATConv.lin has no bias)
    xw = jnp.dot(h0.astype(jnp.bfloat16), w1_ref[...],
                 preferred_element_type=jnp.float32)                      # [N, C1]
    head = _gat_attention(xw, asrc_ref[0], adst_ref[0], adj_ref[...])
    # This head's column slab of norm1's input:  x.repeat(1,2) + (conv1 out + bias)
    o_ref[...] = h0 + head + b1_ref[0]


def block1(x, p, adj, *, heads, out_ch):
    N, Fin = x.shape
    C1 = out_ch
    K = p["conv1_w"].shape[0]
    return pl.pallas_call(
        _block1_kernel,
        out_shape=jax.ShapeDtypeStruct((N, heads * C1), jnp.float32),
        grid_spec=pltpu.PrefetchScalarGridSpec(
            num_scalar_prefetch=0,
            grid=(heads,),
            in_specs=[
                pl.BlockSpec((N, Fin), lambda h: (0, 0)),          # x
                pl.BlockSpec((Fin, C1), lambda h: (0, 0)),         # embed_w (bf16)
                pl.BlockSpec((1, C1), lambda h: (0, 0)),           # embed_b
                pl.BlockSpec((K, C1), lambda h: (0, h)),           # conv1_w head slab (bf16)
                pl.BlockSpec((1, 1, C1), lambda h: (h, 0, 0)),     # att_src[h]
                pl.BlockSpec((1, 1, C1), lambda h: (h, 0, 0)),     # att_dst[h]
                pl.BlockSpec((1, 1, C1), lambda h: (h, 0, 0)),     # conv1 bias[h]
                pl.BlockSpec((N, N), lambda h: (0, 0)),            # adj
            ],
            out_specs=pl.BlockSpec((N, C1), lambda h: (0, h)),
        ),
        compiler_params=pltpu.CompilerParams(
            dimension_semantics=("parallel",)),
    )(x, p["embed_w"], p["embed_b"].reshape(1, C1), p["conv1_w"],
      p["conv1_asrc"], p["conv1_adst"], p["conv1_b"], adj)


# -------------------- K2: norm1 + ff1 + ELU + conv2 (fused) -------------------
def _block2_kernel(pn_ref, g_ref, bta_ref, fw_ref, fb_ref, w2_ref,
                   asrc_ref, adst_ref, adj_ref, o_ref, *, eps):
    # PyTorch LayerNorm([N, D1]) on an [N, D1] input: normalize over ALL N*D1 elems.
    x = pn_ref[...]
    mean = jnp.mean(jnp.mean(x, axis=1, keepdims=True), axis=0, keepdims=True)
    d = x - mean
    var = jnp.mean(jnp.mean(d * d, axis=1, keepdims=True), axis=0, keepdims=True)
    xn = d * jax.lax.rsqrt(var + eps) * g_ref[...] + bta_ref[...]
    # ff1 + ELU.  Recomputed per head step (~33 MFLOP, negligible); ff1_w has a
    # constant block index so it streams from HBM only once per core.
    h1 = _elu(jnp.dot(xn.astype(jnp.bfloat16), fw_ref[...],
                      preferred_element_type=jnp.float32) + fb_ref[...])   # [N, D1]
    # conv2 projection + attention for this head (concat=False: heads averaged in K3)
    xw = jnp.dot(h1.astype(jnp.bfloat16), w2_ref[...],
                 preferred_element_type=jnp.float32)                       # [N, C2]
    o_ref[...] = _gat_attention(xw, asrc_ref[0], adst_ref[0], adj_ref[...])


def block2(pre_norm, p, adj, *, heads, out_ch, eps=1e-5):
    N, D1 = pre_norm.shape
    C2 = out_ch
    return pl.pallas_call(
        functools.partial(_block2_kernel, eps=eps),
        out_shape=jax.ShapeDtypeStruct((N, heads * C2), jnp.float32),
        grid_spec=pltpu.PrefetchScalarGridSpec(
            num_scalar_prefetch=0,
            grid=(heads,),
            in_specs=[
                pl.BlockSpec((N, D1), lambda h: (0, 0)),           # pre-norm1 activations
                pl.BlockSpec((N, D1), lambda h: (0, 0)),           # norm1 gamma
                pl.BlockSpec((N, D1), lambda h: (0, 0)),           # norm1 beta
                pl.BlockSpec((D1, D1), lambda h: (0, 0)),          # ff1_w (bf16)
                pl.BlockSpec((1, D1), lambda h: (0, 0)),           # ff1_b
                pl.BlockSpec((D1, C2), lambda h: (0, h)),          # conv2_w head slab (bf16)
                pl.BlockSpec((1, 1, C2), lambda h: (h, 0, 0)),     # att_src[h]
                pl.BlockSpec((1, 1, C2), lambda h: (h, 0, 0)),     # att_dst[h]
                pl.BlockSpec((N, N), lambda h: (0, 0)),            # adj
            ],
            out_specs=pl.BlockSpec((N, C2), lambda h: (0, h)),
        ),
        compiler_params=pltpu.CompilerParams(
            dimension_semantics=("parallel",)),
    )(pre_norm, p["norm1_g"], p["norm1_b"], p["ff1_w"],
      p["ff1_b"].reshape(1, D1), p["conv2_w"],
      p["conv2_asrc"], p["conv2_adst"], adj)


# ------------- K3: head mean + conv2 bias + ELU + final linear ----------------
def _finalize_kernel(hh_ref, b2_ref, lw_ref, lb_ref, o_ref, *, out_ch):
    l2 = 0.5 * (hh_ref[:, :out_ch] + hh_ref[:, out_ch:]) + b2_ref[...]   # conv2 output
    a = _elu(l2)                                                         # F.elu(latent_embedding2)
    o_ref[...] = (jnp.dot(a.astype(jnp.bfloat16), lw_ref[...],
                          preferred_element_type=jnp.float32)
                  + lb_ref[...]).astype(o_ref.dtype)


def finalize(head_out, p, *, out_ch):
    N = head_out.shape[0]
    C2 = out_ch
    Fo = p["lin_w"].shape[1]
    return pl.pallas_call(
        functools.partial(_finalize_kernel, out_ch=C2),
        out_shape=jax.ShapeDtypeStruct((N, Fo), jnp.float32),
        grid=(1,),
        in_specs=[
            pl.BlockSpec((N, 2 * C2), lambda i: (0, 0)),           # per-head conv2 outputs
            pl.BlockSpec((1, C2), lambda i: (0, 0)),               # conv2 bias
            pl.BlockSpec((C2, Fo), lambda i: (0, 0)),              # final linear W (bf16)
            pl.BlockSpec((1, Fo), lambda i: (0, 0)),               # final linear b
        ],
        out_specs=pl.BlockSpec((N, Fo), lambda i: (0, 0)),
    )(head_out, p["conv2_b"].reshape(1, C2), p["lin_w"],
      p["lin_b"].reshape(1, Fo))


# ------------------------------ full forward ---------------------------------
def gatsby_forward(x, adj, p):
    # TODO(synk): training-mode dropout (p=0.6) not implemented (inference identity).
    pre1 = block1(x, p, adj, heads=2, out_ch=512)        # [N,1024] = x.repeat(1,2)+conv1(x)
    heads2 = block2(pre1, p, adj, heads=2, out_ch=1024)  # [N,2048] = per-head conv2 outputs
    out = finalize(heads2, p, out_ch=1024)               # [N, num_features]
    return out


# ------------------------ deterministic parameter init ------------------------
def init_params(key, num_features, n_nodes):
    H1, HEADS = 512, 2          # conv1_hid, conv{1,2}_heads
    D1 = H1 * HEADS             # 1024 (conv1 concat output / ff1 width)
    C2 = 512 * 2                # 1024 (conv2 out_channels, concat=False)
    ks = jax.random.split(key, 9)
    bf = jnp.bfloat16

    def w(k, fan_in, shape, dtype=jnp.float32):
        return (jax.random.normal(k, shape, jnp.float32)
                / jnp.sqrt(jnp.float32(fan_in))).astype(dtype)

    p = {
        "embed_w": w(ks[0], num_features, (num_features, H1), bf),
        "embed_b": jnp.zeros((H1,), jnp.float32),
        "conv1_w": w(ks[1], H1, (H1, HEADS * H1), bf),
        "conv1_asrc": w(ks[2], H1, (HEADS, 1, H1)),
        "conv1_adst": w(ks[3], H1, (HEADS, 1, H1)),
        "conv1_b": jnp.zeros((HEADS, 1, H1), jnp.float32),
        "norm1_g": jnp.ones((n_nodes, D1), jnp.float32),
        "norm1_b": jnp.zeros((n_nodes, D1), jnp.float32),
        "ff1_w": w(ks[4], D1, (D1, D1), bf),
        "ff1_b": jnp.zeros((D1,), jnp.float32),
        "conv2_w": w(ks[5], D1, (D1, HEADS * C2), bf),
        "conv2_asrc": w(ks[6], C2, (HEADS, 1, C2)),
        "conv2_adst": w(ks[7], C2, (HEADS, 1, C2)),
        "conv2_b": jnp.zeros((C2,), jnp.float32),
        "lin_w": w(ks[8], C2, (C2, num_features), bf),
        "lin_b": jnp.zeros((num_features,), jnp.float32),
        # norm2 / ff2 exist in the PyTorch module but never influence forward()'s
        # returned tensor, so they are intentionally omitted (dead code).
    }
    return p


if __name__ == "__main__":
    N = 16          # number of graph nodes (dataset.x.shape[0])
    FEAT = 32       # dataset.num_features

    key = jax.random.PRNGKey(0)
    kx, kp = jax.random.split(key)
    x = jax.random.normal(kx, (N, FEAT), jnp.float32)

    # Deterministic bidirectional ring graph, edge_index = [src; dst]
    src = jnp.arange(N)
    dst = (src + 1) % N
    edge_index = jnp.stack([jnp.concatenate([src, dst]),
                            jnp.concatenate([dst, src])])          # [2, 2N]
    adj = jnp.zeros((N, N), jnp.float32).at[edge_index[1], edge_index[0]].set(1.0)
    adj = jnp.maximum(adj, jnp.eye(N, dtype=jnp.float32))          # self loops (GATConv default)

    params = init_params(kp, FEAT, N)
    out = jax.jit(gatsby_forward)(x, adj, params)
    out = jax.block_until_ready(out)
    assert out.shape == (N, FEAT)
    assert bool(jnp.all(jnp.isfinite(out)))
    print("KERNEL_OK")
</pallas_src>

<mosaic_0001>
module attributes {stable_mosaic.version = 11 : i64} {
  func.func @_block1_kernel(%arg0: i32, %arg1: memref<16x32xf32, #tpu.memory_space<vmem>>, %arg2: memref<32x512xbf16, #tpu.memory_space<vmem>>, %arg3: memref<1x512xf32, #tpu.memory_space<vmem>>, %arg4: memref<512x512xbf16, #tpu.memory_space<vmem>>, %arg5: memref<1x1x512xf32, #tpu.memory_space<vmem>>, %arg6: memref<1x1x512xf32, #tpu.memory_space<vmem>>, %arg7: memref<1x1x512xf32, #tpu.memory_space<vmem>>, %arg8: memref<16x16xf32, #tpu.memory_space<vmem>>, %arg9: memref<16x512xf32, #tpu.memory_space<vmem>>) attributes {dimension_semantics = [#tpu.dimension_semantics<parallel>], iteration_bounds = array<i64: 2>, scalar_prefetch = 0 : i64, scratch_operands = 0 : i64, tpu.core_type = #tpu.core_type<tc>, window_params = [{pipeline_mode = #tpu.pipeline_mode<synchronous>, transform_indices = @transform_0, window_bounds = array<i64: 16, 32>}, {pipeline_mode = #tpu.pipeline_mode<synchronous>, transform_indices = @transform_1, window_bounds = array<i64: 32, 512>}, {pipeline_mode = #tpu.pipeline_mode<synchronous>, transform_indices = @transform_2, window_bounds = array<i64: 1, 512>}, {transform_indices = @transform_3, window_bounds = array<i64: 512, 512>}, {transform_indices = @transform_4, window_bounds = array<i64: 1, 1, 512>}, {transform_indices = @transform_5, window_bounds = array<i64: 1, 1, 512>}, {transform_indices = @transform_6, window_bounds = array<i64: 1, 1, 512>}, {pipeline_mode = #tpu.pipeline_mode<synchronous>, transform_indices = @transform_7, window_bounds = array<i64: 16, 16>}, {transform_indices = @transform_8, window_bounds = array<i64: 16, 512>}]} {
    %c0 = arith.constant 0 : index
    %c0_0 = arith.constant 0 : index
    %0 = vector.load %arg1[%c0, %c0_0] : memref<16x32xf32, #tpu.memory_space<vmem>>, vector<16x32xf32>
    %1 = arith.truncf %0 : vector<16x32xf32> to vector<16x32xbf16>
    %c0_1 = arith.constant 0 : index
    %c0_2 = arith.constant 0 : index
    %2 = vector.load %arg2[%c0_1, %c0_2] : memref<32x512xbf16, #tpu.memory_space<vmem>>, vector<32x512xbf16>
    %cst = arith.constant dense<0.000000e+00> : vector<16x512xf32>
    %3 = tpu.matmul %1, %2, %cst {dimension_numbers = #tpu.dot_dimension_numbers<[1], [0], [0], [1], [0, 0, 1, 1], [], []>} : vector<16x32xbf16>, vector<32x512xbf16>, vector<16x512xf32> -> vector<16x512xf32>
    %c0_3 = arith.constant 0 : index
    %c0_4 = arith.constant 0 : index
    %4 = vector.load %arg3[%c0_3, %c0_4] : memref<1x512xf32, #tpu.memory_space<vmem>>, vector<1x512xf32>
    %5 = vector.broadcast %4 : vector<1x512xf32> to vector<16x512xf32>
    %6 = arith.addf %3, %5 : vector<16x512xf32>
    %7 = arith.truncf %6 : vector<16x512xf32> to vector<16x512xbf16>
    %c0_5 = arith.constant 0 : index
    %c0_6 = arith.constant 0 : index
    %8 = vector.load %arg4[%c0_5, %c0_6] : memref<512x512xbf16, #tpu.memory_space<vmem>>, vector<512x512xbf16>
    %cst_7 = arith.constant dense<0.000000e+00> : vector<16x512xf32>
    %9 = tpu.matmul %7, %8, %cst_7 {dimension_numbers = #tpu.dot_dimension_numbers<[1], [0], [0], [1], [0, 0, 1, 1], [], []>} : vector<16x512xbf16>, vector<512x512xbf16>, vector<16x512xf32> -> vector<16x512xf32>
    %c0_8 = arith.constant 0 : index
    %c0_9 = arith.constant 0 : index
    %c0_10 = arith.constant 0 : index
    %10 = vector.load %arg5[%c0_8, %c0_9, %c0_10] : memref<1x1x512xf32, #tpu.memory_space<vmem>>, vector<1x1x512xf32>
    %11 = vector.shape_cast %10 : vector<1x1x512xf32> to vector<1x512xf32>
    %c0_11 = arith.constant 0 : index
    %c0_12 = arith.constant 0 : index
    %c0_13 = arith.constant 0 : index
    %12 = vector.load %arg6[%c0_11, %c0_12, %c0_13] : memref<1x1x512xf32, #tpu.memory_space<vmem>>, vector<1x1x512xf32>
    %13 = vector.shape_cast %12 : vector<1x1x512xf32> to vector<1x512xf32>
    %c0_14 = arith.constant 0 : index
    %c0_15 = arith.constant 0 : index
    %14 = vector.load %arg8[%c0_14, %c0_15] : memref<16x16xf32, #tpu.memory_space<vmem>>, vector<16x16xf32>
    %15 = vector.broadcast %11 : vector<1x512xf32> to vector<16x512xf32>
    %16 = arith.mulf %9, %15 : vector<16x512xf32>
    %cst_16 = arith.constant dense<0.000000e+00> : vector<16xf32>
    %17 = vector.multi_reduction <add>, %16, %cst_16 [1] : vector<16x512xf32> to vector<16xf32>
    %18 = vector.shape_cast %17 : vector<16xf32> to vector<16x1xf32>
    %19 = vector.broadcast %13 : vector<1x512xf32> to vector<16x512xf32>
    %20 = arith.mulf %9, %19 : vector<16x512xf32>
    %cst_17 = arith.constant dense<0.000000e+00> : vector<16xf32>
    %21 = vector.multi_reduction <add>, %20, %cst_17 [1] : vector<16x512xf32> to vector<16xf32>
    %22 = vector.shape_cast %21 : vector<16xf32> to vector<16x1xf32>
    %23 = tpu.transpose %18, [1, 0] : vector<16x1xf32> -> vector<1x16xf32>
    %24 = vector.broadcast %22 : vector<16x1xf32> to vector<16x16xf32>
    %25 = vector.broadcast %23 : vector<1x16xf32> to vector<16x16xf32>
    %26 = arith.addf %24, %25 : vector<16x16xf32>
    %cst_18 = arith.constant 0.000000e+00 : f32
    %27 = vector.broadcast %cst_18 : f32 to vector<16x16xf32>
    %28 = arith.cmpf ogt, %26, %27 : vector<16x16xf32>
    %cst_19 = arith.constant 2.000000e-01 : f32
    %29 = vector.broadcast %cst_19 : f32 to vector<16x16xf32>
    %30 = arith.mulf %29, %26 : vector<16x16xf32>
    %31 = arith.select %28, %26, %30 : vector<16x16xi1>, vector<16x16xf32>
    %cst_20 = arith.constant 0.000000e+00 : f32
    %32 = vector.broadcast %cst_20 : f32 to vector<16x16xf32>
    %33 = arith.cmpf ogt, %14, %32 : vector<16x16xf32>
    %cst_21 = arith.constant -1.000000e+30 : f32
    %34 = vector.broadcast %cst_21 : f32 to vector<16x16xf32>
    %35 = arith.select %33, %31, %34 : vector<16x16xi1>, vector<16x16xf32>
    %cst_22 = arith.constant dense<0xFF800000> : vector<16xf32>
    %36 = vector.multi_reduction <maximumf>, %35, %cst_22 [1] : vector<16x16xf32> to vector<16xf32>
    %37 = vector.shape_cast %36 : vector<16xf32> to vector<16x1xf32>
    %38 = vector.broadcast %37 : vector<16x1xf32> to vector<16x16xf32>
    %39 = arith.subf %35, %38 : vector<16x16xf32>
    %cst_23 = arith.constant 0.000000e+00 : f32
    %40 = vector.broadcast %cst_23 : f32 to vector<16x16xf32>
    %41 = arith.cmpf ogt, %14, %40 : vector<16x16xf32>
    %42 = math.exp %39 : vector<16x16xf32>
    %cst_24 = arith.constant 0.000000e+00 : f32
    %43 = vector.broadcast %cst_24 : f32 to vector<16x16xf32>
    %44 = arith.select %41, %42, %43 : vector<16x16xi1>, vector<16x16xf32>
    %cst_25 = arith.constant dense<0.000000e+00> : vector<16xf32>
    %45 = vector.multi_reduction <add>, %44, %cst_25 [1] : vector<16x16xf32> to vector<16xf32>
    %46 = vector.shape_cast %45 : vector<16xf32> to vector<16x1xf32>
    %47 = tpu.reciprocal %46 {approx = true} : vector<16x1xf32> -> vector<16x1xf32>
    %48 = vector.broadcast %47 : vector<16x1xf32> to vector<16x16xf32>
    %49 = arith.mulf %44, %48 : vector<16x16xf32>
    %cst_26 = arith.constant dense<0.000000e+00> : vector<16x512xf32>
    %50 = tpu.matmul %49, %9, %cst_26 {dimension_numbers = #tpu.dot_dimension_numbers<[1], [0], [0], [1], [0, 0, 1, 1], [], []>} : vector<16x16xf32>, vector<16x512xf32>, vector<16x512xf32> -> vector<16x512xf32>
    %51 = arith.addf %6, %50 : vector<16x512xf32>
    %c0_27 = arith.constant 0 : index
    %c0_28 = arith.constant 0 : index
    %c0_29 = arith.constant 0 : index
    %52 = vector.load %arg7[%c0_27, %c0_28, %c0_29] : memref<1x1x512xf32, #tpu.memory_space<vmem>>, vector<1x1x512xf32>
    %53 = vector.shape_cast %52 : vector<1x1x512xf32> to vector<1x512xf32>
    %54 = vector.broadcast %53 : vector<1x512xf32> to vector<16x512xf32>
    %55 = arith.addf %51, %54 : vector<16x512xf32>
    %c0_30 = arith.constant 0 : index
    %c0_31 = arith.constant 0 : index
    %56 = vector.load %arg9[%c0_30, %c0_31] : memref<16x512xf32, #tpu.memory_space<vmem>>, vector<16x512xf32>
    tpu.vector_store %arg9[%c0_30, %c0_31], %55 {strides = array<i32>} : memref<16x512xf32, #tpu.memory_space<vmem>>, vector<16x512xf32>,
    return
  }
  func.func @transform_0(%arg0: i32) -> (i32, i32) {
    %c0_i32 = arith.constant 0 : i32
    %c0_i32_0 = arith.constant 0 : i32
    %c0_i32_1 = arith.constant 0 : i32
    return %c0_i32, %c0_i32_0 : i32, i32
  }
  func.func @transform_1(%arg0: i32) -> (i32, i32) {
    %c0_i32 = arith.constant 0 : i32
    %c0_i32_0 = arith.constant 0 : i32
    %c0_i32_1 = arith.constant 0 : i32
    return %c0_i32, %c0_i32_0 : i32, i32
  }
  func.func @transform_2(%arg0: i32) -> (i32, i32) {
    %c0_i32 = arith.constant 0 : i32
    %c0_i32_0 = arith.constant 0 : i32
    %c0_i32_1 = arith.constant 0 : i32
    return %c0_i32, %c0_i32_0 : i32, i32
  }
  func.func @transform_3(%arg0: i32) -> (i32, i32) {
    %c0_i32 = arith.constant 0 : i32
    %c0_i32_0 = arith.constant 0 : i32
    return %c0_i32, %arg0 : i32, i32
  }
  func.func @transform_4(%arg0: i32) -> (i32, i32, i32) {
    %c0_i32 = arith.constant 0 : i32
    %c0_i32_0 = arith.constant 0 : i32
    %c0_i32_1 = arith.constant 0 : i32
    return %arg0, %c0_i32, %c0_i32_0 : i32, i32, i32
  }
  func.func @transform_5(%arg0: i32) -> (i32, i32, i32) {
    %c0_i32 = arith.constant 0 : i32
    %c0_i32_0 = arith.constant 0 : i32
    %c0_i32_1 = arith.constant 0 : i32
    return %arg0, %c0_i32, %c0_i32_0 : i32, i32, i32
  }
  func.func @transform_6(%arg0: i32) -> (i32, i32, i32) {
    %c0_i32 = arith.constant 0 : i32
    %c0_i32_0 = arith.constant 0 : i32
    %c0_i32_1 = arith.constant 0 : i32
    return %arg0, %c0_i32, %c0_i32_0 : i32, i32, i32
  }
  func.func @transform_7(%arg0: i32) -> (i32, i32) {
    %c0_i32 = arith.constant 0 : i32
    %c0_i32_0 = arith.constant 0 : i32
    %c0_i32_1 = arith.constant 0 : i32
    return %c0_i32, %c0_i32_0 : i32, i32
  }
  func.func @transform_8(%arg0: i32) -> (i32, i32) {
    %c0_i32 = arith.constant 0 : i32
    %c0_i32_0 = arith.constant 0 : i32
    return %c0_i32, %arg0 : i32, i32
  }
}

module attributes {stable_mosaic.version = 11 : i64} {
  func.func @_block2_kernel(%arg0: i32, %arg1: memref<16x1024xf32, #tpu.memory_space<vmem>>, %arg2: memref<16x1024xf32, #tpu.memory_space<vmem>>, %arg3: memref<16x1024xf32, #tpu.memory_space<vmem>>, %arg4: memref<1024x1024xbf16, #tpu.memory_space<vmem>>, %arg5: memref<1x1024xf32, #tpu.memory_space<vmem>>, %arg6: memref<1024x1024xbf16, #tpu.memory_space<vmem>>, %arg7: memref<1x1x1024xf32, #tpu.memory_space<vmem>>, %arg8: memref<1x1x1024xf32, #tpu.memory_space<vmem>>, %arg9: memref<16x16xf32, #tpu.memory_space<vmem>>, %arg10: memref<16x1024xf32, #tpu.memory_space<vmem>>) attributes {dimension_semantics = [#tpu.dimension_semantics<parallel>], iteration_bounds = array<i64: 2>, scalar_prefetch = 0 : i64, scratch_operands = 0 : i64, tpu.core_type = #tpu.core_type<tc>, window_params = [{pipeline_mode = #tpu.pipeline_mode<synchronous>, transform_indices = @transform_0, window_bounds = array<i64: 16, 1024>}, {pipeline_mode = #tpu.pipeline_mode<synchronous>, transform_indices = @transform_1, window_bounds = array<i64: 16, 1024>}, {pipeline_mode = #tpu.pipeline_mode<synchronous>, transform_indices = @transform_2, window_bounds = array<i64: 16, 1024>}, {pipeline_mode = #tpu.pipeline_mode<synchronous>, transform_indices = @transform_3, window_bounds = array<i64: 1024, 1024>}, {pipeline_mode = #tpu.pipeline_mode<synchronous>, transform_indices = @transform_4, window_bounds = array<i64: 1, 1024>}, {transform_indices = @transform_5, window_bounds = array<i64: 1024, 1024>}, {transform_indices = @transform_6, window_bounds = array<i64: 1, 1, 1024>}, {transform_indices = @transform_7, window_bounds = array<i64: 1, 1, 1024>}, {pipeline_mode = #tpu.pipeline_mode<synchronous>, transform_indices = @transform_8, window_bounds = array<i64: 16, 16>}, {transform_indices = @transform_9, window_bounds = array<i64: 16, 1024>}]} {
    %c0 = arith.constant 0 : index
    %c0_0 = arith.constant 0 : index
    %0 = vector.load %arg1[%c0, %c0_0] : memref<16x1024xf32, #tpu.memory_space<vmem>>, vector<16x1024xf32>
    %cst = arith.constant dense<0.000000e+00> : vector<16xf32>
    %1 = vector.multi_reduction <add>, %0, %cst [1] : vector<16x1024xf32> to vector<16xf32>
    %2 = vector.shape_cast %1 : vector<16xf32> to vector<16x1xf32>
    %cst_1 = arith.constant 1.024000e+03 : f32
    %3 = vector.broadcast %cst_1 : f32 to vector<16x1xf32>
    %4 = arith.divf %2, %3 : vector<16x1xf32>
    %cst_2 = arith.constant dense<0.000000e+00> : vector<1xf32>
    %5 = vector.multi_reduction <add>, %4, %cst_2 [0] : vector<16x1xf32> to vector<1xf32>
    %6 = vector.shape_cast %5 : vector<1xf32> to vector<1x1xf32>
    %cst_3 = arith.constant 1.600000e+01 : f32
    %7 = vector.broadcast %cst_3 : f32 to vector<1x1xf32>
    %8 = arith.divf %6, %7 : vector<1x1xf32>
    %9 = vector.broadcast %8 : vector<1x1xf32> to vector<16x1024xf32>
    %10 = arith.subf %0, %9 : vector<16x1024xf32>
    %11 = arith.mulf %10, %10 : vector<16x1024xf32>
    %cst_4 = arith.constant dense<0.000000e+00> : vector<16xf32>
    %12 = vector.multi_reduction <add>, %11, %cst_4 [1] : vector<16x1024xf32> to vector<16xf32>
    %13 = vector.shape_cast %12 : vector<16xf32> to vector<16x1xf32>
    %cst_5 = arith.constant 1.024000e+03 : f32
    %14 = vector.broadcast %cst_5 : f32 to vector<16x1xf32>
    %15 = arith.divf %13, %14 : vector<16x1xf32>
    %cst_6 = arith.constant dense<0.000000e+00> : vector<1xf32>
    %16 = vector.multi_reduction <add>, %15, %cst_6 [0] : vector<16x1xf32> to vector<1xf32>
    %17 = vector.shape_cast %16 : vector<1xf32> to vector<1x1xf32>
    %cst_7 = arith.constant 1.600000e+01 : f32
    %18 = vector.broadcast %cst_7 : f32 to vector<1x1xf32>
    %19 = arith.divf %17, %18 : vector<1x1xf32>
    %cst_8 = arith.constant 9.99999974E-6 : f32
    %20 = vector.broadcast %cst_8 : f32 to vector<1x1xf32>
    %21 = arith.addf %19, %20 : vector<1x1xf32>
    %22 = math.rsqrt %21 : vector<1x1xf32>
    %23 = vector.broadcast %22 : vector<1x1xf32> to vector<16x1024xf32>
    %24 = arith.mulf %10, %23 : vector<16x1024xf32>
    %c0_9 = arith.constant 0 : index
    %c0_10 = arith.constant 0 : index
    %25 = vector.load %arg2[%c0_9, %c0_10] : memref<16x1024xf32, #tpu.memory_space<vmem>>, vector<16x1024xf32>
    %26 = arith.mulf %24, %25 : vector<16x1024xf32>
    %c0_11 = arith.constant 0 : index
    %c0_12 = arith.constant 0 : index
    %27 = vector.load %arg3[%c0_11, %c0_12] : memref<16x1024xf32, #tpu.memory_space<vmem>>, vector<16x1024xf32>
    %28 = arith.addf %26, %27 : vector<16x1024xf32>
    %29 = arith.truncf %28 : vector<16x1024xf32> to vector<16x1024xbf16>
    %c0_13 = arith.constant 0 : index
    %c0_14 = arith.constant 0 : index
    %30 = vector.load %arg4[%c0_13, %c0_14] : memref<1024x1024xbf16, #tpu.memory_space<vmem>>, vector<1024x1024xbf16>
    %cst_15 = arith.constant dense<0.000000e+00> : vector<16x1024xf32>
    %31 = tpu.matmul %29, %30, %cst_15 {dimension_numbers = #tpu.dot_dimension_numbers<[1], [0], [0], [1], [0, 0, 1, 1], [], []>} : vector<16x1024xbf16>, vector<1024x1024xbf16>, vector<16x1024xf32> -> vector<16x1024xf32>
    %c0_16 = arith.constant 0 : index
    %c0_17 = arith.constant 0 : index
    %32 = vector.load %arg5[%c0_16, %c0_17] : memref<1x1024xf32, #tpu.memory_space<vmem>>, vector<1x1024xf32>
    %33 = vector.broadcast %32 : vector<1x1024xf32> to vector<16x1024xf32>
    %34 = arith.addf %31, %33 : vector<16x1024xf32>
    %cst_18 = arith.constant 0.000000e+00 : f32
    %35 = vector.broadcast %cst_18 : f32 to vector<16x1024xf32>
    %36 = arith.cmpf ogt, %34, %35 : vector<16x1024xf32>
    %cst_19 = arith.constant 0.000000e+00 : f32
    %37 = vector.broadcast %cst_19 : f32 to vector<16x1024xf32>
    %38 = arith.minimumf %34, %37 : vector<16x1024xf32>
    %39 = math.exp %38 : vector<16x1024xf32>
    %cst_20 = arith.constant 1.000000e+00 : f32
    %40 = vector.broadcast %cst_20 : f32 to vector<16x1024xf32>
    %41 = arith.subf %39, %40 : vector<16x1024xf32>
    %42 = arith.select %36, %34, %41 : vector<16x1024xi1>, vector<16x1024xf32>
    %43 = arith.truncf %42 : vector<16x1024xf32> to vector<16x1024xbf16>
    %c0_21 = arith.constant 0 : index
    %c0_22 = arith.constant 0 : index
    %44 = vector.load %arg6[%c0_21, %c0_22] : memref<1024x1024xbf16, #tpu.memory_space<vmem>>, vector<1024x1024xbf16>
    %cst_23 = arith.constant dense<0.000000e+00> : vector<16x1024xf32>
    %45 = tpu.matmul %43, %44, %cst_23 {dimension_numbers = #tpu.dot_dimension_numbers<[1], [0], [0], [1], [0, 0, 1, 1], [], []>} : vector<16x1024xbf16>, vector<1024x1024xbf16>, vector<16x1024xf32> -> vector<16x1024xf32>
    %c0_24 = arith.constant 0 : index
    %c0_25 = arith.constant 0 : index
    %c0_26 = arith.constant 0 : index
    %46 = vector.load %arg7[%c0_24, %c0_25, %c0_26] : memref<1x1x1024xf32, #tpu.memory_space<vmem>>, vector<1x1x1024xf32>
    %47 = vector.shape_cast %46 : vector<1x1x1024xf32> to vector<1x1024xf32>
    %c0_27 = arith.constant 0 : index
    %c0_28 = arith.constant 0 : index
    %c0_29 = arith.constant 0 : index
    %48 = vector.load %arg8[%c0_27, %c0_28, %c0_29] : memref<1x1x1024xf32, #tpu.memory_space<vmem>>, vector<1x1x1024xf32>
    %49 = vector.shape_cast %48 : vector<1x1x1024xf32> to vector<1x1024xf32>
    %c0_30 = arith.constant 0 : index
    %c0_31 = arith.constant 0 : index
    %50 = vector.load %arg9[%c0_30, %c0_31] : memref<16x16xf32, #tpu.memory_space<vmem>>, vector<16x16xf32>
    %51 = vector.broadcast %47 : vector<1x1024xf32> to vector<16x1024xf32>
    %52 = arith.mulf %45, %51 : vector<16x1024xf32>
    %cst_32 = arith.constant dense<0.000000e+00> : vector<16xf32>
    %53 = vector.multi_reduction <add>, %52, %cst_32 [1] : vector<16x1024xf32> to vector<16xf32>
    %54 = vector.shape_cast %53 : vector<16xf32> to vector<16x1xf32>
    %55 = vector.broadcast %49 : vector<1x1024xf32> to vector<16x1024xf32>
    %56 = arith.mulf %45, %55 : vector<16x1024xf32>
    %cst_33 = arith.constant dense<0.000000e+00> : vector<16xf32>
    %57 = vector.multi_reduction <add>, %56, %cst_33 [1] : vector<16x1024xf32> to vector<16xf32>
    %58 = vector.shape_cast %57 : vector<16xf32> to vector<16x1xf32>
    %59 = tpu.transpose %54, [1, 0] : vector<16x1xf32> -> vector<1x16xf32>
    %60 = vector.broadcast %58 : vector<16x1xf32> to vector<16x16xf32>
    %61 = vector.broadcast %59 : vector<1x16xf32> to vector<16x16xf32>
    %62 = arith.addf %60, %61 : vector<16x16xf32>
    %cst_34 = arith.constant 0.000000e+00 : f32
    %63 = vector.broadcast %cst_34 : f32 to vector<16x16xf32>
    %64 = arith.cmpf ogt, %62, %63 : vector<16x16xf32>
    %cst_35 = arith.constant 2.000000e-01 : f32
    %65 = vector.broadcast %cst_35 : f32 to vector<16x16xf32>
    %66 = arith.mulf %65, %62 : vector<16x16xf32>
    %67 = arith.select %64, %62, %66 : vector<16x16xi1>, vector<16x16xf32>
    %cst_36 = arith.constant 0.000000e+00 : f32
    %68 = vector.broadcast %cst_36 : f32 to vector<16x16xf32>
    %69 = arith.cmpf ogt, %50, %68 : vector<16x16xf32>
    %cst_37 = arith.constant -1.000000e+30 : f32
    %70 = vector.broadcast %cst_37 : f32 to vector<16x16xf32>
    %71 = arith.select %69, %67, %70 : vector<16x16xi1>, vector<16x16xf32>
    %cst_38 = arith.constant dense<0xFF800000> : vector<16xf32>
    %72 = vector.multi_reduction <maximumf>, %71, %cst_38 [1] : vector<16x16xf32> to vector<16xf32>
    %73 = vector.shape_cast %72 : vector<16xf32> to vector<16x1xf32>
    %74 = vector.broadcast %73 : vector<16x1xf32> to vector<16x16xf32>
    %75 = arith.subf %71, %74 : vector<16x16xf32>
    %cst_39 = arith.constant 0.000000e+00 : f32
    %76 = vector.broadcast %cst_39 : f32 to vector<16x16xf32>
    %77 = arith.cmpf ogt, %50, %76 : vector<16x16xf32>
    %78 = math.exp %75 : vector<16x16xf32>
    %cst_40 = arith.constant 0.000000e+00 : f32
    %79 = vector.broadcast %cst_40 : f32 to vector<16x16xf32>
    %80 = arith.select %77, %78, %79 : vector<16x16xi1>, vector<16x16xf32>
    %cst_41 = arith.constant dense<0.000000e+00> : vector<16xf32>
    %81 = vector.multi_reduction <add>, %80, %cst_41 [1] : vector<16x16xf32> to vector<16xf32>
    %82 = vector.shape_cast %81 : vector<16xf32> to vector<16x1xf32>
    %83 = tpu.reciprocal %82 {approx = true} : vector<16x1xf32> -> vector<16x1xf32>
    %84 = vector.broadcast %83 : vector<16x1xf32> to vector<16x16xf32>
    %85 = arith.mulf %80, %84 : vector<16x16xf32>
    %cst_42 = arith.constant dense<0.000000e+00> : vector<16x1024xf32>
    %86 = tpu.matmul %85, %45, %cst_42 {dimension_numbers = #tpu.dot_dimension_numbers<[1], [0], [0], [1], [0, 0, 1, 1], [], []>} : vector<16x16xf32>, vector<16x1024xf32>, vector<16x1024xf32> -> vector<16x1024xf32>
    %c0_43 = arith.constant 0 : index
    %c0_44 = arith.constant 0 : index
    %87 = vector.load %arg10[%c0_43, %c0_44] : memref<16x1024xf32, #tpu.memory_space<vmem>>, vector<16x1024xf32>
    tpu.vector_store %arg10[%c0_43, %c0_44], %86 {strides = array<i32>} : memref<16x1024xf32, #tpu.memory_space<vmem>>, vector<16x1024xf32>,
    return
  }
  func.func @transform_0(%arg0: i32) -> (i32, i32) {
    %c0_i32 = arith.constant 0 : i32
    %c0_i32_0 = arith.constant 0 : i32
    %c0_i32_1 = arith.constant 0 : i32
    return %c0_i32, %c0_i32_0 : i32, i32
  }
  func.func @transform_1(%arg0: i32) -> (i32, i32) {
    %c0_i32 = arith.constant 0 : i32
    %c0_i32_0 = arith.constant 0 : i32
    %c0_i32_1 = arith.constant 0 : i32
    return %c0_i32, %c0_i32_0 : i32, i32
  }
  func.func @transform_2(%arg0: i32) -> (i32, i32) {
    %c0_i32 = arith.constant 0 : i32
    %c0_i32_0 = arith.constant 0 : i32
    %c0_i32_1 = arith.constant 0 : i32
    return %c0_i32, %c0_i32_0 : i32, i32
  }
  func.func @transform_3(%arg0: i32) -> (i32, i32) {
    %c0_i32 = arith.constant 0 : i32
    %c0_i32_0 = arith.constant 0 : i32
    %c0_i32_1 = arith.constant 0 : i32
    return %c0_i32, %c0_i32_0 : i32, i32
  }
  func.func @transform_4(%arg0: i32) -> (i32, i32) {
    %c0_i32 = arith.constant 0 : i32
    %c0_i32_0 = arith.constant 0 : i32
    %c0_i32_1 = arith.constant 0 : i32
    return %c0_i32, %c0_i32_0 : i32, i32
  }
  func.func @transform_5(%arg0: i32) -> (i32, i32) {
    %c0_i32 = arith.constant 0 : i32
    %c0_i32_0 = arith.constant 0 : i32
    return %c0_i32, %arg0 : i32, i32
  }
  func.func @transform_6(%arg0: i32) -> (i32, i32, i32) {
    %c0_i32 = arith.constant 0 : i32
    %c0_i32_0 = arith.constant 0 : i32
    %c0_i32_1 = arith.constant 0 : i32
    return %arg0, %c0_i32, %c0_i32_0 : i32, i32, i32
  }
  func.func @transform_7(%arg0: i32) -> (i32, i32, i32) {
    %c0_i32 = arith.constant 0 : i32
    %c0_i32_0 = arith.constant 0 : i32
    %c0_i32_1 = arith.constant 0 : i32
    return %arg0, %c0_i32, %c0_i32_0 : i32, i32, i32
  }
  func.func @transform_8(%arg0: i32) -> (i32, i32) {
    %c0_i32 = arith.constant 0 : i32
    %c0_i32_0 = arith.constant 0 : i32
    %c0_i32_1 = arith.constant 0 : i32
    return %c0_i32, %c0_i32_0 : i32, i32
  }
  func.func @transform_9(%arg0: i32) -> (i32, i32) {
    %c0_i32 = arith.constant 0 : i32
    %c0_i32_0 = arith.constant 0 : i32
    return %c0_i32, %arg0 : i32, i32
  }
}

module attributes {stable_mosaic.version = 11 : i64} {
  func.func @_finalize_kernel(%arg0: i32, %arg1: memref<16x2048xf32, #tpu.memory_space<vmem>>, %arg2: memref<1x1024xf32, #tpu.memory_space<vmem>>, %arg3: memref<1024x32xbf16, #tpu.memory_space<vmem>>, %arg4: memref<1x32xf32, #tpu.memory_space<vmem>>, %arg5: memref<16x32xf32, #tpu.memory_space<vmem>>) attributes {dimension_semantics = [#tpu.dimension_semantics<arbitrary>], iteration_bounds = array<i64: 1>, scalar_prefetch = 0 : i64, scratch_operands = 0 : i64, tpu.core_type = #tpu.core_type<tc>, window_params = [{pipeline_mode = #tpu.pipeline_mode<synchronous>, transform_indices = @transform_0, window_bounds = array<i64: 16, 2048>}, {pipeline_mode = #tpu.pipeline_mode<synchronous>, transform_indices = @transform_1, window_bounds = array<i64: 1, 1024>}, {pipeline_mode = #tpu.pipeline_mode<synchronous>, transform_indices = @transform_2, window_bounds = array<i64: 1024, 32>}, {pipeline_mode = #tpu.pipeline_mode<synchronous>, transform_indices = @transform_3, window_bounds = array<i64: 1, 32>}, {pipeline_mode = #tpu.pipeline_mode<synchronous>, transform_indices = @transform_4, window_bounds = array<i64: 16, 32>}]} {
    %c0 = arith.constant 0 : index
    %c0_0 = arith.constant 0 : index
    %0 = vector.load %arg1[%c0, %c0_0] : memref<16x2048xf32, #tpu.memory_space<vmem>>, vector<16x1024xf32>
    %c0_1 = arith.constant 0 : index
    %c1024 = arith.constant 1024 : index
    %1 = vector.load %arg1[%c0_1, %c1024] : memref<16x2048xf32, #tpu.memory_space<vmem>>, vector<16x1024xf32>
    %2 = arith.addf %0, %1 : vector<16x1024xf32>
    %cst = arith.constant 5.000000e-01 : f32
    %3 = vector.broadcast %cst : f32 to vector<16x1024xf32>
    %4 = arith.mulf %3, %2 : vector<16x1024xf32>
    %c0_2 = arith.constant 0 : index
    %c0_3 = arith.constant 0 : index
    %5 = vector.load %arg2[%c0_2, %c0_3] : memref<1x1024xf32, #tpu.memory_space<vmem>>, vector<1x1024xf32>
    %6 = vector.broadcast %5 : vector<1x1024xf32> to vector<16x1024xf32>
    %7 = arith.addf %4, %6 : vector<16x1024xf32>
    %cst_4 = arith.constant 0.000000e+00 : f32
    %8 = vector.broadcast %cst_4 : f32 to vector<16x1024xf32>
    %9 = arith.cmpf ogt, %7, %8 : vector<16x1024xf32>
    %cst_5 = arith.constant 0.000000e+00 : f32
    %10 = vector.broadcast %cst_5 : f32 to vector<16x1024xf32>
    %11 = arith.minimumf %7, %10 : vector<16x1024xf32>
    %12 = math.exp %11 : vector<16x1024xf32>
    %cst_6 = arith.constant 1.000000e+00 : f32
    %13 = vector.broadcast %cst_6 : f32 to vector<16x1024xf32>
    %14 = arith.subf %12, %13 : vector<16x1024xf32>
    %15 = arith.select %9, %7, %14 : vector<16x1024xi1>, vector<16x1024xf32>
    %16 = arith.truncf %15 : vector<16x1024xf32> to vector<16x1024xbf16>
    %c0_7 = arith.constant 0 : index
    %c0_8 = arith.constant 0 : index
    %17 = vector.load %arg3[%c0_7, %c0_8] : memref<1024x32xbf16, #tpu.memory_space<vmem>>, vector<1024x32xbf16>
    %cst_9 = arith.constant dense<0.000000e+00> : vector<16x32xf32>
    %18 = tpu.matmul %16, %17, %cst_9 {dimension_numbers = #tpu.dot_dimension_numbers<[1], [0], [0], [1], [0, 0, 1, 1], [], []>} : vector<16x1024xbf16>, vector<1024x32xbf16>, vector<16x32xf32> -> vector<16x32xf32>
    %c0_10 = arith.constant 0 : index
    %c0_11 = arith.constant 0 : index
    %19 = vector.load %arg4[%c0_10, %c0_11] : memref<1x32xf32, #tpu.memory_space<vmem>>, vector<1x32xf32>
    %20 = vector.broadcast %19 : vector<1x32xf32> to vector<16x32xf32>
    %21 = arith.addf %18, %20 : vector<16x32xf32>
    %c0_12 = arith.constant 0 : index
    %c0_13 = arith.constant 0 : index
    %22 = vector.load %arg5[%c0_12, %c0_13] : memref<16x32xf32, #tpu.memory_space<vmem>>, vector<16x32xf32>
    tpu.vector_store %arg5[%c0_12, %c0_13], %21 {strides = array<i32>} : memref<16x32xf32, #tpu.memory_space<vmem>>, vector<16x32xf32>,
    return
  }
  func.func @transform_0(%arg0: i32) -> (i32, i32) {
    %c0_i32 = arith.constant 0 : i32
    %c0_i32_0 = arith.constant 0 : i32
    %c0_i32_1 = arith.constant 0 : i32
    return %c0_i32, %c0_i32_0 : i32, i32
  }
  func.func @transform_1(%arg0: i32) -> (i32, i32) {
    %c0_i32 = arith.constant 0 : i32
    %c0_i32_0 = arith.constant 0 : i32
    %c0_i32_1 = arith.constant 0 : i32
    return %c0_i32, %c0_i32_0 : i32, i32
  }
  func.func @transform_2(%arg0: i32) -> (i32, i32) {
    %c0_i32 = arith.constant 0 : i32
    %c0_i32_0 = arith.constant 0 : i32
    %c0_i32_1 = arith.constant 0 : i32
    return %c0_i32, %c0_i32_0 : i32, i32
  }
  func.func @transform_3(%arg0: i32) -> (i32, i32) {
    %c0_i32 = arith.constant 0 : i32
    %c0_i32_0 = arith.constant 0 : i32
    %c0_i32_1 = arith.constant 0 : i32
    return %c0_i32, %c0_i32_0 : i32, i32
  }
  func.func @transform_4(%arg0: i32) -> (i32, i32) {
    %c0_i32 = arith.constant 0 : i32
    %c0_i32_0 = arith.constant 0 : i32
    %c0_i32_1 = arith.constant 0 : i32
    return %c0_i32, %c0_i32_0 : i32, i32
  }
}

</mosaic_0001>

<llo_original>
// kernel: gatsby_forward.3
$region0: #{gatsby_forward.3}
  #allocation0 [shape = 'u32[]', space=smem, size = 0x4, offset = 0x4, fixed_abs, tag = 'smem constant byte address 0x4 - core index']
  #allocation1 [shape = 'u32[72,128]{1,0:T(1,128)}', space=vmem, size = 0x9000, scoped, tag = 'internal scratch']
  %s0 = inlined_call_operand.hbm [shape: f32[16,32], index: 0, kind: input, shape index: {}]
  %s1 = inlined_call_operand.hbm [shape: bf16[32,512], index: 1, kind: input, shape index: {}]
  %s2 = inlined_call_operand.hbm [shape: f32[1,512], index: 2, kind: input, shape index: {}]
  %s3 = inlined_call_operand.hbm [shape: bf16[512,1024], index: 3, kind: input, shape index: {}]
  %s4 = inlined_call_operand.hbm [shape: f32[2,1,512], index: 4, kind: input, shape index: {}]
  %s5 = inlined_call_operand.hbm [shape: f32[2,1,512], index: 5, kind: input, shape index: {}]
  %s6 = inlined_call_operand.hbm [shape: f32[2,1,512], index: 6, kind: input, shape index: {}]
  %s7 = inlined_call_operand.hbm [shape: f32[16,16], index: 7, kind: input, shape index: {}]
  %s8 = inlined_call_operand.vmem [shape: f32[16,1024], index: 8, kind: output, shape index: {}]
  %s9 = sld [smem:[#allocation0]]
  $region116: #{gatsby_forward.3} parent=0
    _
  %s11 = ssub.s32 1, %s9
  %s12 = scalar_select 0, %s11, %s9
  $region1: #{gatsby_forward.3} parent=0
    #allocation2 [shape = 'u8[8192]{0}', space=vmem, size = 0x2000, scoped, tag = 'input window, operand 0, single buffered']
    #allocation3 [shape = 's32[2]{0}', space=sflag, size = 0x8, scoped, tag = 'scoped memory for gatsby_forward.3']
    #allocation4 [shape = 'u8[32768]{0}', space=vmem, size = 0x8000, scoped, tag = 'input window, operand 1, single buffered']
    #allocation5 [shape = 's32[1]{0}', space=sflag, size = 0x4, scoped, tag = 'scoped memory for gatsby_forward.3']
    #allocation6 [shape = 'u8[2048]{0}', space=vmem, size = 0x800, scoped, tag = 'input window, operand 2, single buffered']
    #allocation7 [shape = 'u8[1048576]{0}', space=vmem, size = 0x100000, scoped, tag = 'input window, operand 3']
    #allocation8 [shape = 's32[2]{0}', space=sflag, size = 0x8, scoped, tag = 'scoped memory for gatsby_forward.3']
    #allocation9 [shape = 'u8[4096]{0}', space=vmem, size = 0x1000, scoped, tag = 'input window, operand 4']
    #allocation10 [shape = 'u8[4096]{0}', space=vmem, size = 0x1000, scoped, tag = 'input window, operand 5']
    #allocation11 [shape = 's32[2]{0}', space=sflag, size = 0x8, scoped, tag = 'scoped memory for gatsby_forward.3']
    #allocation12 [shape = 'u8[4096]{0}', space=vmem, size = 0x1000, scoped, tag = 'input window, operand 6']
    #allocation13 [shape = 'u8[8192]{0}', space=vmem, size = 0x2000, scoped, tag = 'input window, operand 7, single buffered']
    #allocation14 [shape = 's32[1]{0}', space=sflag, size = 0x4, scoped, tag = 'scoped memory for gatsby_forward.3']
    #allocation15 [shape = 'u8[65536]{0}', space=vmem, size = 0x10000, scoped, tag = 'output window, operand 0']
    %13 = vsyncpa [#allocation3], 0
    %14 = vsyncpa [#allocation5], 0
    %15 = vsyncpa [#allocation8], 0
    %s16 = scalar_lea.sflag [#allocation8], 1
    %17 = vsyncpa %s16, 0
    %18 = vsyncpa [#allocation11], 0
    %s19 = scalar_lea.sflag [#allocation11], 1
    %20 = vsyncpa %s19, 0
    %21 = vsyncpa [#allocation14], 0
    loop: start=0, step=1, limit=4
    $region2: #{gatsby_forward.3} parent=1 // loop_pre_header
      _
    $region3: #{gatsby_forward.3} parent=1 // loop_header
      %s23 = sphi 0, %s27
      %p24 = scmp.ge.s32.totalorder %s23, 4
      %s31 = sphi 0, %s31
      %s33 = sphi 0, %s31
      %s34 = sphi 0, %s33
      %s48 = sphi 0, %s34
      %s52 = sphi 0, %s52
      %s54 = sphi 0, %s52
      %s55 = sphi 0, %s54
      %s69 = sphi 0, %s55
      %s73 = sphi 0, %s73
      %s75 = sphi 0, %s73
      %s76 = sphi 0, %s75
      %s90 = sphi 0, %s76
      %s96 = sphi 0, %s98
      %s99 = sphi 0, %s96
      %s100 = sphi 0, %s99
      %s116 = sphi 0, %s100
      %s122 = sphi 0, %s124
      %s125 = sphi 0, %s122
      %s126 = sphi 0, %s125
      %s142 = sphi 0, %s126
      %s148 = sphi 0, %s150
      %s151 = sphi 0, %s148
      %s152 = sphi 0, %s151
      %s168 = sphi 0, %s152
      %s174 = sphi 0, %s176
      %s177 = sphi 0, %s174
      %s178 = sphi 0, %s177
      %s194 = sphi 0, %s178
      %s198 = sphi 0, %s198
      %s200 = sphi 0, %s198
      %s201 = sphi 0, %s200
      %s215 = sphi 0, %s201
      %s221 = sphi 0, %s223
      %s224 = sphi 0, %s221
      %s225 = sphi 0, %s224
      %s241 = sphi 0, %s225
    $region4: #{gatsby_forward.3} parent=1 // loop_header_branch
      %26 = sbr.rel (%p24) target = $region8
    $region5: #{gatsby_forward.3} parent=1 // loop_body
      %s28 = ssub.s32 %s23, 1
      %s29 = ssub.s32 %s23, 2
      %s30 = sadd.s32 %s23, 1
      %s32 = sadd.s32 %s31, 1
      %p35 = scmp.eq.s32.totalorder %s23, 1
      %p36 = scmp.ne.s32.totalorder %s31, %s33
      %p37 = scmp.eq.s32.totalorder %s23, 0
      %p38 = por %p36, %p37
      %p39 = scmp.ne.s32.totalorder %s31, %s33
      %p40 = scmp.eq.s32.totalorder %s28, 1
      %p41 = por %p39, %p40
      %p42 = scmp.ne.s32.totalorder %s33, %s34
      %p43 = scmp.eq.s32.totalorder %s28, 0
      %p44 = por %p42, %p43
      %p45 = scmp.ne.s32.totalorder %s33, %s34
      %p46 = scmp.eq.s32.totalorder %s29, 1
      %p47 = por %p45, %p46
      %p49 = scmp.ne.s32.totalorder %s34, %s48
      %p50 = scmp.eq.s32.totalorder %s29, 0
      %p51 = por %p49, %p50
      %s53 = sadd.s32 %s52, 1
      %p56 = scmp.eq.s32.totalorder %s23, 1
      %p57 = scmp.ne.s32.totalorder %s52, %s54
      %p58 = scmp.eq.s32.totalorder %s23, 0
      %p59 = por %p57, %p58
      %p60 = scmp.ne.s32.totalorder %s52, %s54
      %p61 = scmp.eq.s32.totalorder %s28, 1
      %p62 = por %p60, %p61
      %p63 = scmp.ne.s32.totalorder %s54, %s55
      %p64 = scmp.eq.s32.totalorder %s28, 0
      %p65 = por %p63, %p64
      %p66 = scmp.ne.s32.totalorder %s54, %s55
      %p67 = scmp.eq.s32.totalorder %s29, 1
      %p68 = por %p66, %p67
      %p70 = scmp.ne.s32.totalorder %s55, %s69
      %p71 = scmp.eq.s32.totalorder %s29, 0
      %p72 = por %p70, %p71
      %s74 = sadd.s32 %s73, 1
      %p77 = scmp.eq.s32.totalorder %s23, 1
      %p78 = scmp.ne.s32.totalorder %s73, %s75
      %p79 = scmp.eq.s32.totalorder %s23, 0
      %p80 = por %p78, %p79
      %p81 = scmp.ne.s32.totalorder %s73, %s75
      %p82 = scmp.eq.s32.totalorder %s28, 1
      %p83 = por %p81, %p82
      %p84 = scmp.ne.s32.totalorder %s75, %s76
      %p85 = scmp.eq.s32.totalorder %s28, 0
      %p86 = por %p84, %p85
      %p87 = scmp.ne.s32.totalorder %s75, %s76
      %p88 = scmp.eq.s32.totalorder %s29, 1
      %p89 = por %p87, %p88
      %p91 = scmp.ne.s32.totalorder %s76, %s90
      %p92 = scmp.eq.s32.totalorder %s29, 0
      %p93 = por %p91, %p92
      %s94 = ssub.s32 %s23, %s30
      %p95 = scmp.eq.s32.totalorder %s94, 0
      %s97 = sadd.s32 %s96, 1
      %s98 = scalar_select %p95, %s96, %s97
      %p101 = pneg %p95
      %p102 = scmp.eq.s32.totalorder %s23, 1
      %p103 = por %p101, %p102
      %p104 = scmp.ne.s32.totalorder %s96, %s99
      %p105 = scmp.eq.s32.totalorder %s23, 0
      %p106 = por %p104, %p105
      %p107 = scmp.ne.s32.totalorder %s96, %s99
      %p108 = scmp.eq.s32.totalorder %s28, 1
      %p109 = por %p107, %p108
      %p110 = scmp.ne.s32.totalorder %s99, %s100
      %p111 = scmp.eq.s32.totalorder %s28, 0
      %p112 = por %p110, %p111
      %p113 = scmp.ne.s32.totalorder %s99, %s100
      %p114 = scmp.eq.s32.totalorder %s29, 1
      %p115 = por %p113, %p114
      %p117 = scmp.ne.s32.totalorder %s100, %s116
      %p118 = scmp.eq.s32.totalorder %s29, 0
      %p119 = por %p117, %p118
      %s120 = ssub.s32 %s23, %s30
      %p121 = scmp.eq.s32.totalorder %s120, 0
      %s123 = sadd.s32 %s122, 1
      %s124 = scalar_select %p121, %s122, %s123
      %p127 = pneg %p121
      %p128 = scmp.eq.s32.totalorder %s23, 1
      %p129 = por %p127, %p128
      %p130 = scmp.ne.s32.totalorder %s122, %s125
      %p131 = scmp.eq.s32.totalorder %s23, 0
      %p132 = por %p130, %p131
      %p133 = scmp.ne.s32.totalorder %s122, %s125
      %p134 = scmp.eq.s32.totalorder %s28, 1
      %p135 = por %p133, %p134
      %p136 = scmp.ne.s32.totalorder %s125, %s126
      %p137 = scmp.eq.s32.totalorder %s28, 0
      %p138 = por %p136, %p137
      %p139 = scmp.ne.s32.totalorder %s125, %s126
      %p140 = scmp.eq.s32.totalorder %s29, 1
      %p141 = por %p139, %p140
      %p143 = scmp.ne.s32.totalorder %s126, %s142
      %p144 = scmp.eq.s32.totalorder %s29, 0
      %p145 = por %p143, %p144
      %s146 = ssub.s32 %s23, %s30
      %p147 = scmp.eq.s32.totalorder %s146, 0
      %s149 = sadd.s32 %s148, 1
      %s150 = scalar_select %p147, %s148, %s149
      %p153 = pneg %p147
      %p154 = scmp.eq.s32.totalorder %s23, 1
      %p155 = por %p153, %p154
      %p156 = scmp.ne.s32.totalorder %s148, %s151
      %p157 = scmp.eq.s32.totalorder %s23, 0
      %p158 = por %p156, %p157
      %p159 = scmp.ne.s32.totalorder %s148, %s151
      %p160 = scmp.eq.s32.totalorder %s28, 1
      %p161 = por %p159, %p160
      %p162 = scmp.ne.s32.totalorder %s151, %s152
      %p163 = scmp.eq.s32.totalorder %s28, 0
      %p164 = por %p162, %p163
      %p165 = scmp.ne.s32.totalorder %s151, %s152
      %p166 = scmp.eq.s32.totalorder %s29, 1
      %p167 = por %p165, %p166
      %p169 = scmp.ne.s32.totalorder %s152, %s168
      %p170 = scmp.eq.s32.totalorder %s29, 0
      %p171 = por %p169, %p170
      %s172 = ssub.s32 %s23, %s30
      %p173 = scmp.eq.s32.totalorder %s172, 0
      %s175 = sadd.s32 %s174, 1
      %s176 = scalar_select %p173, %s174, %s175
      %p179 = pneg %p173
      %p180 = scmp.eq.s32.totalorder %s23, 1
      %p181 = por %p179, %p180
      %p182 = scmp.ne.s32.totalorder %s174, %s177
      %p183 = scmp.eq.s32.totalorder %s23, 0
      %p184 = por %p182, %p183
      %p185 = scmp.ne.s32.totalorder %s174, %s177
      %p186 = scmp.eq.s32.totalorder %s28, 1
      %p187 = por %p185, %p186
      %p188 = scmp.ne.s32.totalorder %s177, %s178
      %p189 = scmp.eq.s32.totalorder %s28, 0
      %p190 = por %p188, %p189
      %p191 = scmp.ne.s32.totalorder %s177, %s178
      %p192 = scmp.eq.s32.totalorder %s29, 1
      %p193 = por %p191, %p192
      %p195 = scmp.ne.s32.totalorder %s178, %s194
      %p196 = scmp.eq.s32.totalorder %s29, 0
      %p197 = por %p195, %p196
      %s199 = sadd.s32 %s198, 1
      %p202 = scmp.eq.s32.totalorder %s23, 1
      %p203 = scmp.ne.s32.totalorder %s198, %s200
      %p204 = scmp.eq.s32.totalorder %s23, 0
      %p205 = por %p203, %p204
      %p206 = scmp.ne.s32.totalorder %s198, %s200
      %p207 = scmp.eq.s32.totalorder %s28, 1
      %p208 = por %p206, %p207
      %p209 = scmp.ne.s32.totalorder %s200, %s201
      %p210 = scmp.eq.s32.totalorder %s28, 0
      %p211 = por %p209, %p210
      %p212 = scmp.ne.s32.totalorder %s200, %s201
      %p213 = scmp.eq.s32.totalorder %s29, 1
      %p214 = por %p212, %p213
      %p216 = scmp.ne.s32.totalorder %s201, %s215
      %p217 = scmp.eq.s32.totalorder %s29, 0
      %p218 = por %p216, %p217
      %s219 = ssub.s32 %s23, %s30
      %p220 = scmp.eq.s32.totalorder %s219, 0
      %s222 = sadd.s32 %s221, 1
      %s223 = scalar_select %p220, %s221, %s222
      %p226 = pneg %p220
      %p227 = scmp.eq.s32.totalorder %s23, 1
      %p228 = por %p226, %p227
      %p229 = scmp.ne.s32.totalorder %s221, %s224
      %p230 = scmp.eq.s32.totalorder %s23, 0
      %p231 = por %p229, %p230
      %p232 = scmp.ne.s32.totalorder %s221, %s224
      %p233 = scmp.eq.s32.totalorder %s28, 1
      %p234 = por %p232, %p233
      %p235 = scmp.ne.s32.totalorder %s224, %s225
      %p236 = scmp.eq.s32.totalorder %s28, 0
      %p237 = por %p235, %p236
      %p238 = scmp.ne.s32.totalorder %s224, %s225
      %p239 = scmp.eq.s32.totalorder %s29, 1
      %p240 = por %p238, %p239
      %p242 = scmp.ne.s32.totalorder %s225, %s241
      %p243 = scmp.eq.s32.totalorder %s29, 0
      %p244 = por %p242, %p243
      %p245 = scmp.le.s32.totalorder 1, %s23
      %p246 = scmp.lt.s32.totalorder %s23, 3
      %p247 = pnand %p245, %p246
      %p248 = pneg %p247
      // Predicated region
      $region9: #{gatsby_forward.3} parent=5 // pred_check
        _
      $region10: #{gatsby_forward.3} parent=5 // pred_check_branch
        %250 = sbr.rel (%p247) target = $region12
      $region11: #{gatsby_forward.3} parent=5 // pred_region
        %s251 = ssub.s32 %s23, 1
        // Predicated region
        $region13: #{gatsby_forward.3} parent=11 // pred_check
          %p252 = pneg %p44
        $region14: #{gatsby_forward.3} parent=11 // pred_check_branch
          %254 = sbr.rel (%p252) target = $region16
        $region15: #{gatsby_forward.3} parent=11 // pred_region
          %256 = vsyncadd [#allocation3], 0
          %s257 = sshll.u32 %s0, 4
          %s258 = int_to_ptr.hbm [resolvable:$true] %s257
          %s259 = sshll.u32 [#allocation2], 4
          %s260 = int_to_ptr.vmem [resolvable:$true] %s259
          %265 = dma.hbm_to_vmem [thread:$0]  %s258, 256, %s260, [#allocation3], 128, 128, 8
        $region16: #{gatsby_forward.3} parent=11 // pred_fallthru
          _
        // Predicated region
        $region17: #{gatsby_forward.3} parent=11 // pred_check
          %p266 = pneg %p65
        $region18: #{gatsby_forward.3} parent=11 // pred_check_branch
          %268 = sbr.rel (%p266) target = $region20
        $region19: #{gatsby_forward.3} parent=11 // pred_region
          %270 = vsyncadd [#allocation5], 0
          %s271 = sshll.u32 %s1, 4
          %s272 = int_to_ptr.hbm [resolvable:$true] %s271
          %s273 = sshll.u32 [#allocation4], 4
          %s274 = int_to_ptr.vmem [resolvable:$true] %s273
          %279 = dma.hbm_to_vmem [thread:$0]  %s272, 1024, %s274, [#allocation5], 256, 256, 16
        $region20: #{gatsby_forward.3} parent=11 // pred_fallthru
          _
        // Predicated region
        $region21: #{gatsby_forward.3} parent=11 // pred_check
          %p280 = pneg %p86
        $region22: #{gatsby_forward.3} parent=11 // pred_check_branch
          %282 = sbr.rel (%p280) target = $region24
        $region23: #{gatsby_forward.3} parent=11 // pred_region
          %284 = vsyncadd [#allocation5], 0
          %s286 = sshll.u32 %s2, 4
          %s287 = int_to_ptr.hbm [resolvable:$true] %s286
          %s288 = sshll.u32 [#allocation6], 4
          %s289 = int_to_ptr.vmem [resolvable:$true] %s288
          %291 = dma.hbm_to_vmem [thread:$0]  %s287, 64, %s289, [#allocation5]
        $region24: #{gatsby_forward.3} parent=11 // pred_fallthru
          _
        // Predicated region
        $region25: #{gatsby_forward.3} parent=11 // pred_check
          %p292 = pneg %p211
        $region26: #{gatsby_forward.3} parent=11 // pred_check_branch
          %294 = sbr.rel (%p292) target = $region28
        $region27: #{gatsby_forward.3} parent=11 // pred_region
          %296 = vsyncadd [#allocation14], 0
          %s297 = sshll.u32 %s7, 4
          %s298 = int_to_ptr.hbm [resolvable:$true] %s297
          %s299 = sshll.u32 [#allocation13], 4
          %s300 = int_to_ptr.vmem [resolvable:$true] %s299
          %305 = dma.hbm_to_vmem [thread:$0]  %s298, 256, %s300, [#allocation14], 128, 128, 8
        $region28: #{gatsby_forward.3} parent=11 // pred_fallthru
          _
      $region12: #{gatsby_forward.3} parent=5 // pred_fallthru
        _
      %p306 = scmp.lt.s32.totalorder %s23, 2
      // Predicated region
      $region29: #{gatsby_forward.3} parent=5 // pred_check
        %p307 = pneg %p306
      $region30: #{gatsby_forward.3} parent=5 // pred_check_branch
        %309 = sbr.rel (%p307) target = $region32
      $region31: #{gatsby_forward.3} parent=5 // pred_region
        // Predicated region
        $region33: #{gatsby_forward.3} parent=31 // pred_check
          %p310 = pneg %p106
        $region34: #{gatsby_forward.3} parent=31 // pred_check_branch
          %312 = sbr.rel (%p310) target = $region36
        $region35: #{gatsby_forward.3} parent=31 // pred_region
          %s313 = sand.u32 %s23, 1
          %s314 = scalar_lea.sflag [#allocation8], %s313
          %s315 = sand.u32 %s96, 1
          %s316 = smul.addr %s315, 1024
          %s317 = scalar_lea.vmem [#allocation7], %s316
          %s318 = smul.u32 4, %s23
          %320 = vsyncadd %s314, 0
          %s321 = smul.addr %s318, 4
          %s322 = scalar_lea.hbm %s3, %s321
          %s323 = sshll.u32 %s322, 4
          %s324 = int_to_ptr.hbm [resolvable:$true] %s323
          %s325 = sshll.u32 %s317, 4
          %s326 = int_to_ptr.vmem [resolvable:$true] %s325
          %331 = dma.hbm_to_vmem [thread:$0]  %s324, 16384, %s326, %s314, 512, 256, 16
        $region36: #{gatsby_forward.3} parent=31 // pred_fallthru
          _
        // Predicated region
        $region37: #{gatsby_forward.3} parent=31 // pred_check
          %p332 = pneg %p132
        $region38: #{gatsby_forward.3} parent=31 // pred_check_branch
          %334 = sbr.rel (%p332) target = $region40
        $region39: #{gatsby_forward.3} parent=31 // pred_region
          %s335 = sand.u32 %s23, 1
          %s336 = scalar_lea.sflag [#allocation8], %s335
          %s337 = sand.u32 %s122, 1
          %s338 = smul.addr %s337, 4
          %s339 = scalar_lea.vmem [#allocation9], %s338
          %341 = vsyncadd %s336, 0
          %s342 = smul.addr %s23, 4
          %s343 = scalar_lea.hbm %s4, %s342
          %s345 = sshll.u32 %s343, 4
          %s346 = int_to_ptr.hbm [resolvable:$true] %s345
          %s347 = sshll.u32 %s339, 4
          %s348 = int_to_ptr.vmem [resolvable:$true] %s347
          %350 = dma.hbm_to_vmem [thread:$0]  %s346, 64, %s348, %s336
        $region40: #{gatsby_forward.3} parent=31 // pred_fallthru
          _
        // Predicated region
        $region41: #{gatsby_forward.3} parent=31 // pred_check
          %p351 = pneg %p158
        $region42: #{gatsby_forward.3} parent=31 // pred_check_branch
          %353 = sbr.rel (%p351) target = $region44
        $region43: #{gatsby_forward.3} parent=31 // pred_region
          %s354 = sand.u32 %s23, 1
          %s355 = scalar_lea.sflag [#allocation11], %s354
          %s356 = sand.u32 %s148, 1
          %s357 = smul.addr %s356, 4
          %s358 = scalar_lea.vmem [#allocation10], %s357
          %360 = vsyncadd %s355, 0
          %s361 = smul.addr %s23, 4
          %s362 = scalar_lea.hbm %s5, %s361
          %s364 = sshll.u32 %s362, 4
          %s365 = int_to_ptr.hbm [resolvable:$true] %s364
          %s366 = sshll.u32 %s358, 4
          %s367 = int_to_ptr.vmem [resolvable:$true] %s366
          %369 = dma.hbm_to_vmem [thread:$0]  %s365, 64, %s367, %s355
        $region44: #{gatsby_forward.3} parent=31 // pred_fallthru
          _
        // Predicated region
        $region45: #{gatsby_forward.3} parent=31 // pred_check
          %p370 = pneg %p184
        $region46: #{gatsby_forward.3} parent=31 // pred_check_branch
          %372 = sbr.rel (%p370) target = $region48
        $region47: #{gatsby_forward.3} parent=31 // pred_region
          %s373 = sand.u32 %s23, 1
          %s374 = scalar_lea.sflag [#allocation11], %s373
          %s375 = sand.u32 %s174, 1
          %s376 = smul.addr %s375, 4
          %s377 = scalar_lea.vmem [#allocation12], %s376
          %379 = vsyncadd %s374, 0
          %s380 = smul.addr %s23, 4
          %s381 = scalar_lea.hbm %s6, %s380
          %s383 = sshll.u32 %s381, 4
          %s384 = int_to_ptr.hbm [resolvable:$true] %s383
          %s385 = sshll.u32 %s377, 4
          %s386 = int_to_ptr.vmem [resolvable:$true] %s385
          %388 = dma.hbm_to_vmem [thread:$0]  %s384, 64, %s386, %s374
        $region48: #{gatsby_forward.3} parent=31 // pred_fallthru
          _
      $region32: #{gatsby_forward.3} parent=5 // pred_fallthru
        _
      %p389 = scmp.le.s32.totalorder 1, %s23
      %p390 = scmp.lt.s32.totalorder %s23, 3
      %p391 = pnand %p389, %p390
      %p392 = pneg %p391
      // Predicated region
      $region49: #{gatsby_forward.3} parent=5 // pred_check
        _
      $region50: #{gatsby_forward.3} parent=5 // pred_check_branch
        %394 = sbr.rel (%p391) target = $region52
      $region51: #{gatsby_forward.3} parent=5 // pred_region
        %s395 = ssub.s32 %s23, 1
        // Predicated region
        $region53: #{gatsby_forward.3} parent=51 // pred_check
          %p396 = pneg %p44
        $region54: #{gatsby_forward.3} parent=51 // pred_check_branch
          %398 = sbr.rel (%p396) target = $region56
        $region55: #{gatsby_forward.3} parent=51 // pred_region
          %400 = dma.done [#allocation3], 256
        $region56: #{gatsby_forward.3} parent=51 // pred_fallthru
          _
        // Predicated region
        $region57: #{gatsby_forward.3} parent=51 // pred_check
          %p401 = pneg %p65
        $region58: #{gatsby_forward.3} parent=51 // pred_check_branch
          %403 = sbr.rel (%p401) target = $region60
        $region59: #{gatsby_forward.3} parent=51 // pred_region
          %405 = dma.done [#allocation5], 1024
        $region60: #{gatsby_forward.3} parent=51 // pred_fallthru
          _
        // Predicated region
        $region61: #{gatsby_forward.3} parent=51 // pred_check
          %p406 = pneg %p86
        $region62: #{gatsby_forward.3} parent=51 // pred_check_branch
          %408 = sbr.rel (%p406) target = $region64
        $region63: #{gatsby_forward.3} parent=51 // pred_region
          %410 = dma.done [#allocation5], 64
        $region64: #{gatsby_forward.3} parent=51 // pred_fallthru
          _
        %s411 = sand.u32 %s28, 1
        %s412 = scalar_lea.sflag [#allocation8], %s411
        %s413 = sand.u32 %s99, 1
        %s414 = smul.addr %s413, 1024
        %s415 = scalar_lea.vmem [#allocation7], %s414
        // Predicated region
        $region65: #{gatsby_forward.3} parent=51 // pred_check
          %p416 = pneg %p112
        $region66: #{gatsby_forward.3} parent=51 // pred_check_branch
          %418 = sbr.rel (%p416) target = $region68
        $region67: #{gatsby_forward.3} parent=51 // pred_region
          %420 = dma.done %s412, 16384
        $region68: #{gatsby_forward.3} parent=51 // pred_fallthru
          _
        %s421 = sand.u32 %s28, 1
        %s422 = scalar_lea.sflag [#allocation8], %s421
        %s423 = sand.u32 %s125, 1
        %s424 = smul.addr %s423, 4
        %s425 = scalar_lea.vmem [#allocation9], %s424
        // Predicated region
        $region69: #{gatsby_forward.3} parent=51 // pred_check
          %p426 = pneg %p138
        $region70: #{gatsby_forward.3} parent=51 // pred_check_branch
          %428 = sbr.rel (%p426) target = $region72
        $region71: #{gatsby_forward.3} parent=51 // pred_region
          %430 = dma.done %s422, 64
        $region72: #{gatsby_forward.3} parent=51 // pred_fallthru
          _
        %s431 = sand.u32 %s28, 1
        %s432 = scalar_lea.sflag [#allocation11], %s431
        %s433 = sand.u32 %s151, 1
        %s434 = smul.addr %s433, 4
        %s435 = scalar_lea.vmem [#allocation10], %s434
        // Predicated region
        $region73: #{gatsby_forward.3} parent=51 // pred_check
          %p436 = pneg %p164
        $region74: #{gatsby_forward.3} parent=51 // pred_check_branch
          %438 = sbr.rel (%p436) target = $region76
        $region75: #{gatsby_forward.3} parent=51 // pred_region
          %440 = dma.done %s432, 64
        $region76: #{gatsby_forward.3} parent=51 // pred_fallthru
          _
        %s441 = sand.u32 %s28, 1
        %s442 = scalar_lea.sflag [#allocation11], %s441
        %s443 = sand.u32 %s177, 1
        %s444 = smul.addr %s443, 4
        %s445 = scalar_lea.vmem [#allocation12], %s444
        // Predicated region
        $region77: #{gatsby_forward.3} parent=51 // pred_check
          %p446 = pneg %p190
        $region78: #{gatsby_forward.3} parent=51 // pred_check_branch
          %448 = sbr.rel (%p446) target = $region80
        $region79: #{gatsby_forward.3} parent=51 // pred_region
          %450 = dma.done %s442, 64
        $region80: #{gatsby_forward.3} parent=51 // pred_fallthru
          _
        // Predicated region
        $region81: #{gatsby_forward.3} parent=51 // pred_check
          %p451 = pneg %p211
        $region82: #{gatsby_forward.3} parent=51 // pred_check_branch
          %453 = sbr.rel (%p451) target = $region84
        $region83: #{gatsby_forward.3} parent=51 // pred_region
          %455 = dma.done [#allocation14], 256
        $region84: #{gatsby_forward.3} parent=51 // pred_fallthru
          _
        %p456 = pneg %p44
        %p457 = pneg %p41
        %p458 = pneg %p65
        %p459 = pneg %p62
        %p460 = pneg %p86
        %p461 = pneg %p83
        %s462 = sand.u32 %s28, 1
        %s463 = scalar_lea.sflag [#allocation8], %s462
        %s464 = sand.u32 %s99, 1
        %s465 = smul.addr %s464, 1024
        %s466 = scalar_lea.vmem [#allocation7], %s465
        %p467 = pneg %p112
        %p468 = pneg %p109
        %s469 = sand.u32 %s28, 1
        %s470 = scalar_lea.sflag [#allocation8], %s469
        %s471 = sand.u32 %s125, 1
        %s472 = smul.addr %s471, 4
        %s473 = scalar_lea.vmem [#allocation9], %s472
        %p474 = pneg %p138
        %p475 = pneg %p135
        %s476 = sand.u32 %s28, 1
        %s477 = scalar_lea.sflag [#allocation11], %s476
        %s478 = sand.u32 %s151, 1
        %s479 = smul.addr %s478, 4
        %s480 = scalar_lea.vmem [#allocation10], %s479
        %p481 = pneg %p164
        %p482 = pneg %p161
        %s483 = sand.u32 %s28, 1
        %s484 = scalar_lea.sflag [#allocation11], %s483
        %s485 = sand.u32 %s177, 1
        %s486 = smul.addr %s485, 4
        %s487 = scalar_lea.vmem [#allocation12], %s486
        %p488 = pneg %p190
        %p489 = pneg %p187
        %p490 = pneg %p211
        %p491 = pneg %p208
        %p492 = pneg %p237
        %p493 = pneg %p234
        %s494 = sand.u32 %s224, 1
        %s495 = sand.u32 %s224, 1
        %s496 = smul.addr %s495, 64
        %s497 = scalar_lea.vmem [#allocation15], %s496
        %s498 = smul.u32 4, %s28
        %s499 = smul.u32 4, %s28
        %v501 = vld [vmem:[#allocation2] sm:$0xff]
        %v502 = vld [vmem:[#allocation2 + $0x8] sm:$0xff]
        %v503 = vpack.c.bf16 %v502, %v501
        %v504 = vld [vmem:[#allocation4] sm:$0xff]
        %v505 = vld [vmem:[#allocation4 + $0x8] sm:$0xff]
        %v506 = vld [vmem:[#allocation4 + $0x10] sm:$0xff]
        %v507 = vld [vmem:[#allocation4 + $0x18] sm:$0xff]
        %v508 = vld [vmem:[#allocation4 + $0x20] sm:$0xff]
        %v509 = vld [vmem:[#allocation4 + $0x28] sm:$0xff]
        %v510 = vld [vmem:[#allocation4 + $0x30] sm:$0xff]
        %v511 = vld [vmem:[#allocation4 + $0x38] sm:$0xff]
        %v512 = vld [vmem:[#allocation6] sm:$0xf]
        %v514 = vperm.slane %v512, 0
        %v515 = vperm.slane %v512, 1
        %v516 = vperm.slane %v512, 2
        %v517 = vperm.slane %v512, 3
        %v530 = vunpack.c.l.b16 %v504
        %v531 = vunpack.c.h.b16 %v504
        %v532 = vunpack.c.l.b16 %v505
        %v533 = vunpack.c.h.b16 %v505
        %v534 = vunpack.c.l.b16 %v506
        %v535 = vunpack.c.h.b16 %v506
        %v536 = vunpack.c.l.b16 %v507
        %v537 = vunpack.c.h.b16 %v507
        %v538 = vunpack.c.l.b16 %v508
        %v539 = vunpack.c.h.b16 %v508
        %v540 = vunpack.c.l.b16 %v509
        %v541 = vunpack.c.h.b16 %v509
        %v542 = vunpack.c.l.b16 %v510
        %v543 = vunpack.c.h.b16 %v510
        %v544 = vunpack.c.l.b16 %v511
        %v545 = vunpack.c.h.b16 %v511
        %v546 = vpack.c.b16 %v534, %v530
        %v547 = vpack.c.b16 %v535, %v531
        %v548 = vpack.c.b16 %v536, %v532
        %v549 = vpack.c.b16 %v537, %v533
        %v550 = vpack.c.b16 %v542, %v538
        %v551 = vpack.c.b16 %v543, %v539
        %v552 = vpack.c.b16 %v544, %v540
        %v553 = vpack.c.b16 %v545, %v541
        %vm562 = vcmask 261120
        %v564 = vsel %vm562, %v503, 0
        %566 = vmatpush.bf16.msra.mxu0 0
        %567 = vmatpush.bf16.msra.mxu0 0
        %568 = vmatpush.bf16.msra.mxu0 0
        %569 = vmatpush.bf16.msra.mxu0 0
        %570 = vmatpush.bf16.msra.mxu0 0
        %571 = vmatpush.bf16.msra.mxu0 0
        %572 = vmatpush.bf16.msra.mxu0 %v550
        %573 = vmatpush.bf16.msra.mxu0 %v546
        %574 = vmatmul.bf16.gmra.mxu0 %v564
        %v575 = vpop.f32.mrf.mxu0
        %v576 = vadd.f32 %v514, %v575
        %v577 = vpop.f32.mrf.mxu0
        %v578 = vadd.f32 %v514, %v577
        %579 = vdwg.mxu0
        %580 = vmatpush.bf16.msra.mxu0 0
        %581 = vmatpush.bf16.msra.mxu0 0
        %582 = vmatpush.bf16.msra.mxu0 0
        %583 = vmatpush.bf16.msra.mxu0 0
        %584 = vmatpush.bf16.msra.mxu0 0
        %585 = vmatpush.bf16.msra.mxu0 0
        %586 = vmatpush.bf16.msra.mxu0 %v551
        %587 = vmatpush.bf16.msra.mxu0 %v547
        %588 = vmatmul.bf16.gmra.mxu0 %v564
        %v589 = vpop.f32.mrf.mxu0
        %v590 = vadd.f32 %v515, %v589
        %v591 = vpop.f32.mrf.mxu0
        %v592 = vadd.f32 %v515, %v591
        %593 = vdwg.mxu0
        %594 = vmatpush.bf16.msra.mxu0 0
        %595 = vmatpush.bf16.msra.mxu0 0
        %596 = vmatpush.bf16.msra.mxu0 0
        %597 = vmatpush.bf16.msra.mxu0 0
        %598 = vmatpush.bf16.msra.mxu0 0
        %599 = vmatpush.bf16.msra.mxu0 0
        %600 = vmatpush.bf16.msra.mxu0 %v552
        %601 = vmatpush.bf16.msra.mxu0 %v548
        %602 = vmatmul.bf16.gmra.mxu0 %v564
        %v603 = vpop.f32.mrf.mxu0
        %v604 = vadd.f32 %v516, %v603
        %v605 = vpop.f32.mrf.mxu0
        %v606 = vadd.f32 %v516, %v605
        %607 = vdwg.mxu0
        %608 = vmatpush.bf16.msra.mxu0 0
        %609 = vmatpush.bf16.msra.mxu0 0
        %610 = vmatpush.bf16.msra.mxu0 0
        %611 = vmatpush.bf16.msra.mxu0 0
        %612 = vmatpush.bf16.msra.mxu0 0
        %613 = vmatpush.bf16.msra.mxu0 0
        %614 = vmatpush.bf16.msra.mxu0 %v553
        %615 = vmatpush.bf16.msra.mxu0 %v549
        %616 = vmatmul.bf16.gmra.mxu0 %v564
        %v617 = vpop.f32.mrf.mxu0
        %v618 = vadd.f32 %v517, %v617
        %v619 = vpop.f32.mrf.mxu0
        %v620 = vadd.f32 %v517, %v619
        %621 = vdwg.mxu0
        %v622 = vpack.c.bf16 %v578, %v576
        %v623 = vpack.c.bf16 %v592, %v590
        %v624 = vpack.c.bf16 %v606, %v604
        %v625 = vpack.c.bf16 %v620, %v618
        %v626 = vld [vmem:[%s415] sm:$0xff]
        %v627 = vld [vmem:[%s415 + $0x8] sm:$0xff]
        %v628 = vld [vmem:[%s415 + $0x10] sm:$0xff]
        %v629 = vld [vmem:[%s415 + $0x18] sm:$0xff]
        %v630 = vld [vmem:[%s415 + $0x20] sm:$0xff]
        %v631 = vld [vmem:[%s415 + $0x28] sm:$0xff]
        %v632 = vld [vmem:[%s415 + $0x30] sm:$0xff]
        %v633 = vld [vmem:[%s415 + $0x38] sm:$0xff]
        %v634 = vld [vmem:[%s415 + $0x40] sm:$0xff]
        %v635 = vld [vmem:[%s415 + $0x48] sm:$0xff]
        %v636 = vld [vmem:[%s415 + $0x50] sm:$0xff]
        %v637 = vld [vmem:[%s415 + $0x58] sm:$0xff]
        %v638 = vld [vmem:[%s415 + $0x60] sm:$0xff]
        %v639 = vld [vmem:[%s415 + $0x68] sm:$0xff]
        %v640 = vld [vmem:[%s415 + $0x70] sm:$0xff]
        %v641 = vld [vmem:[%s415 + $0x78] sm:$0xff]
        %v642 = vld [vmem:[%s415 + $0x80] sm:$0xff]
        %v643 = vld [vmem:[%s415 + $0x88] sm:$0xff]
        %v644 = vld [vmem:[%s415 + $0x90] sm:$0xff]
        %v645 = vld [vmem:[%s415 + $0x98] sm:$0xff]
        %v646 = vld [vmem:[%s415 + $0xa0] sm:$0xff]
        %v647 = vld [vmem:[%s415 + $0xa8] sm:$0xff]
        %v648 = vld [vmem:[%s415 + $0xb0] sm:$0xff]
        %v649 = vld [vmem:[%s415 + $0xb8] sm:$0xff]
        %v650 = vld [vmem:[%s415 + $0xc0] sm:$0xff]
        %v651 = vld [vmem:[%s415 + $0xc8] sm:$0xff]
        %v652 = vld [vmem:[%s415 + $0xd0] sm:$0xff]
        %v653 = vld [vmem:[%s415 + $0xd8] sm:$0xff]
        %v654 = vld [vmem:[%s415 + $0xe0] sm:$0xff]
        %v655 = vld [vmem:[%s415 + $0xe8] sm:$0xff]
        %v656 = vld [vmem:[%s415 + $0xf0] sm:$0xff]
        %v657 = vld [vmem:[%s415 + $0xf8] sm:$0xff]
        %v658 = vld [vmem:[%s415 + $0x100] sm:$0xff]
        %v659 = vld [vmem:[%s415 + $0x108] sm:$0xff]
        %v660 = vld [vmem:[%s415 + $0x110] sm:$0xff]
        %v661 = vld [vmem:[%s415 + $0x118] sm:$0xff]
        %v662 = vld [vmem:[%s415 + $0x120] sm:$0xff]
        %v663 = vld [vmem:[%s415 + $0x128] sm:$0xff]
        %v664 = vld [vmem:[%s415 + $0x130] sm:$0xff]
        %v665 = vld [vmem:[%s415 + $0x138] sm:$0xff]
        %v666 = vld [vmem:[%s415 + $0x140] sm:$0xff]
        %v667 = vld [vmem:[%s415 + $0x148] sm:$0xff]
        %v668 = vld [vmem:[%s415 + $0x150] sm:$0xff]
        %v669 = vld [vmem:[%s415 + $0x158] sm:$0xff]
        %v670 = vld [vmem:[%s415 + $0x160] sm:$0xff]
        %v671 = vld [vmem:[%s415 + $0x168] sm:$0xff]
        %v672 = vld [vmem:[%s415 + $0x170] sm:$0xff]
        %v673 = vld [vmem:[%s415 + $0x178] sm:$0xff]
        %v674 = vld [vmem:[%s415 + $0x180] sm:$0xff]
        %v675 = vld [vmem:[%s415 + $0x188] sm:$0xff]
        %v676 = vld [vmem:[%s415 + $0x190] sm:$0xff]
        %v677 = vld [vmem:[%s415 + $0x198] sm:$0xff]
        %v678 = vld [vmem:[%s415 + $0x1a0] sm:$0xff]
        %v679 = vld [vmem:[%s415 + $0x1a8] sm:$0xff]
        %v680 = vld [vmem:[%s415 + $0x1b0] sm:$0xff]
        %v681 = vld [vmem:[%s415 + $0x1b8] sm:$0xff]
        %v682 = vld [vmem:[%s415 + $0x1c0] sm:$0xff]
        %v683 = vld [vmem:[%s415 + $0x1c8] sm:$0xff]
        %v684 = vld [vmem:[%s415 + $0x1d0] sm:$0xff]
        %v685 = vld [vmem:[%s415 + $0x1d8] sm:$0xff]
        %v686 = vld [vmem:[%s415 + $0x1e0] sm:$0xff]
        %v687 = vld [vmem:[%s415 + $0x1e8] sm:$0xff]
        %v688 = vld [vmem:[%s415 + $0x1f0] sm:$0xff]
        %v689 = vld [vmem:[%s415 + $0x1f8] sm:$0xff]
        %v690 = vld [vmem:[%s415 + $0x200] sm:$0xff]
        %v691 = vld [vmem:[%s415 + $0x208] sm:$0xff]
        %v692 = vld [vmem:[%s415 + $0x210] sm:$0xff]
        %v693 = vld [vmem:[%s415 + $0x218] sm:$0xff]
        %v694 = vld [vmem:[%s415 + $0x220] sm:$0xff]
        %v695 = vld [vmem:[%s415 + $0x228] sm:$0xff]
        %v696 = vld [vmem:[%s415 + $0x230] sm:$0xff]
        %v697 = vld [vmem:[%s415 + $0x238] sm:$0xff]
        %v698 = vld [vmem:[%s415 + $0x240] sm:$0xff]
        %v699 = vld [vmem:[%s415 + $0x248] sm:$0xff]
        %v700 = vld [vmem:[%s415 + $0x250] sm:$0xff]
        %v701 = vld [vmem:[%s415 + $0x258] sm:$0xff]
        %v702 = vld [vmem:[%s415 + $0x260] sm:$0xff]
        %v703 = vld [vmem:[%s415 + $0x268] sm:$0xff]
        %v704 = vld [vmem:[%s415 + $0x270] sm:$0xff]
        %v705 = vld [vmem:[%s415 + $0x278] sm:$0xff]
        %v706 = vld [vmem:[%s415 + $0x280] sm:$0xff]
        %v707 = vld [vmem:[%s415 + $0x288] sm:$0xff]
        %v708 = vld [vmem:[%s415 + $0x290] sm:$0xff]
        %v709 = vld [vmem:[%s415 + $0x298] sm:$0xff]
        %v710 = vld [vmem:[%s415 + $0x2a0] sm:$0xff]
        %v711 = vld [vmem:[%s415 + $0x2a8] sm:$0xff]
        %v712 = vld [vmem:[%s415 + $0x2b0] sm:$0xff]
        %v713 = vld [vmem:[%s415 + $0x2b8] sm:$0xff]
        %v714 = vld [vmem:[%s415 + $0x2c0] sm:$0xff]
        %v715 = vld [vmem:[%s415 + $0x2c8] sm:$0xff]
        %v716 = vld [vmem:[%s415 + $0x2d0] sm:$0xff]
        %v717 = vld [vmem:[%s415 + $0x2d8] sm:$0xff]
        %v718 = vld [vmem:[%s415 + $0x2e0] sm:$0xff]
        %v719 = vld [vmem:[%s415 + $0x2e8] sm:$0xff]
        %v720 = vld [vmem:[%s415 + $0x2f0] sm:$0xff]
        %v721 = vld [vmem:[%s415 + $0x2f8] sm:$0xff]
        %v722 = vld [vmem:[%s415 + $0x300] sm:$0xff]
        %v723 = vld [vmem:[%s415 + $0x308] sm:$0xff]
        %v724 = vld [vmem:[%s415 + $0x310] sm:$0xff]
        %v725 = vld [vmem:[%s415 + $0x318] sm:$0xff]
        %v726 = vld [vmem:[%s415 + $0x320] sm:$0xff]
        %v727 = vld [vmem:[%s415 + $0x328] sm:$0xff]
        %v728 = vld [vmem:[%s415 + $0x330] sm:$0xff]
        %v729 = vld [vmem:[%s415 + $0x338] sm:$0xff]
        %v730 = vld [vmem:[%s415 + $0x340] sm:$0xff]
        %v731 = vld [vmem:[%s415 + $0x348] sm:$0xff]
        %v732 = vld [vmem:[%s415 + $0x350] sm:$0xff]
        %v733 = vld [vmem:[%s415 + $0x358] sm:$0xff]
        %v734 = vld [vmem:[%s415 + $0x360] sm:$0xff]
        %v735 = vld [vmem:[%s415 + $0x368] sm:$0xff]
        %v736 = vld [vmem:[%s415 + $0x370] sm:$0xff]
        %v737 = vld [vmem:[%s415 + $0x378] sm:$0xff]
        %v738 = vld [vmem:[%s415 + $0x380] sm:$0xff]
        %v739 = vld [vmem:[%s415 + $0x388] sm:$0xff]
        %v740 = vld [vmem:[%s415 + $0x390] sm:$0xff]
        %v741 = vld [vmem:[%s415 + $0x398] sm:$0xff]
        %v742 = vld [vmem:[%s415 + $0x3a0] sm:$0xff]
        %v743 = vld [vmem:[%s415 + $0x3a8] sm:$0xff]
        %v744 = vld [vmem:[%s415 + $0x3b0] sm:$0xff]
        %v745 = vld [vmem:[%s415 + $0x3b8] sm:$0xff]
        %v746 = vld [vmem:[%s415 + $0x3c0] sm:$0xff]
        %v747 = vld [vmem:[%s415 + $0x3c8] sm:$0xff]
        %v748 = vld [vmem:[%s415 + $0x3d0] sm:$0xff]
        %v749 = vld [vmem:[%s415 + $0x3d8] sm:$0xff]
        %v750 = vld [vmem:[%s415 + $0x3e0] sm:$0xff]
        %v751 = vld [vmem:[%s415 + $0x3e8] sm:$0xff]
        %v752 = vld [vmem:[%s415 + $0x3f0] sm:$0xff]
        %v753 = vld [vmem:[%s415 + $0x3f8] sm:$0xff]
        %v882 = vunpack.c.l.b16 %v626
        %v883 = vunpack.c.h.b16 %v626
        %v884 = vunpack.c.l.b16 %v627
        %v885 = vunpack.c.h.b16 %v627
        %v886 = vunpack.c.l.b16 %v628
        %v887 = vunpack.c.h.b16 %v628
        %v888 = vunpack.c.l.b16 %v629
        %v889 = vunpack.c.h.b16 %v629
        %v890 = vunpack.c.l.b16 %v630
        %v891 = vunpack.c.h.b16 %v630
        %v892 = vunpack.c.l.b16 %v631
        %v893 = vunpack.c.h.b16 %v631
        %v894 = vunpack.c.l.b16 %v632
        %v895 = vunpack.c.h.b16 %v632
        %v896 = vunpack.c.l.b16 %v633
        %v897 = vunpack.c.h.b16 %v633
        %v898 = vunpack.c.l.b16 %v634
        %v899 = vunpack.c.h.b16 %v634
        %v900 = vunpack.c.l.b16 %v635
        %v901 = vunpack.c.h.b16 %v635
        %v902 = vunpack.c.l.b16 %v636
        %v903 = vunpack.c.h.b16 %v636
        %v904 = vunpack.c.l.b16 %v637
        %v905 = vunpack.c.h.b16 %v637
        %v906 = vunpack.c.l.b16 %v638
        %v907 = vunpack.c.h.b16 %v638
        %v908 = vunpack.c.l.b16 %v639
        %v909 = vunpack.c.h.b16 %v639
        %v910 = vunpack.c.l.b16 %v640
        %v911 = vunpack.c.h.b16 %v640
        %v912 = vunpack.c.l.b16 %v641
        %v913 = vunpack.c.h.b16 %v641
        %v914 = vunpack.c.l.b16 %v642
        %v915 = vunpack.c.h.b16 %v642
        %v916 = vunpack.c.l.b16 %v643
        %v917 = vunpack.c.h.b16 %v643
        %v918 = vunpack.c.l.b16 %v644
        %v919 = vunpack.c.h.b16 %v644
        %v920 = vunpack.c.l.b16 %v645
        %v921 = vunpack.c.h.b16 %v645
        %v922 = vunpack.c.l.b16 %v646
        %v923 = vunpack.c.h.b16 %v646
        %v924 = vunpack.c.l.b16 %v647
        %v925 = vunpack.c.h.b16 %v647
        %v926 = vunpack.c.l.b16 %v648
        %v927 = vunpack.c.h.b16 %v648
        %v928 = vunpack.c.l.b16 %v649
        %v929 = vunpack.c.h.b16 %v649
        %v930 = vunpack.c.l.b16 %v650
        %v931 = vunpack.c.h.b16 %v650
        %v932 = vunpack.c.l.b16 %v651
        %v933 = vunpack.c.h.b16 %v651
        %v934 = vunpack.c.l.b16 %v652
        %v935 = vunpack.c.h.b16 %v652
        %v936 = vunpack.c.l.b16 %v653
        %v937 = vunpack.c.h.b16 %v653
        %v938 = vunpack.c.l.b16 %v654
        %v939 = vunpack.c.h.b16 %v654
        %v940 = vunpack.c.l.b16 %v655
        %v941 = vunpack.c.h.b16 %v655
        %v942 = vunpack.c.l.b16 %v656
        %v943 = vunpack.c.h.b16 %v656
        %v944 = vunpack.c.l.b16 %v657
        %v945 = vunpack.c.h.b16 %v657
        %v946 = vunpack.c.l.b16 %v658
        %v947 = vunpack.c.h.b16 %v658
        %v948 = vunpack.c.l.b16 %v659
        %v949 = vunpack.c.h.b16 %v659
        %v950 = vunpack.c.l.b16 %v660
        %v951 = vunpack.c.h.b16 %v660
        %v952 = vunpack.c.l.b16 %v661
        %v953 = vunpack.c.h.b16 %v661
        %v954 = vunpack.c.l.b16 %v662
        %v955 = vunpack.c.h.b16 %v662
        %v956 = vunpack.c.l.b16 %v663
        %v957 = vunpack.c.h.b16 %v663
        %v958 = vunpack.c.l.b16 %v664
        %v959 = vunpack.c.h.b16 %v664
        %v960 = vunpack.c.l.b16 %v665
        %v961 = vunpack.c.h.b16 %v665
        %v962 = vunpack.c.l.b16 %v666
        %v963 = vunpack.c.h.b16 %v666
        %v964 = vunpack.c.l.b16 %v667
        %v965 = vunpack.c.h.b16 %v667
        %v966 = vunpack.c.l.b16 %v668
        %v967 = vunpack.c.h.b16 %v668
        %v968 = vunpack.c.l.b16 %v669
        %v969 = vunpack.c.h.b16 %v669
        %v970 = vunpack.c.l.b16 %v670
        %v971 = vunpack.c.h.b16 %v670
        %v972 = vunpack.c.l.b16 %v671
        %v973 = vunpack.c.h.b16 %v671
        %v974 = vunpack.c.l.b16 %v672
        %v975 = vunpack.c.h.b16 %v672
        %v976 = vunpack.c.l.b16 %v673
        %v977 = vunpack.c.h.b16 %v673
        %v978 = vunpack.c.l.b16 %v674
        %v979 = vunpack.c.h.b16 %v674
        %v980 = vunpack.c.l.b16 %v675
        %v981 = vunpack.c.h.b16 %v675
        %v982 = vunpack.c.l.b16 %v676
        %v983 = vunpack.c.h.b16 %v676
        %v984 = vunpack.c.l.b16 %v677
        %v985 = vunpack.c.h.b16 %v677
        %v986 = vunpack.c.l.b16 %v678
        %v987 = vunpack.c.h.b16 %v678
        %v988 = vunpack.c.l.b16 %v679
        %v989 = vunpack.c.h.b16 %v679
        %v990 = vunpack.c.l.b16 %v680
        %v991 = vunpack.c.h.b16 %v680
        %v992 = vunpack.c.l.b16 %v681
        %v993 = vunpack.c.h.b16 %v681
        %v994 = vunpack.c.l.b16 %v682
        %v995 = vunpack.c.h.b16 %v682
        %v996 = vunpack.c.l.b16 %v683
        %v997 = vunpack.c.h.b16 %v683
        %v998 = vunpack.c.l.b16 %v684
        %v999 = vunpack.c.h.b16 %v684
        %v1000 = vunpack.c.l.b16 %v685
        %v1001 = vunpack.c.h.b16 %v685
        %v1002 = vunpack.c.l.b16 %v686
        %v1003 = vunpack.c.h.b16 %v686
        %v1004 = vunpack.c.l.b16 %v687
        %v1005 = vunpack.c.h.b16 %v687
        %v1006 = vunpack.c.l.b16 %v688
        %v1007 = vunpack.c.h.b16 %v688
        %v1008 = vunpack.c.l.b16 %v689
        %v1009 = vunpack.c.h.b16 %v689
        %v1010 = vunpack.c.l.b16 %v690
        %v1011 = vunpack.c.h.b16 %v690
        %v1012 = vunpack.c.l.b16 %v691
        %v1013 = vunpack.c.h.b16 %v691
        %v1014 = vunpack.c.l.b16 %v692
        %v1015 = vunpack.c.h.b16 %v692
        %v1016 = vunpack.c.l.b16 %v693
        %v1017 = vunpack.c.h.b16 %v693
        %v1018 = vunpack.c.l.b16 %v694
        %v1019 = vunpack.c.h.b16 %v694
        %v1020 = vunpack.c.l.b16 %v695
        %v1021 = vunpack.c.h.b16 %v695
        %v1022 = vunpack.c.l.b16 %v696
        %v1023 = vunpack.c.h.b16 %v696
        %v1024 = vunpack.c.l.b16 %v697
        %v1025 = vunpack.c.h.b16 %v697
        %v1026 = vunpack.c.l.b16 %v698
        %v1027 = vunpack.c.h.b16 %v698
        %v1028 = vunpack.c.l.b16 %v699
        %v1029 = vunpack.c.h.b16 %v699
        %v1030 = vunpack.c.l.b16 %v700
        %v1031 = vunpack.c.h.b16 %v700
        %v1032 = vunpack.c.l.b16 %v701
        %v1033 = vunpack.c.h.b16 %v701
        %v1034 = vunpack.c.l.b16 %v702
        %v1035 = vunpack.c.h.b16 %v702
        %v1036 = vunpack.c.l.b16 %v703
        %v1037 = vunpack.c.h.b16 %v703
        %v1038 = vunpack.c.l.b16 %v704
        %v1039 = vunpack.c.h.b16 %v704
        %v1040 = vunpack.c.l.b16 %v705
        %v1041 = vunpack.c.h.b16 %v705
        %v1042 = vunpack.c.l.b16 %v706
        %v1043 = vunpack.c.h.b16 %v706
        %v1044 = vunpack.c.l.b16 %v707
        %v1045 = vunpack.c.h.b16 %v707
        %v1046 = vunpack.c.l.b16 %v708
        %v1047 = vunpack.c.h.b16 %v708
        %v1048 = vunpack.c.l.b16 %v709
        %v1049 = vunpack.c.h.b16 %v709
        %v1050 = vunpack.c.l.b16 %v710
        %v1051 = vunpack.c.h.b16 %v710
        %v1052 = vunpack.c.l.b16 %v711
        %v1053 = vunpack.c.h.b16 %v711
        %v1054 = vunpack.c.l.b16 %v712
        %v1055 = vunpack.c.h.b16 %v712
        %v1056 = vunpack.c.l.b16 %v713
        %v1057 = vunpack.c.h.b16 %v713
        %v1058 = vunpack.c.l.b16 %v714
        %v1059 = vunpack.c.h.b16 %v714
        %v1060 = vunpack.c.l.b16 %v715
        %v1061 = vunpack.c.h.b16 %v715
        %v1062 = vunpack.c.l.b16 %v716
        %v1063 = vunpack.c.h.b16 %v716
        %v1064 = vunpack.c.l.b16 %v717
        %v1065 = vunpack.c.h.b16 %v717
        %v1066 = vunpack.c.l.b16 %v718
        %v1067 = vunpack.c.h.b16 %v718
        %v1068 = vunpack.c.l.b16 %v719
        %v1069 = vunpack.c.h.b16 %v719
        %v1070 = vunpack.c.l.b16 %v720
        %v1071 = vunpack.c.h.b16 %v720
        %v1072 = vunpack.c.l.b16 %v721
        %v1073 = vunpack.c.h.b16 %v721
        %v1074 = vunpack.c.l.b16 %v722
        %v1075 = vunpack.c.h.b16 %v722
        %v1076 = vunpack.c.l.b16 %v723
        %v1077 = vunpack.c.h.b16 %v723
        %v1078 = vunpack.c.l.b16 %v724
        %v1079 = vunpack.c.h.b16 %v724
        %v1080 = vunpack.c.l.b16 %v725
        %v1081 = vunpack.c.h.b16 %v725
        %v1082 = vunpack.c.l.b16 %v726
        %v1083 = vunpack.c.h.b16 %v726
        %v1084 = vunpack.c.l.b16 %v727
        %v1085 = vunpack.c.h.b16 %v727
        %v1086 = vunpack.c.l.b16 %v728
        %v1087 = vunpack.c.h.b16 %v728
        %v1088 = vunpack.c.l.b16 %v729
        %v1089 = vunpack.c.h.b16 %v729
        %v1090 = vunpack.c.l.b16 %v730
        %v1091 = vunpack.c.h.b16 %v730
        %v1092 = vunpack.c.l.b16 %v731
        %v1093 = vunpack.c.h.b16 %v731
        %v1094 = vunpack.c.l.b16 %v732
        %v1095 = vunpack.c.h.b16 %v732
        %v1096 = vunpack.c.l.b16 %v733
        %v1097 = vunpack.c.h.b16 %v733
        %v1098 = vunpack.c.l.b16 %v734
        %v1099 = vunpack.c.h.b16 %v734
        %v1100 = vunpack.c.l.b16 %v735
        %v1101 = vunpack.c.h.b16 %v735
        %v1102 = vunpack.c.l.b16 %v736
        %v1103 = vunpack.c.h.b16 %v736
        %v1104 = vunpack.c.l.b16 %v737
        %v1105 = vunpack.c.h.b16 %v737
        %v1106 = vunpack.c.l.b16 %v738
        %v1107 = vunpack.c.h.b16 %v738
        %v1108 = vunpack.c.l.b16 %v739
        %v1109 = vunpack.c.h.b16 %v739
        %v1110 = vunpack.c.l.b16 %v740
        %v1111 = vunpack.c.h.b16 %v740
        %v1112 = vunpack.c.l.b16 %v741
        %v1113 = vunpack.c.h.b16 %v741
        %v1114 = vunpack.c.l.b16 %v742
        %v1115 = vunpack.c.h.b16 %v742
        %v1116 = vunpack.c.l.b16 %v743
        %v1117 = vunpack.c.h.b16 %v743
        %v1118 = vunpack.c.l.b16 %v744
        %v1119 = vunpack.c.h.b16 %v744
        %v1120 = vunpack.c.l.b16 %v745
        %v1121 = vunpack.c.h.b16 %v745
        %v1122 = vunpack.c.l.b16 %v746
        %v1123 = vunpack.c.h.b16 %v746
        %v1124 = vunpack.c.l.b16 %v747
        %v1125 = vunpack.c.h.b16 %v747
        %v1126 = vunpack.c.l.b16 %v748
        %v1127 = vunpack.c.h.b16 %v748
        %v1128 = vunpack.c.l.b16 %v749
        %v1129 = vunpack.c.h.b16 %v749
        %v1130 = vunpack.c.l.b16 %v750
        %v1131 = vunpack.c.h.b16 %v750
        %v1132 = vunpack.c.l.b16 %v751
        %v1133 = vunpack.c.h.b16 %v751
        %v1134 = vunpack.c.l.b16 %v752
        %v1135 = vunpack.c.h.b16 %v752
        %v1136 = vunpack.c.l.b16 %v753
        %v1137 = vunpack.c.h.b16 %v753
        %v1138 = vpack.c.b16 %v886, %v882
        %v1139 = vpack.c.b16 %v887, %v883
        %v1140 = vpack.c.b16 %v888, %v884
        %v1141 = vpack.c.b16 %v889, %v885
        %v1142 = vpack.c.b16 %v894, %v890
        %v1143 = vpack.c.b16 %v895, %v891
        %v1144 = vpack.c.b16 %v896, %v892
        %v1145 = vpack.c.b16 %v897, %v893
        %v1146 = vpack.c.b16 %v902, %v898
        %v1147 = vpack.c.b16 %v903, %v899
        %v1148 = vpack.c.b16 %v904, %v900
        %v1149 = vpack.c.b16 %v905, %v901
        %v1150 = vpack.c.b16 %v910, %v906
        %v1151 = vpack.c.b16 %v911, %v907
        %v1152 = vpack.c.b16 %v912, %v908
        %v1153 = vpack.c.b16 %v913, %v909
        %v1154 = vpack.c.b16 %v918, %v914
        %v1155 = vpack.c.b16 %v919, %v915
        %v1156 = vpack.c.b16 %v920, %v916
        %v1157 = vpack.c.b16 %v921, %v917
        %v1158 = vpack.c.b16 %v926, %v922
        %v1159 = vpack.c.b16 %v927, %v923
        %v1160 = vpack.c.b16 %v928, %v924
        %v1161 = vpack.c.b16 %v929, %v925
        %v1162 = vpack.c.b16 %v934, %v930
        %v1163 = vpack.c.b16 %v935, %v931
        %v1164 = vpack.c.b16 %v936, %v932
        %v1165 = vpack.c.b16 %v937, %v933
        %v1166 = vpack.c.b16 %v942, %v938
        %v1167 = vpack.c.b16 %v943, %v939
        %v1168 = vpack.c.b16 %v944, %v940
        %v1169 = vpack.c.b16 %v945, %v941
        %v1170 = vpack.c.b16 %v950, %v946
        %v1171 = vpack.c.b16 %v951, %v947
        %v1172 = vpack.c.b16 %v952, %v948
        %v1173 = vpack.c.b16 %v953, %v949
        %v1174 = vpack.c.b16 %v958, %v954
        %v1175 = vpack.c.b16 %v959, %v955
        %v1176 = vpack.c.b16 %v960, %v956
        %v1177 = vpack.c.b16 %v961, %v957
        %v1178 = vpack.c.b16 %v966, %v962
        %v1179 = vpack.c.b16 %v967, %v963
        %v1180 = vpack.c.b16 %v968, %v964
        %v1181 = vpack.c.b16 %v969, %v965
        %v1182 = vpack.c.b16 %v974, %v970
        %v1183 = vpack.c.b16 %v975, %v971
        %v1184 = vpack.c.b16 %v976, %v972
        %v1185 = vpack.c.b16 %v977, %v973
        %v1186 = vpack.c.b16 %v982, %v978
        %v1187 = vpack.c.b16 %v983, %v979
        %v1188 = vpack.c.b16 %v984, %v980
        %v1189 = vpack.c.b16 %v985, %v981
        %v1190 = vpack.c.b16 %v990, %v986
        %v1191 = vpack.c.b16 %v991, %v987
        %v1192 = vpack.c.b16 %v992, %v988
        %v1193 = vpack.c.b16 %v993, %v989
        %v1194 = vpack.c.b16 %v998, %v994
        %v1195 = vpack.c.b16 %v999, %v995
        %v1196 = vpack.c.b16 %v1000, %v996
        %v1197 = vpack.c.b16 %v1001, %v997
        %v1198 = vpack.c.b16 %v1006, %v1002
        %v1199 = vpack.c.b16 %v1007, %v1003
        %v1200 = vpack.c.b16 %v1008, %v1004
        %v1201 = vpack.c.b16 %v1009, %v1005
        %v1202 = vpack.c.b16 %v1014, %v1010
        %v1203 = vpack.c.b16 %v1015, %v1011
        %v1204 = vpack.c.b16 %v1016, %v1012
        %v1205 = vpack.c.b16 %v1017, %v1013
        %v1206 = vpack.c.b16 %v1022, %v1018
        %v1207 = vpack.c.b16 %v1023, %v1019
        %v1208 = vpack.c.b16 %v1024, %v1020
        %v1209 = vpack.c.b16 %v1025, %v1021
        %v1210 = vpack.c.b16 %v1030, %v1026
        %v1211 = vpack.c.b16 %v1031, %v1027
        %v1212 = vpack.c.b16 %v1032, %v1028
        %v1213 = vpack.c.b16 %v1033, %v1029
        %v1214 = vpack.c.b16 %v1038, %v1034
        %v1215 = vpack.c.b16 %v1039, %v1035
        %v1216 = vpack.c.b16 %v1040, %v1036
        %v1217 = vpack.c.b16 %v1041, %v1037
        %v1218 = vpack.c.b16 %v1046, %v1042
        %v1219 = vpack.c.b16 %v1047, %v1043
        %v1220 = vpack.c.b16 %v1048, %v1044
        %v1221 = vpack.c.b16 %v1049, %v1045
        %v1222 = vpack.c.b16 %v1054, %v1050
        %v1223 = vpack.c.b16 %v1055, %v1051
        %v1224 = vpack.c.b16 %v1056, %v1052
        %v1225 = vpack.c.b16 %v1057, %v1053
        %v1226 = vpack.c.b16 %v1062, %v1058
        %v1227 = vpack.c.b16 %v1063, %v1059
        %v1228 = vpack.c.b16 %v1064, %v1060
        %v1229 = vpack.c.b16 %v1065, %v1061
        %v1230 = vpack.c.b16 %v1070, %v1066
        %v1231 = vpack.c.b16 %v1071, %v1067
        %v1232 = vpack.c.b16 %v1072, %v1068
        %v1233 = vpack.c.b16 %v1073, %v1069
        %v1234 = vpack.c.b16 %v1078, %v1074
        %v1235 = vpack.c.b16 %v1079, %v1075
        %v1236 = vpack.c.b16 %v1080, %v1076
        %v1237 = vpack.c.b16 %v1081, %v1077
        %v1238 = vpack.c.b16 %v1086, %v1082
        %v1239 = vpack.c.b16 %v1087, %v1083
        %v1240 = vpack.c.b16 %v1088, %v1084
        %v1241 = vpack.c.b16 %v1089, %v1085
        %v1242 = vpack.c.b16 %v1094, %v1090
        %v1243 = vpack.c.b16 %v1095, %v1091
        %v1244 = vpack.c.b16 %v1096, %v1092
        %v1245 = vpack.c.b16 %v1097, %v1093
        %v1246 = vpack.c.b16 %v1102, %v1098
        %v1247 = vpack.c.b16 %v1103, %v1099
        %v1248 = vpack.c.b16 %v1104, %v1100
        %v1249 = vpack.c.b16 %v1105, %v1101
        %v1250 = vpack.c.b16 %v1110, %v1106
        %v1251 = vpack.c.b16 %v1111, %v1107
        %v1252 = vpack.c.b16 %v1112, %v1108
        %v1253 = vpack.c.b16 %v1113, %v1109
        %v1254 = vpack.c.b16 %v1118, %v1114
        %v1255 = vpack.c.b16 %v1119, %v1115
        %v1256 = vpack.c.b16 %v1120, %v1116
        %v1257 = vpack.c.b16 %v1121, %v1117
        %v1258 = vpack.c.b16 %v1126, %v1122
        %v1259 = vpack.c.b16 %v1127, %v1123
        %v1260 = vpack.c.b16 %v1128, %v1124
        %v1261 = vpack.c.b16 %v1129, %v1125
        %v1262 = vpack.c.b16 %v1134, %v1130
        %v1263 = vpack.c.b16 %v1135, %v1131
        %v1264 = vpack.c.b16 %v1136, %v1132
        %v1265 = vpack.c.b16 %v1137, %v1133
        %1394 = vmatpush.bf16.msra.mxu0 %v1166
        %1395 = vmatpush.bf16.msra.mxu0 %v1162
        %1396 = vmatpush.bf16.msra.mxu0 %v1158
        %1397 = vmatpush.bf16.msra.mxu0 %v1154
        %1398 = vmatpush.bf16.msra.mxu0 %v1150
        %1399 = vmatpush.bf16.msra.mxu0 %v1146
        %1400 = vmatpush.bf16.msra.mxu0 %v1142
        %1401 = vmatpush.bf16.msra.mxu0 %v1138
        %1402 = vmatmul.bf16.gmra.mxu0 %v622
        %v1403 = vpop.f32.mrf.mxu0
        %v1404 = vadd.f32 0.0, %v1403
        %v1405 = vpop.f32.mrf.mxu0
        %v1406 = vadd.f32 0.0, %v1405
        %1407 = vdwg.mxu0
        %1408 = vmatpush.bf16.msra.mxu0 %v1198
        %1409 = vmatpush.bf16.msra.mxu0 %v1194
        %1410 = vmatpush.bf16.msra.mxu0 %v1190
        %1411 = vmatpush.bf16.msra.mxu0 %v1186
        %1412 = vmatpush.bf16.msra.mxu0 %v1182
        %1413 = vmatpush.bf16.msra.mxu0 %v1178
        %1414 = vmatpush.bf16.msra.mxu0 %v1174
        %1415 = vmatpush.bf16.msra.mxu0 %v1170
        %1416 = vmatmul.bf16.gmra.mxu0 %v623
        %v1417 = vpop.f32.mrf.mxu0
        %v1418 = vadd.f32 %v1404, %v1417
        %v1419 = vpop.f32.mrf.mxu0
        %v1420 = vadd.f32 %v1406, %v1419
        %1421 = vdwg.mxu0
        %1422 = vmatpush.bf16.msra.mxu0 %v1230
        %1423 = vmatpush.bf16.msra.mxu0 %v1226
        %1424 = vmatpush.bf16.msra.mxu0 %v1222
        %1425 = vmatpush.bf16.msra.mxu0 %v1218
        %1426 = vmatpush.bf16.msra.mxu0 %v1214
        %1427 = vmatpush.bf16.msra.mxu0 %v1210
        %1428 = vmatpush.bf16.msra.mxu0 %v1206
        %1429 = vmatpush.bf16.msra.mxu0 %v1202
        %1430 = vmatmul.bf16.gmra.mxu0 %v624
        %v1431 = vpop.f32.mrf.mxu0
        %v1432 = vadd.f32 %v1418, %v1431
        %v1433 = vpop.f32.mrf.mxu0
        %v1434 = vadd.f32 %v1420, %v1433
        %1435 = vdwg.mxu0
        %1436 = vmatpush.bf16.msra.mxu0 %v1262
        %1437 = vmatpush.bf16.msra.mxu0 %v1258
        %1438 = vmatpush.bf16.msra.mxu0 %v1254
        %1439 = vmatpush.bf16.msra.mxu0 %v1250
        %1440 = vmatpush.bf16.msra.mxu0 %v1246
        %1441 = vmatpush.bf16.msra.mxu0 %v1242
        %1442 = vmatpush.bf16.msra.mxu0 %v1238
        %1443 = vmatpush.bf16.msra.mxu0 %v1234
        %1444 = vmatmul.bf16.gmra.mxu0 %v625
        %v1445 = vpop.f32.mrf.mxu0
        %v1446 = vadd.f32 %v1432, %v1445
        %v1447 = vpop.f32.mrf.mxu0
        %v1448 = vadd.f32 %v1434, %v1447
        %1449 = vdwg.mxu0
        %1450 = vmatpush.bf16.msra.mxu0 %v1167
        %1451 = vmatpush.bf16.msra.mxu0 %v1163
        %1452 = vmatpush.bf16.msra.mxu0 %v1159
        %1453 = vmatpush.bf16.msra.mxu0 %v1155
        %1454 = vmatpush.bf16.msra.mxu0 %v1151
        %1455 = vmatpush.bf16.msra.mxu0 %v1147
        %1456 = vmatpush.bf16.msra.mxu0 %v1143
        %1457 = vmatpush.bf16.msra.mxu0 %v1139
        %1458 = vmatmul.bf16.gmra.mxu0 %v622
        %v1459 = vpop.f32.mrf.mxu0
        %v1460 = vadd.f32 0.0, %v1459
        %v1461 = vpop.f32.mrf.mxu0
        %v1462 = vadd.f32 0.0, %v1461
        %1463 = vdwg.mxu0
        %1464 = vmatpush.bf16.msra.mxu0 %v1199
        %1465 = vmatpush.bf16.msra.mxu0 %v1195
        %1466 = vmatpush.bf16.msra.mxu0 %v1191
        %1467 = vmatpush.bf16.msra.mxu0 %v1187
        %1468 = vmatpush.bf16.msra.mxu0 %v1183
        %1469 = vmatpush.bf16.msra.mxu0 %v1179
        %1470 = vmatpush.bf16.msra.mxu0 %v1175
        %1471 = vmatpush.bf16.msra.mxu0 %v1171
        %1472 = vmatmul.bf16.gmra.mxu0 %v623
        %v1473 = vpop.f32.mrf.mxu0
        %v1474 = vadd.f32 %v1460, %v1473
        %v1475 = vpop.f32.mrf.mxu0
        %v1476 = vadd.f32 %v1462, %v1475
        %1477 = vdwg.mxu0
        %1478 = vmatpush.bf16.msra.mxu0 %v1231
        %1479 = vmatpush.bf16.msra.mxu0 %v1227
        %1480 = vmatpush.bf16.msra.mxu0 %v1223
        %1481 = vmatpush.bf16.msra.mxu0 %v1219
        %1482 = vmatpush.bf16.msra.mxu0 %v1215
        %1483 = vmatpush.bf16.msra.mxu0 %v1211
        %1484 = vmatpush.bf16.msra.mxu0 %v1207
        %1485 = vmatpush.bf16.msra.mxu0 %v1203
        %1486 = vmatmul.bf16.gmra.mxu0 %v624
        %v1487 = vpop.f32.mrf.mxu0
        %v1488 = vadd.f32 %v1474, %v1487
        %v1489 = vpop.f32.mrf.mxu0
        %v1490 = vadd.f32 %v1476, %v1489
        %1491 = vdwg.mxu0
        %1492 = vmatpush.bf16.msra.mxu0 %v1263
        %1493 = vmatpush.bf16.msra.mxu0 %v1259
        %1494 = vmatpush.bf16.msra.mxu0 %v1255
        %1495 = vmatpush.bf16.msra.mxu0 %v1251
        %1496 = vmatpush.bf16.msra.mxu0 %v1247
        %1497 = vmatpush.bf16.msra.mxu0 %v1243
        %1498 = vmatpush.bf16.msra.mxu0 %v1239
        %1499 = vmatpush.bf16.msra.mxu0 %v1235
        %1500 = vmatmul.bf16.gmra.mxu0 %v625
        %v1501 = vpop.f32.mrf.mxu0
        %v1502 = vadd.f32 %v1488, %v1501
        %v1503 = vpop.f32.mrf.mxu0
        %v1504 = vadd.f32 %v1490, %v1503
        %1505 = vdwg.mxu0
        %1506 = vmatpush.bf16.msra.mxu0 %v1168
        %1507 = vmatpush.bf16.msra.mxu0 %v1164
        %1508 = vmatpush.bf16.msra.mxu0 %v1160
        %1509 = vmatpush.bf16.msra.mxu0 %v1156
        %1510 = vmatpush.bf16.msra.mxu0 %v1152
        %1511 = vmatpush.bf16.msra.mxu0 %v1148
        %1512 = vmatpush.bf16.msra.mxu0 %v1144
        %1513 = vmatpush.bf16.msra.mxu0 %v1140
        %1514 = vmatmul.bf16.gmra.mxu0 %v622
        %v1515 = vpop.f32.mrf.mxu0
        %v1516 = vadd.f32 0.0, %v1515
        %v1517 = vpop.f32.mrf.mxu0
        %v1518 = vadd.f32 0.0, %v1517
        %1519 = vdwg.mxu0
        %1520 = vmatpush.bf16.msra.mxu0 %v1200
        %1521 = vmatpush.bf16.msra.mxu0 %v1196
        %1522 = vmatpush.bf16.msra.mxu0 %v1192
        %1523 = vmatpush.bf16.msra.mxu0 %v1188
        %1524 = vmatpush.bf16.msra.mxu0 %v1184
        %1525 = vmatpush.bf16.msra.mxu0 %v1180
        %1526 = vmatpush.bf16.msra.mxu0 %v1176
        %1527 = vmatpush.bf16.msra.mxu0 %v1172
        %1528 = vmatmul.bf16.gmra.mxu0 %v623
        %v1529 = vpop.f32.mrf.mxu0
        %v1530 = vadd.f32 %v1516, %v1529
        %v1531 = vpop.f32.mrf.mxu0
        %v1532 = vadd.f32 %v1518, %v1531
        %1533 = vdwg.mxu0
        %1534 = vmatpush.bf16.msra.mxu0 %v1232
        %1535 = vmatpush.bf16.msra.mxu0 %v1228
        %1536 = vmatpush.bf16.msra.mxu0 %v1224
        %1537 = vmatpush.bf16.msra.mxu0 %v1220
        %1538 = vmatpush.bf16.msra.mxu0 %v1216
        %1539 = vmatpush.bf16.msra.mxu0 %v1212
        %1540 = vmatpush.bf16.msra.mxu0 %v1208
        %1541 = vmatpush.bf16.msra.mxu0 %v1204
        %1542 = vmatmul.bf16.gmra.mxu0 %v624
        %v1543 = vpop.f32.mrf.mxu0
        %v1544 = vadd.f32 %v1530, %v1543
        %v1545 = vpop.f32.mrf.mxu0
        %v1546 = vadd.f32 %v1532, %v1545
        %1547 = vdwg.mxu0
        %1548 = vmatpush.bf16.msra.mxu0 %v1264
        %1549 = vmatpush.bf16.msra.mxu0 %v1260
        %1550 = vmatpush.bf16.msra.mxu0 %v1256
        %1551 = vmatpush.bf16.msra.mxu0 %v1252
        %1552 = vmatpush.bf16.msra.mxu0 %v1248
        %1553 = vmatpush.bf16.msra.mxu0 %v1244
        %1554 = vmatpush.bf16.msra.mxu0 %v1240
        %1555 = vmatpush.bf16.msra.mxu0 %v1236
        %1556 = vmatmul.bf16.gmra.mxu0 %v625
        %v1557 = vpop.f32.mrf.mxu0
        %v1558 = vadd.f32 %v1544, %v1557
        %v1559 = vpop.f32.mrf.mxu0
        %v1560 = vadd.f32 %v1546, %v1559
        %1561 = vdwg.mxu0
        %1562 = vmatpush.bf16.msra.mxu0 %v1169
        %1563 = vmatpush.bf16.msra.mxu0 %v1165
        %1564 = vmatpush.bf16.msra.mxu0 %v1161
        %1565 = vmatpush.bf16.msra.mxu0 %v1157
        %1566 = vmatpush.bf16.msra.mxu0 %v1153
        %1567 = vmatpush.bf16.msra.mxu0 %v1149
        %1568 = vmatpush.bf16.msra.mxu0 %v1145
        %1569 = vmatpush.bf16.msra.mxu0 %v1141
        %1570 = vmatmul.bf16.gmra.mxu0 %v622
        %v1571 = vpop.f32.mrf.mxu0
        %v1572 = vadd.f32 0.0, %v1571
        %v1573 = vpop.f32.mrf.mxu0
        %v1574 = vadd.f32 0.0, %v1573
        %1575 = vdwg.mxu0
        %1576 = vmatpush.bf16.msra.mxu0 %v1201
        %1577 = vmatpush.bf16.msra.mxu0 %v1197
        %1578 = vmatpush.bf16.msra.mxu0 %v1193
        %1579 = vmatpush.bf16.msra.mxu0 %v1189
        %1580 = vmatpush.bf16.msra.mxu0 %v1185
        %1581 = vmatpush.bf16.msra.mxu0 %v1181
        %1582 = vmatpush.bf16.msra.mxu0 %v1177
        %1583 = vmatpush.bf16.msra.mxu0 %v1173
        %1584 = vmatmul.bf16.gmra.mxu0 %v623
        %v1585 = vpop.f32.mrf.mxu0
        %v1586 = vadd.f32 %v1572, %v1585
        %v1587 = vpop.f32.mrf.mxu0
        %v1588 = vadd.f32 %v1574, %v1587
        %1589 = vdwg.mxu0
        %1590 = vmatpush.bf16.msra.mxu0 %v1233
        %1591 = vmatpush.bf16.msra.mxu0 %v1229
        %1592 = vmatpush.bf16.msra.mxu0 %v1225
        %1593 = vmatpush.bf16.msra.mxu0 %v1221
        %1594 = vmatpush.bf16.msra.mxu0 %v1217
        %1595 = vmatpush.bf16.msra.mxu0 %v1213
        %1596 = vmatpush.bf16.msra.mxu0 %v1209
        %1597 = vmatpush.bf16.msra.mxu0 %v1205
        %1598 = vmatmul.bf16.gmra.mxu0 %v624
        %v1599 = vpop.f32.mrf.mxu0
        %v1600 = vadd.f32 %v1586, %v1599
        %v1601 = vpop.f32.mrf.mxu0
        %v1602 = vadd.f32 %v1588, %v1601
        %1603 = vdwg.mxu0
        %1604 = vmatpush.bf16.msra.mxu0 %v1265
        %1605 = vmatpush.bf16.msra.mxu0 %v1261
        %1606 = vmatpush.bf16.msra.mxu0 %v1257
        %1607 = vmatpush.bf16.msra.mxu0 %v1253
        %1608 = vmatpush.bf16.msra.mxu0 %v1249
        %1609 = vmatpush.bf16.msra.mxu0 %v1245
        %1610 = vmatpush.bf16.msra.mxu0 %v1241
        %1611 = vmatpush.bf16.msra.mxu0 %v1237
        %1612 = vmatmul.bf16.gmra.mxu0 %v625
        %v1613 = vpop.f32.mrf.mxu0
        %v1614 = vadd.f32 %v1600, %v1613
        %v1615 = vpop.f32.mrf.mxu0
        %v1616 = vadd.f32 %v1602, %v1615
        %1617 = vdwg.mxu0
        %v1618 = vld [vmem:[%s425] sm:$0xf]
        %v1619 = vld [vmem:[%s435] sm:$0xf]
        %v1620 = vld [vmem:[#allocation13] sm:$0xff]
        %v1621 = vld [vmem:[#allocation13 + $0x8] sm:$0xff]
        %v1623 = vperm.slane %v1618, 0
        %v1624 = vperm.slane %v1618, 1
        %v1625 = vperm.slane %v1618, 2
        %v1626 = vperm.slane %v1618, 3
        %v1631 = vmul.f32 %v1446, %v1623
        %v1632 = vmul.f32 %v1502, %v1624
        %v1633 = vmul.f32 %v1558, %v1625
        %v1634 = vmul.f32 %v1614, %v1626
        %v1635 = vmul.f32 %v1448, %v1623
        %v1636 = vmul.f32 %v1504, %v1624
        %v1637 = vmul.f32 %v1560, %v1625
        %v1638 = vmul.f32 %v1616, %v1626
        %v1639 = vadd.f32 %v1631, %v1632
        %v1640 = vadd.f32 %v1639, %v1633
        %v1641 = vadd.f32 %v1640, %v1634
        %1642 = vadd.xlane.f32.xlu0 %v1641
        %v1643 = vpop.xlane.xlu0 %1642
        %v1644 = vadd.f32 %v1635, %v1636
        %v1645 = vadd.f32 %v1644, %v1637
        %v1646 = vadd.f32 %v1645, %v1638
        %1647 = vadd.xlane.f32.xlu0 %v1646
        %v1648 = vpop.xlane.xlu0 %1647
        %v1650 = vperm.slane %v1619, 0
        %v1651 = vperm.slane %v1619, 1
        %v1652 = vperm.slane %v1619, 2
        %v1653 = vperm.slane %v1619, 3
        %v1658 = vmul.f32 %v1446, %v1650
        %v1659 = vmul.f32 %v1502, %v1651
        %v1660 = vmul.f32 %v1558, %v1652
        %v1661 = vmul.f32 %v1614, %v1653
        %v1662 = vmul.f32 %v1448, %v1650
        %v1663 = vmul.f32 %v1504, %v1651
        %v1664 = vmul.f32 %v1560, %v1652
        %v1665 = vmul.f32 %v1616, %v1653
        %v1666 = vadd.f32 %v1658, %v1659
        %v1667 = vadd.f32 %v1666, %v1660
        %v1668 = vadd.f32 %v1667, %v1661
        %1669 = vadd.xlane.f32.xlu0 %v1668
        %v1670 = vpop.xlane.xlu0 %1669
        %v1671 = vadd.f32 %v1662, %v1663
        %v1672 = vadd.f32 %v1671, %v1664
        %v1673 = vadd.f32 %v1672, %v1665
        %1674 = vadd.xlane.f32.xlu0 %v1673
        %v1675 = vpop.xlane.xlu0 %1674
        %1676 = vxpose.xlu0.b32.start [1/16] %v1643, 128
        %1677 = vxpose.xlu0.b32.cont [2/16] %v1648, 128
        %1678 = vxpose.xlu0.b32.cont [3/16] 0.0, 128
        %1679 = vxpose.xlu0.b32.cont [4/16] 0.0, 128
        %1680 = vxpose.xlu0.b32.cont [5/16] 0.0, 128
        %1681 = vxpose.xlu0.b32.cont [6/16] 0.0, 128
        %1682 = vxpose.xlu0.b32.cont [7/16] 0.0, 128
        %1683 = vxpose.xlu0.b32.cont [8/16] 0.0, 128
        %1684 = vxpose.xlu0.b32.cont [9/16] 0.0, 128
        %1685 = vxpose.xlu0.b32.cont [10/16] 0.0, 128
        %1686 = vxpose.xlu0.b32.cont [11/16] 0.0, 128
        %1687 = vxpose.xlu0.b32.cont [12/16] 0.0, 128
        %1688 = vxpose.xlu0.b32.cont [13/16] 0.0, 128
        %1689 = vxpose.xlu0.b32.cont [14/16] 0.0, 128
        %1690 = vxpose.xlu0.b32.cont [15/16] 0.0, 128
        %1691 = vxpose.xlu0.b32.end [16/16] 0.0, 128
        %v1692 = vpop.trf.xlu0
        %v1693 = vpop.trf.xlu0
        %v1694 = vpop.trf.xlu0
        %v1695 = vpop.trf.xlu0
        %v1696 = vpop.trf.xlu0
        %v1697 = vpop.trf.xlu0
        %v1698 = vpop.trf.xlu0
        %v1699 = vpop.trf.xlu0
        %v1700 = vpop.trf.xlu0
        %v1701 = vpop.trf.xlu0
        %v1702 = vpop.trf.xlu0
        %v1703 = vpop.trf.xlu0
        %v1704 = vpop.trf.xlu0
        %v1705 = vpop.trf.xlu0
        %v1706 = vpop.trf.xlu0
        %v1707 = vpop.trf.xlu0
        %v1708 = vperm.slane %v1692, 0
        %v1709 = vadd.f32 %v1670, %v1708
        %v1710 = vadd.f32 %v1675, %v1708
        %vm1711 = vcmp.gt.f32.partialorder %v1709, 0.0
        %vm1712 = vcmp.gt.f32.partialorder %v1710, 0.0
        %v1713 = vmul.f32 %v1709, 0.2
        %v1714 = vmul.f32 %v1710, 0.2
        %v1715 = vsel %vm1711, %v1709, %v1713
        %v1716 = vsel %vm1712, %v1710, %v1714
        %vm1717 = vcmp.gt.f32.partialorder %v1620, 0.0
        %vm1718 = vcmp.gt.f32.partialorder %v1621, 0.0
        %v1719 = vsel %vm1717, %v1715, -1e+30
        %v1720 = vsel %vm1718, %v1716, -1e+30
        %vm1721 = vcmask 130048
        %v1722 = vsel %vm1721, %v1719, -inf
        %1723 = vmax.xlane.f32.xlu0 %v1722
        %v1724 = vpop.xlane.xlu0 %1723
        %v1725 = vsel %vm1721, %v1720, -inf
        %1726 = vmax.xlane.f32.xlu0 %v1725
        %v1727 = vpop.xlane.xlu0 %1726
        %v1728 = vsub.f32 %v1719, %v1724
        %v1729 = vsub.f32 %v1720, %v1727
        %v1730 = vmul.f32 %v1728, 1.442695
        %v1731 = vpow.pop %v1730
        %v1732 = vmul.f32 %v1729, 1.442695
        %v1733 = vpow.pop %v1732
        %v1734 = vsel %vm1717, %v1731, 0.0
        %v1735 = vsel %vm1718, %v1733, 0.0
        %v1736 = vsel %vm1721, %v1734, 0.0
        %1737 = vadd.xlane.f32.xlu0 %v1736
        %v1738 = vpop.xlane.xlu0 %1737
        %v1739 = vsel %vm1721, %v1735, 0.0
        %1740 = vadd.xlane.f32.xlu0 %v1739
        %v1741 = vpop.xlane.xlu0 %1740
        %v1742 = vrcp.pop %v1738
        %v1743 = vrcp.pop %v1741
        %v1744 = vmul.f32 %v1734, %v1742
        %v1745 = vmul.f32 %v1735, %v1743
        %v1747 = vsel %vm1721, %v1744, 0
        %v1750 = vsel %vm1721, %v1745, 0
        %1752 = vmatpush.msra.mxu0 0.0
        %1753 = vmatpush.msra.mxu0 0.0
        %1754 = vmatpush.msra.mxu0 0.0
        %1755 = vmatpush.msra.mxu0 0.0
        %1756 = vmatpush.msra.mxu0 0.0
        %1757 = vmatpush.msra.mxu0 0.0
        %1758 = vmatpush.msra.mxu0 0.0
        %1759 = vmatpush.msra.mxu0 0.0
        %1760 = vmatpush.msra.mxu0 0.0
        %1761 = vmatpush.msra.mxu0 0.0
        %1762 = vmatpush.msra.mxu0 0.0
        %1763 = vmatpush.msra.mxu0 0.0
        %1764 = vmatpush.msra.mxu0 0.0
        %1765 = vmatpush.msra.mxu0 0.0
        %1766 = vmatpush.msra.mxu0 %v1448
        %1767 = vmatpush.msra.mxu0 %v1446
        %1768 = vmatmul.f32.gmra.mxu0 %v1747
        %v1769 = vpop.f32.mrf.mxu0
        %v1770 = vadd.f32 0.0, %v1769
        %1771 = vmatmul.f32.gmra.mxu0 %v1750
        %v1772 = vpop.f32.mrf.mxu0
        %v1773 = vadd.f32 0.0, %v1772
        %1774 = vdwg.mxu0
        %1775 = vmatpush.msra.mxu0 0.0
        %1776 = vmatpush.msra.mxu0 0.0
        %1777 = vmatpush.msra.mxu0 0.0
        %1778 = vmatpush.msra.mxu0 0.0
        %1779 = vmatpush.msra.mxu0 0.0
        %1780 = vmatpush.msra.mxu0 0.0
        %1781 = vmatpush.msra.mxu0 0.0
        %1782 = vmatpush.msra.mxu0 0.0
        %1783 = vmatpush.msra.mxu0 0.0
        %1784 = vmatpush.msra.mxu0 0.0
        %1785 = vmatpush.msra.mxu0 0.0
        %1786 = vmatpush.msra.mxu0 0.0
        %1787 = vmatpush.msra.mxu0 0.0
        %1788 = vmatpush.msra.mxu0 0.0
        %1789 = vmatpush.msra.mxu0 %v1504
        %1790 = vmatpush.msra.mxu0 %v1502
        %1791 = vmatmul.f32.gmra.mxu0 %v1747
        %v1792 = vpop.f32.mrf.mxu0
        %v1793 = vadd.f32 0.0, %v1792
        %1794 = vmatmul.f32.gmra.mxu0 %v1750
        %v1795 = vpop.f32.mrf.mxu0
        %v1796 = vadd.f32 0.0, %v1795
        %1797 = vdwg.mxu0
        %1798 = vmatpush.msra.mxu0 0.0
        %1799 = vmatpush.msra.mxu0 0.0
        %1800 = vmatpush.msra.mxu0 0.0
        %1801 = vmatpush.msra.mxu0 0.0
        %1802 = vmatpush.msra.mxu0 0.0
        %1803 = vmatpush.msra.mxu0 0.0
        %1804 = vmatpush.msra.mxu0 0.0
        %1805 = vmatpush.msra.mxu0 0.0
        %1806 = vmatpush.msra.mxu0 0.0
        %1807 = vmatpush.msra.mxu0 0.0
        %1808 = vmatpush.msra.mxu0 0.0
        %1809 = vmatpush.msra.mxu0 0.0
        %1810 = vmatpush.msra.mxu0 0.0
        %1811 = vmatpush.msra.mxu0 0.0
        %1812 = vmatpush.msra.mxu0 %v1560
        %1813 = vmatpush.msra.mxu0 %v1558
        %1814 = vmatmul.f32.gmra.mxu0 %v1747
        %v1815 = vpop.f32.mrf.mxu0
        %v1816 = vadd.f32 0.0, %v1815
        %1817 = vmatmul.f32.gmra.mxu0 %v1750
        %v1818 = vpop.f32.mrf.mxu0
        %v1819 = vadd.f32 0.0, %v1818
        %1820 = vdwg.mxu0
        %1821 = vmatpush.msra.mxu0 0.0
        %1822 = vmatpush.msra.mxu0 0.0
        %1823 = vmatpush.msra.mxu0 0.0
        %1824 = vmatpush.msra.mxu0 0.0
        %1825 = vmatpush.msra.mxu0 0.0
        %1826 = vmatpush.msra.mxu0 0.0
        %1827 = vmatpush.msra.mxu0 0.0
        %1828 = vmatpush.msra.mxu0 0.0
        %1829 = vmatpush.msra.mxu0 0.0
        %1830 = vmatpush.msra.mxu0 0.0
        %1831 = vmatpush.msra.mxu0 0.0
        %1832 = vmatpush.msra.mxu0 0.0
        %1833 = vmatpush.msra.mxu0 0.0
        %1834 = vmatpush.msra.mxu0 0.0
        %1835 = vmatpush.msra.mxu0 %v1616
        %1836 = vmatpush.msra.mxu0 %v1614
        %1837 = vmatmul.f32.gmra.mxu0 %v1747
        %v1838 = vpop.f32.mrf.mxu0
        %v1839 = vadd.f32 0.0, %v1838
        %1840 = vmatmul.f32.gmra.mxu0 %v1750
        %v1841 = vpop.f32.mrf.mxu0
        %v1842 = vadd.f32 0.0, %v1841
        %1843 = vdwg.mxu0
        %v1844 = vadd.f32 %v576, %v1770
        %v1845 = vadd.f32 %v590, %v1793
        %v1846 = vadd.f32 %v604, %v1816
        %v1847 = vadd.f32 %v618, %v1839
        %v1848 = vadd.f32 %v578, %v1773
        %v1849 = vadd.f32 %v592, %v1796
        %v1850 = vadd.f32 %v606, %v1819
        %v1851 = vadd.f32 %v620, %v1842
        %v1852 = vld [vmem:[%s445] sm:$0xf]
        %v1854 = vperm.slane %v1852, 0
        %v1855 = vperm.slane %v1852, 1
        %v1856 = vperm.slane %v1852, 2
        %v1857 = vperm.slane %v1852, 3
        %v1862 = vadd.f32 %v1844, %v1854
        %v1863 = vadd.f32 %v1845, %v1855
        %v1864 = vadd.f32 %v1846, %v1856
        %v1865 = vadd.f32 %v1847, %v1857
        %v1866 = vadd.f32 %v1848, %v1854
        %v1867 = vadd.f32 %v1849, %v1855
        %v1868 = vadd.f32 %v1850, %v1856
        %v1869 = vadd.f32 %v1851, %v1857
        %1870 = vst [vmem:[%s497] sm:$0xff] %v1862
        %1871 = vst [vmem:[%s497 + $0x8] sm:$0xff] %v1863
        %1872 = vst [vmem:[%s497 + $0x10] sm:$0xff] %v1864
        %1873 = vst [vmem:[%s497 + $0x18] sm:$0xff] %v1865
        %1874 = vst [vmem:[%s497 + $0x20] sm:$0xff] %v1866
        %1875 = vst [vmem:[%s497 + $0x28] sm:$0xff] %v1867
        %1876 = vst [vmem:[%s497 + $0x30] sm:$0xff] %v1868
        %1877 = vst [vmem:[%s497 + $0x38] sm:$0xff] %v1869
        %s1878 = sand.u32 %s224, 1
        %s1879 = sand.u32 %s224, 1
        %s1880 = smul.addr %s1879, 64
        %s1881 = scalar_lea.vmem [#allocation15], %s1880
        // Predicated region
        $region85: #{gatsby_forward.3} parent=51 // pred_check
          %p1882 = pneg %p234
        $region86: #{gatsby_forward.3} parent=51 // pred_check_branch
          %1884 = sbr.rel (%p1882) target = $region88
        $region87: #{gatsby_forward.3} parent=51 // pred_region
          %s1885 = smul.u32 4, %s28
          %s1886 = smul.addr %s1885, 8
          %s1887 = scalar_lea.vmem %s8, %s1886
          // Predicated region
          $region89: #{gatsby_forward.3} parent=87 // pred_check
            _
          $region90: #{gatsby_forward.3} parent=87 // pred_check_branch
            %1889 = sbr.rel (0) target = $region92
          $region91: #{gatsby_forward.3} parent=87 // pred_region
            // Predicated region
            $region93: #{gatsby_forward.3} parent=91 // pred_check
              _
            $region94: #{gatsby_forward.3} parent=91 // pred_check_branch
              %1891 = sbr.rel (0) target = $region96
            $region95: #{gatsby_forward.3} parent=91 // pred_region
              loop: start=0, step=1, limit=1
              $region97: #{gatsby_forward.3} parent=95 // loop_pre_header
                _
              $region98: #{gatsby_forward.3} parent=95 // loop_header
                %s1893 = sphi 0, %s1897
                %p1894 = scmp.ge.s32.totalorder %s1893, 1
                %s1898 = sphi %s1881, %s1881
                %s1899 = sphi %s1887, %s1887
              $region99: #{gatsby_forward.3} parent=95 // loop_header_branch
                %1896 = sbr.rel (%p1894) target = $region103
              $region100: #{gatsby_forward.3} parent=95 // loop_body
                %v1900 = vld [vmem:[%s1898] sm:$0xff]
                %1901 = vst [vmem:[%s1899] sm:$0xff] %v1900
                %v1902 = vld [vmem:[%s1898 + $0x8] sm:$0xff]
                %1903 = vst [vmem:[%s1899 + $0x8] sm:$0xff] %v1902
                %v1904 = vld [vmem:[%s1898 + $0x10] sm:$0xff]
                %1905 = vst [vmem:[%s1899 + $0x10] sm:$0xff] %v1904
                %v1906 = vld [vmem:[%s1898 + $0x18] sm:$0xff]
                %1907 = vst [vmem:[%s1899 + $0x18] sm:$0xff] %v1906
                %v1908 = vld [vmem:[%s1898 + $0x20] sm:$0xff]
                %1909 = vst [vmem:[%s1899 + $0x40] sm:$0xff] %v1908
                %v1910 = vld [vmem:[%s1898 + $0x28] sm:$0xff]
                %1911 = vst [vmem:[%s1899 + $0x48] sm:$0xff] %v1910
                %v1912 = vld [vmem:[%s1898 + $0x30] sm:$0xff]
                %1913 = vst [vmem:[%s1899 + $0x50] sm:$0xff] %v1912
                %v1914 = vld [vmem:[%s1898 + $0x38] sm:$0xff]
                %1915 = vst [vmem:[%s1899 + $0x58] sm:$0xff] %v1914
              $region101: #{gatsby_forward.3} parent=95 // loop_footer
                %s1897 = sadd.s32 1, %s1893
              $region102: #{gatsby_forward.3} parent=95 // loop_footer_branch
                %1892 = sbr.rel target = $region98
              $region103: #{gatsby_forward.3} parent=95 // loop_exit
                _
            $region96: #{gatsby_forward.3} parent=91 // pred_fallthru
              _
            // Predicated region
            $region104: #{gatsby_forward.3} parent=91 // pred_check
              _
            $region105: #{gatsby_forward.3} parent=91 // pred_check_branch
              %1917 = sbr.rel target = $region107
            $region106: #{gatsby_forward.3} parent=91 // pred_region
              _
            $region107: #{gatsby_forward.3} parent=91 // pred_fallthru
              _
          $region92: #{gatsby_forward.3} parent=87 // pred_fallthru
            _
          %1918 = vnop
        $region88: #{gatsby_forward.3} parent=51 // pred_fallthru
          _
      $region52: #{gatsby_forward.3} parent=5 // pred_fallthru
        _
      %p1919 = scmp.le.s32.totalorder 2, %s23
      // Predicated region
      $region108: #{gatsby_forward.3} parent=5 // pred_check
        %p1920 = pneg %p1919
      $region109: #{gatsby_forward.3} parent=5 // pred_check_branch
        %1922 = sbr.rel (%p1920) target = $region111
      $region110: #{gatsby_forward.3} parent=5 // pred_region
        %s1923 = ssub.s32 %s23, 2
        // Predicated region
        $region112: #{gatsby_forward.3} parent=110 // pred_check
          %p1924 = pneg %p240
        $region113: #{gatsby_forward.3} parent=110 // pred_check_branch
          %1926 = sbr.rel (%p1924) target = $region115
        $region114: #{gatsby_forward.3} parent=110 // pred_region
          %s1927 = sand.u32 %s225, 1
          %s1928 = sand.u32 %s225, 1
          %s1929 = smul.addr %s1928, 64
          %s1930 = scalar_lea.vmem [#allocation15], %s1929
        $region115: #{gatsby_forward.3} parent=110 // pred_fallthru
          _
      $region111: #{gatsby_forward.3} parent=5 // pred_fallthru
        _
    $region6: #{gatsby_forward.3} parent=1 // loop_footer
      %s27 = sadd.s32 1, %s23
    $region7: #{gatsby_forward.3} parent=1 // loop_footer_branch
      %22 = sbr.rel target = $region3
    $region8: #{gatsby_forward.3} parent=1 // loop_exit
      _
    %1931 = vsyncpa [#allocation3], 1
    %s1932 = scalar_lea.sflag [#allocation3], 1
    %1933 = vsyncpa %s1932, 1
    %1934 = vsyncpa [#allocation5], 1
    %1935 = vsyncpa [#allocation8], 1
    %s1936 = scalar_lea.sflag [#allocation8], 1
    %1937 = vsyncpa %s1936, 1
    %1938 = vsyncpa [#allocation11], 1
    %s1939 = scalar_lea.sflag [#allocation11], 1
    %1940 = vsyncpa %s1939, 1
    %1941 = vsyncpa [#allocation14], 1

// kernel: gatsby_forward.5
$region0: #{gatsby_forward.5}
  #allocation0 [shape = 'u32[]', space=smem, size = 0x4, offset = 0x4, fixed_abs, tag = 'smem constant byte address 0x4 - core index']
  #allocation1 [shape = 'u32[72,128]{1,0:T(1,128)}', space=vmem, size = 0x9000, scoped, tag = 'internal scratch']
  %s0 = inlined_call_operand.vmem [shape: f32[16,2048], index: 0, kind: input, shape index: {}]
  %s1 = inlined_call_operand.hbm [shape: f32[1,1024], index: 1, kind: input, shape index: {}]
  %s2 = inlined_call_operand.vmem [shape: bf16[1024,32], index: 2, kind: input, shape index: {}]
  %s3 = inlined_call_operand.hbm [shape: f32[1,32], index: 3, kind: input, shape index: {}]
  %s4 = inlined_call_operand.hbm [shape: f32[16,32], index: 4, kind: output, shape index: {}]
  %s5 = sld [smem:[#allocation0]]
  $region34: #{gatsby_forward.5} parent=0
    _
  %s7 = ssub.s32 1, %s5
  %s8 = scalar_select 0, %s7, %s5
  $region1: #{gatsby_forward.5} parent=0
    #allocation2 [shape = 'u8[4096]{0}', space=vmem, size = 0x1000, scoped, tag = 'input window, operand 1, single buffered']
    #allocation3 [shape = 's32[1]{0}', space=sflag, size = 0x4, scoped, tag = 'scoped memory for gatsby_forward.5']
    #allocation4 [shape = 's32[1]{0}', space=sflag, size = 0x4, scoped, tag = 'scoped memory for gatsby_forward.5']
    #allocation5 [shape = 'u8[512]{0}', space=vmem, size = 0x400, scoped, tag = 'input window, operand 3, single buffered']
    #allocation6 [shape = 's32[1]{0}', space=sflag, size = 0x4, scoped, tag = 'scoped memory for gatsby_forward.5']
    #allocation7 [shape = 'u8[8192]{0}', space=vmem, size = 0x2000, scoped, tag = 'output window, operand 0, single buffered']
    %9 = vsyncpa [#allocation3], 0
    %10 = vsyncpa [#allocation6], 0
    %11 = vsyncpa [#allocation4], 0
    // Predicated region
    $region2: #{gatsby_forward.5} parent=1 // pred_check
      _
    $region3: #{gatsby_forward.5} parent=1 // pred_check_branch
      %13 = sbr.rel (0) target = $region5
    $region4: #{gatsby_forward.5} parent=1 // pred_region
      _
    $region5: #{gatsby_forward.5} parent=1 // pred_fallthru
      _
    // Predicated region
    $region6: #{gatsby_forward.5} parent=1 // pred_check
      _
    $region7: #{gatsby_forward.5} parent=1 // pred_check_branch
      %15 = sbr.rel (0) target = $region9
    $region8: #{gatsby_forward.5} parent=1 // pred_region
      %17 = vsyncadd [#allocation3], 0
      %s19 = sshll.u32 %s1, 4
      %s20 = int_to_ptr.hbm [resolvable:$true] %s19
      %s21 = sshll.u32 [#allocation2], 4
      %s22 = int_to_ptr.vmem [resolvable:$true] %s21
      %24 = dma.hbm_to_vmem [thread:$0]  %s20, 128, %s22, [#allocation3]
    $region9: #{gatsby_forward.5} parent=1 // pred_fallthru
      _
    // Predicated region
    $region10: #{gatsby_forward.5} parent=1 // pred_check
      _
    $region11: #{gatsby_forward.5} parent=1 // pred_check_branch
      %26 = sbr.rel (0) target = $region13
    $region12: #{gatsby_forward.5} parent=1 // pred_region
      _
    $region13: #{gatsby_forward.5} parent=1 // pred_fallthru
      _
    // Predicated region
    $region14: #{gatsby_forward.5} parent=1 // pred_check
      _
    $region15: #{gatsby_forward.5} parent=1 // pred_check_branch
      %28 = sbr.rel (0) target = $region17
    $region16: #{gatsby_forward.5} parent=1 // pred_region
      %30 = vsyncadd [#allocation6], 0
      %s32 = sshll.u32 %s3, 4
      %s33 = int_to_ptr.hbm [resolvable:$true] %s32
      %s34 = sshll.u32 [#allocation5], 4
      %s35 = int_to_ptr.vmem [resolvable:$true] %s34
      %37 = dma.hbm_to_vmem [thread:$0]  %s33, 16, %s35, [#allocation6]
    $region17: #{gatsby_forward.5} parent=1 // pred_fallthru
      _
    // Predicated region
    $region18: #{gatsby_forward.5} parent=1 // pred_check
      _
    $region19: #{gatsby_forward.5} parent=1 // pred_check_branch
      %39 = sbr.rel (0) target = $region21
    $region20: #{gatsby_forward.5} parent=1 // pred_region
      %41 = dma.done [#allocation3], 128
    $region21: #{gatsby_forward.5} parent=1 // pred_fallthru
      _
    // Predicated region
    $region22: #{gatsby_forward.5} parent=1 // pred_check
      _
    $region23: #{gatsby_forward.5} parent=1 // pred_check_branch
      %43 = sbr.rel (0) target = $region25
    $region24: #{gatsby_forward.5} parent=1 // pred_region
      %45 = dma.done [#allocation6], 16
    $region25: #{gatsby_forward.5} parent=1 // pred_fallthru
      _
    %v46 = vld [vmem:[%s0] sm:$0xff]
    %v47 = vld [vmem:[%s0 + $0x8] sm:$0xff]
    %v48 = vld [vmem:[%s0 + $0x10] sm:$0xff]
    %v49 = vld [vmem:[%s0 + $0x18] sm:$0xff]
    %v50 = vld [vmem:[%s0 + $0x20] sm:$0xff]
    %v51 = vld [vmem:[%s0 + $0x28] sm:$0xff]
    %v52 = vld [vmem:[%s0 + $0x30] sm:$0xff]
    %v53 = vld [vmem:[%s0 + $0x38] sm:$0xff]
    %v54 = vld [vmem:[%s0 + $0x80] sm:$0xff]
    %v55 = vld [vmem:[%s0 + $0x88] sm:$0xff]
    %v56 = vld [vmem:[%s0 + $0x90] sm:$0xff]
    %v57 = vld [vmem:[%s0 + $0x98] sm:$0xff]
    %v58 = vld [vmem:[%s0 + $0xa0] sm:$0xff]
    %v59 = vld [vmem:[%s0 + $0xa8] sm:$0xff]
    %v60 = vld [vmem:[%s0 + $0xb0] sm:$0xff]
    %v61 = vld [vmem:[%s0 + $0xb8] sm:$0xff]
    %v62 = vld [vmem:[%s0 + $0x40] sm:$0xff]
    %v63 = vld [vmem:[%s0 + $0x48] sm:$0xff]
    %v64 = vld [vmem:[%s0 + $0x50] sm:$0xff]
    %v65 = vld [vmem:[%s0 + $0x58] sm:$0xff]
    %v66 = vld [vmem:[%s0 + $0x60] sm:$0xff]
    %v67 = vld [vmem:[%s0 + $0x68] sm:$0xff]
    %v68 = vld [vmem:[%s0 + $0x70] sm:$0xff]
    %v69 = vld [vmem:[%s0 + $0x78] sm:$0xff]
    %v70 = vld [vmem:[%s0 + $0xc0] sm:$0xff]
    %v71 = vld [vmem:[%s0 + $0xc8] sm:$0xff]
    %v72 = vld [vmem:[%s0 + $0xd0] sm:$0xff]
    %v73 = vld [vmem:[%s0 + $0xd8] sm:$0xff]
    %v74 = vld [vmem:[%s0 + $0xe0] sm:$0xff]
    %v75 = vld [vmem:[%s0 + $0xe8] sm:$0xff]
    %v76 = vld [vmem:[%s0 + $0xf0] sm:$0xff]
    %v77 = vld [vmem:[%s0 + $0xf8] sm:$0xff]
    %v78 = vadd.f32 %v46, %v62
    %v79 = vadd.f32 %v47, %v63
    %v80 = vadd.f32 %v48, %v64
    %v81 = vadd.f32 %v49, %v65
    %v82 = vadd.f32 %v50, %v66
    %v83 = vadd.f32 %v51, %v67
    %v84 = vadd.f32 %v52, %v68
    %v85 = vadd.f32 %v53, %v69
    %v86 = vadd.f32 %v54, %v70
    %v87 = vadd.f32 %v55, %v71
    %v88 = vadd.f32 %v56, %v72
    %v89 = vadd.f32 %v57, %v73
    %v90 = vadd.f32 %v58, %v74
    %v91 = vadd.f32 %v59, %v75
    %v92 = vadd.f32 %v60, %v76
    %v93 = vadd.f32 %v61, %v77
    %v94 = vmul.f32 %v78, 0.5
    %v95 = vmul.f32 %v79, 0.5
    %v96 = vmul.f32 %v80, 0.5
    %v97 = vmul.f32 %v81, 0.5
    %v98 = vmul.f32 %v82, 0.5
    %v99 = vmul.f32 %v83, 0.5
    %v100 = vmul.f32 %v84, 0.5
    %v101 = vmul.f32 %v85, 0.5
    %v102 = vmul.f32 %v86, 0.5
    %v103 = vmul.f32 %v87, 0.5
    %v104 = vmul.f32 %v88, 0.5
    %v105 = vmul.f32 %v89, 0.5
    %v106 = vmul.f32 %v90, 0.5
    %v107 = vmul.f32 %v91, 0.5
    %v108 = vmul.f32 %v92, 0.5
    %v109 = vmul.f32 %v93, 0.5
    %v110 = vld [vmem:[#allocation2] sm:$0xff]
    %v112 = vperm.slane %v110, 0
    %v113 = vperm.slane %v110, 1
    %v114 = vperm.slane %v110, 2
    %v115 = vperm.slane %v110, 3
    %v116 = vperm.slane %v110, 4
    %v117 = vperm.slane %v110, 5
    %v118 = vperm.slane %v110, 6
    %v119 = vperm.slane %v110, 7
    %v128 = vadd.f32 %v94, %v112
    %v129 = vadd.f32 %v95, %v113
    %v130 = vadd.f32 %v96, %v114
    %v131 = vadd.f32 %v97, %v115
    %v132 = vadd.f32 %v98, %v116
    %v133 = vadd.f32 %v99, %v117
    %v134 = vadd.f32 %v100, %v118
    %v135 = vadd.f32 %v101, %v119
    %v136 = vadd.f32 %v102, %v112
    %v137 = vadd.f32 %v103, %v113
    %v138 = vadd.f32 %v104, %v114
    %v139 = vadd.f32 %v105, %v115
    %v140 = vadd.f32 %v106, %v116
    %v141 = vadd.f32 %v107, %v117
    %v142 = vadd.f32 %v108, %v118
    %v143 = vadd.f32 %v109, %v119
    %vm144 = vcmp.gt.f32.partialorder %v128, 0.0
    %vm145 = vcmp.gt.f32.partialorder %v129, 0.0
    %vm146 = vcmp.gt.f32.partialorder %v130, 0.0
    %vm147 = vcmp.gt.f32.partialorder %v131, 0.0
    %vm148 = vcmp.gt.f32.partialorder %v132, 0.0
    %vm149 = vcmp.gt.f32.partialorder %v133, 0.0
    %vm150 = vcmp.gt.f32.partialorder %v134, 0.0
    %vm151 = vcmp.gt.f32.partialorder %v135, 0.0
    %vm152 = vcmp.gt.f32.partialorder %v136, 0.0
    %vm153 = vcmp.gt.f32.partialorder %v137, 0.0
    %vm154 = vcmp.gt.f32.partialorder %v138, 0.0
    %vm155 = vcmp.gt.f32.partialorder %v139, 0.0
    %vm156 = vcmp.gt.f32.partialorder %v140, 0.0
    %vm157 = vcmp.gt.f32.partialorder %v141, 0.0
    %vm158 = vcmp.gt.f32.partialorder %v142, 0.0
    %vm159 = vcmp.gt.f32.partialorder %v143, 0.0
    %v160 = vmin.f32 %v128, 0.0
    %v161 = vmin.f32 %v129, 0.0
    %v162 = vmin.f32 %v130, 0.0
    %v163 = vmin.f32 %v131, 0.0
    %v164 = vmin.f32 %v132, 0.0
    %v165 = vmin.f32 %v133, 0.0
    %v166 = vmin.f32 %v134, 0.0
    %v167 = vmin.f32 %v135, 0.0
    %v168 = vmin.f32 %v136, 0.0
    %v169 = vmin.f32 %v137, 0.0
    %v170 = vmin.f32 %v138, 0.0
    %v171 = vmin.f32 %v139, 0.0
    %v172 = vmin.f32 %v140, 0.0
    %v173 = vmin.f32 %v141, 0.0
    %v174 = vmin.f32 %v142, 0.0
    %v175 = vmin.f32 %v143, 0.0
    %v176 = vmul.f32 %v160, 1.442695
    %v177 = vpow.pop %v176
    %v178 = vmul.f32 %v161, 1.442695
    %v179 = vpow.pop %v178
    %v180 = vmul.f32 %v162, 1.442695
    %v181 = vpow.pop %v180
    %v182 = vmul.f32 %v163, 1.442695
    %v183 = vpow.pop %v182
    %v184 = vmul.f32 %v164, 1.442695
    %v185 = vpow.pop %v184
    %v186 = vmul.f32 %v165, 1.442695
    %v187 = vpow.pop %v186
    %v188 = vmul.f32 %v166, 1.442695
    %v189 = vpow.pop %v188
    %v190 = vmul.f32 %v167, 1.442695
    %v191 = vpow.pop %v190
    %v192 = vmul.f32 %v168, 1.442695
    %v193 = vpow.pop %v192
    %v194 = vmul.f32 %v169, 1.442695
    %v195 = vpow.pop %v194
    %v196 = vmul.f32 %v170, 1.442695
    %v197 = vpow.pop %v196
    %v198 = vmul.f32 %v171, 1.442695
    %v199 = vpow.pop %v198
    %v200 = vmul.f32 %v172, 1.442695
    %v201 = vpow.pop %v200
    %v202 = vmul.f32 %v173, 1.442695
    %v203 = vpow.pop %v202
    %v204 = vmul.f32 %v174, 1.442695
    %v205 = vpow.pop %v204
    %v206 = vmul.f32 %v175, 1.442695
    %v207 = vpow.pop %v206
    %v208 = vsub.f32 %v177, 1.0
    %v209 = vsub.f32 %v179, 1.0
    %v210 = vsub.f32 %v181, 1.0
    %v211 = vsub.f32 %v183, 1.0
    %v212 = vsub.f32 %v185, 1.0
    %v213 = vsub.f32 %v187, 1.0
    %v214 = vsub.f32 %v189, 1.0
    %v215 = vsub.f32 %v191, 1.0
    %v216 = vsub.f32 %v193, 1.0
    %v217 = vsub.f32 %v195, 1.0
    %v218 = vsub.f32 %v197, 1.0
    %v219 = vsub.f32 %v199, 1.0
    %v220 = vsub.f32 %v201, 1.0
    %v221 = vsub.f32 %v203, 1.0
    %v222 = vsub.f32 %v205, 1.0
    %v223 = vsub.f32 %v207, 1.0
    %v224 = vsel %vm144, %v128, %v208
    %v225 = vsel %vm145, %v129, %v209
    %v226 = vsel %vm146, %v130, %v210
    %v227 = vsel %vm147, %v131, %v211
    %v228 = vsel %vm148, %v132, %v212
    %v229 = vsel %vm149, %v133, %v213
    %v230 = vsel %vm150, %v134, %v214
    %v231 = vsel %vm151, %v135, %v215
    %v232 = vsel %vm152, %v136, %v216
    %v233 = vsel %vm153, %v137, %v217
    %v234 = vsel %vm154, %v138, %v218
    %v235 = vsel %vm155, %v139, %v219
    %v236 = vsel %vm156, %v140, %v220
    %v237 = vsel %vm157, %v141, %v221
    %v238 = vsel %vm158, %v142, %v222
    %v239 = vsel %vm159, %v143, %v223
    %v240 = vpack.c.bf16 %v232, %v224
    %v241 = vpack.c.bf16 %v233, %v225
    %v242 = vpack.c.bf16 %v234, %v226
    %v243 = vpack.c.bf16 %v235, %v227
    %v244 = vpack.c.bf16 %v236, %v228
    %v245 = vpack.c.bf16 %v237, %v229
    %v246 = vpack.c.bf16 %v238, %v230
    %v247 = vpack.c.bf16 %v239, %v231
    %v248 = vld [vmem:[%s2] sm:$0xf]
    %v249 = vld [vmem:[%s2 + $0x4] sm:$0xf]
    %v250 = vld [vmem:[%s2 + $0x8] sm:$0xf]
    %v251 = vld [vmem:[%s2 + $0xc] sm:$0xf]
    %v252 = vld [vmem:[%s2 + $0x10] sm:$0xf]
    %v253 = vld [vmem:[%s2 + $0x14] sm:$0xf]
    %v254 = vld [vmem:[%s2 + $0x18] sm:$0xf]
    %v255 = vld [vmem:[%s2 + $0x1c] sm:$0xf]
    %v256 = vld [vmem:[%s2 + $0x20] sm:$0xf]
    %v257 = vld [vmem:[%s2 + $0x24] sm:$0xf]
    %v258 = vld [vmem:[%s2 + $0x28] sm:$0xf]
    %v259 = vld [vmem:[%s2 + $0x2c] sm:$0xf]
    %v260 = vld [vmem:[%s2 + $0x30] sm:$0xf]
    %v261 = vld [vmem:[%s2 + $0x34] sm:$0xf]
    %v262 = vld [vmem:[%s2 + $0x38] sm:$0xf]
    %v263 = vld [vmem:[%s2 + $0x3c] sm:$0xf]
    %v264 = vld [vmem:[%s2 + $0x40] sm:$0xf]
    %v265 = vld [vmem:[%s2 + $0x44] sm:$0xf]
    %v266 = vld [vmem:[%s2 + $0x48] sm:$0xf]
    %v267 = vld [vmem:[%s2 + $0x4c] sm:$0xf]
    %v268 = vld [vmem:[%s2 + $0x50] sm:$0xf]
    %v269 = vld [vmem:[%s2 + $0x54] sm:$0xf]
    %v270 = vld [vmem:[%s2 + $0x58] sm:$0xf]
    %v271 = vld [vmem:[%s2 + $0x5c] sm:$0xf]
    %v272 = vld [vmem:[%s2 + $0x60] sm:$0xf]
    %v273 = vld [vmem:[%s2 + $0x64] sm:$0xf]
    %v274 = vld [vmem:[%s2 + $0x68] sm:$0xf]
    %v275 = vld [vmem:[%s2 + $0x6c] sm:$0xf]
    %v276 = vld [vmem:[%s2 + $0x70] sm:$0xf]
    %v277 = vld [vmem:[%s2 + $0x74] sm:$0xf]
    %v278 = vld [vmem:[%s2 + $0x78] sm:$0xf]
    %v279 = vld [vmem:[%s2 + $0x7c] sm:$0xf]
    %v280 = vld [vmem:[%s2 + $0x80] sm:$0xf]
    %v281 = vld [vmem:[%s2 + $0x84] sm:$0xf]
    %v282 = vld [vmem:[%s2 + $0x88] sm:$0xf]
    %v283 = vld [vmem:[%s2 + $0x8c] sm:$0xf]
    %v284 = vld [vmem:[%s2 + $0x90] sm:$0xf]
    %v285 = vld [vmem:[%s2 + $0x94] sm:$0xf]
    %v286 = vld [vmem:[%s2 + $0x98] sm:$0xf]
    %v287 = vld [vmem:[%s2 + $0x9c] sm:$0xf]
    %v288 = vld [vmem:[%s2 + $0xa0] sm:$0xf]
    %v289 = vld [vmem:[%s2 + $0xa4] sm:$0xf]
    %v290 = vld [vmem:[%s2 + $0xa8] sm:$0xf]
    %v291 = vld [vmem:[%s2 + $0xac] sm:$0xf]
    %v292 = vld [vmem:[%s2 + $0xb0] sm:$0xf]
    %v293 = vld [vmem:[%s2 + $0xb4] sm:$0xf]
    %v294 = vld [vmem:[%s2 + $0xb8] sm:$0xf]
    %v295 = vld [vmem:[%s2 + $0xbc] sm:$0xf]
    %v296 = vld [vmem:[%s2 + $0xc0] sm:$0xf]
    %v297 = vld [vmem:[%s2 + $0xc4] sm:$0xf]
    %v298 = vld [vmem:[%s2 + $0xc8] sm:$0xf]
    %v299 = vld [vmem:[%s2 + $0xcc] sm:$0xf]
    %v300 = vld [vmem:[%s2 + $0xd0] sm:$0xf]
    %v301 = vld [vmem:[%s2 + $0xd4] sm:$0xf]
    %v302 = vld [vmem:[%s2 + $0xd8] sm:$0xf]
    %v303 = vld [vmem:[%s2 + $0xdc] sm:$0xf]
    %v304 = vld [vmem:[%s2 + $0xe0] sm:$0xf]
    %v305 = vld [vmem:[%s2 + $0xe4] sm:$0xf]
    %v306 = vld [vmem:[%s2 + $0xe8] sm:$0xf]
    %v307 = vld [vmem:[%s2 + $0xec] sm:$0xf]
    %v308 = vld [vmem:[%s2 + $0xf0] sm:$0xf]
    %v309 = vld [vmem:[%s2 + $0xf4] sm:$0xf]
    %v310 = vld [vmem:[%s2 + $0xf8] sm:$0xf]
    %v311 = vld [vmem:[%s2 + $0xfc] sm:$0xf]
    %v312 = vld [vmem:[%s2 + $0x100] sm:$0xf]
    %v313 = vld [vmem:[%s2 + $0x104] sm:$0xf]
    %v314 = vld [vmem:[%s2 + $0x108] sm:$0xf]
    %v315 = vld [vmem:[%s2 + $0x10c] sm:$0xf]
    %v316 = vld [vmem:[%s2 + $0x110] sm:$0xf]
    %v317 = vld [vmem:[%s2 + $0x114] sm:$0xf]
    %v318 = vld [vmem:[%s2 + $0x118] sm:$0xf]
    %v319 = vld [vmem:[%s2 + $0x11c] sm:$0xf]
    %v320 = vld [vmem:[%s2 + $0x120] sm:$0xf]
    %v321 = vld [vmem:[%s2 + $0x124] sm:$0xf]
    %v322 = vld [vmem:[%s2 + $0x128] sm:$0xf]
    %v323 = vld [vmem:[%s2 + $0x12c] sm:$0xf]
    %v324 = vld [vmem:[%s2 + $0x130] sm:$0xf]
    %v325 = vld [vmem:[%s2 + $0x134] sm:$0xf]
    %v326 = vld [vmem:[%s2 + $0x138] sm:$0xf]
    %v327 = vld [vmem:[%s2 + $0x13c] sm:$0xf]
    %v328 = vld [vmem:[%s2 + $0x140] sm:$0xf]
    %v329 = vld [vmem:[%s2 + $0x144] sm:$0xf]
    %v330 = vld [vmem:[%s2 + $0x148] sm:$0xf]
    %v331 = vld [vmem:[%s2 + $0x14c] sm:$0xf]
    %v332 = vld [vmem:[%s2 + $0x150] sm:$0xf]
    %v333 = vld [vmem:[%s2 + $0x154] sm:$0xf]
    %v334 = vld [vmem:[%s2 + $0x158] sm:$0xf]
    %v335 = vld [vmem:[%s2 + $0x15c] sm:$0xf]
    %v336 = vld [vmem:[%s2 + $0x160] sm:$0xf]
    %v337 = vld [vmem:[%s2 + $0x164] sm:$0xf]
    %v338 = vld [vmem:[%s2 + $0x168] sm:$0xf]
    %v339 = vld [vmem:[%s2 + $0x16c] sm:$0xf]
    %v340 = vld [vmem:[%s2 + $0x170] sm:$0xf]
    %v341 = vld [vmem:[%s2 + $0x174] sm:$0xf]
    %v342 = vld [vmem:[%s2 + $0x178] sm:$0xf]
    %v343 = vld [vmem:[%s2 + $0x17c] sm:$0xf]
    %v344 = vld [vmem:[%s2 + $0x180] sm:$0xf]
    %v345 = vld [vmem:[%s2 + $0x184] sm:$0xf]
    %v346 = vld [vmem:[%s2 + $0x188] sm:$0xf]
    %v347 = vld [vmem:[%s2 + $0x18c] sm:$0xf]
    %v348 = vld [vmem:[%s2 + $0x190] sm:$0xf]
    %v349 = vld [vmem:[%s2 + $0x194] sm:$0xf]
    %v350 = vld [vmem:[%s2 + $0x198] sm:$0xf]
    %v351 = vld [vmem:[%s2 + $0x19c] sm:$0xf]
    %v352 = vld [vmem:[%s2 + $0x1a0] sm:$0xf]
    %v353 = vld [vmem:[%s2 + $0x1a4] sm:$0xf]
    %v354 = vld [vmem:[%s2 + $0x1a8] sm:$0xf]
    %v355 = vld [vmem:[%s2 + $0x1ac] sm:$0xf]
    %v356 = vld [vmem:[%s2 + $0x1b0] sm:$0xf]
    %v357 = vld [vmem:[%s2 + $0x1b4] sm:$0xf]
    %v358 = vld [vmem:[%s2 + $0x1b8] sm:$0xf]
    %v359 = vld [vmem:[%s2 + $0x1bc] sm:$0xf]
    %v360 = vld [vmem:[%s2 + $0x1c0] sm:$0xf]
    %v361 = vld [vmem:[%s2 + $0x1c4] sm:$0xf]
    %v362 = vld [vmem:[%s2 + $0x1c8] sm:$0xf]
    %v363 = vld [vmem:[%s2 + $0x1cc] sm:$0xf]
    %v364 = vld [vmem:[%s2 + $0x1d0] sm:$0xf]
    %v365 = vld [vmem:[%s2 + $0x1d4] sm:$0xf]
    %v366 = vld [vmem:[%s2 + $0x1d8] sm:$0xf]
    %v367 = vld [vmem:[%s2 + $0x1dc] sm:$0xf]
    %v368 = vld [vmem:[%s2 + $0x1e0] sm:$0xf]
    %v369 = vld [vmem:[%s2 + $0x1e4] sm:$0xf]
    %v370 = vld [vmem:[%s2 + $0x1e8] sm:$0xf]
    %v371 = vld [vmem:[%s2 + $0x1ec] sm:$0xf]
    %v372 = vld [vmem:[%s2 + $0x1f0] sm:$0xf]
    %v373 = vld [vmem:[%s2 + $0x1f4] sm:$0xf]
    %v374 = vld [vmem:[%s2 + $0x1f8] sm:$0xf]
    %v375 = vld [vmem:[%s2 + $0x1fc] sm:$0xf]
    %v376 = vld [vmem:[#allocation5] sm:$0x1]
    %v378 = vperm.slane %v376, 0
    %v508 = vunpack.c.l.b16 %v248
    %v509 = vunpack.c.l.b16 %v249
    %v510 = vunpack.c.l.b16 %v250
    %v511 = vunpack.c.l.b16 %v251
    %v512 = vunpack.c.l.b16 %v252
    %v513 = vunpack.c.l.b16 %v253
    %v514 = vunpack.c.l.b16 %v254
    %v515 = vunpack.c.l.b16 %v255
    %v516 = vunpack.c.l.b16 %v256
    %v517 = vunpack.c.l.b16 %v257
    %v518 = vunpack.c.l.b16 %v258
    %v519 = vunpack.c.l.b16 %v259
    %v520 = vunpack.c.l.b16 %v260
    %v521 = vunpack.c.l.b16 %v261
    %v522 = vunpack.c.l.b16 %v262
    %v523 = vunpack.c.l.b16 %v263
    %v524 = vunpack.c.l.b16 %v264
    %v525 = vunpack.c.l.b16 %v265
    %v526 = vunpack.c.l.b16 %v266
    %v527 = vunpack.c.l.b16 %v267
    %v528 = vunpack.c.l.b16 %v268
    %v529 = vunpack.c.l.b16 %v269
    %v530 = vunpack.c.l.b16 %v270
    %v531 = vunpack.c.l.b16 %v271
    %v532 = vunpack.c.l.b16 %v272
    %v533 = vunpack.c.l.b16 %v273
    %v534 = vunpack.c.l.b16 %v274
    %v535 = vunpack.c.l.b16 %v275
    %v536 = vunpack.c.l.b16 %v276
    %v537 = vunpack.c.l.b16 %v277
    %v538 = vunpack.c.l.b16 %v278
    %v539 = vunpack.c.l.b16 %v279
    %v540 = vunpack.c.l.b16 %v280
    %v541 = vunpack.c.l.b16 %v281
    %v542 = vunpack.c.l.b16 %v282
    %v543 = vunpack.c.l.b16 %v283
    %v544 = vunpack.c.l.b16 %v284
    %v545 = vunpack.c.l.b16 %v285
    %v546 = vunpack.c.l.b16 %v286
    %v547 = vunpack.c.l.b16 %v287
    %v548 = vunpack.c.l.b16 %v288
    %v549 = vunpack.c.l.b16 %v289
    %v550 = vunpack.c.l.b16 %v290
    %v551 = vunpack.c.l.b16 %v291
    %v552 = vunpack.c.l.b16 %v292
    %v553 = vunpack.c.l.b16 %v293
    %v554 = vunpack.c.l.b16 %v294
    %v555 = vunpack.c.l.b16 %v295
    %v556 = vunpack.c.l.b16 %v296
    %v557 = vunpack.c.l.b16 %v297
    %v558 = vunpack.c.l.b16 %v298
    %v559 = vunpack.c.l.b16 %v299
    %v560 = vunpack.c.l.b16 %v300
    %v561 = vunpack.c.l.b16 %v301
    %v562 = vunpack.c.l.b16 %v302
    %v563 = vunpack.c.l.b16 %v303
    %v564 = vunpack.c.l.b16 %v304
    %v565 = vunpack.c.l.b16 %v305
    %v566 = vunpack.c.l.b16 %v306
    %v567 = vunpack.c.l.b16 %v307
    %v568 = vunpack.c.l.b16 %v308
    %v569 = vunpack.c.l.b16 %v309
    %v570 = vunpack.c.l.b16 %v310
    %v571 = vunpack.c.l.b16 %v311
    %v572 = vunpack.c.l.b16 %v312
    %v573 = vunpack.c.l.b16 %v313
    %v574 = vunpack.c.l.b16 %v314
    %v575 = vunpack.c.l.b16 %v315
    %v576 = vunpack.c.l.b16 %v316
    %v577 = vunpack.c.l.b16 %v317
    %v578 = vunpack.c.l.b16 %v318
    %v579 = vunpack.c.l.b16 %v319
    %v580 = vunpack.c.l.b16 %v320
    %v581 = vunpack.c.l.b16 %v321
    %v582 = vunpack.c.l.b16 %v322
    %v583 = vunpack.c.l.b16 %v323
    %v584 = vunpack.c.l.b16 %v324
    %v585 = vunpack.c.l.b16 %v325
    %v586 = vunpack.c.l.b16 %v326
    %v587 = vunpack.c.l.b16 %v327
    %v588 = vunpack.c.l.b16 %v328
    %v589 = vunpack.c.l.b16 %v329
    %v590 = vunpack.c.l.b16 %v330
    %v591 = vunpack.c.l.b16 %v331
    %v592 = vunpack.c.l.b16 %v332
    %v593 = vunpack.c.l.b16 %v333
    %v594 = vunpack.c.l.b16 %v334
    %v595 = vunpack.c.l.b16 %v335
    %v596 = vunpack.c.l.b16 %v336
    %v597 = vunpack.c.l.b16 %v337
    %v598 = vunpack.c.l.b16 %v338
    %v599 = vunpack.c.l.b16 %v339
    %v600 = vunpack.c.l.b16 %v340
    %v601 = vunpack.c.l.b16 %v341
    %v602 = vunpack.c.l.b16 %v342
    %v603 = vunpack.c.l.b16 %v343
    %v604 = vunpack.c.l.b16 %v344
    %v605 = vunpack.c.l.b16 %v345
    %v606 = vunpack.c.l.b16 %v346
    %v607 = vunpack.c.l.b16 %v347
    %v608 = vunpack.c.l.b16 %v348
    %v609 = vunpack.c.l.b16 %v349
    %v610 = vunpack.c.l.b16 %v350
    %v611 = vunpack.c.l.b16 %v351
    %v612 = vunpack.c.l.b16 %v352
    %v613 = vunpack.c.l.b16 %v353
    %v614 = vunpack.c.l.b16 %v354
    %v615 = vunpack.c.l.b16 %v355
    %v616 = vunpack.c.l.b16 %v356
    %v617 = vunpack.c.l.b16 %v357
    %v618 = vunpack.c.l.b16 %v358
    %v619 = vunpack.c.l.b16 %v359
    %v620 = vunpack.c.l.b16 %v360
    %v621 = vunpack.c.l.b16 %v361
    %v622 = vunpack.c.l.b16 %v362
    %v623 = vunpack.c.l.b16 %v363
    %v624 = vunpack.c.l.b16 %v364
    %v625 = vunpack.c.l.b16 %v365
    %v626 = vunpack.c.l.b16 %v366
    %v627 = vunpack.c.l.b16 %v367
    %v628 = vunpack.c.l.b16 %v368
    %v629 = vunpack.c.l.b16 %v369
    %v630 = vunpack.c.l.b16 %v370
    %v631 = vunpack.c.l.b16 %v371
    %v632 = vunpack.c.l.b16 %v372
    %v633 = vunpack.c.l.b16 %v373
    %v634 = vunpack.c.l.b16 %v374
    %v635 = vunpack.c.l.b16 %v375
    %v636 = vpack.c.b16 %v509, %v508
    %v637 = vpack.c.b16 %v511, %v510
    %v638 = vpack.c.b16 %v513, %v512
    %v639 = vpack.c.b16 %v515, %v514
    %v640 = vpack.c.b16 %v517, %v516
    %v641 = vpack.c.b16 %v519, %v518
    %v642 = vpack.c.b16 %v521, %v520
    %v643 = vpack.c.b16 %v523, %v522
    %v644 = vpack.c.b16 %v525, %v524
    %v645 = vpack.c.b16 %v527, %v526
    %v646 = vpack.c.b16 %v529, %v528
    %v647 = vpack.c.b16 %v531, %v530
    %v648 = vpack.c.b16 %v533, %v532
    %v649 = vpack.c.b16 %v535, %v534
    %v650 = vpack.c.b16 %v537, %v536
    %v651 = vpack.c.b16 %v539, %v538
    %v652 = vpack.c.b16 %v541, %v540
    %v653 = vpack.c.b16 %v543, %v542
    %v654 = vpack.c.b16 %v545, %v544
    %v655 = vpack.c.b16 %v547, %v546
    %v656 = vpack.c.b16 %v549, %v548
    %v657 = vpack.c.b16 %v551, %v550
    %v658 = vpack.c.b16 %v553, %v552
    %v659 = vpack.c.b16 %v555, %v554
    %v660 = vpack.c.b16 %v557, %v556
    %v661 = vpack.c.b16 %v559, %v558
    %v662 = vpack.c.b16 %v561, %v560
    %v663 = vpack.c.b16 %v563, %v562
    %v664 = vpack.c.b16 %v565, %v564
    %v665 = vpack.c.b16 %v567, %v566
    %v666 = vpack.c.b16 %v569, %v568
    %v667 = vpack.c.b16 %v571, %v570
    %v668 = vpack.c.b16 %v573, %v572
    %v669 = vpack.c.b16 %v575, %v574
    %v670 = vpack.c.b16 %v577, %v576
    %v671 = vpack.c.b16 %v579, %v578
    %v672 = vpack.c.b16 %v581, %v580
    %v673 = vpack.c.b16 %v583, %v582
    %v674 = vpack.c.b16 %v585, %v584
    %v675 = vpack.c.b16 %v587, %v586
    %v676 = vpack.c.b16 %v589, %v588
    %v677 = vpack.c.b16 %v591, %v590
    %v678 = vpack.c.b16 %v593, %v592
    %v679 = vpack.c.b16 %v595, %v594
    %v680 = vpack.c.b16 %v597, %v596
    %v681 = vpack.c.b16 %v599, %v598
    %v682 = vpack.c.b16 %v601, %v600
    %v683 = vpack.c.b16 %v603, %v602
    %v684 = vpack.c.b16 %v605, %v604
    %v685 = vpack.c.b16 %v607, %v606
    %v686 = vpack.c.b16 %v609, %v608
    %v687 = vpack.c.b16 %v611, %v610
    %v688 = vpack.c.b16 %v613, %v612
    %v689 = vpack.c.b16 %v615, %v614
    %v690 = vpack.c.b16 %v617, %v616
    %v691 = vpack.c.b16 %v619, %v618
    %v692 = vpack.c.b16 %v621, %v620
    %v693 = vpack.c.b16 %v623, %v622
    %v694 = vpack.c.b16 %v625, %v624
    %v695 = vpack.c.b16 %v627, %v626
    %v696 = vpack.c.b16 %v629, %v628
    %v697 = vpack.c.b16 %v631, %v630
    %v698 = vpack.c.b16 %v633, %v632
    %v699 = vpack.c.b16 %v635, %v634
    %764 = vmatpush.bf16.msra.mxu0 %v643
    %765 = vmatpush.bf16.msra.mxu0 %v642
    %766 = vmatpush.bf16.msra.mxu0 %v641
    %767 = vmatpush.bf16.msra.mxu0 %v640
    %768 = vmatpush.bf16.msra.mxu0 %v639
    %769 = vmatpush.bf16.msra.mxu0 %v638
    %770 = vmatpush.bf16.msra.mxu0 %v637
    %771 = vmatpush.bf16.msra.mxu0 %v636
    %772 = vmatmul.bf16.gmra.mxu0 %v240
    %v773 = vpop.f32.mrf.mxu0
    %v774 = vadd.f32 %v378, %v773
    %v775 = vpop.f32.mrf.mxu0
    %v776 = vadd.f32 %v378, %v775
    %777 = vdwg.mxu0
    %778 = vmatpush.bf16.msra.mxu0 %v651
    %779 = vmatpush.bf16.msra.mxu0 %v650
    %780 = vmatpush.bf16.msra.mxu0 %v649
    %781 = vmatpush.bf16.msra.mxu0 %v648
    %782 = vmatpush.bf16.msra.mxu0 %v647
    %783 = vmatpush.bf16.msra.mxu0 %v646
    %784 = vmatpush.bf16.msra.mxu0 %v645
    %785 = vmatpush.bf16.msra.mxu0 %v644
    %786 = vmatmul.bf16.gmra.mxu0 %v241
    %v787 = vpop.f32.mrf.mxu0
    %v788 = vadd.f32 %v774, %v787
    %v789 = vpop.f32.mrf.mxu0
    %v790 = vadd.f32 %v776, %v789
    %791 = vdwg.mxu0
    %792 = vmatpush.bf16.msra.mxu0 %v659
    %793 = vmatpush.bf16.msra.mxu0 %v658
    %794 = vmatpush.bf16.msra.mxu0 %v657
    %795 = vmatpush.bf16.msra.mxu0 %v656
    %796 = vmatpush.bf16.msra.mxu0 %v655
    %797 = vmatpush.bf16.msra.mxu0 %v654
    %798 = vmatpush.bf16.msra.mxu0 %v653
    %799 = vmatpush.bf16.msra.mxu0 %v652
    %800 = vmatmul.bf16.gmra.mxu0 %v242
    %v801 = vpop.f32.mrf.mxu0
    %v802 = vadd.f32 %v788, %v801
    %v803 = vpop.f32.mrf.mxu0
    %v804 = vadd.f32 %v790, %v803
    %805 = vdwg.mxu0
    %806 = vmatpush.bf16.msra.mxu0 %v667
    %807 = vmatpush.bf16.msra.mxu0 %v666
    %808 = vmatpush.bf16.msra.mxu0 %v665
    %809 = vmatpush.bf16.msra.mxu0 %v664
    %810 = vmatpush.bf16.msra.mxu0 %v663
    %811 = vmatpush.bf16.msra.mxu0 %v662
    %812 = vmatpush.bf16.msra.mxu0 %v661
    %813 = vmatpush.bf16.msra.mxu0 %v660
    %814 = vmatmul.bf16.gmra.mxu0 %v243
    %v815 = vpop.f32.mrf.mxu0
    %v816 = vadd.f32 %v802, %v815
    %v817 = vpop.f32.mrf.mxu0
    %v818 = vadd.f32 %v804, %v817
    %819 = vdwg.mxu0
    %820 = vmatpush.bf16.msra.mxu0 %v675
    %821 = vmatpush.bf16.msra.mxu0 %v674
    %822 = vmatpush.bf16.msra.mxu0 %v673
    %823 = vmatpush.bf16.msra.mxu0 %v672
    %824 = vmatpush.bf16.msra.mxu0 %v671
    %825 = vmatpush.bf16.msra.mxu0 %v670
    %826 = vmatpush.bf16.msra.mxu0 %v669
    %827 = vmatpush.bf16.msra.mxu0 %v668
    %828 = vmatmul.bf16.gmra.mxu0 %v244
    %v829 = vpop.f32.mrf.mxu0
    %v830 = vadd.f32 %v816, %v829
    %v831 = vpop.f32.mrf.mxu0
    %v832 = vadd.f32 %v818, %v831
    %833 = vdwg.mxu0
    %834 = vmatpush.bf16.msra.mxu0 %v683
    %835 = vmatpush.bf16.msra.mxu0 %v682
    %836 = vmatpush.bf16.msra.mxu0 %v681
    %837 = vmatpush.bf16.msra.mxu0 %v680
    %838 = vmatpush.bf16.msra.mxu0 %v679
    %839 = vmatpush.bf16.msra.mxu0 %v678
    %840 = vmatpush.bf16.msra.mxu0 %v677
    %841 = vmatpush.bf16.msra.mxu0 %v676
    %842 = vmatmul.bf16.gmra.mxu0 %v245
    %v843 = vpop.f32.mrf.mxu0
    %v844 = vadd.f32 %v830, %v843
    %v845 = vpop.f32.mrf.mxu0
    %v846 = vadd.f32 %v832, %v845
    %847 = vdwg.mxu0
    %848 = vmatpush.bf16.msra.mxu0 %v691
    %849 = vmatpush.bf16.msra.mxu0 %v690
    %850 = vmatpush.bf16.msra.mxu0 %v689
    %851 = vmatpush.bf16.msra.mxu0 %v688
    %852 = vmatpush.bf16.msra.mxu0 %v687
    %853 = vmatpush.bf16.msra.mxu0 %v686
    %854 = vmatpush.bf16.msra.mxu0 %v685
    %855 = vmatpush.bf16.msra.mxu0 %v684
    %856 = vmatmul.bf16.gmra.mxu0 %v246
    %v857 = vpop.f32.mrf.mxu0
    %v858 = vadd.f32 %v844, %v857
    %v859 = vpop.f32.mrf.mxu0
    %v860 = vadd.f32 %v846, %v859
    %861 = vdwg.mxu0
    %862 = vmatpush.bf16.msra.mxu0 %v699
    %863 = vmatpush.bf16.msra.mxu0 %v698
    %864 = vmatpush.bf16.msra.mxu0 %v697
    %865 = vmatpush.bf16.msra.mxu0 %v696
    %866 = vmatpush.bf16.msra.mxu0 %v695
    %867 = vmatpush.bf16.msra.mxu0 %v694
    %868 = vmatpush.bf16.msra.mxu0 %v693
    %869 = vmatpush.bf16.msra.mxu0 %v692
    %870 = vmatmul.bf16.gmra.mxu0 %v247
    %v871 = vpop.f32.mrf.mxu0
    %v872 = vadd.f32 %v858, %v871
    %v873 = vpop.f32.mrf.mxu0
    %v874 = vadd.f32 %v860, %v873
    %875 = vdwg.mxu0
    %vm876 = vcmask 261120
    %877 = vst.msk [vmem:[#allocation7] sm:$0xff] %vm876, %v872
    %878 = vst.msk [vmem:[#allocation7 + $0x8] sm:$0xff] %vm876, %v874
    // Predicated region
    $region26: #{gatsby_forward.5} parent=1 // pred_check
      _
    $region27: #{gatsby_forward.5} parent=1 // pred_check_branch
      %880 = sbr.rel (0) target = $region29
    $region28: #{gatsby_forward.5} parent=1 // pred_region
      %882 = vsyncadd [#allocation4], 0
      %s883 = sshll.u32 [#allocation7], 4
      %s884 = int_to_ptr.vmem [resolvable:$true] %s883
      %s885 = sshll.u32 %s4, 4
      %s886 = int_to_ptr.hbm [resolvable:$true] %s885
      %891 = dma.vmem_to_hbm [thread:$0]  %s884, 256, %s886, [#allocation4], 128, 128, 8
    $region29: #{gatsby_forward.5} parent=1 // pred_fallthru
      _
    // Predicated region
    $region30: #{gatsby_forward.5} parent=1 // pred_check
      _
    $region31: #{gatsby_forward.5} parent=1 // pred_check_branch
      %893 = sbr.rel (0) target = $region33
    $region32: #{gatsby_forward.5} parent=1 // pred_region
      %895 = dma.done [#allocation4], 256
    $region33: #{gatsby_forward.5} parent=1 // pred_fallthru
      _
    %896 = vsyncpa [#allocation3], 1
    %897 = vsyncpa [#allocation6], 1
    %898 = vsyncpa [#allocation4], 1

// kernel: gatsby_forward.4
$region0: #{gatsby_forward.4}
  #allocation0 [shape = 'u32[]', space=smem, size = 0x4, offset = 0x4, fixed_abs, tag = 'smem constant byte address 0x4 - core index']
  #allocation1 [shape = 'u32[72,128]{1,0:T(1,128)}', space=vmem, size = 0x9000, scoped, tag = 'internal scratch']
  %s0 = inlined_call_operand.vmem [shape: f32[16,1024], index: 0, kind: input, shape index: {}]
  %s1 = inlined_call_operand.hbm [shape: f32[16,1024], index: 1, kind: input, shape index: {}]
  %s2 = inlined_call_operand.hbm [shape: f32[16,1024], index: 2, kind: input, shape index: {}]
  %s3 = inlined_call_operand.hbm [shape: bf16[1024,1024], index: 3, kind: input, shape index: {}]
  %s4 = inlined_call_operand.hbm [shape: f32[1,1024], index: 4, kind: input, shape index: {}]
  %s5 = inlined_call_operand.hbm [shape: bf16[1024,2048], index: 5, kind: input, shape index: {}]
  %s6 = inlined_call_operand.hbm [shape: f32[2,1,1024], index: 6, kind: input, shape index: {}]
  %s7 = inlined_call_operand.hbm [shape: f32[2,1,1024], index: 7, kind: input, shape index: {}]
  %s8 = inlined_call_operand.hbm [shape: f32[16,16], index: 8, kind: input, shape index: {}]
  %s9 = inlined_call_operand.vmem [shape: f32[16,2048], index: 9, kind: output, shape index: {}]
  %s10 = sld [smem:[#allocation0]]
  $region120: #{gatsby_forward.4} parent=0
    _
  %s12 = ssub.s32 1, %s10
  %s13 = scalar_select 0, %s12, %s10
  $region1: #{gatsby_forward.4} parent=0
    #allocation2 [shape = 'u8[65536]{0}', space=vmem, size = 0x10000, scoped, tag = 'input window, operand 1, single buffered']
    #allocation3 [shape = 's32[2]{0}', space=sflag, size = 0x8, scoped, tag = 'scoped memory for gatsby_forward.4']
    #allocation4 [shape = 'u8[65536]{0}', space=vmem, size = 0x10000, scoped, tag = 'input window, operand 2, single buffered']
    #allocation5 [shape = 's32[1]{0}', space=sflag, size = 0x4, scoped, tag = 'scoped memory for gatsby_forward.4']
    #allocation6 [shape = 'u8[2097152]{0}', space=vmem, size = 0x200000, scoped, tag = 'input window, operand 3, single buffered']
    #allocation7 [shape = 'u8[4096]{0}', space=vmem, size = 0x1000, scoped, tag = 'input window, operand 4, single buffered']
    #allocation8 [shape = 's32[1]{0}', space=sflag, size = 0x4, scoped, tag = 'scoped memory for gatsby_forward.4']
    #allocation9 [shape = 'u8[4194304]{0}', space=vmem, size = 0x400000, scoped, tag = 'input window, operand 5']
    #allocation10 [shape = 'u8[8192]{0}', space=vmem, size = 0x2000, scoped, tag = 'input window, operand 6']
    #allocation11 [shape = 'u8[8192]{0}', space=vmem, size = 0x2000, scoped, tag = 'input window, operand 7']
    #allocation12 [shape = 'u8[8192]{0}', space=vmem, size = 0x2000, scoped, tag = 'input window, operand 8, single buffered']
    #allocation13 [shape = 'u8[131072]{0}', space=vmem, size = 0x20000, scoped, tag = 'output window, operand 0']
    %14 = vsyncpa [#allocation3], 0
    %15 = vsyncpa [#allocation5], 0
    %16 = vsyncpa [#allocation8], 0
    loop: start=0, step=1, limit=4
    $region2: #{gatsby_forward.4} parent=1 // loop_pre_header
      _
    $region3: #{gatsby_forward.4} parent=1 // loop_header
      %s18 = sphi 0, %s22
      %p19 = scmp.ge.s32.totalorder %s18, 4
      %s26 = sphi 0, %s26
      %s28 = sphi 0, %s26
      %s29 = sphi 0, %s28
      %s43 = sphi 0, %s29
      %s47 = sphi 0, %s47
      %s49 = sphi 0, %s47
      %s50 = sphi 0, %s49
      %s64 = sphi 0, %s50
      %s68 = sphi 0, %s68
      %s70 = sphi 0, %s68
      %s71 = sphi 0, %s70
      %s85 = sphi 0, %s71
      %s89 = sphi 0, %s89
      %s91 = sphi 0, %s89
      %s92 = sphi 0, %s91
      %s106 = sphi 0, %s92
      %s110 = sphi 0, %s110
      %s112 = sphi 0, %s110
      %s113 = sphi 0, %s112
      %s127 = sphi 0, %s113
      %s133 = sphi 0, %s135
      %s136 = sphi 0, %s133
      %s137 = sphi 0, %s136
      %s153 = sphi 0, %s137
      %s159 = sphi 0, %s161
      %s162 = sphi 0, %s159
      %s163 = sphi 0, %s162
      %s179 = sphi 0, %s163
      %s185 = sphi 0, %s187
      %s188 = sphi 0, %s185
      %s189 = sphi 0, %s188
      %s205 = sphi 0, %s189
      %s209 = sphi 0, %s209
      %s211 = sphi 0, %s209
      %s212 = sphi 0, %s211
      %s226 = sphi 0, %s212
      %s232 = sphi 0, %s234
      %s235 = sphi 0, %s232
      %s236 = sphi 0, %s235
      %s252 = sphi 0, %s236
    $region4: #{gatsby_forward.4} parent=1 // loop_header_branch
      %21 = sbr.rel (%p19) target = $region8
    $region5: #{gatsby_forward.4} parent=1 // loop_body
      %s23 = ssub.s32 %s18, 1
      %s24 = ssub.s32 %s18, 2
      %s25 = sadd.s32 %s18, 1
      %s27 = sadd.s32 %s26, 1
      %p30 = scmp.eq.s32.totalorder %s18, 1
      %p31 = scmp.ne.s32.totalorder %s26, %s28
      %p32 = scmp.eq.s32.totalorder %s18, 0
      %p33 = por %p31, %p32
      %p34 = scmp.ne.s32.totalorder %s26, %s28
      %p35 = scmp.eq.s32.totalorder %s23, 1
      %p36 = por %p34, %p35
      %p37 = scmp.ne.s32.totalorder %s28, %s29
      %p38 = scmp.eq.s32.totalorder %s23, 0
      %p39 = por %p37, %p38
      %p40 = scmp.ne.s32.totalorder %s28, %s29
      %p41 = scmp.eq.s32.totalorder %s24, 1
      %p42 = por %p40, %p41
      %p44 = scmp.ne.s32.totalorder %s29, %s43
      %p45 = scmp.eq.s32.totalorder %s24, 0
      %p46 = por %p44, %p45
      %s48 = sadd.s32 %s47, 1
      %p51 = scmp.eq.s32.totalorder %s18, 1
      %p52 = scmp.ne.s32.totalorder %s47, %s49
      %p53 = scmp.eq.s32.totalorder %s18, 0
      %p54 = por %p52, %p53
      %p55 = scmp.ne.s32.totalorder %s47, %s49
      %p56 = scmp.eq.s32.totalorder %s23, 1
      %p57 = por %p55, %p56
      %p58 = scmp.ne.s32.totalorder %s49, %s50
      %p59 = scmp.eq.s32.totalorder %s23, 0
      %p60 = por %p58, %p59
      %p61 = scmp.ne.s32.totalorder %s49, %s50
      %p62 = scmp.eq.s32.totalorder %s24, 1
      %p63 = por %p61, %p62
      %p65 = scmp.ne.s32.totalorder %s50, %s64
      %p66 = scmp.eq.s32.totalorder %s24, 0
      %p67 = por %p65, %p66
      %s69 = sadd.s32 %s68, 1
      %p72 = scmp.eq.s32.totalorder %s18, 1
      %p73 = scmp.ne.s32.totalorder %s68, %s70
      %p74 = scmp.eq.s32.totalorder %s18, 0
      %p75 = por %p73, %p74
      %p76 = scmp.ne.s32.totalorder %s68, %s70
      %p77 = scmp.eq.s32.totalorder %s23, 1
      %p78 = por %p76, %p77
      %p79 = scmp.ne.s32.totalorder %s70, %s71
      %p80 = scmp.eq.s32.totalorder %s23, 0
      %p81 = por %p79, %p80
      %p82 = scmp.ne.s32.totalorder %s70, %s71
      %p83 = scmp.eq.s32.totalorder %s24, 1
      %p84 = por %p82, %p83
      %p86 = scmp.ne.s32.totalorder %s71, %s85
      %p87 = scmp.eq.s32.totalorder %s24, 0
      %p88 = por %p86, %p87
      %s90 = sadd.s32 %s89, 1
      %p93 = scmp.eq.s32.totalorder %s18, 1
      %p94 = scmp.ne.s32.totalorder %s89, %s91
      %p95 = scmp.eq.s32.totalorder %s18, 0
      %p96 = por %p94, %p95
      %p97 = scmp.ne.s32.totalorder %s89, %s91
      %p98 = scmp.eq.s32.totalorder %s23, 1
      %p99 = por %p97, %p98
      %p100 = scmp.ne.s32.totalorder %s91, %s92
      %p101 = scmp.eq.s32.totalorder %s23, 0
      %p102 = por %p100, %p101
      %p103 = scmp.ne.s32.totalorder %s91, %s92
      %p104 = scmp.eq.s32.totalorder %s24, 1
      %p105 = por %p103, %p104
      %p107 = scmp.ne.s32.totalorder %s92, %s106
      %p108 = scmp.eq.s32.totalorder %s24, 0
      %p109 = por %p107, %p108
      %s111 = sadd.s32 %s110, 1
      %p114 = scmp.eq.s32.totalorder %s18, 1
      %p115 = scmp.ne.s32.totalorder %s110, %s112
      %p116 = scmp.eq.s32.totalorder %s18, 0
      %p117 = por %p115, %p116
      %p118 = scmp.ne.s32.totalorder %s110, %s112
      %p119 = scmp.eq.s32.totalorder %s23, 1
      %p120 = por %p118, %p119
      %p121 = scmp.ne.s32.totalorder %s112, %s113
      %p122 = scmp.eq.s32.totalorder %s23, 0
      %p123 = por %p121, %p122
      %p124 = scmp.ne.s32.totalorder %s112, %s113
      %p125 = scmp.eq.s32.totalorder %s24, 1
      %p126 = por %p124, %p125
      %p128 = scmp.ne.s32.totalorder %s113, %s127
      %p129 = scmp.eq.s32.totalorder %s24, 0
      %p130 = por %p128, %p129
      %s131 = ssub.s32 %s18, %s25
      %p132 = scmp.eq.s32.totalorder %s131, 0
      %s134 = sadd.s32 %s133, 1
      %s135 = scalar_select %p132, %s133, %s134
      %p138 = pneg %p132
      %p139 = scmp.eq.s32.totalorder %s18, 1
      %p140 = por %p138, %p139
      %p141 = scmp.ne.s32.totalorder %s133, %s136
      %p142 = scmp.eq.s32.totalorder %s18, 0
      %p143 = por %p141, %p142
      %p144 = scmp.ne.s32.totalorder %s133, %s136
      %p145 = scmp.eq.s32.totalorder %s23, 1
      %p146 = por %p144, %p145
      %p147 = scmp.ne.s32.totalorder %s136, %s137
      %p148 = scmp.eq.s32.totalorder %s23, 0
      %p149 = por %p147, %p148
      %p150 = scmp.ne.s32.totalorder %s136, %s137
      %p151 = scmp.eq.s32.totalorder %s24, 1
      %p152 = por %p150, %p151
      %p154 = scmp.ne.s32.totalorder %s137, %s153
      %p155 = scmp.eq.s32.totalorder %s24, 0
      %p156 = por %p154, %p155
      %s157 = ssub.s32 %s18, %s25
      %p158 = scmp.eq.s32.totalorder %s157, 0
      %s160 = sadd.s32 %s159, 1
      %s161 = scalar_select %p158, %s159, %s160
      %p164 = pneg %p158
      %p165 = scmp.eq.s32.totalorder %s18, 1
      %p166 = por %p164, %p165
      %p167 = scmp.ne.s32.totalorder %s159, %s162
      %p168 = scmp.eq.s32.totalorder %s18, 0
      %p169 = por %p167, %p168
      %p170 = scmp.ne.s32.totalorder %s159, %s162
      %p171 = scmp.eq.s32.totalorder %s23, 1
      %p172 = por %p170, %p171
      %p173 = scmp.ne.s32.totalorder %s162, %s163
      %p174 = scmp.eq.s32.totalorder %s23, 0
      %p175 = por %p173, %p174
      %p176 = scmp.ne.s32.totalorder %s162, %s163
      %p177 = scmp.eq.s32.totalorder %s24, 1
      %p178 = por %p176, %p177
      %p180 = scmp.ne.s32.totalorder %s163, %s179
      %p181 = scmp.eq.s32.totalorder %s24, 0
      %p182 = por %p180, %p181
      %s183 = ssub.s32 %s18, %s25
      %p184 = scmp.eq.s32.totalorder %s183, 0
      %s186 = sadd.s32 %s185, 1
      %s187 = scalar_select %p184, %s185, %s186
      %p190 = pneg %p184
      %p191 = scmp.eq.s32.totalorder %s18, 1
      %p192 = por %p190, %p191
      %p193 = scmp.ne.s32.totalorder %s185, %s188
      %p194 = scmp.eq.s32.totalorder %s18, 0
      %p195 = por %p193, %p194
      %p196 = scmp.ne.s32.totalorder %s185, %s188
      %p197 = scmp.eq.s32.totalorder %s23, 1
      %p198 = por %p196, %p197
      %p199 = scmp.ne.s32.totalorder %s188, %s189
      %p200 = scmp.eq.s32.totalorder %s23, 0
      %p201 = por %p199, %p200
      %p202 = scmp.ne.s32.totalorder %s188, %s189
      %p203 = scmp.eq.s32.totalorder %s24, 1
      %p204 = por %p202, %p203
      %p206 = scmp.ne.s32.totalorder %s189, %s205
      %p207 = scmp.eq.s32.totalorder %s24, 0
      %p208 = por %p206, %p207
      %s210 = sadd.s32 %s209, 1
      %p213 = scmp.eq.s32.totalorder %s18, 1
      %p214 = scmp.ne.s32.totalorder %s209, %s211
      %p215 = scmp.eq.s32.totalorder %s18, 0
      %p216 = por %p214, %p215
      %p217 = scmp.ne.s32.totalorder %s209, %s211
      %p218 = scmp.eq.s32.totalorder %s23, 1
      %p219 = por %p217, %p218
      %p220 = scmp.ne.s32.totalorder %s211, %s212
      %p221 = scmp.eq.s32.totalorder %s23, 0
      %p222 = por %p220, %p221
      %p223 = scmp.ne.s32.totalorder %s211, %s212
      %p224 = scmp.eq.s32.totalorder %s24, 1
      %p225 = por %p223, %p224
      %p227 = scmp.ne.s32.totalorder %s212, %s226
      %p228 = scmp.eq.s32.totalorder %s24, 0
      %p229 = por %p227, %p228
      %s230 = ssub.s32 %s18, %s25
      %p231 = scmp.eq.s32.totalorder %s230, 0
      %s233 = sadd.s32 %s232, 1
      %s234 = scalar_select %p231, %s232, %s233
      %p237 = pneg %p231
      %p238 = scmp.eq.s32.totalorder %s18, 1
      %p239 = por %p237, %p238
      %p240 = scmp.ne.s32.totalorder %s232, %s235
      %p241 = scmp.eq.s32.totalorder %s18, 0
      %p242 = por %p240, %p241
      %p243 = scmp.ne.s32.totalorder %s232, %s235
      %p244 = scmp.eq.s32.totalorder %s23, 1
      %p245 = por %p243, %p244
      %p246 = scmp.ne.s32.totalorder %s235, %s236
      %p247 = scmp.eq.s32.totalorder %s23, 0
      %p248 = por %p246, %p247
      %p249 = scmp.ne.s32.totalorder %s235, %s236
      %p250 = scmp.eq.s32.totalorder %s24, 1
      %p251 = por %p249, %p250
      %p253 = scmp.ne.s32.totalorder %s236, %s252
      %p254 = scmp.eq.s32.totalorder %s24, 0
      %p255 = por %p253, %p254
      %p256 = scmp.le.s32.totalorder 1, %s18
      %p257 = scmp.lt.s32.totalorder %s18, 3
      %p258 = pnand %p256, %p257
      %p259 = pneg %p258
      // Predicated region
      $region9: #{gatsby_forward.4} parent=5 // pred_check
        _
      $region10: #{gatsby_forward.4} parent=5 // pred_check_branch
        %261 = sbr.rel (%p258) target = $region12
      $region11: #{gatsby_forward.4} parent=5 // pred_region
        %s262 = ssub.s32 %s18, 1
        // Predicated region
        $region13: #{gatsby_forward.4} parent=11 // pred_check
          %p263 = pneg %p39
        $region14: #{gatsby_forward.4} parent=11 // pred_check_branch
          %265 = sbr.rel (%p263) target = $region16
        $region15: #{gatsby_forward.4} parent=11 // pred_region
          _
        $region16: #{gatsby_forward.4} parent=11 // pred_fallthru
          _
        // Predicated region
        $region17: #{gatsby_forward.4} parent=11 // pred_check
          %p266 = pneg %p60
        $region18: #{gatsby_forward.4} parent=11 // pred_check_branch
          %268 = sbr.rel (%p266) target = $region20
        $region19: #{gatsby_forward.4} parent=11 // pred_region
          %270 = vsyncadd [#allocation3], 0
          %s271 = sshll.u32 %s1, 4
          %s272 = int_to_ptr.hbm [resolvable:$true] %s271
          %s273 = sshll.u32 [#allocation2], 4
          %s274 = int_to_ptr.vmem [resolvable:$true] %s273
          %279 = dma.hbm_to_vmem [thread:$0]  %s272, 2048, %s274, [#allocation3], 1024, 1024, 64
        $region20: #{gatsby_forward.4} parent=11 // pred_fallthru
          _
        // Predicated region
        $region21: #{gatsby_forward.4} parent=11 // pred_check
          %p280 = pneg %p81
        $region22: #{gatsby_forward.4} parent=11 // pred_check_branch
          %282 = sbr.rel (%p280) target = $region24
        $region23: #{gatsby_forward.4} parent=11 // pred_region
          %284 = vsyncadd [#allocation5], 0
          %s285 = sshll.u32 %s2, 4
          %s286 = int_to_ptr.hbm [resolvable:$true] %s285
          %s287 = sshll.u32 [#allocation4], 4
          %s288 = int_to_ptr.vmem [resolvable:$true] %s287
          %293 = dma.hbm_to_vmem [thread:$0]  %s286, 2048, %s288, [#allocation5], 1024, 1024, 64
        $region24: #{gatsby_forward.4} parent=11 // pred_fallthru
          _
        // Predicated region
        $region25: #{gatsby_forward.4} parent=11 // pred_check
          %p294 = pneg %p102
        $region26: #{gatsby_forward.4} parent=11 // pred_check_branch
          %296 = sbr.rel (%p294) target = $region28
        $region27: #{gatsby_forward.4} parent=11 // pred_region
          %298 = vsyncadd [#allocation5], 0
          %s299 = sshll.u32 %s3, 4
          %s300 = int_to_ptr.hbm [resolvable:$true] %s299
          %s301 = sshll.u32 [#allocation6], 4
          %s302 = int_to_ptr.vmem [resolvable:$true] %s301
          %307 = dma.hbm_to_vmem [thread:$0]  %s300, 65536, %s302, [#allocation5], 512, 512, 32
        $region28: #{gatsby_forward.4} parent=11 // pred_fallthru
          _
        // Predicated region
        $region29: #{gatsby_forward.4} parent=11 // pred_check
          %p308 = pneg %p123
        $region30: #{gatsby_forward.4} parent=11 // pred_check_branch
          %310 = sbr.rel (%p308) target = $region32
        $region31: #{gatsby_forward.4} parent=11 // pred_region
          %312 = vsyncadd [#allocation8], 0
          %s314 = sshll.u32 %s4, 4
          %s315 = int_to_ptr.hbm [resolvable:$true] %s314
          %s316 = sshll.u32 [#allocation7], 4
          %s317 = int_to_ptr.vmem [resolvable:$true] %s316
          %319 = dma.hbm_to_vmem [thread:$0]  %s315, 128, %s317, [#allocation8]
        $region32: #{gatsby_forward.4} parent=11 // pred_fallthru
          _
        // Predicated region
        $region33: #{gatsby_forward.4} parent=11 // pred_check
          %p320 = pneg %p222
        $region34: #{gatsby_forward.4} parent=11 // pred_check_branch
          %322 = sbr.rel (%p320) target = $region36
        $region35: #{gatsby_forward.4} parent=11 // pred_region
          %324 = vsyncadd [#allocation5], 0
          %s325 = sshll.u32 %s8, 4
          %s326 = int_to_ptr.hbm [resolvable:$true] %s325
          %s327 = sshll.u32 [#allocation12], 4
          %s328 = int_to_ptr.vmem [resolvable:$true] %s327
          %333 = dma.hbm_to_vmem [thread:$0]  %s326, 256, %s328, [#allocation5], 128, 128, 8
        $region36: #{gatsby_forward.4} parent=11 // pred_fallthru
          _
      $region12: #{gatsby_forward.4} parent=5 // pred_fallthru
        _
      %p334 = scmp.lt.s32.totalorder %s18, 2
      // Predicated region
      $region37: #{gatsby_forward.4} parent=5 // pred_check
        %p335 = pneg %p334
      $region38: #{gatsby_forward.4} parent=5 // pred_check_branch
        %337 = sbr.rel (%p335) target = $region40
      $region39: #{gatsby_forward.4} parent=5 // pred_region
        // Predicated region
        $region41: #{gatsby_forward.4} parent=39 // pred_check
          %p338 = pneg %p143
        $region42: #{gatsby_forward.4} parent=39 // pred_check_branch
          %340 = sbr.rel (%p338) target = $region44
        $region43: #{gatsby_forward.4} parent=39 // pred_region
          %s341 = sand.u32 %s18, 1
          %s342 = scalar_lea.sflag [#allocation3], %s341
          %s343 = sand.u32 %s133, 1
          %s344 = smul.addr %s343, 4096
          %s345 = scalar_lea.vmem [#allocation9], %s344
          %s346 = smul.u32 8, %s18
          %348 = vsyncadd %s342, 0
          %s349 = smul.addr %s346, 4
          %s350 = scalar_lea.hbm %s5, %s349
          %s351 = sshll.u32 %s350, 4
          %s352 = int_to_ptr.hbm [resolvable:$true] %s351
          %s353 = sshll.u32 %s345, 4
          %s354 = int_to_ptr.vmem [resolvable:$true] %s353
          %359 = dma.hbm_to_vmem [thread:$0]  %s352, 65536, %s354, %s342, 1024, 512, 32
        $region44: #{gatsby_forward.4} parent=39 // pred_fallthru
          _
        // Predicated region
        $region45: #{gatsby_forward.4} parent=39 // pred_check
          %p360 = pneg %p169
        $region46: #{gatsby_forward.4} parent=39 // pred_check_branch
          %362 = sbr.rel (%p360) target = $region48
        $region47: #{gatsby_forward.4} parent=39 // pred_region
          %s363 = sand.u32 %s18, 1
          %s364 = scalar_lea.sflag [#allocation3], %s363
          %s365 = sand.u32 %s159, 1
          %s366 = smul.addr %s365, 8
          %s367 = scalar_lea.vmem [#allocation10], %s366
          %369 = vsyncadd %s364, 0
          %s370 = smul.addr %s18, 8
          %s371 = scalar_lea.hbm %s6, %s370
          %s373 = sshll.u32 %s371, 4
          %s374 = int_to_ptr.hbm [resolvable:$true] %s373
          %s375 = sshll.u32 %s367, 4
          %s376 = int_to_ptr.vmem [resolvable:$true] %s375
          %378 = dma.hbm_to_vmem [thread:$0]  %s374, 128, %s376, %s364
        $region48: #{gatsby_forward.4} parent=39 // pred_fallthru
          _
        // Predicated region
        $region49: #{gatsby_forward.4} parent=39 // pred_check
          %p379 = pneg %p195
        $region50: #{gatsby_forward.4} parent=39 // pred_check_branch
          %381 = sbr.rel (%p379) target = $region52
        $region51: #{gatsby_forward.4} parent=39 // pred_region
          %s382 = sand.u32 %s18, 1
          %s383 = scalar_lea.sflag [#allocation3], %s382
          %s384 = sand.u32 %s185, 1
          %s385 = smul.addr %s384, 8
          %s386 = scalar_lea.vmem [#allocation11], %s385
          %388 = vsyncadd %s383, 0
          %s389 = smul.addr %s18, 8
          %s390 = scalar_lea.hbm %s7, %s389
          %s392 = sshll.u32 %s390, 4
          %s393 = int_to_ptr.hbm [resolvable:$true] %s392
          %s394 = sshll.u32 %s386, 4
          %s395 = int_to_ptr.vmem [resolvable:$true] %s394
          %397 = dma.hbm_to_vmem [thread:$0]  %s393, 128, %s395, %s383
        $region52: #{gatsby_forward.4} parent=39 // pred_fallthru
          _
      $region40: #{gatsby_forward.4} parent=5 // pred_fallthru
        _
      %p398 = scmp.le.s32.totalorder 1, %s18
      %p399 = scmp.lt.s32.totalorder %s18, 3
      %p400 = pnand %p398, %p399
      %p401 = pneg %p400
      // Predicated region
      $region53: #{gatsby_forward.4} parent=5 // pred_check
        _
      $region54: #{gatsby_forward.4} parent=5 // pred_check_branch
        %403 = sbr.rel (%p400) target = $region56
      $region55: #{gatsby_forward.4} parent=5 // pred_region
        %s404 = ssub.s32 %s18, 1
        // Predicated region
        $region57: #{gatsby_forward.4} parent=55 // pred_check
          %p405 = pneg %p60
        $region58: #{gatsby_forward.4} parent=55 // pred_check_branch
          %407 = sbr.rel (%p405) target = $region60
        $region59: #{gatsby_forward.4} parent=55 // pred_region
          %409 = dma.done [#allocation3], 2048
        $region60: #{gatsby_forward.4} parent=55 // pred_fallthru
          _
        // Predicated region
        $region61: #{gatsby_forward.4} parent=55 // pred_check
          %p410 = pneg %p81
        $region62: #{gatsby_forward.4} parent=55 // pred_check_branch
          %412 = sbr.rel (%p410) target = $region64
        $region63: #{gatsby_forward.4} parent=55 // pred_region
          %414 = dma.done [#allocation5], 2048
        $region64: #{gatsby_forward.4} parent=55 // pred_fallthru
          _
        // Predicated region
        $region65: #{gatsby_forward.4} parent=55 // pred_check
          %p415 = pneg %p102
        $region66: #{gatsby_forward.4} parent=55 // pred_check_branch
          %417 = sbr.rel (%p415) target = $region68
        $region67: #{gatsby_forward.4} parent=55 // pred_region
          %419 = dma.done [#allocation5], 65536
        $region68: #{gatsby_forward.4} parent=55 // pred_fallthru
          _
        // Predicated region
        $region69: #{gatsby_forward.4} parent=55 // pred_check
          %p420 = pneg %p123
        $region70: #{gatsby_forward.4} parent=55 // pred_check_branch
          %422 = sbr.rel (%p420) target = $region72
        $region71: #{gatsby_forward.4} parent=55 // pred_region
          %424 = dma.done [#allocation8], 128
        $region72: #{gatsby_forward.4} parent=55 // pred_fallthru
          _
        %s425 = sand.u32 %s23, 1
        %s426 = scalar_lea.sflag [#allocation3], %s425
        %s427 = sand.u32 %s136, 1
        %s428 = smul.addr %s427, 4096
        %s429 = scalar_lea.vmem [#allocation9], %s428
        // Predicated region
        $region73: #{gatsby_forward.4} parent=55 // pred_check
          %p430 = pneg %p149
        $region74: #{gatsby_forward.4} parent=55 // pred_check_branch
          %432 = sbr.rel (%p430) target = $region76
        $region75: #{gatsby_forward.4} parent=55 // pred_region
          %434 = dma.done %s426, 65536
        $region76: #{gatsby_forward.4} parent=55 // pred_fallthru
          _
        %s435 = sand.u32 %s23, 1
        %s436 = scalar_lea.sflag [#allocation3], %s435
        %s437 = sand.u32 %s162, 1
        %s438 = smul.addr %s437, 8
        %s439 = scalar_lea.vmem [#allocation10], %s438
        // Predicated region
        $region77: #{gatsby_forward.4} parent=55 // pred_check
          %p440 = pneg %p175
        $region78: #{gatsby_forward.4} parent=55 // pred_check_branch
          %442 = sbr.rel (%p440) target = $region80
        $region79: #{gatsby_forward.4} parent=55 // pred_region
          %444 = dma.done %s436, 128
        $region80: #{gatsby_forward.4} parent=55 // pred_fallthru
          _
        %s445 = sand.u32 %s23, 1
        %s446 = scalar_lea.sflag [#allocation3], %s445
        %s447 = sand.u32 %s188, 1
        %s448 = smul.addr %s447, 8
        %s449 = scalar_lea.vmem [#allocation11], %s448
        // Predicated region
        $region81: #{gatsby_forward.4} parent=55 // pred_check
          %p450 = pneg %p201
        $region82: #{gatsby_forward.4} parent=55 // pred_check_branch
          %452 = sbr.rel (%p450) target = $region84
        $region83: #{gatsby_forward.4} parent=55 // pred_region
          %454 = dma.done %s446, 128
        $region84: #{gatsby_forward.4} parent=55 // pred_fallthru
          _
        // Predicated region
        $region85: #{gatsby_forward.4} parent=55 // pred_check
          %p455 = pneg %p222
        $region86: #{gatsby_forward.4} parent=55 // pred_check_branch
          %457 = sbr.rel (%p455) target = $region88
        $region87: #{gatsby_forward.4} parent=55 // pred_region
          %459 = dma.done [#allocation5], 256
        $region88: #{gatsby_forward.4} parent=55 // pred_fallthru
          _
        %p460 = pneg %p39
        %p461 = pneg %p36
        %p462 = pneg %p60
        %p463 = pneg %p57
        %p464 = pneg %p81
        %p465 = pneg %p78
        %p466 = pneg %p102
        %p467 = pneg %p99
        %p468 = pneg %p123
        %p469 = pneg %p120
        %s470 = sand.u32 %s23, 1
        %s471 = scalar_lea.sflag [#allocation3], %s470
        %s472 = sand.u32 %s136, 1
        %s473 = smul.addr %s472, 4096
        %s474 = scalar_lea.vmem [#allocation9], %s473
        %p475 = pneg %p149
        %p476 = pneg %p146
        %s477 = sand.u32 %s23, 1
        %s478 = scalar_lea.sflag [#allocation3], %s477
        %s479 = sand.u32 %s162, 1
        %s480 = smul.addr %s479, 8
        %s481 = scalar_lea.vmem [#allocation10], %s480
        %p482 = pneg %p175
        %p483 = pneg %p172
        %s484 = sand.u32 %s23, 1
        %s485 = scalar_lea.sflag [#allocation3], %s484
        %s486 = sand.u32 %s188, 1
        %s487 = smul.addr %s486, 8
        %s488 = scalar_lea.vmem [#allocation11], %s487
        %p489 = pneg %p201
        %p490 = pneg %p198
        %p491 = pneg %p222
        %p492 = pneg %p219
        %p493 = pneg %p248
        %p494 = pneg %p245
        %s495 = sand.u32 %s235, 1
        %s496 = sand.u32 %s235, 1
        %s497 = smul.addr %s496, 128
        %s498 = scalar_lea.vmem [#allocation13], %s497
        %s499 = smul.u32 8, %s23
        %s500 = smul.u32 8, %s23
        %v501 = vld [vmem:[%s0] sm:$0xff]
        %v502 = vld [vmem:[%s0 + $0x8] sm:$0xff]
        %v503 = vld [vmem:[%s0 + $0x10] sm:$0xff]
        %v504 = vld [vmem:[%s0 + $0x18] sm:$0xff]
        %v505 = vld [vmem:[%s0 + $0x20] sm:$0xff]
        %v506 = vld [vmem:[%s0 + $0x28] sm:$0xff]
        %v507 = vld [vmem:[%s0 + $0x30] sm:$0xff]
        %v508 = vld [vmem:[%s0 + $0x38] sm:$0xff]
        %v509 = vld [vmem:[%s0 + $0x40] sm:$0xff]
        %v510 = vld [vmem:[%s0 + $0x48] sm:$0xff]
        %v511 = vld [vmem:[%s0 + $0x50] sm:$0xff]
        %v512 = vld [vmem:[%s0 + $0x58] sm:$0xff]
        %v513 = vld [vmem:[%s0 + $0x60] sm:$0xff]
        %v514 = vld [vmem:[%s0 + $0x68] sm:$0xff]
        %v515 = vld [vmem:[%s0 + $0x70] sm:$0xff]
        %v516 = vld [vmem:[%s0 + $0x78] sm:$0xff]
        %v517 = vadd.f32 %v501, %v502
        %v518 = vadd.f32 %v517, %v503
        %v519 = vadd.f32 %v518, %v504
        %v520 = vadd.f32 %v519, %v505
        %v521 = vadd.f32 %v520, %v506
        %v522 = vadd.f32 %v521, %v507
        %v523 = vadd.f32 %v522, %v508
        %524 = vadd.xlane.f32.xlu0 %v523
        %v525 = vpop.xlane.xlu0 %524
        %v526 = vadd.f32 %v509, %v510
        %v527 = vadd.f32 %v526, %v511
        %v528 = vadd.f32 %v527, %v512
        %v529 = vadd.f32 %v528, %v513
        %v530 = vadd.f32 %v529, %v514
        %v531 = vadd.f32 %v530, %v515
        %v532 = vadd.f32 %v531, %v516
        %533 = vadd.xlane.f32.xlu0 %v532
        %v534 = vpop.xlane.xlu0 %533
        %v535 = vrcp.pop 1024.0
        %v536 = vmul.f32 1024.0, %v535
        %v537 = vsub.f32 1.0, %v536
        %v538 = vmul.f32 %v535, %v537
        %v539 = vadd.f32 %v535, %v538
        %vm540 = vweird.f32 %v535
        %v541 = vsel %vm540, %v535, %v539
        %v542 = vmul.f32 %v525, %v541
        %v543 = vmul.f32 %v534, %v541
        %v544 = vadd.f32 %v542, %v543
        %v545 = vrot.slane %v544, 4
        %v546 = vadd.f32 %v544, %v545
        %v547 = vrot.slane %v546, 2
        %v548 = vadd.f32 %v546, %v547
        %v549 = vrot.slane %v548, 1
        %v550 = vadd.f32 %v548, %v549
        %v551 = vrcp.pop 16.0
        %v552 = vmul.f32 16.0, %v551
        %v553 = vsub.f32 1.0, %v552
        %v554 = vmul.f32 %v551, %v553
        %v555 = vadd.f32 %v551, %v554
        %vm556 = vweird.f32 %v551
        %v557 = vsel %vm556, %v551, %v555
        %v558 = vmul.f32 %v550, %v557
        %v559 = vsub.f32 %v501, %v558
        %v560 = vsub.f32 %v502, %v558
        %v561 = vsub.f32 %v503, %v558
        %v562 = vsub.f32 %v504, %v558
        %v563 = vsub.f32 %v505, %v558
        %v564 = vsub.f32 %v506, %v558
        %v565 = vsub.f32 %v507, %v558
        %v566 = vsub.f32 %v508, %v558
        %v567 = vsub.f32 %v509, %v558
        %v568 = vsub.f32 %v510, %v558
        %v569 = vsub.f32 %v511, %v558
        %v570 = vsub.f32 %v512, %v558
        %v571 = vsub.f32 %v513, %v558
        %v572 = vsub.f32 %v514, %v558
        %v573 = vsub.f32 %v515, %v558
        %v574 = vsub.f32 %v516, %v558
        %v575 = vmul.f32 %v559, %v559
        %v576 = vmul.f32 %v560, %v560
        %v577 = vmul.f32 %v561, %v561
        %v578 = vmul.f32 %v562, %v562
        %v579 = vmul.f32 %v563, %v563
        %v580 = vmul.f32 %v564, %v564
        %v581 = vmul.f32 %v565, %v565
        %v582 = vmul.f32 %v566, %v566
        %v583 = vmul.f32 %v567, %v567
        %v584 = vmul.f32 %v568, %v568
        %v585 = vmul.f32 %v569, %v569
        %v586 = vmul.f32 %v570, %v570
        %v587 = vmul.f32 %v571, %v571
        %v588 = vmul.f32 %v572, %v572
        %v589 = vmul.f32 %v573, %v573
        %v590 = vmul.f32 %v574, %v574
        %v591 = vadd.f32 %v575, %v576
        %v592 = vadd.f32 %v591, %v577
        %v593 = vadd.f32 %v592, %v578
        %v594 = vadd.f32 %v593, %v579
        %v595 = vadd.f32 %v594, %v580
        %v596 = vadd.f32 %v595, %v581
        %v597 = vadd.f32 %v596, %v582
        %598 = vadd.xlane.f32.xlu0 %v597
        %v599 = vpop.xlane.xlu0 %598
        %v600 = vadd.f32 %v583, %v584
        %v601 = vadd.f32 %v600, %v585
        %v602 = vadd.f32 %v601, %v586
        %v603 = vadd.f32 %v602, %v587
        %v604 = vadd.f32 %v603, %v588
        %v605 = vadd.f32 %v604, %v589
        %v606 = vadd.f32 %v605, %v590
        %607 = vadd.xlane.f32.xlu0 %v606
        %v608 = vpop.xlane.xlu0 %607
        %v609 = vmul.f32 %v599, %v541
        %v610 = vmul.f32 %v608, %v541
        %v611 = vadd.f32 %v609, %v610
        %v612 = vrot.slane %v611, 4
        %v613 = vadd.f32 %v611, %v612
        %v614 = vrot.slane %v613, 2
        %v615 = vadd.f32 %v613, %v614
        %v616 = vrot.slane %v615, 1
        %v617 = vadd.f32 %v615, %v616
        %v618 = vmul.f32 %v617, %v557
        %v619 = vadd.f32 %v618, 1e-05
        %v620 = vrsqrt.pop %v619
        %v621 = vmul.f32 %v620, %v619
        %v622 = vmul.f32 %v621, %v620
        %v623 = vmul.f32 0.5, %v622
        %v624 = vsub.f32 1.5, %v623
        %v625 = vmul.f32 %v620, %v624
        %vm626 = vweird.f32 %v619
        %vm627 = vweird.f32 %v620
        %vm628 = vmor %vm626, %vm627
        %v629 = vsel %vm628, %v620, %v625
        %v630 = vmul.f32 %v559, %v629
        %v631 = vmul.f32 %v560, %v629
        %v632 = vmul.f32 %v561, %v629
        %v633 = vmul.f32 %v562, %v629
        %v634 = vmul.f32 %v563, %v629
        %v635 = vmul.f32 %v564, %v629
        %v636 = vmul.f32 %v565, %v629
        %v637 = vmul.f32 %v566, %v629
        %v638 = vmul.f32 %v567, %v629
        %v639 = vmul.f32 %v568, %v629
        %v640 = vmul.f32 %v569, %v629
        %v641 = vmul.f32 %v570, %v629
        %v642 = vmul.f32 %v571, %v629
        %v643 = vmul.f32 %v572, %v629
        %v644 = vmul.f32 %v573, %v629
        %v645 = vmul.f32 %v574, %v629
        %v646 = vld [vmem:[#allocation2] sm:$0xff]
        %v647 = vld [vmem:[#allocation2 + $0x8] sm:$0xff]
        %v648 = vld [vmem:[#allocation2 + $0x10] sm:$0xff]
        %v649 = vld [vmem:[#allocation2 + $0x18] sm:$0xff]
        %v650 = vld [vmem:[#allocation2 + $0x20] sm:$0xff]
        %v651 = vld [vmem:[#allocation2 + $0x28] sm:$0xff]
        %v652 = vld [vmem:[#allocation2 + $0x30] sm:$0xff]
        %v653 = vld [vmem:[#allocation2 + $0x38] sm:$0xff]
        %v654 = vld [vmem:[#allocation2 + $0x40] sm:$0xff]
        %v655 = vld [vmem:[#allocation2 + $0x48] sm:$0xff]
        %v656 = vld [vmem:[#allocation2 + $0x50] sm:$0xff]
        %v657 = vld [vmem:[#allocation2 + $0x58] sm:$0xff]
        %v658 = vld [vmem:[#allocation2 + $0x60] sm:$0xff]
        %v659 = vld [vmem:[#allocation2 + $0x68] sm:$0xff]
        %v660 = vld [vmem:[#allocation2 + $0x70] sm:$0xff]
        %v661 = vld [vmem:[#allocation2 + $0x78] sm:$0xff]
        %v662 = vmul.f32 %v630, %v646
        %v663 = vmul.f32 %v631, %v647
        %v664 = vmul.f32 %v632, %v648
        %v665 = vmul.f32 %v633, %v649
        %v666 = vmul.f32 %v634, %v650
        %v667 = vmul.f32 %v635, %v651
        %v668 = vmul.f32 %v636, %v652
        %v669 = vmul.f32 %v637, %v653
        %v670 = vmul.f32 %v638, %v654
        %v671 = vmul.f32 %v639, %v655
        %v672 = vmul.f32 %v640, %v656
        %v673 = vmul.f32 %v641, %v657
        %v674 = vmul.f32 %v642, %v658
        %v675 = vmul.f32 %v643, %v659
        %v676 = vmul.f32 %v644, %v660
        %v677 = vmul.f32 %v645, %v661
        %v678 = vld [vmem:[#allocation4] sm:$0xff]
        %v679 = vld [vmem:[#allocation4 + $0x8] sm:$0xff]
        %v680 = vld [vmem:[#allocation4 + $0x10] sm:$0xff]
        %v681 = vld [vmem:[#allocation4 + $0x18] sm:$0xff]
        %v682 = vld [vmem:[#allocation4 + $0x20] sm:$0xff]
        %v683 = vld [vmem:[#allocation4 + $0x28] sm:$0xff]
        %v684 = vld [vmem:[#allocation4 + $0x30] sm:$0xff]
        %v685 = vld [vmem:[#allocation4 + $0x38] sm:$0xff]
        %v686 = vld [vmem:[#allocation4 + $0x40] sm:$0xff]
        %v687 = vld [vmem:[#allocation4 + $0x48] sm:$0xff]
        %v688 = vld [vmem:[#allocation4 + $0x50] sm:$0xff]
        %v689 = vld [vmem:[#allocation4 + $0x58] sm:$0xff]
        %v690 = vld [vmem:[#allocation4 + $0x60] sm:$0xff]
        %v691 = vld [vmem:[#allocation4 + $0x68] sm:$0xff]
        %v692 = vld [vmem:[#allocation4 + $0x70] sm:$0xff]
        %v693 = vld [vmem:[#allocation4 + $0x78] sm:$0xff]
        %v694 = vadd.f32 %v662, %v678
        %v695 = vadd.f32 %v663, %v679
        %v696 = vadd.f32 %v664, %v680
        %v697 = vadd.f32 %v665, %v681
        %v698 = vadd.f32 %v666, %v682
        %v699 = vadd.f32 %v667, %v683
        %v700 = vadd.f32 %v668, %v684
        %v701 = vadd.f32 %v669, %v685
        %v702 = vadd.f32 %v670, %v686
        %v703 = vadd.f32 %v671, %v687
        %v704 = vadd.f32 %v672, %v688
        %v705 = vadd.f32 %v673, %v689
        %v706 = vadd.f32 %v674, %v690
        %v707 = vadd.f32 %v675, %v691
        %v708 = vadd.f32 %v676, %v692
        %v709 = vadd.f32 %v677, %v693
        %v710 = vpack.c.bf16 %v702, %v694
        %v711 = vpack.c.bf16 %v703, %v695
        %v712 = vpack.c.bf16 %v704, %v696
        %v713 = vpack.c.bf16 %v705, %v697
        %v714 = vpack.c.bf16 %v706, %v698
        %v715 = vpack.c.bf16 %v707, %v699
        %v716 = vpack.c.bf16 %v708, %v700
        %v717 = vpack.c.bf16 %v709, %v701
        %v718 = vld [vmem:[#allocation6] sm:$0xff]
        %v719 = vld [vmem:[#allocation6 + $0x8] sm:$0xff]
        %v720 = vld [vmem:[#allocation6 + $0x10] sm:$0xff]
        %v721 = vld [vmem:[#allocation6 + $0x18] sm:$0xff]
        %v722 = vld [vmem:[#allocation6 + $0x20] sm:$0xff]
        %v723 = vld [vmem:[#allocation6 + $0x28] sm:$0xff]
        %v724 = vld [vmem:[#allocation6 + $0x30] sm:$0xff]
        %v725 = vld [vmem:[#allocation6 + $0x38] sm:$0xff]
        %v726 = vld [vmem:[#allocation6 + $0x40] sm:$0xff]
        %v727 = vld [vmem:[#allocation6 + $0x48] sm:$0xff]
        %v728 = vld [vmem:[#allocation6 + $0x50] sm:$0xff]
        %v729 = vld [vmem:[#allocation6 + $0x58] sm:$0xff]
        %v730 = vld [vmem:[#allocation6 + $0x60] sm:$0xff]
        %v731 = vld [vmem:[#allocation6 + $0x68] sm:$0xff]
        %v732 = vld [vmem:[#allocation6 + $0x70] sm:$0xff]
        %v733 = vld [vmem:[#allocation6 + $0x78] sm:$0xff]
        %v734 = vld [vmem:[#allocation6 + $0x80] sm:$0xff]
        %v735 = vld [vmem:[#allocation6 + $0x88] sm:$0xff]
        %v736 = vld [vmem:[#allocation6 + $0x90] sm:$0xff]
        %v737 = vld [vmem:[#allocation6 + $0x98] sm:$0xff]
        %v738 = vld [vmem:[#allocation6 + $0xa0] sm:$0xff]
        %v739 = vld [vmem:[#allocation6 + $0xa8] sm:$0xff]
        %v740 = vld [vmem:[#allocation6 + $0xb0] sm:$0xff]
        %v741 = vld [vmem:[#allocation6 + $0xb8] sm:$0xff]
        %v742 = vld [vmem:[#allocation6 + $0xc0] sm:$0xff]
        %v743 = vld [vmem:[#allocation6 + $0xc8] sm:$0xff]
        %v744 = vld [vmem:[#allocation6 + $0xd0] sm:$0xff]
        %v745 = vld [vmem:[#allocation6 + $0xd8] sm:$0xff]
        %v746 = vld [vmem:[#allocation6 + $0xe0] sm:$0xff]
        %v747 = vld [vmem:[#allocation6 + $0xe8] sm:$0xff]
        %v748 = vld [vmem:[#allocation6 + $0xf0] sm:$0xff]
        %v749 = vld [vmem:[#allocation6 + $0xf8] sm:$0xff]
        %v750 = vld [vmem:[#allocation6 + $0x100] sm:$0xff]
        %v751 = vld [vmem:[#allocation6 + $0x108] sm:$0xff]
        %v752 = vld [vmem:[#allocation6 + $0x110] sm:$0xff]
        %v753 = vld [vmem:[#allocation6 + $0x118] sm:$0xff]
        %v754 = vld [vmem:[#allocation6 + $0x120] sm:$0xff]
        %v755 = vld [vmem:[#allocation6 + $0x128] sm:$0xff]
        %v756 = vld [vmem:[#allocation6 + $0x130] sm:$0xff]
        %v757 = vld [vmem:[#allocation6 + $0x138] sm:$0xff]
        %v758 = vld [vmem:[#allocation6 + $0x140] sm:$0xff]
        %v759 = vld [vmem:[#allocation6 + $0x148] sm:$0xff]
        %v760 = vld [vmem:[#allocation6 + $0x150] sm:$0xff]
        %v761 = vld [vmem:[#allocation6 + $0x158] sm:$0xff]
        %v762 = vld [vmem:[#allocation6 + $0x160] sm:$0xff]
        %v763 = vld [vmem:[#allocation6 + $0x168] sm:$0xff]
        %v764 = vld [vmem:[#allocation6 + $0x170] sm:$0xff]
        %v765 = vld [vmem:[#allocation6 + $0x178] sm:$0xff]
        %v766 = vld [vmem:[#allocation6 + $0x180] sm:$0xff]
        %v767 = vld [vmem:[#allocation6 + $0x188] sm:$0xff]
        %v768 = vld [vmem:[#allocation6 + $0x190] sm:$0xff]
        %v769 = vld [vmem:[#allocation6 + $0x198] sm:$0xff]
        %v770 = vld [vmem:[#allocation6 + $0x1a0] sm:$0xff]
        %v771 = vld [vmem:[#allocation6 + $0x1a8] sm:$0xff]
        %v772 = vld [vmem:[#allocation6 + $0x1b0] sm:$0xff]
        %v773 = vld [vmem:[#allocation6 + $0x1b8] sm:$0xff]
        %v774 = vld [vmem:[#allocation6 + $0x1c0] sm:$0xff]
        %v775 = vld [vmem:[#allocation6 + $0x1c8] sm:$0xff]
        %v776 = vld [vmem:[#allocation6 + $0x1d0] sm:$0xff]
        %v777 = vld [vmem:[#allocation6 + $0x1d8] sm:$0xff]
        %v778 = vld [vmem:[#allocation6 + $0x1e0] sm:$0xff]
        %v779 = vld [vmem:[#allocation6 + $0x1e8] sm:$0xff]
        %v780 = vld [vmem:[#allocation6 + $0x1f0] sm:$0xff]
        %v781 = vld [vmem:[#allocation6 + $0x1f8] sm:$0xff]
        %v782 = vld [vmem:[#allocation6 + $0x200] sm:$0xff]
        %v783 = vld [vmem:[#allocation6 + $0x208] sm:$0xff]
        %v784 = vld [vmem:[#allocation6 + $0x210] sm:$0xff]
        %v785 = vld [vmem:[#allocation6 + $0x218] sm:$0xff]
        %v786 = vld [vmem:[#allocation6 + $0x220] sm:$0xff]
        %v787 = vld [vmem:[#allocation6 + $0x228] sm:$0xff]
        %v788 = vld [vmem:[#allocation6 + $0x230] sm:$0xff]
        %v789 = vld [vmem:[#allocation6 + $0x238] sm:$0xff]
        %v790 = vld [vmem:[#allocation6 + $0x240] sm:$0xff]
        %v791 = vld [vmem:[#allocation6 + $0x248] sm:$0xff]
        %v792 = vld [vmem:[#allocation6 + $0x250] sm:$0xff]
        %v793 = vld [vmem:[#allocation6 + $0x258] sm:$0xff]
        %v794 = vld [vmem:[#allocation6 + $0x260] sm:$0xff]
        %v795 = vld [vmem:[#allocation6 + $0x268] sm:$0xff]
        %v796 = vld [vmem:[#allocation6 + $0x270] sm:$0xff]
        %v797 = vld [vmem:[#allocation6 + $0x278] sm:$0xff]
        %v798 = vld [vmem:[#allocation6 + $0x280] sm:$0xff]
        %v799 = vld [vmem:[#allocation6 + $0x288] sm:$0xff]
        %v800 = vld [vmem:[#allocation6 + $0x290] sm:$0xff]
        %v801 = vld [vmem:[#allocation6 + $0x298] sm:$0xff]
        %v802 = vld [vmem:[#allocation6 + $0x2a0] sm:$0xff]
        %v803 = vld [vmem:[#allocation6 + $0x2a8] sm:$0xff]
        %v804 = vld [vmem:[#allocation6 + $0x2b0] sm:$0xff]
        %v805 = vld [vmem:[#allocation6 + $0x2b8] sm:$0xff]
        %v806 = vld [vmem:[#allocation6 + $0x2c0] sm:$0xff]
        %v807 = vld [vmem:[#allocation6 + $0x2c8] sm:$0xff]
        %v808 = vld [vmem:[#allocation6 + $0x2d0] sm:$0xff]
        %v809 = vld [vmem:[#allocation6 + $0x2d8] sm:$0xff]
        %v810 = vld [vmem:[#allocation6 + $0x2e0] sm:$0xff]
        %v811 = vld [vmem:[#allocation6 + $0x2e8] sm:$0xff]
        %v812 = vld [vmem:[#allocation6 + $0x2f0] sm:$0xff]
        %v813 = vld [vmem:[#allocation6 + $0x2f8] sm:$0xff]
        %v814 = vld [vmem:[#allocation6 + $0x300] sm:$0xff]
        %v815 = vld [vmem:[#allocation6 + $0x308] sm:$0xff]
        %v816 = vld [vmem:[#allocation6 + $0x310] sm:$0xff]
        %v817 = vld [vmem:[#allocation6 + $0x318] sm:$0xff]
        %v818 = vld [vmem:[#allocation6 + $0x320] sm:$0xff]
        %v819 = vld [vmem:[#allocation6 + $0x328] sm:$0xff]
        %v820 = vld [vmem:[#allocation6 + $0x330] sm:$0xff]
        %v821 = vld [vmem:[#allocation6 + $0x338] sm:$0xff]
        %v822 = vld [vmem:[#allocation6 + $0x340] sm:$0xff]
        %v823 = vld [vmem:[#allocation6 + $0x348] sm:$0xff]
        %v824 = vld [vmem:[#allocation6 + $0x350] sm:$0xff]
        %v825 = vld [vmem:[#allocation6 + $0x358] sm:$0xff]
        %v826 = vld [vmem:[#allocation6 + $0x360] sm:$0xff]
        %v827 = vld [vmem:[#allocation6 + $0x368] sm:$0xff]
        %v828 = vld [vmem:[#allocation6 + $0x370] sm:$0xff]
        %v829 = vld [vmem:[#allocation6 + $0x378] sm:$0xff]
        %v830 = vld [vmem:[#allocation6 + $0x380] sm:$0xff]
        %v831 = vld [vmem:[#allocation6 + $0x388] sm:$0xff]
        %v832 = vld [vmem:[#allocation6 + $0x390] sm:$0xff]
        %v833 = vld [vmem:[#allocation6 + $0x398] sm:$0xff]
        %v834 = vld [vmem:[#allocation6 + $0x3a0] sm:$0xff]
        %v835 = vld [vmem:[#allocation6 + $0x3a8] sm:$0xff]
        %v836 = vld [vmem:[#allocation6 + $0x3b0] sm:$0xff]
        %v837 = vld [vmem:[#allocation6 + $0x3b8] sm:$0xff]
        %v838 = vld [vmem:[#allocation6 + $0x3c0] sm:$0xff]
        %v839 = vld [vmem:[#allocation6 + $0x3c8] sm:$0xff]
        %v840 = vld [vmem:[#allocation6 + $0x3d0] sm:$0xff]
        %v841 = vld [vmem:[#allocation6 + $0x3d8] sm:$0xff]
        %v842 = vld [vmem:[#allocation6 + $0x3e0] sm:$0xff]
        %v843 = vld [vmem:[#allocation6 + $0x3e8] sm:$0xff]
        %v844 = vld [vmem:[#allocation6 + $0x3f0] sm:$0xff]
        %v845 = vld [vmem:[#allocation6 + $0x3f8] sm:$0xff]
        %v846 = vld [vmem:[#allocation6 + $0x400] sm:$0xff]
        %v847 = vld [vmem:[#allocation6 + $0x408] sm:$0xff]
        %v848 = vld [vmem:[#allocation6 + $0x410] sm:$0xff]
        %v849 = vld [vmem:[#allocation6 + $0x418] sm:$0xff]
        %v850 = vld [vmem:[#allocation6 + $0x420] sm:$0xff]
        %v851 = vld [vmem:[#allocation6 + $0x428] sm:$0xff]
        %v852 = vld [vmem:[#allocation6 + $0x430] sm:$0xff]
        %v853 = vld [vmem:[#allocation6 + $0x438] sm:$0xff]
        %v854 = vld [vmem:[#allocation6 + $0x440] sm:$0xff]
        %v855 = vld [vmem:[#allocation6 + $0x448] sm:$0xff]
        %v856 = vld [vmem:[#allocation6 + $0x450] sm:$0xff]
        %v857 = vld [vmem:[#allocation6 + $0x458] sm:$0xff]
        %v858 = vld [vmem:[#allocation6 + $0x460] sm:$0xff]
        %v859 = vld [vmem:[#allocation6 + $0x468] sm:$0xff]
        %v860 = vld [vmem:[#allocation6 + $0x470] sm:$0xff]
        %v861 = vld [vmem:[#allocation6 + $0x478] sm:$0xff]
        %v862 = vld [vmem:[#allocation6 + $0x480] sm:$0xff]
        %v863 = vld [vmem:[#allocation6 + $0x488] sm:$0xff]
        %v864 = vld [vmem:[#allocation6 + $0x490] sm:$0xff]
        %v865 = vld [vmem:[#allocation6 + $0x498] sm:$0xff]
        %v866 = vld [vmem:[#allocation6 + $0x4a0] sm:$0xff]
        %v867 = vld [vmem:[#allocation6 + $0x4a8] sm:$0xff]
        %v868 = vld [vmem:[#allocation6 + $0x4b0] sm:$0xff]
        %v869 = vld [vmem:[#allocation6 + $0x4b8] sm:$0xff]
        %v870 = vld [vmem:[#allocation6 + $0x4c0] sm:$0xff]
        %v871 = vld [vmem:[#allocation6 + $0x4c8] sm:$0xff]
        %v872 = vld [vmem:[#allocation6 + $0x4d0] sm:$0xff]
        %v873 = vld [vmem:[#allocation6 + $0x4d8] sm:$0xff]
        %v874 = vld [vmem:[#allocation6 + $0x4e0] sm:$0xff]
        %v875 = vld [vmem:[#allocation6 + $0x4e8] sm:$0xff]
        %v876 = vld [vmem:[#allocation6 + $0x4f0] sm:$0xff]
        %v877 = vld [vmem:[#allocation6 + $0x4f8] sm:$0xff]
        %v878 = vld [vmem:[#allocation6 + $0x500] sm:$0xff]
        %v879 = vld [vmem:[#allocation6 + $0x508] sm:$0xff]
        %v880 = vld [vmem:[#allocation6 + $0x510] sm:$0xff]
        %v881 = vld [vmem:[#allocation6 + $0x518] sm:$0xff]
        %v882 = vld [vmem:[#allocation6 + $0x520] sm:$0xff]
        %v883 = vld [vmem:[#allocation6 + $0x528] sm:$0xff]
        %v884 = vld [vmem:[#allocation6 + $0x530] sm:$0xff]
        %v885 = vld [vmem:[#allocation6 + $0x538] sm:$0xff]
        %v886 = vld [vmem:[#allocation6 + $0x540] sm:$0xff]
        %v887 = vld [vmem:[#allocation6 + $0x548] sm:$0xff]
        %v888 = vld [vmem:[#allocation6 + $0x550] sm:$0xff]
        %v889 = vld [vmem:[#allocation6 + $0x558] sm:$0xff]
        %v890 = vld [vmem:[#allocation6 + $0x560] sm:$0xff]
        %v891 = vld [vmem:[#allocation6 + $0x568] sm:$0xff]
        %v892 = vld [vmem:[#allocation6 + $0x570] sm:$0xff]
        %v893 = vld [vmem:[#allocation6 + $0x578] sm:$0xff]
        %v894 = vld [vmem:[#allocation6 + $0x580] sm:$0xff]
        %v895 = vld [vmem:[#allocation6 + $0x588] sm:$0xff]
        %v896 = vld [vmem:[#allocation6 + $0x590] sm:$0xff]
        %v897 = vld [vmem:[#allocation6 + $0x598] sm:$0xff]
        %v898 = vld [vmem:[#allocation6 + $0x5a0] sm:$0xff]
        %v899 = vld [vmem:[#allocation6 + $0x5a8] sm:$0xff]
        %v900 = vld [vmem:[#allocation6 + $0x5b0] sm:$0xff]
        %v901 = vld [vmem:[#allocation6 + $0x5b8] sm:$0xff]
        %v902 = vld [vmem:[#allocation6 + $0x5c0] sm:$0xff]
        %v903 = vld [vmem:[#allocation6 + $0x5c8] sm:$0xff]
        %v904 = vld [vmem:[#allocation6 + $0x5d0] sm:$0xff]
        %v905 = vld [vmem:[#allocation6 + $0x5d8] sm:$0xff]
        %v906 = vld [vmem:[#allocation6 + $0x5e0] sm:$0xff]
        %v907 = vld [vmem:[#allocation6 + $0x5e8] sm:$0xff]
        %v908 = vld [vmem:[#allocation6 + $0x5f0] sm:$0xff]
        %v909 = vld [vmem:[#allocation6 + $0x5f8] sm:$0xff]
        %v910 = vld [vmem:[#allocation6 + $0x600] sm:$0xff]
        %v911 = vld [vmem:[#allocation6 + $0x608] sm:$0xff]
        %v912 = vld [vmem:[#allocation6 + $0x610] sm:$0xff]
        %v913 = vld [vmem:[#allocation6 + $0x618] sm:$0xff]
        %v914 = vld [vmem:[#allocation6 + $0x620] sm:$0xff]
        %v915 = vld [vmem:[#allocation6 + $0x628] sm:$0xff]
        %v916 = vld [vmem:[#allocation6 + $0x630] sm:$0xff]
        %v917 = vld [vmem:[#allocation6 + $0x638] sm:$0xff]
        %v918 = vld [vmem:[#allocation6 + $0x640] sm:$0xff]
        %v919 = vld [vmem:[#allocation6 + $0x648] sm:$0xff]
        %v920 = vld [vmem:[#allocation6 + $0x650] sm:$0xff]
        %v921 = vld [vmem:[#allocation6 + $0x658] sm:$0xff]
        %v922 = vld [vmem:[#allocation6 + $0x660] sm:$0xff]
        %v923 = vld [vmem:[#allocation6 + $0x668] sm:$0xff]
        %v924 = vld [vmem:[#allocation6 + $0x670] sm:$0xff]
        %v925 = vld [vmem:[#allocation6 + $0x678] sm:$0xff]
        %v926 = vld [vmem:[#allocation6 + $0x680] sm:$0xff]
        %v927 = vld [vmem:[#allocation6 + $0x688] sm:$0xff]
        %v928 = vld [vmem:[#allocation6 + $0x690] sm:$0xff]
        %v929 = vld [vmem:[#allocation6 + $0x698] sm:$0xff]
        %v930 = vld [vmem:[#allocation6 + $0x6a0] sm:$0xff]
        %v931 = vld [vmem:[#allocation6 + $0x6a8] sm:$0xff]
        %v932 = vld [vmem:[#allocation6 + $0x6b0] sm:$0xff]
        %v933 = vld [vmem:[#allocation6 + $0x6b8] sm:$0xff]
        %v934 = vld [vmem:[#allocation6 + $0x6c0] sm:$0xff]
        %v935 = vld [vmem:[#allocation6 + $0x6c8] sm:$0xff]
        %v936 = vld [vmem:[#allocation6 + $0x6d0] sm:$0xff]
        %v937 = vld [vmem:[#allocation6 + $0x6d8] sm:$0xff]
        %v938 = vld [vmem:[#allocation6 + $0x6e0] sm:$0xff]
        %v939 = vld [vmem:[#allocation6 + $0x6e8] sm:$0xff]
        %v940 = vld [vmem:[#allocation6 + $0x6f0] sm:$0xff]
        %v941 = vld [vmem:[#allocation6 + $0x6f8] sm:$0xff]
        %v942 = vld [vmem:[#allocation6 + $0x700] sm:$0xff]
        %v943 = vld [vmem:[#allocation6 + $0x708] sm:$0xff]
        %v944 = vld [vmem:[#allocation6 + $0x710] sm:$0xff]
        %v945 = vld [vmem:[#allocation6 + $0x718] sm:$0xff]
        %v946 = vld [vmem:[#allocation6 + $0x720] sm:$0xff]
        %v947 = vld [vmem:[#allocation6 + $0x728] sm:$0xff]
        %v948 = vld [vmem:[#allocation6 + $0x730] sm:$0xff]
        %v949 = vld [vmem:[#allocation6 + $0x738] sm:$0xff]
        %v950 = vld [vmem:[#allocation6 + $0x740] sm:$0xff]
        %v951 = vld [vmem:[#allocation6 + $0x748] sm:$0xff]
        %v952 = vld [vmem:[#allocation6 + $0x750] sm:$0xff]
        %v953 = vld [vmem:[#allocation6 + $0x758] sm:$0xff]
        %v954 = vld [vmem:[#allocation6 + $0x760] sm:$0xff]
        %v955 = vld [vmem:[#allocation6 + $0x768] sm:$0xff]
        %v956 = vld [vmem:[#allocation6 + $0x770] sm:$0xff]
        %v957 = vld [vmem:[#allocation6 + $0x778] sm:$0xff]
        %v958 = vld [vmem:[#allocation6 + $0x780] sm:$0xff]
        %v959 = vld [vmem:[#allocation6 + $0x788] sm:$0xff]
        %v960 = vld [vmem:[#allocation6 + $0x790] sm:$0xff]
        %v961 = vld [vmem:[#allocation6 + $0x798] sm:$0xff]
        %v962 = vld [vmem:[#allocation6 + $0x7a0] sm:$0xff]
        %v963 = vld [vmem:[#allocation6 + $0x7a8] sm:$0xff]
        %v964 = vld [vmem:[#allocation6 + $0x7b0] sm:$0xff]
        %v965 = vld [vmem:[#allocation6 + $0x7b8] sm:$0xff]
        %v966 = vld [vmem:[#allocation6 + $0x7c0] sm:$0xff]
        %v967 = vld [vmem:[#allocation6 + $0x7c8] sm:$0xff]
        %v968 = vld [vmem:[#allocation6 + $0x7d0] sm:$0xff]
        %v969 = vld [vmem:[#allocation6 + $0x7d8] sm:$0xff]
        %v970 = vld [vmem:[#allocation6 + $0x7e0] sm:$0xff]
        %v971 = vld [vmem:[#allocation6 + $0x7e8] sm:$0xff]
        %v972 = vld [vmem:[#allocation6 + $0x7f0] sm:$0xff]
        %v973 = vld [vmem:[#allocation6 + $0x7f8] sm:$0xff]
        %v974 = vld [vmem:[#allocation6 + $0x800] sm:$0xff]
        %v975 = vld [vmem:[#allocation6 + $0x808] sm:$0xff]
        %v976 = vld [vmem:[#allocation6 + $0x810] sm:$0xff]
        %v977 = vld [vmem:[#allocation6 + $0x818] sm:$0xff]
        %v978 = vld [vmem:[#allocation6 + $0x820] sm:$0xff]
        %v979 = vld [vmem:[#allocation6 + $0x828] sm:$0xff]
        %v980 = vld [vmem:[#allocation6 + $0x830] sm:$0xff]
        %v981 = vld [vmem:[#allocation6 + $0x838] sm:$0xff]
        %v982 = vld [vmem:[#allocation6 + $0x840] sm:$0xff]
        %v983 = vld [vmem:[#allocation6 + $0x848] sm:$0xff]
        %v984 = vld [vmem:[#allocation6 + $0x850] sm:$0xff]
        %v985 = vld [vmem:[#allocation6 + $0x858] sm:$0xff]
        %v986 = vld [vmem:[#allocation6 + $0x860] sm:$0xff]
        %v987 = vld [vmem:[#allocation6 + $0x868] sm:$0xff]
        %v988 = vld [vmem:[#allocation6 + $0x870] sm:$0xff]
        %v989 = vld [vmem:[#allocation6 + $0x878] sm:$0xff]
        %v990 = vld [vmem:[#allocation6 + $0x880] sm:$0xff]
        %v991 = vld [vmem:[#allocation6 + $0x888] sm:$0xff]
        %v992 = vld [vmem:[#allocation6 + $0x890] sm:$0xff]
        %v993 = vld [vmem:[#allocation6 + $0x898] sm:$0xff]
        %v994 = vld [vmem:[#allocation6 + $0x8a0] sm:$0xff]
        %v995 = vld [vmem:[#allocation6 + $0x8a8] sm:$0xff]
        %v996 = vld [vmem:[#allocation6 + $0x8b0] sm:$0xff]
        %v997 = vld [vmem:[#allocation6 + $0x8b8] sm:$0xff]
        %v998 = vld [vmem:[#allocation6 + $0x8c0] sm:$0xff]
        %v999 = vld [vmem:[#allocation6 + $0x8c8] sm:$0xff]
        %v1000 = vld [vmem:[#allocation6 + $0x8d0] sm:$0xff]
        %v1001 = vld [vmem:[#allocation6 + $0x8d8] sm:$0xff]
        %v1002 = vld [vmem:[#allocation6 + $0x8e0] sm:$0xff]
        %v1003 = vld [vmem:[#allocation6 + $0x8e8] sm:$0xff]
        %v1004 = vld [vmem:[#allocation6 + $0x8f0] sm:$0xff]
        %v1005 = vld [vmem:[#allocation6 + $0x8f8] sm:$0xff]
        %v1006 = vld [vmem:[#allocation6 + $0x900] sm:$0xff]
        %v1007 = vld [vmem:[#allocation6 + $0x908] sm:$0xff]
        %v1008 = vld [vmem:[#allocation6 + $0x910] sm:$0xff]
        %v1009 = vld [vmem:[#allocation6 + $0x918] sm:$0xff]
        %v1010 = vld [vmem:[#allocation6 + $0x920] sm:$0xff]
        %v1011 = vld [vmem:[#allocation6 + $0x928] sm:$0xff]
        %v1012 = vld [vmem:[#allocation6 + $0x930] sm:$0xff]
        %v1013 = vld [vmem:[#allocation6 + $0x938] sm:$0xff]
        %v1014 = vld [vmem:[#allocation6 + $0x940] sm:$0xff]
        %v1015 = vld [vmem:[#allocation6 + $0x948] sm:$0xff]
        %v1016 = vld [vmem:[#allocation6 + $0x950] sm:$0xff]
        %v1017 = vld [vmem:[#allocation6 + $0x958] sm:$0xff]
        %v1018 = vld [vmem:[#allocation6 + $0x960] sm:$0xff]
        %v1019 = vld [vmem:[#allocation6 + $0x968] sm:$0xff]
        %v1020 = vld [vmem:[#allocation6 + $0x970] sm:$0xff]
        %v1021 = vld [vmem:[#allocation6 + $0x978] sm:$0xff]
        %v1022 = vld [vmem:[#allocation6 + $0x980] sm:$0xff]
        %v1023 = vld [vmem:[#allocation6 + $0x988] sm:$0xff]
        %v1024 = vld [vmem:[#allocation6 + $0x990] sm:$0xff]
        %v1025 = vld [vmem:[#allocation6 + $0x998] sm:$0xff]
        %v1026 = vld [vmem:[#allocation6 + $0x9a0] sm:$0xff]
        %v1027 = vld [vmem:[#allocation6 + $0x9a8] sm:$0xff]
        %v1028 = vld [vmem:[#allocation6 + $0x9b0] sm:$0xff]
        %v1029 = vld [vmem:[#allocation6 + $0x9b8] sm:$0xff]
        %v1030 = vld [vmem:[#allocation6 + $0x9c0] sm:$0xff]
        %v1031 = vld [vmem:[#allocation6 + $0x9c8] sm:$0xff]
        %v1032 = vld [vmem:[#allocation6 + $0x9d0] sm:$0xff]
        %v1033 = vld [vmem:[#allocation6 + $0x9d8] sm:$0xff]
        %v1034 = vld [vmem:[#allocation6 + $0x9e0] sm:$0xff]
        %v1035 = vld [vmem:[#allocation6 + $0x9e8] sm:$0xff]
        %v1036 = vld [vmem:[#allocation6 + $0x9f0] sm:$0xff]
        %v1037 = vld [vmem:[#allocation6 + $0x9f8] sm:$0xff]
        %v1038 = vld [vmem:[#allocation6 + $0xa00] sm:$0xff]
        %v1039 = vld [vmem:[#allocation6 + $0xa08] sm:$0xff]
        %v1040 = vld [vmem:[#allocation6 + $0xa10] sm:$0xff]
        %v1041 = vld [vmem:[#allocation6 + $0xa18] sm:$0xff]
        %v1042 = vld [vmem:[#allocation6 + $0xa20] sm:$0xff]
        %v1043 = vld [vmem:[#allocation6 + $0xa28] sm:$0xff]
        %v1044 = vld [vmem:[#allocation6 + $0xa30] sm:$0xff]
        %v1045 = vld [vmem:[#allocation6 + $0xa38] sm:$0xff]
        %v1046 = vld [vmem:[#allocation6 + $0xa40] sm:$0xff]
        %v1047 = vld [vmem:[#allocation6 + $0xa48] sm:$0xff]
        %v1048 = vld [vmem:[#allocation6 + $0xa50] sm:$0xff]
        %v1049 = vld [vmem:[#allocation6 + $0xa58] sm:$0xff]
        %v1050 = vld [vmem:[#allocation6 + $0xa60] sm:$0xff]
        %v1051 = vld [vmem:[#allocation6 + $0xa68] sm:$0xff]
        %v1052 = vld [vmem:[#allocation6 + $0xa70] sm:$0xff]
        %v1053 = vld [vmem:[#allocation6 + $0xa78] sm:$0xff]
        %v1054 = vld [vmem:[#allocation6 + $0xa80] sm:$0xff]
        %v1055 = vld [vmem:[#allocation6 + $0xa88] sm:$0xff]
        %v1056 = vld [vmem:[#allocation6 + $0xa90] sm:$0xff]
        %v1057 = vld [vmem:[#allocation6 + $0xa98] sm:$0xff]
        %v1058 = vld [vmem:[#allocation6 + $0xaa0] sm:$0xff]
        %v1059 = vld [vmem:[#allocation6 + $0xaa8] sm:$0xff]
        %v1060 = vld [vmem:[#allocation6 + $0xab0] sm:$0xff]
        %v1061 = vld [vmem:[#allocation6 + $0xab8] sm:$0xff]
        %v1062 = vld [vmem:[#allocation6 + $0xac0] sm:$0xff]
        %v1063 = vld [vmem:[#allocation6 + $0xac8] sm:$0xff]
        %v1064 = vld [vmem:[#allocation6 + $0xad0] sm:$0xff]
        %v1065 = vld [vmem:[#allocation6 + $0xad8] sm:$0xff]
        %v1066 = vld [vmem:[#allocation6 + $0xae0] sm:$0xff]
        %v1067 = vld [vmem:[#allocation6 + $0xae8] sm:$0xff]
        %v1068 = vld [vmem:[#allocation6 + $0xaf0] sm:$0xff]
        %v1069 = vld [vmem:[#allocation6 + $0xaf8] sm:$0xff]
        %v1070 = vld [vmem:[#allocation6 + $0xb00] sm:$0xff]
        %v1071 = vld [vmem:[#allocation6 + $0xb08] sm:$0xff]
        %v1072 = vld [vmem:[#allocation6 + $0xb10] sm:$0xff]
        %v1073 = vld [vmem:[#allocation6 + $0xb18] sm:$0xff]
        %v1074 = vld [vmem:[#allocation6 + $0xb20] sm:$0xff]
        %v1075 = vld [vmem:[#allocation6 + $0xb28] sm:$0xff]
        %v1076 = vld [vmem:[#allocation6 + $0xb30] sm:$0xff]
        %v1077 = vld [vmem:[#allocation6 + $0xb38] sm:$0xff]
        %v1078 = vld [vmem:[#allocation6 + $0xb40] sm:$0xff]
        %v1079 = vld [vmem:[#allocation6 + $0xb48] sm:$0xff]
        %v1080 = vld [vmem:[#allocation6 + $0xb50] sm:$0xff]
        %v1081 = vld [vmem:[#allocation6 + $0xb58] sm:$0xff]
        %v1082 = vld [vmem:[#allocation6 + $0xb60] sm:$0xff]
        %v1083 = vld [vmem:[#allocation6 + $0xb68] sm:$0xff]
        %v1084 = vld [vmem:[#allocation6 + $0xb70] sm:$0xff]
        %v1085 = vld [vmem:[#allocation6 + $0xb78] sm:$0xff]
        %v1086 = vld [vmem:[#allocation6 + $0xb80] sm:$0xff]
        %v1087 = vld [vmem:[#allocation6 + $0xb88] sm:$0xff]
        %v1088 = vld [vmem:[#allocation6 + $0xb90] sm:$0xff]
        %v1089 = vld [vmem:[#allocation6 + $0xb98] sm:$0xff]
        %v1090 = vld [vmem:[#allocation6 + $0xba0] sm:$0xff]
        %v1091 = vld [vmem:[#allocation6 + $0xba8] sm:$0xff]
        %v1092 = vld [vmem:[#allocation6 + $0xbb0] sm:$0xff]
        %v1093 = vld [vmem:[#allocation6 + $0xbb8] sm:$0xff]
        %v1094 = vld [vmem:[#allocation6 + $0xbc0] sm:$0xff]
        %v1095 = vld [vmem:[#allocation6 + $0xbc8] sm:$0xff]
        %v1096 = vld [vmem:[#allocation6 + $0xbd0] sm:$0xff]
        %v1097 = vld [vmem:[#allocation6 + $0xbd8] sm:$0xff]
        %v1098 = vld [vmem:[#allocation6 + $0xbe0] sm:$0xff]
        %v1099 = vld [vmem:[#allocation6 + $0xbe8] sm:$0xff]
        %v1100 = vld [vmem:[#allocation6 + $0xbf0] sm:$0xff]
        %v1101 = vld [vmem:[#allocation6 + $0xbf8] sm:$0xff]
        %v1102 = vld [vmem:[#allocation6 + $0xc00] sm:$0xff]
        %v1103 = vld [vmem:[#allocation6 + $0xc08] sm:$0xff]
        %v1104 = vld [vmem:[#allocation6 + $0xc10] sm:$0xff]
        %v1105 = vld [vmem:[#allocation6 + $0xc18] sm:$0xff]
        %v1106 = vld [vmem:[#allocation6 + $0xc20] sm:$0xff]
        %v1107 = vld [vmem:[#allocation6 + $0xc28] sm:$0xff]
        %v1108 = vld [vmem:[#allocation6 + $0xc30] sm:$0xff]
        %v1109 = vld [vmem:[#allocation6 + $0xc38] sm:$0xff]
        %v1110 = vld [vmem:[#allocation6 + $0xc40] sm:$0xff]
        %v1111 = vld [vmem:[#allocation6 + $0xc48] sm:$0xff]
        %v1112 = vld [vmem:[#allocation6 + $0xc50] sm:$0xff]
        %v1113 = vld [vmem:[#allocation6 + $0xc58] sm:$0xff]
        %v1114 = vld [vmem:[#allocation6 + $0xc60] sm:$0xff]
        %v1115 = vld [vmem:[#allocation6 + $0xc68] sm:$0xff]
        %v1116 = vld [vmem:[#allocation6 + $0xc70] sm:$0xff]
        %v1117 = vld [vmem:[#allocation6 + $0xc78] sm:$0xff]
        %v1118 = vld [vmem:[#allocation6 + $0xc80] sm:$0xff]
        %v1119 = vld [vmem:[#allocation6 + $0xc88] sm:$0xff]
        %v1120 = vld [vmem:[#allocation6 + $0xc90] sm:$0xff]
        %v1121 = vld [vmem:[#allocation6 + $0xc98] sm:$0xff]
        %v1122 = vld [vmem:[#allocation6 + $0xca0] sm:$0xff]
        %v1123 = vld [vmem:[#allocation6 + $0xca8] sm:$0xff]
        %v1124 = vld [vmem:[#allocation6 + $0xcb0] sm:$0xff]
        %v1125 = vld [vmem:[#allocation6 + $0xcb8] sm:$0xff]
        %v1126 = vld [vmem:[#allocation6 + $0xcc0] sm:$0xff]
        %v1127 = vld [vmem:[#allocation6 + $0xcc8] sm:$0xff]
        %v1128 = vld [vmem:[#allocation6 + $0xcd0] sm:$0xff]
        %v1129 = vld [vmem:[#allocation6 + $0xcd8] sm:$0xff]
        %v1130 = vld [vmem:[#allocation6 + $0xce0] sm:$0xff]
        %v1131 = vld [vmem:[#allocation6 + $0xce8] sm:$0xff]
        %v1132 = vld [vmem:[#allocation6 + $0xcf0] sm:$0xff]
        %v1133 = vld [vmem:[#allocation6 + $0xcf8] sm:$0xff]
        %v1134 = vld [vmem:[#allocation6 + $0xd00] sm:$0xff]
        %v1135 = vld [vmem:[#allocation6 + $0xd08] sm:$0xff]
        %v1136 = vld [vmem:[#allocation6 + $0xd10] sm:$0xff]
        %v1137 = vld [vmem:[#allocation6 + $0xd18] sm:$0xff]
        %v1138 = vld [vmem:[#allocation6 + $0xd20] sm:$0xff]
        %v1139 = vld [vmem:[#allocation6 + $0xd28] sm:$0xff]
        %v1140 = vld [vmem:[#allocation6 + $0xd30] sm:$0xff]
        %v1141 = vld [vmem:[#allocation6 + $0xd38] sm:$0xff]
        %v1142 = vld [vmem:[#allocation6 + $0xd40] sm:$0xff]
        %v1143 = vld [vmem:[#allocation6 + $0xd48] sm:$0xff]
        %v1144 = vld [vmem:[#allocation6 + $0xd50] sm:$0xff]
        %v1145 = vld [vmem:[#allocation6 + $0xd58] sm:$0xff]
        %v1146 = vld [vmem:[#allocation6 + $0xd60] sm:$0xff]
        %v1147 = vld [vmem:[#allocation6 + $0xd68] sm:$0xff]
        %v1148 = vld [vmem:[#allocation6 + $0xd70] sm:$0xff]
        %v1149 = vld [vmem:[#allocation6 + $0xd78] sm:$0xff]
        %v1150 = vld [vmem:[#allocation6 + $0xd80] sm:$0xff]
        %v1151 = vld [vmem:[#allocation6 + $0xd88] sm:$0xff]
        %v1152 = vld [vmem:[#allocation6 + $0xd90] sm:$0xff]
        %v1153 = vld [vmem:[#allocation6 + $0xd98] sm:$0xff]
        %v1154 = vld [vmem:[#allocation6 + $0xda0] sm:$0xff]
        %v1155 = vld [vmem:[#allocation6 + $0xda8] sm:$0xff]
        %v1156 = vld [vmem:[#allocation6 + $0xdb0] sm:$0xff]
        %v1157 = vld [vmem:[#allocation6 + $0xdb8] sm:$0xff]
        %v1158 = vld [vmem:[#allocation6 + $0xdc0] sm:$0xff]
        %v1159 = vld [vmem:[#allocation6 + $0xdc8] sm:$0xff]
        %v1160 = vld [vmem:[#allocation6 + $0xdd0] sm:$0xff]
        %v1161 = vld [vmem:[#allocation6 + $0xdd8] sm:$0xff]
        %v1162 = vld [vmem:[#allocation6 + $0xde0] sm:$0xff]
        %v1163 = vld [vmem:[#allocation6 + $0xde8] sm:$0xff]
        %v1164 = vld [vmem:[#allocation6 + $0xdf0] sm:$0xff]
        %v1165 = vld [vmem:[#allocation6 + $0xdf8] sm:$0xff]
        %v1166 = vld [vmem:[#allocation6 + $0xe00] sm:$0xff]
        %v1167 = vld [vmem:[#allocation6 + $0xe08] sm:$0xff]
        %v1168 = vld [vmem:[#allocation6 + $0xe10] sm:$0xff]
        %v1169 = vld [vmem:[#allocation6 + $0xe18] sm:$0xff]
        %v1170 = vld [vmem:[#allocation6 + $0xe20] sm:$0xff]
        %v1171 = vld [vmem:[#allocation6 + $0xe28] sm:$0xff]
        %v1172 = vld [vmem:[#allocation6 + $0xe30] sm:$0xff]
        %v1173 = vld [vmem:[#allocation6 + $0xe38] sm:$0xff]
        %v1174 = vld [vmem:[#allocation6 + $0xe40] sm:$0xff]
        %v1175 = vld [vmem:[#allocation6 + $0xe48] sm:$0xff]
        %v1176 = vld [vmem:[#allocation6 + $0xe50] sm:$0xff]
        %v1177 = vld [vmem:[#allocation6 + $0xe58] sm:$0xff]
        %v1178 = vld [vmem:[#allocation6 + $0xe60] sm:$0xff]
        %v1179 = vld [vmem:[#allocation6 + $0xe68] sm:$0xff]
        %v1180 = vld [vmem:[#allocation6 + $0xe70] sm:$0xff]
        %v1181 = vld [vmem:[#allocation6 + $0xe78] sm:$0xff]
        %v1182 = vld [vmem:[#allocation6 + $0xe80] sm:$0xff]
        %v1183 = vld [vmem:[#allocation6 + $0xe88] sm:$0xff]
        %v1184 = vld [vmem:[#allocation6 + $0xe90] sm:$0xff]
        %v1185 = vld [vmem:[#allocation6 + $0xe98] sm:$0xff]
        %v1186 = vld [vmem:[#allocation6 + $0xea0] sm:$0xff]
        %v1187 = vld [vmem:[#allocation6 + $0xea8] sm:$0xff]
        %v1188 = vld [vmem:[#allocation6 + $0xeb0] sm:$0xff]
        %v1189 = vld [vmem:[#allocation6 + $0xeb8] sm:$0xff]
        %v1190 = vld [vmem:[#allocation6 + $0xec0] sm:$0xff]
        %v1191 = vld [vmem:[#allocation6 + $0xec8] sm:$0xff]
        %v1192 = vld [vmem:[#allocation6 + $0xed0] sm:$0xff]
        %v1193 = vld [vmem:[#allocation6 + $0xed8] sm:$0xff]
        %v1194 = vld [vmem:[#allocation6 + $0xee0] sm:$0xff]
        %v1195 = vld [vmem:[#allocation6 + $0xee8] sm:$0xff]
        %v1196 = vld [vmem:[#allocation6 + $0xef0] sm:$0xff]
        %v1197 = vld [vmem:[#allocation6 + $0xef8] sm:$0xff]
        %v1198 = vld [vmem:[#allocation6 + $0xf00] sm:$0xff]
        %v1199 = vld [vmem:[#allocation6 + $0xf08] sm:$0xff]
        %v1200 = vld [vmem:[#allocation6 + $0xf10] sm:$0xff]
        %v1201 = vld [vmem:[#allocation6 + $0xf18] sm:$0xff]
        %v1202 = vld [vmem:[#allocation6 + $0xf20] sm:$0xff]
        %v1203 = vld [vmem:[#allocation6 + $0xf28] sm:$0xff]
        %v1204 = vld [vmem:[#allocation6 + $0xf30] sm:$0xff]
        %v1205 = vld [vmem:[#allocation6 + $0xf38] sm:$0xff]
        %v1206 = vld [vmem:[#allocation6 + $0xf40] sm:$0xff]
        %v1207 = vld [vmem:[#allocation6 + $0xf48] sm:$0xff]
        %v1208 = vld [vmem:[#allocation6 + $0xf50] sm:$0xff]
        %v1209 = vld [vmem:[#allocation6 + $0xf58] sm:$0xff]
        %v1210 = vld [vmem:[#allocation6 + $0xf60] sm:$0xff]
        %v1211 = vld [vmem:[#allocation6 + $0xf68] sm:$0xff]
        %v1212 = vld [vmem:[#allocation6 + $0xf70] sm:$0xff]
        %v1213 = vld [vmem:[#allocation6 + $0xf78] sm:$0xff]
        %v1214 = vld [vmem:[#allocation6 + $0xf80] sm:$0xff]
        %v1215 = vld [vmem:[#allocation6 + $0xf88] sm:$0xff]
        %v1216 = vld [vmem:[#allocation6 + $0xf90] sm:$0xff]
        %v1217 = vld [vmem:[#allocation6 + $0xf98] sm:$0xff]
        %v1218 = vld [vmem:[#allocation6 + $0xfa0] sm:$0xff]
        %v1219 = vld [vmem:[#allocation6 + $0xfa8] sm:$0xff]
        %v1220 = vld [vmem:[#allocation6 + $0xfb0] sm:$0xff]
        %v1221 = vld [vmem:[#allocation6 + $0xfb8] sm:$0xff]
        %v1222 = vld [vmem:[#allocation6 + $0xfc0] sm:$0xff]
        %v1223 = vld [vmem:[#allocation6 + $0xfc8] sm:$0xff]
        %v1224 = vld [vmem:[#allocation6 + $0xfd0] sm:$0xff]
        %v1225 = vld [vmem:[#allocation6 + $0xfd8] sm:$0xff]
        %v1226 = vld [vmem:[#allocation6 + $0xfe0] sm:$0xff]
        %v1227 = vld [vmem:[#allocation6 + $0xfe8] sm:$0xff]
        %v1228 = vld [vmem:[#allocation6 + $0xff0] sm:$0xff]
        %v1229 = vld [vmem:[#allocation6 + $0xff8] sm:$0xff]
        %v1230 = vld [vmem:[#allocation7] sm:$0xff]
        %v1232 = vperm.slane %v1230, 0
        %v1233 = vperm.slane %v1230, 1
        %v1234 = vperm.slane %v1230, 2
        %v1235 = vperm.slane %v1230, 3
        %v1236 = vperm.slane %v1230, 4
        %v1237 = vperm.slane %v1230, 5
        %v1238 = vperm.slane %v1230, 6
        %v1239 = vperm.slane %v1230, 7
        %v1760 = vunpack.c.l.b16 %v718
        %v1761 = vunpack.c.h.b16 %v718
        %v1762 = vunpack.c.l.b16 %v719
        %v1763 = vunpack.c.h.b16 %v719
        %v1764 = vunpack.c.l.b16 %v720
        %v1765 = vunpack.c.h.b16 %v720
        %v1766 = vunpack.c.l.b16 %v721
        %v1767 = vunpack.c.h.b16 %v721
        %v1768 = vunpack.c.l.b16 %v722
        %v1769 = vunpack.c.h.b16 %v722
        %v1770 = vunpack.c.l.b16 %v723
        %v1771 = vunpack.c.h.b16 %v723
        %v1772 = vunpack.c.l.b16 %v724
        %v1773 = vunpack.c.h.b16 %v724
        %v1774 = vunpack.c.l.b16 %v725
        %v1775 = vunpack.c.h.b16 %v725
        %v1776 = vunpack.c.l.b16 %v726
        %v1777 = vunpack.c.h.b16 %v726
        %v1778 = vunpack.c.l.b16 %v727
        %v1779 = vunpack.c.h.b16 %v727
        %v1780 = vunpack.c.l.b16 %v728
        %v1781 = vunpack.c.h.b16 %v728
        %v1782 = vunpack.c.l.b16 %v729
        %v1783 = vunpack.c.h.b16 %v729
        %v1784 = vunpack.c.l.b16 %v730
        %v1785 = vunpack.c.h.b16 %v730
        %v1786 = vunpack.c.l.b16 %v731
        %v1787 = vunpack.c.h.b16 %v731
        %v1788 = vunpack.c.l.b16 %v732
        %v1789 = vunpack.c.h.b16 %v732
        %v1790 = vunpack.c.l.b16 %v733
        %v1791 = vunpack.c.h.b16 %v733
        %v1792 = vunpack.c.l.b16 %v734
        %v1793 = vunpack.c.h.b16 %v734
        %v1794 = vunpack.c.l.b16 %v735
        %v1795 = vunpack.c.h.b16 %v735
        %v1796 = vunpack.c.l.b16 %v736
        %v1797 = vunpack.c.h.b16 %v736
        %v1798 = vunpack.c.l.b16 %v737
        %v1799 = vunpack.c.h.b16 %v737
        %v1800 = vunpack.c.l.b16 %v738
        %v1801 = vunpack.c.h.b16 %v738
        %v1802 = vunpack.c.l.b16 %v739
        %v1803 = vunpack.c.h.b16 %v739
        %v1804 = vunpack.c.l.b16 %v740
        %v1805 = vunpack.c.h.b16 %v740
        %v1806 = vunpack.c.l.b16 %v741
        %v1807 = vunpack.c.h.b16 %v741
        %v1808 = vunpack.c.l.b16 %v742
        %v1809 = vunpack.c.h.b16 %v742
        %v1810 = vunpack.c.l.b16 %v743
        %v1811 = vunpack.c.h.b16 %v743
        %v1812 = vunpack.c.l.b16 %v744
        %v1813 = vunpack.c.h.b16 %v744
        %v1814 = vunpack.c.l.b16 %v745
        %v1815 = vunpack.c.h.b16 %v745
        %v1816 = vunpack.c.l.b16 %v746
        %v1817 = vunpack.c.h.b16 %v746
        %v1818 = vunpack.c.l.b16 %v747
        %v1819 = vunpack.c.h.b16 %v747
        %v1820 = vunpack.c.l.b16 %v748
        %v1821 = vunpack.c.h.b16 %v748
        %v1822 = vunpack.c.l.b16 %v749
        %v1823 = vunpack.c.h.b16 %v749
        %v1824 = vunpack.c.l.b16 %v750
        %v1825 = vunpack.c.h.b16 %v750
        %v1826 = vunpack.c.l.b16 %v751
        %v1827 = vunpack.c.h.b16 %v751
        %v1828 = vunpack.c.l.b16 %v752
        %v1829 = vunpack.c.h.b16 %v752
        %v1830 = vunpack.c.l.b16 %v753
        %v1831 = vunpack.c.h.b16 %v753
        %v1832 = vunpack.c.l.b16 %v754
        %v1833 = vunpack.c.h.b16 %v754
        %v1834 = vunpack.c.l.b16 %v755
        %v1835 = vunpack.c.h.b16 %v755
        %v1836 = vunpack.c.l.b16 %v756
        %v1837 = vunpack.c.h.b16 %v756
        %v1838 = vunpack.c.l.b16 %v757
        %v1839 = vunpack.c.h.b16 %v757
        %v1840 = vunpack.c.l.b16 %v758
        %v1841 = vunpack.c.h.b16 %v758
        %v1842 = vunpack.c.l.b16 %v759
        %v1843 = vunpack.c.h.b16 %v759
        %v1844 = vunpack.c.l.b16 %v760
        %v1845 = vunpack.c.h.b16 %v760
        %v1846 = vunpack.c.l.b16 %v761
        %v1847 = vunpack.c.h.b16 %v761
        %v1848 = vunpack.c.l.b16 %v762
        %v1849 = vunpack.c.h.b16 %v762
        %v1850 = vunpack.c.l.b16 %v763
        %v1851 = vunpack.c.h.b16 %v763
        %v1852 = vunpack.c.l.b16 %v764
        %v1853 = vunpack.c.h.b16 %v764
        %v1854 = vunpack.c.l.b16 %v765
        %v1855 = vunpack.c.h.b16 %v765
        %v1856 = vunpack.c.l.b16 %v766
        %v1857 = vunpack.c.h.b16 %v766
        %v1858 = vunpack.c.l.b16 %v767
        %v1859 = vunpack.c.h.b16 %v767
        %v1860 = vunpack.c.l.b16 %v768
        %v1861 = vunpack.c.h.b16 %v768
        %v1862 = vunpack.c.l.b16 %v769
        %v1863 = vunpack.c.h.b16 %v769
        %v1864 = vunpack.c.l.b16 %v770
        %v1865 = vunpack.c.h.b16 %v770
        %v1866 = vunpack.c.l.b16 %v771
        %v1867 = vunpack.c.h.b16 %v771
        %v1868 = vunpack.c.l.b16 %v772
        %v1869 = vunpack.c.h.b16 %v772
        %v1870 = vunpack.c.l.b16 %v773
        %v1871 = vunpack.c.h.b16 %v773
        %v1872 = vunpack.c.l.b16 %v774
        %v1873 = vunpack.c.h.b16 %v774
        %v1874 = vunpack.c.l.b16 %v775
        %v1875 = vunpack.c.h.b16 %v775
        %v1876 = vunpack.c.l.b16 %v776
        %v1877 = vunpack.c.h.b16 %v776
        %v1878 = vunpack.c.l.b16 %v777
        %v1879 = vunpack.c.h.b16 %v777
        %v1880 = vunpack.c.l.b16 %v778
        %v1881 = vunpack.c.h.b16 %v778
        %v1882 = vunpack.c.l.b16 %v779
        %v1883 = vunpack.c.h.b16 %v779
        %v1884 = vunpack.c.l.b16 %v780
        %v1885 = vunpack.c.h.b16 %v780
        %v1886 = vunpack.c.l.b16 %v781
        %v1887 = vunpack.c.h.b16 %v781
        %v1888 = vunpack.c.l.b16 %v782
        %v1889 = vunpack.c.h.b16 %v782
        %v1890 = vunpack.c.l.b16 %v783
        %v1891 = vunpack.c.h.b16 %v783
        %v1892 = vunpack.c.l.b16 %v784
        %v1893 = vunpack.c.h.b16 %v784
        %v1894 = vunpack.c.l.b16 %v785
        %v1895 = vunpack.c.h.b16 %v785
        %v1896 = vunpack.c.l.b16 %v786
        %v1897 = vunpack.c.h.b16 %v786
        %v1898 = vunpack.c.l.b16 %v787
        %v1899 = vunpack.c.h.b16 %v787
        %v1900 = vunpack.c.l.b16 %v788
        %v1901 = vunpack.c.h.b16 %v788
        %v1902 = vunpack.c.l.b16 %v789
        %v1903 = vunpack.c.h.b16 %v789
        %v1904 = vunpack.c.l.b16 %v790
        %v1905 = vunpack.c.h.b16 %v790
        %v1906 = vunpack.c.l.b16 %v791
        %v1907 = vunpack.c.h.b16 %v791
        %v1908 = vunpack.c.l.b16 %v792
        %v1909 = vunpack.c.h.b16 %v792
        %v1910 = vunpack.c.l.b16 %v793
        %v1911 = vunpack.c.h.b16 %v793
        %v1912 = vunpack.c.l.b16 %v794
        %v1913 = vunpack.c.h.b16 %v794
        %v1914 = vunpack.c.l.b16 %v795
        %v1915 = vunpack.c.h.b16 %v795
        %v1916 = vunpack.c.l.b16 %v796
        %v1917 = vunpack.c.h.b16 %v796
        %v1918 = vunpack.c.l.b16 %v797
        %v1919 = vunpack.c.h.b16 %v797
        %v1920 = vunpack.c.l.b16 %v798
        %v1921 = vunpack.c.h.b16 %v798
        %v1922 = vunpack.c.l.b16 %v799
        %v1923 = vunpack.c.h.b16 %v799
        %v1924 = vunpack.c.l.b16 %v800
        %v1925 = vunpack.c.h.b16 %v800
        %v1926 = vunpack.c.l.b16 %v801
        %v1927 = vunpack.c.h.b16 %v801
        %v1928 = vunpack.c.l.b16 %v802
        %v1929 = vunpack.c.h.b16 %v802
        %v1930 = vunpack.c.l.b16 %v803
        %v1931 = vunpack.c.h.b16 %v803
        %v1932 = vunpack.c.l.b16 %v804
        %v1933 = vunpack.c.h.b16 %v804
        %v1934 = vunpack.c.l.b16 %v805
        %v1935 = vunpack.c.h.b16 %v805
        %v1936 = vunpack.c.l.b16 %v806
        %v1937 = vunpack.c.h.b16 %v806
        %v1938 = vunpack.c.l.b16 %v807
        %v1939 = vunpack.c.h.b16 %v807
        %v1940 = vunpack.c.l.b16 %v808
        %v1941 = vunpack.c.h.b16 %v808
        %v1942 = vunpack.c.l.b16 %v809
        %v1943 = vunpack.c.h.b16 %v809
        %v1944 = vunpack.c.l.b16 %v810
        %v1945 = vunpack.c.h.b16 %v810
        %v1946 = vunpack.c.l.b16 %v811
        %v1947 = vunpack.c.h.b16 %v811
        %v1948 = vunpack.c.l.b16 %v812
        %v1949 = vunpack.c.h.b16 %v812
        %v1950 = vunpack.c.l.b16 %v813
        %v1951 = vunpack.c.h.b16 %v813
        %v1952 = vunpack.c.l.b16 %v814
        %v1953 = vunpack.c.h.b16 %v814
        %v1954 = vunpack.c.l.b16 %v815
        %v1955 = vunpack.c.h.b16 %v815
        %v1956 = vunpack.c.l.b16 %v816
        %v1957 = vunpack.c.h.b16 %v816
        %v1958 = vunpack.c.l.b16 %v817
        %v1959 = vunpack.c.h.b16 %v817
        %v1960 = vunpack.c.l.b16 %v818
        %v1961 = vunpack.c.h.b16 %v818
        %v1962 = vunpack.c.l.b16 %v819
        %v1963 = vunpack.c.h.b16 %v819
        %v1964 = vunpack.c.l.b16 %v820
        %v1965 = vunpack.c.h.b16 %v820
        %v1966 = vunpack.c.l.b16 %v821
        %v1967 = vunpack.c.h.b16 %v821
        %v1968 = vunpack.c.l.b16 %v822
        %v1969 = vunpack.c.h.b16 %v822
        %v1970 = vunpack.c.l.b16 %v823
        %v1971 = vunpack.c.h.b16 %v823
        %v1972 = vunpack.c.l.b16 %v824
        %v1973 = vunpack.c.h.b16 %v824
        %v1974 = vunpack.c.l.b16 %v825
        %v1975 = vunpack.c.h.b16 %v825
        %v1976 = vunpack.c.l.b16 %v826
        %v1977 = vunpack.c.h.b16 %v826
        %v1978 = vunpack.c.l.b16 %v827
        %v1979 = vunpack.c.h.b16 %v827
        %v1980 = vunpack.c.l.b16 %v828
        %v1981 = vunpack.c.h.b16 %v828
        %v1982 = vunpack.c.l.b16 %v829
        %v1983 = vunpack.c.h.b16 %v829
        %v1984 = vunpack.c.l.b16 %v830
        %v1985 = vunpack.c.h.b16 %v830
        %v1986 = vunpack.c.l.b16 %v831
        %v1987 = vunpack.c.h.b16 %v831
        %v1988 = vunpack.c.l.b16 %v832
        %v1989 = vunpack.c.h.b16 %v832
        %v1990 = vunpack.c.l.b16 %v833
        %v1991 = vunpack.c.h.b16 %v833
        %v1992 = vunpack.c.l.b16 %v834
        %v1993 = vunpack.c.h.b16 %v834
        %v1994 = vunpack.c.l.b16 %v835
        %v1995 = vunpack.c.h.b16 %v835
        %v1996 = vunpack.c.l.b16 %v836
        %v1997 = vunpack.c.h.b16 %v836
        %v1998 = vunpack.c.l.b16 %v837
        %v1999 = vunpack.c.h.b16 %v837
        %v2000 = vunpack.c.l.b16 %v838
        %v2001 = vunpack.c.h.b16 %v838
        %v2002 = vunpack.c.l.b16 %v839
        %v2003 = vunpack.c.h.b16 %v839
        %v2004 = vunpack.c.l.b16 %v840
        %v2005 = vunpack.c.h.b16 %v840
        %v2006 = vunpack.c.l.b16 %v841
        %v2007 = vunpack.c.h.b16 %v841
        %v2008 = vunpack.c.l.b16 %v842
        %v2009 = vunpack.c.h.b16 %v842
        %v2010 = vunpack.c.l.b16 %v843
        %v2011 = vunpack.c.h.b16 %v843
        %v2012 = vunpack.c.l.b16 %v844
        %v2013 = vunpack.c.h.b16 %v844
        %v2014 = vunpack.c.l.b16 %v845
        %v2015 = vunpack.c.h.b16 %v845
        %v2016 = vunpack.c.l.b16 %v846
        %v2017 = vunpack.c.h.b16 %v846
        %v2018 = vunpack.c.l.b16 %v847
        %v2019 = vunpack.c.h.b16 %v847
        %v2020 = vunpack.c.l.b16 %v848
        %v2021 = vunpack.c.h.b16 %v848
        %v2022 = vunpack.c.l.b16 %v849
        %v2023 = vunpack.c.h.b16 %v849
        %v2024 = vunpack.c.l.b16 %v850
        %v2025 = vunpack.c.h.b16 %v850
        %v2026 = vunpack.c.l.b16 %v851
        %v2027 = vunpack.c.h.b16 %v851
        %v2028 = vunpack.c.l.b16 %v852
        %v2029 = vunpack.c.h.b16 %v852
        %v2030 = vunpack.c.l.b16 %v853
        %v2031 = vunpack.c.h.b16 %v853
        %v2032 = vunpack.c.l.b16 %v854
        %v2033 = vunpack.c.h.b16 %v854
        %v2034 = vunpack.c.l.b16 %v855
        %v2035 = vunpack.c.h.b16 %v855
        %v2036 = vunpack.c.l.b16 %v856
        %v2037 = vunpack.c.h.b16 %v856
        %v2038 = vunpack.c.l.b16 %v857
        %v2039 = vunpack.c.h.b16 %v857
        %v2040 = vunpack.c.l.b16 %v858
        %v2041 = vunpack.c.h.b16 %v858
        %v2042 = vunpack.c.l.b16 %v859
        %v2043 = vunpack.c.h.b16 %v859
        %v2044 = vunpack.c.l.b16 %v860
        %v2045 = vunpack.c.h.b16 %v860
        %v2046 = vunpack.c.l.b16 %v861
        %v2047 = vunpack.c.h.b16 %v861
        %v2048 = vunpack.c.l.b16 %v862
        %v2049 = vunpack.c.h.b16 %v862
        %v2050 = vunpack.c.l.b16 %v863
        %v2051 = vunpack.c.h.b16 %v863
        %v2052 = vunpack.c.l.b16 %v864
        %v2053 = vunpack.c.h.b16 %v864
        %v2054 = vunpack.c.l.b16 %v865
        %v2055 = vunpack.c.h.b16 %v865
        %v2056 = vunpack.c.l.b16 %v866
        %v2057 = vunpack.c.h.b16 %v866
        %v2058 = vunpack.c.l.b16 %v867
        %v2059 = vunpack.c.h.b16 %v867
        %v2060 = vunpack.c.l.b16 %v868
        %v2061 = vunpack.c.h.b16 %v868
        %v2062 = vunpack.c.l.b16 %v869
        %v2063 = vunpack.c.h.b16 %v869
        %v2064 = vunpack.c.l.b16 %v870
        %v2065 = vunpack.c.h.b16 %v870
        %v2066 = vunpack.c.l.b16 %v871
        %v2067 = vunpack.c.h.b16 %v871
        %v2068 = vunpack.c.l.b16 %v872
        %v2069 = vunpack.c.h.b16 %v872
        %v2070 = vunpack.c.l.b16 %v873
        %v2071 = vunpack.c.h.b16 %v873
        %v2072 = vunpack.c.l.b16 %v874
        %v2073 = vunpack.c.h.b16 %v874
        %v2074 = vunpack.c.l.b16 %v875
        %v2075 = vunpack.c.h.b16 %v875
        %v2076 = vunpack.c.l.b16 %v876
        %v2077 = vunpack.c.h.b16 %v876
        %v2078 = vunpack.c.l.b16 %v877
        %v2079 = vunpack.c.h.b16 %v877
        %v2080 = vunpack.c.l.b16 %v878
        %v2081 = vunpack.c.h.b16 %v878
        %v2082 = vunpack.c.l.b16 %v879
        %v2083 = vunpack.c.h.b16 %v879
        %v2084 = vunpack.c.l.b16 %v880
        %v2085 = vunpack.c.h.b16 %v880
        %v2086 = vunpack.c.l.b16 %v881
        %v2087 = vunpack.c.h.b16 %v881
        %v2088 = vunpack.c.l.b16 %v882
        %v2089 = vunpack.c.h.b16 %v882
        %v2090 = vunpack.c.l.b16 %v883
        %v2091 = vunpack.c.h.b16 %v883
        %v2092 = vunpack.c.l.b16 %v884
        %v2093 = vunpack.c.h.b16 %v884
        %v2094 = vunpack.c.l.b16 %v885
        %v2095 = vunpack.c.h.b16 %v885
        %v2096 = vunpack.c.l.b16 %v886
        %v2097 = vunpack.c.h.b16 %v886
        %v2098 = vunpack.c.l.b16 %v887
        %v2099 = vunpack.c.h.b16 %v887
        %v2100 = vunpack.c.l.b16 %v888
        %v2101 = vunpack.c.h.b16 %v888
        %v2102 = vunpack.c.l.b16 %v889
        %v2103 = vunpack.c.h.b16 %v889
        %v2104 = vunpack.c.l.b16 %v890
        %v2105 = vunpack.c.h.b16 %v890
        %v2106 = vunpack.c.l.b16 %v891
        %v2107 = vunpack.c.h.b16 %v891
        %v2108 = vunpack.c.l.b16 %v892
        %v2109 = vunpack.c.h.b16 %v892
        %v2110 = vunpack.c.l.b16 %v893
        %v2111 = vunpack.c.h.b16 %v893
        %v2112 = vunpack.c.l.b16 %v894
        %v2113 = vunpack.c.h.b16 %v894
        %v2114 = vunpack.c.l.b16 %v895
        %v2115 = vunpack.c.h.b16 %v895
        %v2116 = vunpack.c.l.b16 %v896
        %v2117 = vunpack.c.h.b16 %v896
        %v2118 = vunpack.c.l.b16 %v897
        %v2119 = vunpack.c.h.b16 %v897
        %v2120 = vunpack.c.l.b16 %v898
        %v2121 = vunpack.c.h.b16 %v898
        %v2122 = vunpack.c.l.b16 %v899
        %v2123 = vunpack.c.h.b16 %v899
        %v2124 = vunpack.c.l.b16 %v900
        %v2125 = vunpack.c.h.b16 %v900
        %v2126 = vunpack.c.l.b16 %v901
        %v2127 = vunpack.c.h.b16 %v901
        %v2128 = vunpack.c.l.b16 %v902
        %v2129 = vunpack.c.h.b16 %v902
        %v2130 = vunpack.c.l.b16 %v903
        %v2131 = vunpack.c.h.b16 %v903
        %v2132 = vunpack.c.l.b16 %v904
        %v2133 = vunpack.c.h.b16 %v904
        %v2134 = vunpack.c.l.b16 %v905
        %v2135 = vunpack.c.h.b16 %v905
        %v2136 = vunpack.c.l.b16 %v906
        %v2137 = vunpack.c.h.b16 %v906
        %v2138 = vunpack.c.l.b16 %v907
        %v2139 = vunpack.c.h.b16 %v907
        %v2140 = vunpack.c.l.b16 %v908
        %v2141 = vunpack.c.h.b16 %v908
        %v2142 = vunpack.c.l.b16 %v909
        %v2143 = vunpack.c.h.b16 %v909
        %v2144 = vunpack.c.l.b16 %v910
        %v2145 = vunpack.c.h.b16 %v910
        %v2146 = vunpack.c.l.b16 %v911
        %v2147 = vunpack.c.h.b16 %v911
        %v2148 = vunpack.c.l.b16 %v912
        %v2149 = vunpack.c.h.b16 %v912
        %v2150 = vunpack.c.l.b16 %v913
        %v2151 = vunpack.c.h.b16 %v913
        %v2152 = vunpack.c.l.b16 %v914
        %v2153 = vunpack.c.h.b16 %v914
        %v2154 = vunpack.c.l.b16 %v915
        %v2155 = vunpack.c.h.b16 %v915
        %v2156 = vunpack.c.l.b16 %v916
        %v2157 = vunpack.c.h.b16 %v916
        %v2158 = vunpack.c.l.b16 %v917
        %v2159 = vunpack.c.h.b16 %v917
        %v2160 = vunpack.c.l.b16 %v918
        %v2161 = vunpack.c.h.b16 %v918
        %v2162 = vunpack.c.l.b16 %v919
        %v2163 = vunpack.c.h.b16 %v919
        %v2164 = vunpack.c.l.b16 %v920
        %v2165 = vunpack.c.h.b16 %v920
        %v2166 = vunpack.c.l.b16 %v921
        %v2167 = vunpack.c.h.b16 %v921
        %v2168 = vunpack.c.l.b16 %v922
        %v2169 = vunpack.c.h.b16 %v922
        %v2170 = vunpack.c.l.b16 %v923
        %v2171 = vunpack.c.h.b16 %v923
        %v2172 = vunpack.c.l.b16 %v924
        %v2173 = vunpack.c.h.b16 %v924
        %v2174 = vunpack.c.l.b16 %v925
        %v2175 = vunpack.c.h.b16 %v925
        %v2176 = vunpack.c.l.b16 %v926
        %v2177 = vunpack.c.h.b16 %v926
        %v2178 = vunpack.c.l.b16 %v927
        %v2179 = vunpack.c.h.b16 %v927
        %v2180 = vunpack.c.l.b16 %v928
        %v2181 = vunpack.c.h.b16 %v928
        %v2182 = vunpack.c.l.b16 %v929
        %v2183 = vunpack.c.h.b16 %v929
        %v2184 = vunpack.c.l.b16 %v930
        %v2185 = vunpack.c.h.b16 %v930
        %v2186 = vunpack.c.l.b16 %v931
        %v2187 = vunpack.c.h.b16 %v931
        %v2188 = vunpack.c.l.b16 %v932
        %v2189 = vunpack.c.h.b16 %v932
        %v2190 = vunpack.c.l.b16 %v933
        %v2191 = vunpack.c.h.b16 %v933
        %v2192 = vunpack.c.l.b16 %v934
        %v2193 = vunpack.c.h.b16 %v934
        %v2194 = vunpack.c.l.b16 %v935
        %v2195 = vunpack.c.h.b16 %v935
        %v2196 = vunpack.c.l.b16 %v936
        %v2197 = vunpack.c.h.b16 %v936
        %v2198 = vunpack.c.l.b16 %v937
        %v2199 = vunpack.c.h.b16 %v937
        %v2200 = vunpack.c.l.b16 %v938
        %v2201 = vunpack.c.h.b16 %v938
        %v2202 = vunpack.c.l.b16 %v939
        %v2203 = vunpack.c.h.b16 %v939
        %v2204 = vunpack.c.l.b16 %v940
        %v2205 = vunpack.c.h.b16 %v940
        %v2206 = vunpack.c.l.b16 %v941
        %v2207 = vunpack.c.h.b16 %v941
        %v2208 = vunpack.c.l.b16 %v942
        %v2209 = vunpack.c.h.b16 %v942
        %v2210 = vunpack.c.l.b16 %v943
        %v2211 = vunpack.c.h.b16 %v943
        %v2212 = vunpack.c.l.b16 %v944
        %v2213 = vunpack.c.h.b16 %v944
        %v2214 = vunpack.c.l.b16 %v945
        %v2215 = vunpack.c.h.b16 %v945
        %v2216 = vunpack.c.l.b16 %v946
        %v2217 = vunpack.c.h.b16 %v946
        %v2218 = vunpack.c.l.b16 %v947
        %v2219 = vunpack.c.h.b16 %v947
        %v2220 = vunpack.c.l.b16 %v948
        %v2221 = vunpack.c.h.b16 %v948
        %v2222 = vunpack.c.l.b16 %v949
        %v2223 = vunpack.c.h.b16 %v949
        %v2224 = vunpack.c.l.b16 %v950
        %v2225 = vunpack.c.h.b16 %v950
        %v2226 = vunpack.c.l.b16 %v951
        %v2227 = vunpack.c.h.b16 %v951
        %v2228 = vunpack.c.l.b16 %v952
        %v2229 = vunpack.c.h.b16 %v952
        %v2230 = vunpack.c.l.b16 %v953
        %v2231 = vunpack.c.h.b16 %v953
        %v2232 = vunpack.c.l.b16 %v954
        %v2233 = vunpack.c.h.b16 %v954
        %v2234 = vunpack.c.l.b16 %v955
        %v2235 = vunpack.c.h.b16 %v955
        %v2236 = vunpack.c.l.b16 %v956
        %v2237 = vunpack.c.h.b16 %v956
        %v2238 = vunpack.c.l.b16 %v957
        %v2239 = vunpack.c.h.b16 %v957
        %v2240 = vunpack.c.l.b16 %v958
        %v2241 = vunpack.c.h.b16 %v958
        %v2242 = vunpack.c.l.b16 %v959
        %v2243 = vunpack.c.h.b16 %v959
        %v2244 = vunpack.c.l.b16 %v960
        %v2245 = vunpack.c.h.b16 %v960
        %v2246 = vunpack.c.l.b16 %v961
        %v2247 = vunpack.c.h.b16 %v961
        %v2248 = vunpack.c.l.b16 %v962
        %v2249 = vunpack.c.h.b16 %v962
        %v2250 = vunpack.c.l.b16 %v963
        %v2251 = vunpack.c.h.b16 %v963
        %v2252 = vunpack.c.l.b16 %v964
        %v2253 = vunpack.c.h.b16 %v964
        %v2254 = vunpack.c.l.b16 %v965
        %v2255 = vunpack.c.h.b16 %v965
        %v2256 = vunpack.c.l.b16 %v966
        %v2257 = vunpack.c.h.b16 %v966
        %v2258 = vunpack.c.l.b16 %v967
        %v2259 = vunpack.c.h.b16 %v967
        %v2260 = vunpack.c.l.b16 %v968
        %v2261 = vunpack.c.h.b16 %v968
        %v2262 = vunpack.c.l.b16 %v969
        %v2263 = vunpack.c.h.b16 %v969
        %v2264 = vunpack.c.l.b16 %v970
        %v2265 = vunpack.c.h.b16 %v970
        %v2266 = vunpack.c.l.b16 %v971
        %v2267 = vunpack.c.h.b16 %v971
        %v2268 = vunpack.c.l.b16 %v972
        %v2269 = vunpack.c.h.b16 %v972
        %v2270 = vunpack.c.l.b16 %v973
        %v2271 = vunpack.c.h.b16 %v973
        %v2272 = vunpack.c.l.b16 %v974
        %v2273 = vunpack.c.h.b16 %v974
        %v2274 = vunpack.c.l.b16 %v975
        %v2275 = vunpack.c.h.b16 %v975
        %v2276 = vunpack.c.l.b16 %v976
        %v2277 = vunpack.c.h.b16 %v976
        %v2278 = vunpack.c.l.b16 %v977
        %v2279 = vunpack.c.h.b16 %v977
        %v2280 = vunpack.c.l.b16 %v978
        %v2281 = vunpack.c.h.b16 %v978
        %v2282 = vunpack.c.l.b16 %v979
        %v2283 = vunpack.c.h.b16 %v979
        %v2284 = vunpack.c.l.b16 %v980
        %v2285 = vunpack.c.h.b16 %v980
        %v2286 = vunpack.c.l.b16 %v981
        %v2287 = vunpack.c.h.b16 %v981
        %v2288 = vunpack.c.l.b16 %v982
        %v2289 = vunpack.c.h.b16 %v982
        %v2290 = vunpack.c.l.b16 %v983
        %v2291 = vunpack.c.h.b16 %v983
        %v2292 = vunpack.c.l.b16 %v984
        %v2293 = vunpack.c.h.b16 %v984
        %v2294 = vunpack.c.l.b16 %v985
        %v2295 = vunpack.c.h.b16 %v985
        %v2296 = vunpack.c.l.b16 %v986
        %v2297 = vunpack.c.h.b16 %v986
        %v2298 = vunpack.c.l.b16 %v987
        %v2299 = vunpack.c.h.b16 %v987
        %v2300 = vunpack.c.l.b16 %v988
        %v2301 = vunpack.c.h.b16 %v988
        %v2302 = vunpack.c.l.b16 %v989
        %v2303 = vunpack.c.h.b16 %v989
        %v2304 = vunpack.c.l.b16 %v990
        %v2305 = vunpack.c.h.b16 %v990
        %v2306 = vunpack.c.l.b16 %v991
        %v2307 = vunpack.c.h.b16 %v991
        %v2308 = vunpack.c.l.b16 %v992
        %v2309 = vunpack.c.h.b16 %v992
        %v2310 = vunpack.c.l.b16 %v993
        %v2311 = vunpack.c.h.b16 %v993
        %v2312 = vunpack.c.l.b16 %v994
        %v2313 = vunpack.c.h.b16 %v994
        %v2314 = vunpack.c.l.b16 %v995
        %v2315 = vunpack.c.h.b16 %v995
        %v2316 = vunpack.c.l.b16 %v996
        %v2317 = vunpack.c.h.b16 %v996
        %v2318 = vunpack.c.l.b16 %v997
        %v2319 = vunpack.c.h.b16 %v997
        %v2320 = vunpack.c.l.b16 %v998
        %v2321 = vunpack.c.h.b16 %v998
        %v2322 = vunpack.c.l.b16 %v999
        %v2323 = vunpack.c.h.b16 %v999
        %v2324 = vunpack.c.l.b16 %v1000
        %v2325 = vunpack.c.h.b16 %v1000
        %v2326 = vunpack.c.l.b16 %v1001
        %v2327 = vunpack.c.h.b16 %v1001
        %v2328 = vunpack.c.l.b16 %v1002
        %v2329 = vunpack.c.h.b16 %v1002
        %v2330 = vunpack.c.l.b16 %v1003
        %v2331 = vunpack.c.h.b16 %v1003
        %v2332 = vunpack.c.l.b16 %v1004
        %v2333 = vunpack.c.h.b16 %v1004
        %v2334 = vunpack.c.l.b16 %v1005
        %v2335 = vunpack.c.h.b16 %v1005
        %v2336 = vunpack.c.l.b16 %v1006
        %v2337 = vunpack.c.h.b16 %v1006
        %v2338 = vunpack.c.l.b16 %v1007
        %v2339 = vunpack.c.h.b16 %v1007
        %v2340 = vunpack.c.l.b16 %v1008
        %v2341 = vunpack.c.h.b16 %v1008
        %v2342 = vunpack.c.l.b16 %v1009
        %v2343 = vunpack.c.h.b16 %v1009
        %v2344 = vunpack.c.l.b16 %v1010
        %v2345 = vunpack.c.h.b16 %v1010
        %v2346 = vunpack.c.l.b16 %v1011
        %v2347 = vunpack.c.h.b16 %v1011
        %v2348 = vunpack.c.l.b16 %v1012
        %v2349 = vunpack.c.h.b16 %v1012
        %v2350 = vunpack.c.l.b16 %v1013
        %v2351 = vunpack.c.h.b16 %v1013
        %v2352 = vunpack.c.l.b16 %v1014
        %v2353 = vunpack.c.h.b16 %v1014
        %v2354 = vunpack.c.l.b16 %v1015
        %v2355 = vunpack.c.h.b16 %v1015
        %v2356 = vunpack.c.l.b16 %v1016
        %v2357 = vunpack.c.h.b16 %v1016
        %v2358 = vunpack.c.l.b16 %v1017
        %v2359 = vunpack.c.h.b16 %v1017
        %v2360 = vunpack.c.l.b16 %v1018
        %v2361 = vunpack.c.h.b16 %v1018
        %v2362 = vunpack.c.l.b16 %v1019
        %v2363 = vunpack.c.h.b16 %v1019
        %v2364 = vunpack.c.l.b16 %v1020
        %v2365 = vunpack.c.h.b16 %v1020
        %v2366 = vunpack.c.l.b16 %v1021
        %v2367 = vunpack.c.h.b16 %v1021
        %v2368 = vunpack.c.l.b16 %v1022
        %v2369 = vunpack.c.h.b16 %v1022
        %v2370 = vunpack.c.l.b16 %v1023
        %v2371 = vunpack.c.h.b16 %v1023
        %v2372 = vunpack.c.l.b16 %v1024
        %v2373 = vunpack.c.h.b16 %v1024
        %v2374 = vunpack.c.l.b16 %v1025
        %v2375 = vunpack.c.h.b16 %v1025
        %v2376 = vunpack.c.l.b16 %v1026
        %v2377 = vunpack.c.h.b16 %v1026
        %v2378 = vunpack.c.l.b16 %v1027
        %v2379 = vunpack.c.h.b16 %v1027
        %v2380 = vunpack.c.l.b16 %v1028
        %v2381 = vunpack.c.h.b16 %v1028
        %v2382 = vunpack.c.l.b16 %v1029
        %v2383 = vunpack.c.h.b16 %v1029
        %v2384 = vunpack.c.l.b16 %v1030
        %v2385 = vunpack.c.h.b16 %v1030
        %v2386 = vunpack.c.l.b16 %v1031
        %v2387 = vunpack.c.h.b16 %v1031
        %v2388 = vunpack.c.l.b16 %v1032
        %v2389 = vunpack.c.h.b16 %v1032
        %v2390 = vunpack.c.l.b16 %v1033
        %v2391 = vunpack.c.h.b16 %v1033
        %v2392 = vunpack.c.l.b16 %v1034
        %v2393 = vunpack.c.h.b16 %v1034
        %v2394 = vunpack.c.l.b16 %v1035
        %v2395 = vunpack.c.h.b16 %v1035
        %v2396 = vunpack.c.l.b16 %v1036
        %v2397 = vunpack.c.h.b16 %v1036
        %v2398 = vunpack.c.l.b16 %v1037
        %v2399 = vunpack.c.h.b16 %v1037
        %v2400 = vunpack.c.l.b16 %v1038
        %v2401 = vunpack.c.h.b16 %v1038
        %v2402 = vunpack.c.l.b16 %v1039
        %v2403 = vunpack.c.h.b16 %v1039
        %v2404 = vunpack.c.l.b16 %v1040
        %v2405 = vunpack.c.h.b16 %v1040
        %v2406 = vunpack.c.l.b16 %v1041
        %v2407 = vunpack.c.h.b16 %v1041
        %v2408 = vunpack.c.l.b16 %v1042
        %v2409 = vunpack.c.h.b16 %v1042
        %v2410 = vunpack.c.l.b16 %v1043
        %v2411 = vunpack.c.h.b16 %v1043
        %v2412 = vunpack.c.l.b16 %v1044
        %v2413 = vunpack.c.h.b16 %v1044
        %v2414 = vunpack.c.l.b16 %v1045
        %v2415 = vunpack.c.h.b16 %v1045
        %v2416 = vunpack.c.l.b16 %v1046
        %v2417 = vunpack.c.h.b16 %v1046
        %v2418 = vunpack.c.l.b16 %v1047
        %v2419 = vunpack.c.h.b16 %v1047
        %v2420 = vunpack.c.l.b16 %v1048
        %v2421 = vunpack.c.h.b16 %v1048
        %v2422 = vunpack.c.l.b16 %v1049
        %v2423 = vunpack.c.h.b16 %v1049
        %v2424 = vunpack.c.l.b16 %v1050
        %v2425 = vunpack.c.h.b16 %v1050
        %v2426 = vunpack.c.l.b16 %v1051
        %v2427 = vunpack.c.h.b16 %v1051
        %v2428 = vunpack.c.l.b16 %v1052
        %v2429 = vunpack.c.h.b16 %v1052
        %v2430 = vunpack.c.l.b16 %v1053
        %v2431 = vunpack.c.h.b16 %v1053
        %v2432 = vunpack.c.l.b16 %v1054
        %v2433 = vunpack.c.h.b16 %v1054
        %v2434 = vunpack.c.l.b16 %v1055
        %v2435 = vunpack.c.h.b16 %v1055
        %v2436 = vunpack.c.l.b16 %v1056
        %v2437 = vunpack.c.h.b16 %v1056
        %v2438 = vunpack.c.l.b16 %v1057
        %v2439 = vunpack.c.h.b16 %v1057
        %v2440 = vunpack.c.l.b16 %v1058
        %v2441 = vunpack.c.h.b16 %v1058
        %v2442 = vunpack.c.l.b16 %v1059
        %v2443 = vunpack.c.h.b16 %v1059
        %v2444 = vunpack.c.l.b16 %v1060
        %v2445 = vunpack.c.h.b16 %v1060
        %v2446 = vunpack.c.l.b16 %v1061
        %v2447 = vunpack.c.h.b16 %v1061
        %v2448 = vunpack.c.l.b16 %v1062
        %v2449 = vunpack.c.h.b16 %v1062
        %v2450 = vunpack.c.l.b16 %v1063
        %v2451 = vunpack.c.h.b16 %v1063
        %v2452 = vunpack.c.l.b16 %v1064
        %v2453 = vunpack.c.h.b16 %v1064
        %v2454 = vunpack.c.l.b16 %v1065
        %v2455 = vunpack.c.h.b16 %v1065
        %v2456 = vunpack.c.l.b16 %v1066
        %v2457 = vunpack.c.h.b16 %v1066
        %v2458 = vunpack.c.l.b16 %v1067
        %v2459 = vunpack.c.h.b16 %v1067
        %v2460 = vunpack.c.l.b16 %v1068
        %v2461 = vunpack.c.h.b16 %v1068
        %v2462 = vunpack.c.l.b16 %v1069
        %v2463 = vunpack.c.h.b16 %v1069
        %v2464 = vunpack.c.l.b16 %v1070
        %v2465 = vunpack.c.h.b16 %v1070
        %v2466 = vunpack.c.l.b16 %v1071
        %v2467 = vunpack.c.h.b16 %v1071
        %v2468 = vunpack.c.l.b16 %v1072
        %v2469 = vunpack.c.h.b16 %v1072
        %v2470 = vunpack.c.l.b16 %v1073
        %v2471 = vunpack.c.h.b16 %v1073
        %v2472 = vunpack.c.l.b16 %v1074
        %v2473 = vunpack.c.h.b16 %v1074
        %v2474 = vunpack.c.l.b16 %v1075
        %v2475 = vunpack.c.h.b16 %v1075
        %v2476 = vunpack.c.l.b16 %v1076
        %v2477 = vunpack.c.h.b16 %v1076
        %v2478 = vunpack.c.l.b16 %v1077
        %v2479 = vunpack.c.h.b16 %v1077
        %v2480 = vunpack.c.l.b16 %v1078
        %v2481 = vunpack.c.h.b16 %v1078
        %v2482 = vunpack.c.l.b16 %v1079
        %v2483 = vunpack.c.h.b16 %v1079
        %v2484 = vunpack.c.l.b16 %v1080
        %v2485 = vunpack.c.h.b16 %v1080
        %v2486 = vunpack.c.l.b16 %v1081
        %v2487 = vunpack.c.h.b16 %v1081
        %v2488 = vunpack.c.l.b16 %v1082
        %v2489 = vunpack.c.h.b16 %v1082
        %v2490 = vunpack.c.l.b16 %v1083
        %v2491 = vunpack.c.h.b16 %v1083
        %v2492 = vunpack.c.l.b16 %v1084
        %v2493 = vunpack.c.h.b16 %v1084
        %v2494 = vunpack.c.l.b16 %v1085
        %v2495 = vunpack.c.h.b16 %v1085
        %v2496 = vunpack.c.l.b16 %v1086
        %v2497 = vunpack.c.h.b16 %v1086
        %v2498 = vunpack.c.l.b16 %v1087
        %v2499 = vunpack.c.h.b16 %v1087
        %v2500 = vunpack.c.l.b16 %v1088
        %v2501 = vunpack.c.h.b16 %v1088
        %v2502 = vunpack.c.l.b16 %v1089
        %v2503 = vunpack.c.h.b16 %v1089
        %v2504 = vunpack.c.l.b16 %v1090
        %v2505 = vunpack.c.h.b16 %v1090
        %v2506 = vunpack.c.l.b16 %v1091
        %v2507 = vunpack.c.h.b16 %v1091
        %v2508 = vunpack.c.l.b16 %v1092
        %v2509 = vunpack.c.h.b16 %v1092
        %v2510 = vunpack.c.l.b16 %v1093
        %v2511 = vunpack.c.h.b16 %v1093
        %v2512 = vunpack.c.l.b16 %v1094
        %v2513 = vunpack.c.h.b16 %v1094
        %v2514 = vunpack.c.l.b16 %v1095
        %v2515 = vunpack.c.h.b16 %v1095
        %v2516 = vunpack.c.l.b16 %v1096
        %v2517 = vunpack.c.h.b16 %v1096
        %v2518 = vunpack.c.l.b16 %v1097
        %v2519 = vunpack.c.h.b16 %v1097
        %v2520 = vunpack.c.l.b16 %v1098
        %v2521 = vunpack.c.h.b16 %v1098
        %v2522 = vunpack.c.l.b16 %v1099
        %v2523 = vunpack.c.h.b16 %v1099
        %v2524 = vunpack.c.l.b16 %v1100
        %v2525 = vunpack.c.h.b16 %v1100
        %v2526 = vunpack.c.l.b16 %v1101
        %v2527 = vunpack.c.h.b16 %v1101
        %v2528 = vunpack.c.l.b16 %v1102
        %v2529 = vunpack.c.h.b16 %v1102
        %v2530 = vunpack.c.l.b16 %v1103
        %v2531 = vunpack.c.h.b16 %v1103
        %v2532 = vunpack.c.l.b16 %v1104
        %v2533 = vunpack.c.h.b16 %v1104
        %v2534 = vunpack.c.l.b16 %v1105
        %v2535 = vunpack.c.h.b16 %v1105
        %v2536 = vunpack.c.l.b16 %v1106
        %v2537 = vunpack.c.h.b16 %v1106
        %v2538 = vunpack.c.l.b16 %v1107
        %v2539 = vunpack.c.h.b16 %v1107
        %v2540 = vunpack.c.l.b16 %v1108
        %v2541 = vunpack.c.h.b16 %v1108
        %v2542 = vunpack.c.l.b16 %v1109
        %v2543 = vunpack.c.h.b16 %v1109
        %v2544 = vunpack.c.l.b16 %v1110
        %v2545 = vunpack.c.h.b16 %v1110
        %v2546 = vunpack.c.l.b16 %v1111
        %v2547 = vunpack.c.h.b16 %v1111
        %v2548 = vunpack.c.l.b16 %v1112
        %v2549 = vunpack.c.h.b16 %v1112
        %v2550 = vunpack.c.l.b16 %v1113
        %v2551 = vunpack.c.h.b16 %v1113
        %v2552 = vunpack.c.l.b16 %v1114
        %v2553 = vunpack.c.h.b16 %v1114
        %v2554 = vunpack.c.l.b16 %v1115
        %v2555 = vunpack.c.h.b16 %v1115
        %v2556 = vunpack.c.l.b16 %v1116
        %v2557 = vunpack.c.h.b16 %v1116
        %v2558 = vunpack.c.l.b16 %v1117
        %v2559 = vunpack.c.h.b16 %v1117
        %v2560 = vunpack.c.l.b16 %v1118
        %v2561 = vunpack.c.h.b16 %v1118
        %v2562 = vunpack.c.l.b16 %v1119
        %v2563 = vunpack.c.h.b16 %v1119
        %v2564 = vunpack.c.l.b16 %v1120
        %v2565 = vunpack.c.h.b16 %v1120
        %v2566 = vunpack.c.l.b16 %v1121
        %v2567 = vunpack.c.h.b16 %v1121
        %v2568 = vunpack.c.l.b16 %v1122
        %v2569 = vunpack.c.h.b16 %v1122
        %v2570 = vunpack.c.l.b16 %v1123
        %v2571 = vunpack.c.h.b16 %v1123
        %v2572 = vunpack.c.l.b16 %v1124
        %v2573 = vunpack.c.h.b16 %v1124
        %v2574 = vunpack.c.l.b16 %v1125
        %v2575 = vunpack.c.h.b16 %v1125
        %v2576 = vunpack.c.l.b16 %v1126
        %v2577 = vunpack.c.h.b16 %v1126
        %v2578 = vunpack.c.l.b16 %v1127
        %v2579 = vunpack.c.h.b16 %v1127
        %v2580 = vunpack.c.l.b16 %v1128
        %v2581 = vunpack.c.h.b16 %v1128
        %v2582 = vunpack.c.l.b16 %v1129
        %v2583 = vunpack.c.h.b16 %v1129
        %v2584 = vunpack.c.l.b16 %v1130
        %v2585 = vunpack.c.h.b16 %v1130
        %v2586 = vunpack.c.l.b16 %v1131
        %v2587 = vunpack.c.h.b16 %v1131
        %v2588 = vunpack.c.l.b16 %v1132
        %v2589 = vunpack.c.h.b16 %v1132
        %v2590 = vunpack.c.l.b16 %v1133
        %v2591 = vunpack.c.h.b16 %v1133
        %v2592 = vunpack.c.l.b16 %v1134
        %v2593 = vunpack.c.h.b16 %v1134
        %v2594 = vunpack.c.l.b16 %v1135
        %v2595 = vunpack.c.h.b16 %v1135
        %v2596 = vunpack.c.l.b16 %v1136
        %v2597 = vunpack.c.h.b16 %v1136
        %v2598 = vunpack.c.l.b16 %v1137
        %v2599 = vunpack.c.h.b16 %v1137
        %v2600 = vunpack.c.l.b16 %v1138
        %v2601 = vunpack.c.h.b16 %v1138
        %v2602 = vunpack.c.l.b16 %v1139
        %v2603 = vunpack.c.h.b16 %v1139
        %v2604 = vunpack.c.l.b16 %v1140
        %v2605 = vunpack.c.h.b16 %v1140
        %v2606 = vunpack.c.l.b16 %v1141
        %v2607 = vunpack.c.h.b16 %v1141
        %v2608 = vunpack.c.l.b16 %v1142
        %v2609 = vunpack.c.h.b16 %v1142
        %v2610 = vunpack.c.l.b16 %v1143
        %v2611 = vunpack.c.h.b16 %v1143
        %v2612 = vunpack.c.l.b16 %v1144
        %v2613 = vunpack.c.h.b16 %v1144
        %v2614 = vunpack.c.l.b16 %v1145
        %v2615 = vunpack.c.h.b16 %v1145
        %v2616 = vunpack.c.l.b16 %v1146
        %v2617 = vunpack.c.h.b16 %v1146
        %v2618 = vunpack.c.l.b16 %v1147
        %v2619 = vunpack.c.h.b16 %v1147
        %v2620 = vunpack.c.l.b16 %v1148
        %v2621 = vunpack.c.h.b16 %v1148
        %v2622 = vunpack.c.l.b16 %v1149
        %v2623 = vunpack.c.h.b16 %v1149
        %v2624 = vunpack.c.l.b16 %v1150
        %v2625 = vunpack.c.h.b16 %v1150
        %v2626 = vunpack.c.l.b16 %v1151
        %v2627 = vunpack.c.h.b16 %v1151
        %v2628 = vunpack.c.l.b16 %v1152
        %v2629 = vunpack.c.h.b16 %v1152
        %v2630 = vunpack.c.l.b16 %v1153
        %v2631 = vunpack.c.h.b16 %v1153
        %v2632 = vunpack.c.l.b16 %v1154
        %v2633 = vunpack.c.h.b16 %v1154
        %v2634 = vunpack.c.l.b16 %v1155
        %v2635 = vunpack.c.h.b16 %v1155
        %v2636 = vunpack.c.l.b16 %v1156
        %v2637 = vunpack.c.h.b16 %v1156
        %v2638 = vunpack.c.l.b16 %v1157
        %v2639 = vunpack.c.h.b16 %v1157
        %v2640 = vunpack.c.l.b16 %v1158
        %v2641 = vunpack.c.h.b16 %v1158
        %v2642 = vunpack.c.l.b16 %v1159
        %v2643 = vunpack.c.h.b16 %v1159
        %v2644 = vunpack.c.l.b16 %v1160
        %v2645 = vunpack.c.h.b16 %v1160
        %v2646 = vunpack.c.l.b16 %v1161
        %v2647 = vunpack.c.h.b16 %v1161
        %v2648 = vunpack.c.l.b16 %v1162
        %v2649 = vunpack.c.h.b16 %v1162
        %v2650 = vunpack.c.l.b16 %v1163
        %v2651 = vunpack.c.h.b16 %v1163
        %v2652 = vunpack.c.l.b16 %v1164
        %v2653 = vunpack.c.h.b16 %v1164
        %v2654 = vunpack.c.l.b16 %v1165
        %v2655 = vunpack.c.h.b16 %v1165
        %v2656 = vunpack.c.l.b16 %v1166
        %v2657 = vunpack.c.h.b16 %v1166
        %v2658 = vunpack.c.l.b16 %v1167
        %v2659 = vunpack.c.h.b16 %v1167
        %v2660 = vunpack.c.l.b16 %v1168
        %v2661 = vunpack.c.h.b16 %v1168
        %v2662 = vunpack.c.l.b16 %v1169
        %v2663 = vunpack.c.h.b16 %v1169
        %v2664 = vunpack.c.l.b16 %v1170
        %v2665 = vunpack.c.h.b16 %v1170
        %v2666 = vunpack.c.l.b16 %v1171
        %v2667 = vunpack.c.h.b16 %v1171
        %v2668 = vunpack.c.l.b16 %v1172
        %v2669 = vunpack.c.h.b16 %v1172
        %v2670 = vunpack.c.l.b16 %v1173
        %v2671 = vunpack.c.h.b16 %v1173
        %v2672 = vunpack.c.l.b16 %v1174
        %v2673 = vunpack.c.h.b16 %v1174
        %v2674 = vunpack.c.l.b16 %v1175
        %v2675 = vunpack.c.h.b16 %v1175
        %v2676 = vunpack.c.l.b16 %v1176
        %v2677 = vunpack.c.h.b16 %v1176
        %v2678 = vunpack.c.l.b16 %v1177
        %v2679 = vunpack.c.h.b16 %v1177
        %v2680 = vunpack.c.l.b16 %v1178
        %v2681 = vunpack.c.h.b16 %v1178
        %v2682 = vunpack.c.l.b16 %v1179
        %v2683 = vunpack.c.h.b16 %v1179
        %v2684 = vunpack.c.l.b16 %v1180
        %v2685 = vunpack.c.h.b16 %v1180
        %v2686 = vunpack.c.l.b16 %v1181
        %v2687 = vunpack.c.h.b16 %v1181
        %v2688 = vunpack.c.l.b16 %v1182
        %v2689 = vunpack.c.h.b16 %v1182
        %v2690 = vunpack.c.l.b16 %v1183
        %v2691 = vunpack.c.h.b16 %v1183
        %v2692 = vunpack.c.l.b16 %v1184
        %v2693 = vunpack.c.h.b16 %v1184
        %v2694 = vunpack.c.l.b16 %v1185
        %v2695 = vunpack.c.h.b16 %v1185
        %v2696 = vunpack.c.l.b16 %v1186
        %v2697 = vunpack.c.h.b16 %v1186
        %v2698 = vunpack.c.l.b16 %v1187
        %v2699 = vunpack.c.h.b16 %v1187
        %v2700 = vunpack.c.l.b16 %v1188
        %v2701 = vunpack.c.h.b16 %v1188
        %v2702 = vunpack.c.l.b16 %v1189
        %v2703 = vunpack.c.h.b16 %v1189
        %v2704 = vunpack.c.l.b16 %v1190
        %v2705 = vunpack.c.h.b16 %v1190
        %v2706 = vunpack.c.l.b16 %v1191
        %v2707 = vunpack.c.h.b16 %v1191
        %v2708 = vunpack.c.l.b16 %v1192
        %v2709 = vunpack.c.h.b16 %v1192
        %v2710 = vunpack.c.l.b16 %v1193
        %v2711 = vunpack.c.h.b16 %v1193
        %v2712 = vunpack.c.l.b16 %v1194
        %v2713 = vunpack.c.h.b16 %v1194
        %v2714 = vunpack.c.l.b16 %v1195
        %v2715 = vunpack.c.h.b16 %v1195
        %v2716 = vunpack.c.l.b16 %v1196
        %v2717 = vunpack.c.h.b16 %v1196
        %v2718 = vunpack.c.l.b16 %v1197
        %v2719 = vunpack.c.h.b16 %v1197
        %v2720 = vunpack.c.l.b16 %v1198
        %v2721 = vunpack.c.h.b16 %v1198
        %v2722 = vunpack.c.l.b16 %v1199
        %v2723 = vunpack.c.h.b16 %v1199
        %v2724 = vunpack.c.l.b16 %v1200
        %v2725 = vunpack.c.h.b16 %v1200
        %v2726 = vunpack.c.l.b16 %v1201
        %v2727 = vunpack.c.h.b16 %v1201
        %v2728 = vunpack.c.l.b16 %v1202
        %v2729 = vunpack.c.h.b16 %v1202
        %v2730 = vunpack.c.l.b16 %v1203
        %v2731 = vunpack.c.h.b16 %v1203
        %v2732 = vunpack.c.l.b16 %v1204
        %v2733 = vunpack.c.h.b16 %v1204
        %v2734 = vunpack.c.l.b16 %v1205
        %v2735 = vunpack.c.h.b16 %v1205
        %v2736 = vunpack.c.l.b16 %v1206
        %v2737 = vunpack.c.h.b16 %v1206
        %v2738 = vunpack.c.l.b16 %v1207
        %v2739 = vunpack.c.h.b16 %v1207
        %v2740 = vunpack.c.l.b16 %v1208
        %v2741 = vunpack.c.h.b16 %v1208
        %v2742 = vunpack.c.l.b16 %v1209
        %v2743 = vunpack.c.h.b16 %v1209
        %v2744 = vunpack.c.l.b16 %v1210
        %v2745 = vunpack.c.h.b16 %v1210
        %v2746 = vunpack.c.l.b16 %v1211
        %v2747 = vunpack.c.h.b16 %v1211
        %v2748 = vunpack.c.l.b16 %v1212
        %v2749 = vunpack.c.h.b16 %v1212
        %v2750 = vunpack.c.l.b16 %v1213
        %v2751 = vunpack.c.h.b16 %v1213
        %v2752 = vunpack.c.l.b16 %v1214
        %v2753 = vunpack.c.h.b16 %v1214
        %v2754 = vunpack.c.l.b16 %v1215
        %v2755 = vunpack.c.h.b16 %v1215
        %v2756 = vunpack.c.l.b16 %v1216
        %v2757 = vunpack.c.h.b16 %v1216
        %v2758 = vunpack.c.l.b16 %v1217
        %v2759 = vunpack.c.h.b16 %v1217
        %v2760 = vunpack.c.l.b16 %v1218
        %v2761 = vunpack.c.h.b16 %v1218
        %v2762 = vunpack.c.l.b16 %v1219
        %v2763 = vunpack.c.h.b16 %v1219
        %v2764 = vunpack.c.l.b16 %v1220
        %v2765 = vunpack.c.h.b16 %v1220
        %v2766 = vunpack.c.l.b16 %v1221
        %v2767 = vunpack.c.h.b16 %v1221
        %v2768 = vunpack.c.l.b16 %v1222
        %v2769 = vunpack.c.h.b16 %v1222
        %v2770 = vunpack.c.l.b16 %v1223
        %v2771 = vunpack.c.h.b16 %v1223
        %v2772 = vunpack.c.l.b16 %v1224
        %v2773 = vunpack.c.h.b16 %v1224
        %v2774 = vunpack.c.l.b16 %v1225
        %v2775 = vunpack.c.h.b16 %v1225
        %v2776 = vunpack.c.l.b16 %v1226
        %v2777 = vunpack.c.h.b16 %v1226
        %v2778 = vunpack.c.l.b16 %v1227
        %v2779 = vunpack.c.h.b16 %v1227
        %v2780 = vunpack.c.l.b16 %v1228
        %v2781 = vunpack.c.h.b16 %v1228
        %v2782 = vunpack.c.l.b16 %v1229
        %v2783 = vunpack.c.h.b16 %v1229
        %v2784 = vpack.c.b16 %v1768, %v1760
        %v2785 = vpack.c.b16 %v1769, %v1761
        %v2786 = vpack.c.b16 %v1770, %v1762
        %v2787 = vpack.c.b16 %v1771, %v1763
        %v2788 = vpack.c.b16 %v1772, %v1764
        %v2789 = vpack.c.b16 %v1773, %v1765
        %v2790 = vpack.c.b16 %v1774, %v1766
        %v2791 = vpack.c.b16 %v1775, %v1767
        %v2792 = vpack.c.b16 %v1784, %v1776
        %v2793 = vpack.c.b16 %v1785, %v1777
        %v2794 = vpack.c.b16 %v1786, %v1778
        %v2795 = vpack.c.b16 %v1787, %v1779
        %v2796 = vpack.c.b16 %v1788, %v1780
        %v2797 = vpack.c.b16 %v1789, %v1781
        %v2798 = vpack.c.b16 %v1790, %v1782
        %v2799 = vpack.c.b16 %v1791, %v1783
        %v2800 = vpack.c.b16 %v1800, %v1792
        %v2801 = vpack.c.b16 %v1801, %v1793
        %v2802 = vpack.c.b16 %v1802, %v1794
        %v2803 = vpack.c.b16 %v1803, %v1795
        %v2804 = vpack.c.b16 %v1804, %v1796
        %v2805 = vpack.c.b16 %v1805, %v1797
        %v2806 = vpack.c.b16 %v1806, %v1798
        %v2807 = vpack.c.b16 %v1807, %v1799
        %v2808 = vpack.c.b16 %v1816, %v1808
        %v2809 = vpack.c.b16 %v1817, %v1809
        %v2810 = vpack.c.b16 %v1818, %v1810
        %v2811 = vpack.c.b16 %v1819, %v1811
        %v2812 = vpack.c.b16 %v1820, %v1812
        %v2813 = vpack.c.b16 %v1821, %v1813
        %v2814 = vpack.c.b16 %v1822, %v1814
        %v2815 = vpack.c.b16 %v1823, %v1815
        %v2816 = vpack.c.b16 %v1832, %v1824
        %v2817 = vpack.c.b16 %v1833, %v1825
        %v2818 = vpack.c.b16 %v1834, %v1826
        %v2819 = vpack.c.b16 %v1835, %v1827
        %v2820 = vpack.c.b16 %v1836, %v1828
        %v2821 = vpack.c.b16 %v1837, %v1829
        %v2822 = vpack.c.b16 %v1838, %v1830
        %v2823 = vpack.c.b16 %v1839, %v1831
        %v2824 = vpack.c.b16 %v1848, %v1840
        %v2825 = vpack.c.b16 %v1849, %v1841
        %v2826 = vpack.c.b16 %v1850, %v1842
        %v2827 = vpack.c.b16 %v1851, %v1843
        %v2828 = vpack.c.b16 %v1852, %v1844
        %v2829 = vpack.c.b16 %v1853, %v1845
        %v2830 = vpack.c.b16 %v1854, %v1846
        %v2831 = vpack.c.b16 %v1855, %v1847
        %v2832 = vpack.c.b16 %v1864, %v1856
        %v2833 = vpack.c.b16 %v1865, %v1857
        %v2834 = vpack.c.b16 %v1866, %v1858
        %v2835 = vpack.c.b16 %v1867, %v1859
        %v2836 = vpack.c.b16 %v1868, %v1860
        %v2837 = vpack.c.b16 %v1869, %v1861
        %v2838 = vpack.c.b16 %v1870, %v1862
        %v2839 = vpack.c.b16 %v1871, %v1863
        %v2840 = vpack.c.b16 %v1880, %v1872
        %v2841 = vpack.c.b16 %v1881, %v1873
        %v2842 = vpack.c.b16 %v1882, %v1874
        %v2843 = vpack.c.b16 %v1883, %v1875
        %v2844 = vpack.c.b16 %v1884, %v1876
        %v2845 = vpack.c.b16 %v1885, %v1877
        %v2846 = vpack.c.b16 %v1886, %v1878
        %v2847 = vpack.c.b16 %v1887, %v1879
        %v2848 = vpack.c.b16 %v1896, %v1888
        %v2849 = vpack.c.b16 %v1897, %v1889
        %v2850 = vpack.c.b16 %v1898, %v1890
        %v2851 = vpack.c.b16 %v1899, %v1891
        %v2852 = vpack.c.b16 %v1900, %v1892
        %v2853 = vpack.c.b16 %v1901, %v1893
        %v2854 = vpack.c.b16 %v1902, %v1894
        %v2855 = vpack.c.b16 %v1903, %v1895
        %v2856 = vpack.c.b16 %v1912, %v1904
        %v2857 = vpack.c.b16 %v1913, %v1905
        %v2858 = vpack.c.b16 %v1914, %v1906
        %v2859 = vpack.c.b16 %v1915, %v1907
        %v2860 = vpack.c.b16 %v1916, %v1908
        %v2861 = vpack.c.b16 %v1917, %v1909
        %v2862 = vpack.c.b16 %v1918, %v1910
        %v2863 = vpack.c.b16 %v1919, %v1911
        %v2864 = vpack.c.b16 %v1928, %v1920
        %v2865 = vpack.c.b16 %v1929, %v1921
        %v2866 = vpack.c.b16 %v1930, %v1922
        %v2867 = vpack.c.b16 %v1931, %v1923
        %v2868 = vpack.c.b16 %v1932, %v1924
        %v2869 = vpack.c.b16 %v1933, %v1925
        %v2870 = vpack.c.b16 %v1934, %v1926
        %v2871 = vpack.c.b16 %v1935, %v1927
        %v2872 = vpack.c.b16 %v1944, %v1936
        %v2873 = vpack.c.b16 %v1945, %v1937
        %v2874 = vpack.c.b16 %v1946, %v1938
        %v2875 = vpack.c.b16 %v1947, %v1939
        %v2876 = vpack.c.b16 %v1948, %v1940
        %v2877 = vpack.c.b16 %v1949, %v1941
        %v2878 = vpack.c.b16 %v1950, %v1942
        %v2879 = vpack.c.b16 %v1951, %v1943
        %v2880 = vpack.c.b16 %v1960, %v1952
        %v2881 = vpack.c.b16 %v1961, %v1953
        %v2882 = vpack.c.b16 %v1962, %v1954
        %v2883 = vpack.c.b16 %v1963, %v1955
        %v2884 = vpack.c.b16 %v1964, %v1956
        %v2885 = vpack.c.b16 %v1965, %v1957
        %v2886 = vpack.c.b16 %v1966, %v1958
        %v2887 = vpack.c.b16 %v1967, %v1959
        %v2888 = vpack.c.b16 %v1976, %v1968
        %v2889 = vpack.c.b16 %v1977, %v1969
        %v2890 = vpack.c.b16 %v1978, %v1970
        %v2891 = vpack.c.b16 %v1979, %v1971
        %v2892 = vpack.c.b16 %v1980, %v1972
        %v2893 = vpack.c.b16 %v1981, %v1973
        %v2894 = vpack.c.b16 %v1982, %v1974
        %v2895 = vpack.c.b16 %v1983, %v1975
        %v2896 = vpack.c.b16 %v1992, %v1984
        %v2897 = vpack.c.b16 %v1993, %v1985
        %v2898 = vpack.c.b16 %v1994, %v1986
        %v2899 = vpack.c.b16 %v1995, %v1987
        %v2900 = vpack.c.b16 %v1996, %v1988
        %v2901 = vpack.c.b16 %v1997, %v1989
        %v2902 = vpack.c.b16 %v1998, %v1990
        %v2903 = vpack.c.b16 %v1999, %v1991
        %v2904 = vpack.c.b16 %v2008, %v2000
        %v2905 = vpack.c.b16 %v2009, %v2001
        %v2906 = vpack.c.b16 %v2010, %v2002
        %v2907 = vpack.c.b16 %v2011, %v2003
        %v2908 = vpack.c.b16 %v2012, %v2004
        %v2909 = vpack.c.b16 %v2013, %v2005
        %v2910 = vpack.c.b16 %v2014, %v2006
        %v2911 = vpack.c.b16 %v2015, %v2007
        %v2912 = vpack.c.b16 %v2024, %v2016
        %v2913 = vpack.c.b16 %v2025, %v2017
        %v2914 = vpack.c.b16 %v2026, %v2018
        %v2915 = vpack.c.b16 %v2027, %v2019
        %v2916 = vpack.c.b16 %v2028, %v2020
        %v2917 = vpack.c.b16 %v2029, %v2021
        %v2918 = vpack.c.b16 %v2030, %v2022
        %v2919 = vpack.c.b16 %v2031, %v2023
        %v2920 = vpack.c.b16 %v2040, %v2032
        %v2921 = vpack.c.b16 %v2041, %v2033
        %v2922 = vpack.c.b16 %v2042, %v2034
        %v2923 = vpack.c.b16 %v2043, %v2035
        %v2924 = vpack.c.b16 %v2044, %v2036
        %v2925 = vpack.c.b16 %v2045, %v2037
        %v2926 = vpack.c.b16 %v2046, %v2038
        %v2927 = vpack.c.b16 %v2047, %v2039
        %v2928 = vpack.c.b16 %v2056, %v2048
        %v2929 = vpack.c.b16 %v2057, %v2049
        %v2930 = vpack.c.b16 %v2058, %v2050
        %v2931 = vpack.c.b16 %v2059, %v2051
        %v2932 = vpack.c.b16 %v2060, %v2052
        %v2933 = vpack.c.b16 %v2061, %v2053
        %v2934 = vpack.c.b16 %v2062, %v2054
        %v2935 = vpack.c.b16 %v2063, %v2055
        %v2936 = vpack.c.b16 %v2072, %v2064
        %v2937 = vpack.c.b16 %v2073, %v2065
        %v2938 = vpack.c.b16 %v2074, %v2066
        %v2939 = vpack.c.b16 %v2075, %v2067
        %v2940 = vpack.c.b16 %v2076, %v2068
        %v2941 = vpack.c.b16 %v2077, %v2069
        %v2942 = vpack.c.b16 %v2078, %v2070
        %v2943 = vpack.c.b16 %v2079, %v2071
        %v2944 = vpack.c.b16 %v2088, %v2080
        %v2945 = vpack.c.b16 %v2089, %v2081
        %v2946 = vpack.c.b16 %v2090, %v2082
        %v2947 = vpack.c.b16 %v2091, %v2083
        %v2948 = vpack.c.b16 %v2092, %v2084
        %v2949 = vpack.c.b16 %v2093, %v2085
        %v2950 = vpack.c.b16 %v2094, %v2086
        %v2951 = vpack.c.b16 %v2095, %v2087
        %v2952 = vpack.c.b16 %v2104, %v2096
        %v2953 = vpack.c.b16 %v2105, %v2097
        %v2954 = vpack.c.b16 %v2106, %v2098
        %v2955 = vpack.c.b16 %v2107, %v2099
        %v2956 = vpack.c.b16 %v2108, %v2100
        %v2957 = vpack.c.b16 %v2109, %v2101
        %v2958 = vpack.c.b16 %v2110, %v2102
        %v2959 = vpack.c.b16 %v2111, %v2103
        %v2960 = vpack.c.b16 %v2120, %v2112
        %v2961 = vpack.c.b16 %v2121, %v2113
        %v2962 = vpack.c.b16 %v2122, %v2114
        %v2963 = vpack.c.b16 %v2123, %v2115
        %v2964 = vpack.c.b16 %v2124, %v2116
        %v2965 = vpack.c.b16 %v2125, %v2117
        %v2966 = vpack.c.b16 %v2126, %v2118
        %v2967 = vpack.c.b16 %v2127, %v2119
        %v2968 = vpack.c.b16 %v2136, %v2128
        %v2969 = vpack.c.b16 %v2137, %v2129
        %v2970 = vpack.c.b16 %v2138, %v2130
        %v2971 = vpack.c.b16 %v2139, %v2131
        %v2972 = vpack.c.b16 %v2140, %v2132
        %v2973 = vpack.c.b16 %v2141, %v2133
        %v2974 = vpack.c.b16 %v2142, %v2134
        %v2975 = vpack.c.b16 %v2143, %v2135
        %v2976 = vpack.c.b16 %v2152, %v2144
        %v2977 = vpack.c.b16 %v2153, %v2145
        %v2978 = vpack.c.b16 %v2154, %v2146
        %v2979 = vpack.c.b16 %v2155, %v2147
        %v2980 = vpack.c.b16 %v2156, %v2148
        %v2981 = vpack.c.b16 %v2157, %v2149
        %v2982 = vpack.c.b16 %v2158, %v2150
        %v2983 = vpack.c.b16 %v2159, %v2151
        %v2984 = vpack.c.b16 %v2168, %v2160
        %v2985 = vpack.c.b16 %v2169, %v2161
        %v2986 = vpack.c.b16 %v2170, %v2162
        %v2987 = vpack.c.b16 %v2171, %v2163
        %v2988 = vpack.c.b16 %v2172, %v2164
        %v2989 = vpack.c.b16 %v2173, %v2165
        %v2990 = vpack.c.b16 %v2174, %v2166
        %v2991 = vpack.c.b16 %v2175, %v2167
        %v2992 = vpack.c.b16 %v2184, %v2176
        %v2993 = vpack.c.b16 %v2185, %v2177
        %v2994 = vpack.c.b16 %v2186, %v2178
        %v2995 = vpack.c.b16 %v2187, %v2179
        %v2996 = vpack.c.b16 %v2188, %v2180
        %v2997 = vpack.c.b16 %v2189, %v2181
        %v2998 = vpack.c.b16 %v2190, %v2182
        %v2999 = vpack.c.b16 %v2191, %v2183
        %v3000 = vpack.c.b16 %v2200, %v2192
        %v3001 = vpack.c.b16 %v2201, %v2193
        %v3002 = vpack.c.b16 %v2202, %v2194
        %v3003 = vpack.c.b16 %v2203, %v2195
        %v3004 = vpack.c.b16 %v2204, %v2196
        %v3005 = vpack.c.b16 %v2205, %v2197
        %v3006 = vpack.c.b16 %v2206, %v2198
        %v3007 = vpack.c.b16 %v2207, %v2199
        %v3008 = vpack.c.b16 %v2216, %v2208
        %v3009 = vpack.c.b16 %v2217, %v2209
        %v3010 = vpack.c.b16 %v2218, %v2210
        %v3011 = vpack.c.b16 %v2219, %v2211
        %v3012 = vpack.c.b16 %v2220, %v2212
        %v3013 = vpack.c.b16 %v2221, %v2213
        %v3014 = vpack.c.b16 %v2222, %v2214
        %v3015 = vpack.c.b16 %v2223, %v2215
        %v3016 = vpack.c.b16 %v2232, %v2224
        %v3017 = vpack.c.b16 %v2233, %v2225
        %v3018 = vpack.c.b16 %v2234, %v2226
        %v3019 = vpack.c.b16 %v2235, %v2227
        %v3020 = vpack.c.b16 %v2236, %v2228
        %v3021 = vpack.c.b16 %v2237, %v2229
        %v3022 = vpack.c.b16 %v2238, %v2230
        %v3023 = vpack.c.b16 %v2239, %v2231
        %v3024 = vpack.c.b16 %v2248, %v2240
        %v3025 = vpack.c.b16 %v2249, %v2241
        %v3026 = vpack.c.b16 %v2250, %v2242
        %v3027 = vpack.c.b16 %v2251, %v2243
        %v3028 = vpack.c.b16 %v2252, %v2244
        %v3029 = vpack.c.b16 %v2253, %v2245
        %v3030 = vpack.c.b16 %v2254, %v2246
        %v3031 = vpack.c.b16 %v2255, %v2247
        %v3032 = vpack.c.b16 %v2264, %v2256
        %v3033 = vpack.c.b16 %v2265, %v2257
        %v3034 = vpack.c.b16 %v2266, %v2258
        %v3035 = vpack.c.b16 %v2267, %v2259
        %v3036 = vpack.c.b16 %v2268, %v2260
        %v3037 = vpack.c.b16 %v2269, %v2261
        %v3038 = vpack.c.b16 %v2270, %v2262
        %v3039 = vpack.c.b16 %v2271, %v2263
        %v3040 = vpack.c.b16 %v2280, %v2272
        %v3041 = vpack.c.b16 %v2281, %v2273
        %v3042 = vpack.c.b16 %v2282, %v2274
        %v3043 = vpack.c.b16 %v2283, %v2275
        %v3044 = vpack.c.b16 %v2284, %v2276
        %v3045 = vpack.c.b16 %v2285, %v2277
        %v3046 = vpack.c.b16 %v2286, %v2278
        %v3047 = vpack.c.b16 %v2287, %v2279
        %v3048 = vpack.c.b16 %v2296, %v2288
        %v3049 = vpack.c.b16 %v2297, %v2289
        %v3050 = vpack.c.b16 %v2298, %v2290
        %v3051 = vpack.c.b16 %v2299, %v2291
        %v3052 = vpack.c.b16 %v2300, %v2292
        %v3053 = vpack.c.b16 %v2301, %v2293
        %v3054 = vpack.c.b16 %v2302, %v2294
        %v3055 = vpack.c.b16 %v2303, %v2295
        %v3056 = vpack.c.b16 %v2312, %v2304
        %v3057 = vpack.c.b16 %v2313, %v2305
        %v3058 = vpack.c.b16 %v2314, %v2306
        %v3059 = vpack.c.b16 %v2315, %v2307
        %v3060 = vpack.c.b16 %v2316, %v2308
        %v3061 = vpack.c.b16 %v2317, %v2309
        %v3062 = vpack.c.b16 %v2318, %v2310
        %v3063 = vpack.c.b16 %v2319, %v2311
        %v3064 = vpack.c.b16 %v2328, %v2320
        %v3065 = vpack.c.b16 %v2329, %v2321
        %v3066 = vpack.c.b16 %v2330, %v2322
        %v3067 = vpack.c.b16 %v2331, %v2323
        %v3068 = vpack.c.b16 %v2332, %v2324
        %v3069 = vpack.c.b16 %v2333, %v2325
        %v3070 = vpack.c.b16 %v2334, %v2326
        %v3071 = vpack.c.b16 %v2335, %v2327
        %v3072 = vpack.c.b16 %v2344, %v2336
        %v3073 = vpack.c.b16 %v2345, %v2337
        %v3074 = vpack.c.b16 %v2346, %v2338
        %v3075 = vpack.c.b16 %v2347, %v2339
        %v3076 = vpack.c.b16 %v2348, %v2340
        %v3077 = vpack.c.b16 %v2349, %v2341
        %v3078 = vpack.c.b16 %v2350, %v2342
        %v3079 = vpack.c.b16 %v2351, %v2343
        %v3080 = vpack.c.b16 %v2360, %v2352
        %v3081 = vpack.c.b16 %v2361, %v2353
        %v3082 = vpack.c.b16 %v2362, %v2354
        %v3083 = vpack.c.b16 %v2363, %v2355
        %v3084 = vpack.c.b16 %v2364, %v2356
        %v3085 = vpack.c.b16 %v2365, %v2357
        %v3086 = vpack.c.b16 %v2366, %v2358
        %v3087 = vpack.c.b16 %v2367, %v2359
        %v3088 = vpack.c.b16 %v2376, %v2368
        %v3089 = vpack.c.b16 %v2377, %v2369
        %v3090 = vpack.c.b16 %v2378, %v2370
        %v3091 = vpack.c.b16 %v2379, %v2371
        %v3092 = vpack.c.b16 %v2380, %v2372
        %v3093 = vpack.c.b16 %v2381, %v2373
        %v3094 = vpack.c.b16 %v2382, %v2374
        %v3095 = vpack.c.b16 %v2383, %v2375
        %v3096 = vpack.c.b16 %v2392, %v2384
        %v3097 = vpack.c.b16 %v2393, %v2385
        %v3098 = vpack.c.b16 %v2394, %v2386
        %v3099 = vpack.c.b16 %v2395, %v2387
        %v3100 = vpack.c.b16 %v2396, %v2388
        %v3101 = vpack.c.b16 %v2397, %v2389
        %v3102 = vpack.c.b16 %v2398, %v2390
        %v3103 = vpack.c.b16 %v2399, %v2391
        %v3104 = vpack.c.b16 %v2408, %v2400
        %v3105 = vpack.c.b16 %v2409, %v2401
        %v3106 = vpack.c.b16 %v2410, %v2402
        %v3107 = vpack.c.b16 %v2411, %v2403
        %v3108 = vpack.c.b16 %v2412, %v2404
        %v3109 = vpack.c.b16 %v2413, %v2405
        %v3110 = vpack.c.b16 %v2414, %v2406
        %v3111 = vpack.c.b16 %v2415, %v2407
        %v3112 = vpack.c.b16 %v2424, %v2416
        %v3113 = vpack.c.b16 %v2425, %v2417
        %v3114 = vpack.c.b16 %v2426, %v2418
        %v3115 = vpack.c.b16 %v2427, %v2419
        %v3116 = vpack.c.b16 %v2428, %v2420
        %v3117 = vpack.c.b16 %v2429, %v2421
        %v3118 = vpack.c.b16 %v2430, %v2422
        %v3119 = vpack.c.b16 %v2431, %v2423
        %v3120 = vpack.c.b16 %v2440, %v2432
        %v3121 = vpack.c.b16 %v2441, %v2433
        %v3122 = vpack.c.b16 %v2442, %v2434
        %v3123 = vpack.c.b16 %v2443, %v2435
        %v3124 = vpack.c.b16 %v2444, %v2436
        %v3125 = vpack.c.b16 %v2445, %v2437
        %v3126 = vpack.c.b16 %v2446, %v2438
        %v3127 = vpack.c.b16 %v2447, %v2439
        %v3128 = vpack.c.b16 %v2456, %v2448
        %v3129 = vpack.c.b16 %v2457, %v2449
        %v3130 = vpack.c.b16 %v2458, %v2450
        %v3131 = vpack.c.b16 %v2459, %v2451
        %v3132 = vpack.c.b16 %v2460, %v2452
        %v3133 = vpack.c.b16 %v2461, %v2453
        %v3134 = vpack.c.b16 %v2462, %v2454
        %v3135 = vpack.c.b16 %v2463, %v2455
        %v3136 = vpack.c.b16 %v2472, %v2464
        %v3137 = vpack.c.b16 %v2473, %v2465
        %v3138 = vpack.c.b16 %v2474, %v2466
        %v3139 = vpack.c.b16 %v2475, %v2467
        %v3140 = vpack.c.b16 %v2476, %v2468
        %v3141 = vpack.c.b16 %v2477, %v2469
        %v3142 = vpack.c.b16 %v2478, %v2470
        %v3143 = vpack.c.b16 %v2479, %v2471
        %v3144 = vpack.c.b16 %v2488, %v2480
        %v3145 = vpack.c.b16 %v2489, %v2481
        %v3146 = vpack.c.b16 %v2490, %v2482
        %v3147 = vpack.c.b16 %v2491, %v2483
        %v3148 = vpack.c.b16 %v2492, %v2484
        %v3149 = vpack.c.b16 %v2493, %v2485
        %v3150 = vpack.c.b16 %v2494, %v2486
        %v3151 = vpack.c.b16 %v2495, %v2487
        %v3152 = vpack.c.b16 %v2504, %v2496
        %v3153 = vpack.c.b16 %v2505, %v2497
        %v3154 = vpack.c.b16 %v2506, %v2498
        %v3155 = vpack.c.b16 %v2507, %v2499
        %v3156 = vpack.c.b16 %v2508, %v2500
        %v3157 = vpack.c.b16 %v2509, %v2501
        %v3158 = vpack.c.b16 %v2510, %v2502
        %v3159 = vpack.c.b16 %v2511, %v2503
        %v3160 = vpack.c.b16 %v2520, %v2512
        %v3161 = vpack.c.b16 %v2521, %v2513
        %v3162 = vpack.c.b16 %v2522, %v2514
        %v3163 = vpack.c.b16 %v2523, %v2515
        %v3164 = vpack.c.b16 %v2524, %v2516
        %v3165 = vpack.c.b16 %v2525, %v2517
        %v3166 = vpack.c.b16 %v2526, %v2518
        %v3167 = vpack.c.b16 %v2527, %v2519
        %v3168 = vpack.c.b16 %v2536, %v2528
        %v3169 = vpack.c.b16 %v2537, %v2529
        %v3170 = vpack.c.b16 %v2538, %v2530
        %v3171 = vpack.c.b16 %v2539, %v2531
        %v3172 = vpack.c.b16 %v2540, %v2532
        %v3173 = vpack.c.b16 %v2541, %v2533
        %v3174 = vpack.c.b16 %v2542, %v2534
        %v3175 = vpack.c.b16 %v2543, %v2535
        %v3176 = vpack.c.b16 %v2552, %v2544
        %v3177 = vpack.c.b16 %v2553, %v2545
        %v3178 = vpack.c.b16 %v2554, %v2546
        %v3179 = vpack.c.b16 %v2555, %v2547
        %v3180 = vpack.c.b16 %v2556, %v2548
        %v3181 = vpack.c.b16 %v2557, %v2549
        %v3182 = vpack.c.b16 %v2558, %v2550
        %v3183 = vpack.c.b16 %v2559, %v2551
        %v3184 = vpack.c.b16 %v2568, %v2560
        %v3185 = vpack.c.b16 %v2569, %v2561
        %v3186 = vpack.c.b16 %v2570, %v2562
        %v3187 = vpack.c.b16 %v2571, %v2563
        %v3188 = vpack.c.b16 %v2572, %v2564
        %v3189 = vpack.c.b16 %v2573, %v2565
        %v3190 = vpack.c.b16 %v2574, %v2566
        %v3191 = vpack.c.b16 %v2575, %v2567
        %v3192 = vpack.c.b16 %v2584, %v2576
        %v3193 = vpack.c.b16 %v2585, %v2577
        %v3194 = vpack.c.b16 %v2586, %v2578
        %v3195 = vpack.c.b16 %v2587, %v2579
        %v3196 = vpack.c.b16 %v2588, %v2580
        %v3197 = vpack.c.b16 %v2589, %v2581
        %v3198 = vpack.c.b16 %v2590, %v2582
        %v3199 = vpack.c.b16 %v2591, %v2583
        %v3200 = vpack.c.b16 %v2600, %v2592
        %v3201 = vpack.c.b16 %v2601, %v2593
        %v3202 = vpack.c.b16 %v2602, %v2594
        %v3203 = vpack.c.b16 %v2603, %v2595
        %v3204 = vpack.c.b16 %v2604, %v2596
        %v3205 = vpack.c.b16 %v2605, %v2597
        %v3206 = vpack.c.b16 %v2606, %v2598
        %v3207 = vpack.c.b16 %v2607, %v2599
        %v3208 = vpack.c.b16 %v2616, %v2608
        %v3209 = vpack.c.b16 %v2617, %v2609
        %v3210 = vpack.c.b16 %v2618, %v2610
        %v3211 = vpack.c.b16 %v2619, %v2611
        %v3212 = vpack.c.b16 %v2620, %v2612
        %v3213 = vpack.c.b16 %v2621, %v2613
        %v3214 = vpack.c.b16 %v2622, %v2614
        %v3215 = vpack.c.b16 %v2623, %v2615
        %v3216 = vpack.c.b16 %v2632, %v2624
        %v3217 = vpack.c.b16 %v2633, %v2625
        %v3218 = vpack.c.b16 %v2634, %v2626
        %v3219 = vpack.c.b16 %v2635, %v2627
        %v3220 = vpack.c.b16 %v2636, %v2628
        %v3221 = vpack.c.b16 %v2637, %v2629
        %v3222 = vpack.c.b16 %v2638, %v2630
        %v3223 = vpack.c.b16 %v2639, %v2631
        %v3224 = vpack.c.b16 %v2648, %v2640
        %v3225 = vpack.c.b16 %v2649, %v2641
        %v3226 = vpack.c.b16 %v2650, %v2642
        %v3227 = vpack.c.b16 %v2651, %v2643
        %v3228 = vpack.c.b16 %v2652, %v2644
        %v3229 = vpack.c.b16 %v2653, %v2645
        %v3230 = vpack.c.b16 %v2654, %v2646
        %v3231 = vpack.c.b16 %v2655, %v2647
        %v3232 = vpack.c.b16 %v2664, %v2656
        %v3233 = vpack.c.b16 %v2665, %v2657
        %v3234 = vpack.c.b16 %v2666, %v2658
        %v3235 = vpack.c.b16 %v2667, %v2659
        %v3236 = vpack.c.b16 %v2668, %v2660
        %v3237 = vpack.c.b16 %v2669, %v2661
        %v3238 = vpack.c.b16 %v2670, %v2662
        %v3239 = vpack.c.b16 %v2671, %v2663
        %v3240 = vpack.c.b16 %v2680, %v2672
        %v3241 = vpack.c.b16 %v2681, %v2673
        %v3242 = vpack.c.b16 %v2682, %v2674
        %v3243 = vpack.c.b16 %v2683, %v2675
        %v3244 = vpack.c.b16 %v2684, %v2676
        %v3245 = vpack.c.b16 %v2685, %v2677
        %v3246 = vpack.c.b16 %v2686, %v2678
        %v3247 = vpack.c.b16 %v2687, %v2679
        %v3248 = vpack.c.b16 %v2696, %v2688
        %v3249 = vpack.c.b16 %v2697, %v2689
        %v3250 = vpack.c.b16 %v2698, %v2690
        %v3251 = vpack.c.b16 %v2699, %v2691
        %v3252 = vpack.c.b16 %v2700, %v2692
        %v3253 = vpack.c.b16 %v2701, %v2693
        %v3254 = vpack.c.b16 %v2702, %v2694
        %v3255 = vpack.c.b16 %v2703, %v2695
        %v3256 = vpack.c.b16 %v2712, %v2704
        %v3257 = vpack.c.b16 %v2713, %v2705
        %v3258 = vpack.c.b16 %v2714, %v2706
        %v3259 = vpack.c.b16 %v2715, %v2707
        %v3260 = vpack.c.b16 %v2716, %v2708
        %v3261 = vpack.c.b16 %v2717, %v2709
        %v3262 = vpack.c.b16 %v2718, %v2710
        %v3263 = vpack.c.b16 %v2719, %v2711
        %v3264 = vpack.c.b16 %v2728, %v2720
        %v3265 = vpack.c.b16 %v2729, %v2721
        %v3266 = vpack.c.b16 %v2730, %v2722
        %v3267 = vpack.c.b16 %v2731, %v2723
        %v3268 = vpack.c.b16 %v2732, %v2724
        %v3269 = vpack.c.b16 %v2733, %v2725
        %v3270 = vpack.c.b16 %v2734, %v2726
        %v3271 = vpack.c.b16 %v2735, %v2727
        %v3272 = vpack.c.b16 %v2744, %v2736
        %v3273 = vpack.c.b16 %v2745, %v2737
        %v3274 = vpack.c.b16 %v2746, %v2738
        %v3275 = vpack.c.b16 %v2747, %v2739
        %v3276 = vpack.c.b16 %v2748, %v2740
        %v3277 = vpack.c.b16 %v2749, %v2741
        %v3278 = vpack.c.b16 %v2750, %v2742
        %v3279 = vpack.c.b16 %v2751, %v2743
        %v3280 = vpack.c.b16 %v2760, %v2752
        %v3281 = vpack.c.b16 %v2761, %v2753
        %v3282 = vpack.c.b16 %v2762, %v2754
        %v3283 = vpack.c.b16 %v2763, %v2755
        %v3284 = vpack.c.b16 %v2764, %v2756
        %v3285 = vpack.c.b16 %v2765, %v2757
        %v3286 = vpack.c.b16 %v2766, %v2758
        %v3287 = vpack.c.b16 %v2767, %v2759
        %v3288 = vpack.c.b16 %v2776, %v2768
        %v3289 = vpack.c.b16 %v2777, %v2769
        %v3290 = vpack.c.b16 %v2778, %v2770
        %v3291 = vpack.c.b16 %v2779, %v2771
        %v3292 = vpack.c.b16 %v2780, %v2772
        %v3293 = vpack.c.b16 %v2781, %v2773
        %v3294 = vpack.c.b16 %v2782, %v2774
        %v3295 = vpack.c.b16 %v2783, %v2775
        %3808 = vmatpush.bf16.msra.mxu0 %v2840
        %3809 = vmatpush.bf16.msra.mxu0 %v2832
        %3810 = vmatpush.bf16.msra.mxu0 %v2824
        %3811 = vmatpush.bf16.msra.mxu0 %v2816
        %3812 = vmatpush.bf16.msra.mxu0 %v2808
        %3813 = vmatpush.bf16.msra.mxu0 %v2800
        %3814 = vmatpush.bf16.msra.mxu0 %v2792
        %3815 = vmatpush.bf16.msra.mxu0 %v2784
        %3816 = vmatmul.bf16.gmra.mxu0 %v710
        %v3817 = vpop.f32.mrf.mxu0
        %v3818 = vadd.f32 %v1232, %v3817
        %v3819 = vpop.f32.mrf.mxu0
        %v3820 = vadd.f32 %v1232, %v3819
        %3821 = vdwg.mxu0
        %3822 = vmatpush.bf16.msra.mxu0 %v2904
        %3823 = vmatpush.bf16.msra.mxu0 %v2896
        %3824 = vmatpush.bf16.msra.mxu0 %v2888
        %3825 = vmatpush.bf16.msra.mxu0 %v2880
        %3826 = vmatpush.bf16.msra.mxu0 %v2872
        %3827 = vmatpush.bf16.msra.mxu0 %v2864
        %3828 = vmatpush.bf16.msra.mxu0 %v2856
        %3829 = vmatpush.bf16.msra.mxu0 %v2848
        %3830 = vmatmul.bf16.gmra.mxu0 %v711
        %v3831 = vpop.f32.mrf.mxu0
        %v3832 = vadd.f32 %v3818, %v3831
        %v3833 = vpop.f32.mrf.mxu0
        %v3834 = vadd.f32 %v3820, %v3833
        %3835 = vdwg.mxu0
        %3836 = vmatpush.bf16.msra.mxu0 %v2968
        %3837 = vmatpush.bf16.msra.mxu0 %v2960
        %3838 = vmatpush.bf16.msra.mxu0 %v2952
        %3839 = vmatpush.bf16.msra.mxu0 %v2944
        %3840 = vmatpush.bf16.msra.mxu0 %v2936
        %3841 = vmatpush.bf16.msra.mxu0 %v2928
        %3842 = vmatpush.bf16.msra.mxu0 %v2920
        %3843 = vmatpush.bf16.msra.mxu0 %v2912
        %3844 = vmatmul.bf16.gmra.mxu0 %v712
        %v3845 = vpop.f32.mrf.mxu0
        %v3846 = vadd.f32 %v3832, %v3845
        %v3847 = vpop.f32.mrf.mxu0
        %v3848 = vadd.f32 %v3834, %v3847
        %3849 = vdwg.mxu0
        %3850 = vmatpush.bf16.msra.mxu0 %v3032
        %3851 = vmatpush.bf16.msra.mxu0 %v3024
        %3852 = vmatpush.bf16.msra.mxu0 %v3016
        %3853 = vmatpush.bf16.msra.mxu0 %v3008
        %3854 = vmatpush.bf16.msra.mxu0 %v3000
        %3855 = vmatpush.bf16.msra.mxu0 %v2992
        %3856 = vmatpush.bf16.msra.mxu0 %v2984
        %3857 = vmatpush.bf16.msra.mxu0 %v2976
        %3858 = vmatmul.bf16.gmra.mxu0 %v713
        %v3859 = vpop.f32.mrf.mxu0
        %v3860 = vadd.f32 %v3846, %v3859
        %v3861 = vpop.f32.mrf.mxu0
        %v3862 = vadd.f32 %v3848, %v3861
        %3863 = vdwg.mxu0
        %3864 = vmatpush.bf16.msra.mxu0 %v3096
        %3865 = vmatpush.bf16.msra.mxu0 %v3088
        %3866 = vmatpush.bf16.msra.mxu0 %v3080
        %3867 = vmatpush.bf16.msra.mxu0 %v3072
        %3868 = vmatpush.bf16.msra.mxu0 %v3064
        %3869 = vmatpush.bf16.msra.mxu0 %v3056
        %3870 = vmatpush.bf16.msra.mxu0 %v3048
        %3871 = vmatpush.bf16.msra.mxu0 %v3040
        %3872 = vmatmul.bf16.gmra.mxu0 %v714
        %v3873 = vpop.f32.mrf.mxu0
        %v3874 = vadd.f32 %v3860, %v3873
        %v3875 = vpop.f32.mrf.mxu0
        %v3876 = vadd.f32 %v3862, %v3875
        %3877 = vdwg.mxu0
        %3878 = vmatpush.bf16.msra.mxu0 %v3160
        %3879 = vmatpush.bf16.msra.mxu0 %v3152
        %3880 = vmatpush.bf16.msra.mxu0 %v3144
        %3881 = vmatpush.bf16.msra.mxu0 %v3136
        %3882 = vmatpush.bf16.msra.mxu0 %v3128
        %3883 = vmatpush.bf16.msra.mxu0 %v3120
        %3884 = vmatpush.bf16.msra.mxu0 %v3112
        %3885 = vmatpush.bf16.msra.mxu0 %v3104
        %3886 = vmatmul.bf16.gmra.mxu0 %v715
        %v3887 = vpop.f32.mrf.mxu0
        %v3888 = vadd.f32 %v3874, %v3887
        %v3889 = vpop.f32.mrf.mxu0
        %v3890 = vadd.f32 %v3876, %v3889
        %3891 = vdwg.mxu0
        %3892 = vmatpush.bf16.msra.mxu0 %v3224
        %3893 = vmatpush.bf16.msra.mxu0 %v3216
        %3894 = vmatpush.bf16.msra.mxu0 %v3208
        %3895 = vmatpush.bf16.msra.mxu0 %v3200
        %3896 = vmatpush.bf16.msra.mxu0 %v3192
        %3897 = vmatpush.bf16.msra.mxu0 %v3184
        %3898 = vmatpush.bf16.msra.mxu0 %v3176
        %3899 = vmatpush.bf16.msra.mxu0 %v3168
        %3900 = vmatmul.bf16.gmra.mxu0 %v716
        %v3901 = vpop.f32.mrf.mxu0
        %v3902 = vadd.f32 %v3888, %v3901
        %v3903 = vpop.f32.mrf.mxu0
        %v3904 = vadd.f32 %v3890, %v3903
        %3905 = vdwg.mxu0
        %3906 = vmatpush.bf16.msra.mxu0 %v3288
        %3907 = vmatpush.bf16.msra.mxu0 %v3280
        %3908 = vmatpush.bf16.msra.mxu0 %v3272
        %3909 = vmatpush.bf16.msra.mxu0 %v3264
        %3910 = vmatpush.bf16.msra.mxu0 %v3256
        %3911 = vmatpush.bf16.msra.mxu0 %v3248
        %3912 = vmatpush.bf16.msra.mxu0 %v3240
        %3913 = vmatpush.bf16.msra.mxu0 %v3232
        %3914 = vmatmul.bf16.gmra.mxu0 %v717
        %v3915 = vpop.f32.mrf.mxu0
        %v3916 = vadd.f32 %v3902, %v3915
        %v3917 = vpop.f32.mrf.mxu0
        %v3918 = vadd.f32 %v3904, %v3917
        %3919 = vdwg.mxu0
        %3920 = vmatpush.bf16.msra.mxu0 %v2841
        %3921 = vmatpush.bf16.msra.mxu0 %v2833
        %3922 = vmatpush.bf16.msra.mxu0 %v2825
        %3923 = vmatpush.bf16.msra.mxu0 %v2817
        %3924 = vmatpush.bf16.msra.mxu0 %v2809
        %3925 = vmatpush.bf16.msra.mxu0 %v2801
        %3926 = vmatpush.bf16.msra.mxu0 %v2793
        %3927 = vmatpush.bf16.msra.mxu0 %v2785
        %3928 = vmatmul.bf16.gmra.mxu0 %v710
        %v3929 = vpop.f32.mrf.mxu0
        %v3930 = vadd.f32 %v1233, %v3929
        %v3931 = vpop.f32.mrf.mxu0
        %v3932 = vadd.f32 %v1233, %v3931
        %3933 = vdwg.mxu0
        %3934 = vmatpush.bf16.msra.mxu0 %v2905
        %3935 = vmatpush.bf16.msra.mxu0 %v2897
        %3936 = vmatpush.bf16.msra.mxu0 %v2889
        %3937 = vmatpush.bf16.msra.mxu0 %v2881
        %3938 = vmatpush.bf16.msra.mxu0 %v2873
        %3939 = vmatpush.bf16.msra.mxu0 %v2865
        %3940 = vmatpush.bf16.msra.mxu0 %v2857
        %3941 = vmatpush.bf16.msra.mxu0 %v2849
        %3942 = vmatmul.bf16.gmra.mxu0 %v711
        %v3943 = vpop.f32.mrf.mxu0
        %v3944 = vadd.f32 %v3930, %v3943
        %v3945 = vpop.f32.mrf.mxu0
        %v3946 = vadd.f32 %v3932, %v3945
        %3947 = vdwg.mxu0
        %3948 = vmatpush.bf16.msra.mxu0 %v2969
        %3949 = vmatpush.bf16.msra.mxu0 %v2961
        %3950 = vmatpush.bf16.msra.mxu0 %v2953
        %3951 = vmatpush.bf16.msra.mxu0 %v2945
        %3952 = vmatpush.bf16.msra.mxu0 %v2937
        %3953 = vmatpush.bf16.msra.mxu0 %v2929
        %3954 = vmatpush.bf16.msra.mxu0 %v2921
        %3955 = vmatpush.bf16.msra.mxu0 %v2913
        %3956 = vmatmul.bf16.gmra.mxu0 %v712
        %v3957 = vpop.f32.mrf.mxu0
        %v3958 = vadd.f32 %v3944, %v3957
        %v3959 = vpop.f32.mrf.mxu0
        %v3960 = vadd.f32 %v3946, %v3959
        %3961 = vdwg.mxu0
        %3962 = vmatpush.bf16.msra.mxu0 %v3033
        %3963 = vmatpush.bf16.msra.mxu0 %v3025
        %3964 = vmatpush.bf16.msra.mxu0 %v3017
        %3965 = vmatpush.bf16.msra.mxu0 %v3009
        %3966 = vmatpush.bf16.msra.mxu0 %v3001
        %3967 = vmatpush.bf16.msra.mxu0 %v2993
        %3968 = vmatpush.bf16.msra.mxu0 %v2985
        %3969 = vmatpush.bf16.msra.mxu0 %v2977
        %3970 = vmatmul.bf16.gmra.mxu0 %v713
        %v3971 = vpop.f32.mrf.mxu0
        %v3972 = vadd.f32 %v3958, %v3971
        %v3973 = vpop.f32.mrf.mxu0
        %v3974 = vadd.f32 %v3960, %v3973
        %3975 = vdwg.mxu0
        %3976 = vmatpush.bf16.msra.mxu0 %v3097
        %3977 = vmatpush.bf16.msra.mxu0 %v3089
        %3978 = vmatpush.bf16.msra.mxu0 %v3081
        %3979 = vmatpush.bf16.msra.mxu0 %v3073
        %3980 = vmatpush.bf16.msra.mxu0 %v3065
        %3981 = vmatpush.bf16.msra.mxu0 %v3057
        %3982 = vmatpush.bf16.msra.mxu0 %v3049
        %3983 = vmatpush.bf16.msra.mxu0 %v3041
        %3984 = vmatmul.bf16.gmra.mxu0 %v714
        %v3985 = vpop.f32.mrf.mxu0
        %v3986 = vadd.f32 %v3972, %v3985
        %v3987 = vpop.f32.mrf.mxu0
        %v3988 = vadd.f32 %v3974, %v3987
        %3989 = vdwg.mxu0
        %3990 = vmatpush.bf16.msra.mxu0 %v3161
        %3991 = vmatpush.bf16.msra.mxu0 %v3153
        %3992 = vmatpush.bf16.msra.mxu0 %v3145
        %3993 = vmatpush.bf16.msra.mxu0 %v3137
        %3994 = vmatpush.bf16.msra.mxu0 %v3129
        %3995 = vmatpush.bf16.msra.mxu0 %v3121
        %3996 = vmatpush.bf16.msra.mxu0 %v3113
        %3997 = vmatpush.bf16.msra.mxu0 %v3105
        %3998 = vmatmul.bf16.gmra.mxu0 %v715
        %v3999 = vpop.f32.mrf.mxu0
        %v4000 = vadd.f32 %v3986, %v3999
        %v4001 = vpop.f32.mrf.mxu0
        %v4002 = vadd.f32 %v3988, %v4001
        %4003 = vdwg.mxu0
        %4004 = vmatpush.bf16.msra.mxu0 %v3225
        %4005 = vmatpush.bf16.msra.mxu0 %v3217
        %4006 = vmatpush.bf16.msra.mxu0 %v3209
        %4007 = vmatpush.bf16.msra.mxu0 %v3201
        %4008 = vmatpush.bf16.msra.mxu0 %v3193
        %4009 = vmatpush.bf16.msra.mxu0 %v3185
        %4010 = vmatpush.bf16.msra.mxu0 %v3177
        %4011 = vmatpush.bf16.msra.mxu0 %v3169
        %4012 = vmatmul.bf16.gmra.mxu0 %v716
        %v4013 = vpop.f32.mrf.mxu0
        %v4014 = vadd.f32 %v4000, %v4013
        %v4015 = vpop.f32.mrf.mxu0
        %v4016 = vadd.f32 %v4002, %v4015
        %4017 = vdwg.mxu0
        %4018 = vmatpush.bf16.msra.mxu0 %v3289
        %4019 = vmatpush.bf16.msra.mxu0 %v3281
        %4020 = vmatpush.bf16.msra.mxu0 %v3273
        %4021 = vmatpush.bf16.msra.mxu0 %v3265
        %4022 = vmatpush.bf16.msra.mxu0 %v3257
        %4023 = vmatpush.bf16.msra.mxu0 %v3249
        %4024 = vmatpush.bf16.msra.mxu0 %v3241
        %4025 = vmatpush.bf16.msra.mxu0 %v3233
        %4026 = vmatmul.bf16.gmra.mxu0 %v717
        %v4027 = vpop.f32.mrf.mxu0
        %v4028 = vadd.f32 %v4014, %v4027
        %v4029 = vpop.f32.mrf.mxu0
        %v4030 = vadd.f32 %v4016, %v4029
        %4031 = vdwg.mxu0
        %4032 = vmatpush.bf16.msra.mxu0 %v2842
        %4033 = vmatpush.bf16.msra.mxu0 %v2834
        %4034 = vmatpush.bf16.msra.mxu0 %v2826
        %4035 = vmatpush.bf16.msra.mxu0 %v2818
        %4036 = vmatpush.bf16.msra.mxu0 %v2810
        %4037 = vmatpush.bf16.msra.mxu0 %v2802
        %4038 = vmatpush.bf16.msra.mxu0 %v2794
        %4039 = vmatpush.bf16.msra.mxu0 %v2786
        %4040 = vmatmul.bf16.gmra.mxu0 %v710
        %v4041 = vpop.f32.mrf.mxu0
        %v4042 = vadd.f32 %v1234, %v4041
        %v4043 = vpop.f32.mrf.mxu0
        %v4044 = vadd.f32 %v1234, %v4043
        %4045 = vdwg.mxu0
        %4046 = vmatpush.bf16.msra.mxu0 %v2906
        %4047 = vmatpush.bf16.msra.mxu0 %v2898
        %4048 = vmatpush.bf16.msra.mxu0 %v2890
        %4049 = vmatpush.bf16.msra.mxu0 %v2882
        %4050 = vmatpush.bf16.msra.mxu0 %v2874
        %4051 = vmatpush.bf16.msra.mxu0 %v2866
        %4052 = vmatpush.bf16.msra.mxu0 %v2858
        %4053 = vmatpush.bf16.msra.mxu0 %v2850
        %4054 = vmatmul.bf16.gmra.mxu0 %v711
        %v4055 = vpop.f32.mrf.mxu0
        %v4056 = vadd.f32 %v4042, %v4055
        %v4057 = vpop.f32.mrf.mxu0
        %v4058 = vadd.f32 %v4044, %v4057
        %4059 = vdwg.mxu0
        %4060 = vmatpush.bf16.msra.mxu0 %v2970
        %4061 = vmatpush.bf16.msra.mxu0 %v2962
        %4062 = vmatpush.bf16.msra.mxu0 %v2954
        %4063 = vmatpush.bf16.msra.mxu0 %v2946
        %4064 = vmatpush.bf16.msra.mxu0 %v2938
        %4065 = vmatpush.bf16.msra.mxu0 %v2930
        %4066 = vmatpush.bf16.msra.mxu0 %v2922
        %4067 = vmatpush.bf16.msra.mxu0 %v2914
        %4068 = vmatmul.bf16.gmra.mxu0 %v712
        %v4069 = vpop.f32.mrf.mxu0
        %v4070 = vadd.f32 %v4056, %v4069
        %v4071 = vpop.f32.mrf.mxu0
        %v4072 = vadd.f32 %v4058, %v4071
        %4073 = vdwg.mxu0
        %4074 = vmatpush.bf16.msra.mxu0 %v3034
        %4075 = vmatpush.bf16.msra.mxu0 %v3026
        %4076 = vmatpush.bf16.msra.mxu0 %v3018
        %4077 = vmatpush.bf16.msra.mxu0 %v3010
        %4078 = vmatpush.bf16.msra.mxu0 %v3002
        %4079 = vmatpush.bf16.msra.mxu0 %v2994
        %4080 = vmatpush.bf16.msra.mxu0 %v2986
        %4081 = vmatpush.bf16.msra.mxu0 %v2978
        %4082 = vmatmul.bf16.gmra.mxu0 %v713
        %v4083 = vpop.f32.mrf.mxu0
        %v4084 = vadd.f32 %v4070, %v4083
        %v4085 = vpop.f32.mrf.mxu0
        %v4086 = vadd.f32 %v4072, %v4085
        %4087 = vdwg.mxu0
        %4088 = vmatpush.bf16.msra.mxu0 %v3098
        %4089 = vmatpush.bf16.msra.mxu0 %v3090
        %4090 = vmatpush.bf16.msra.mxu0 %v3082
        %4091 = vmatpush.bf16.msra.mxu0 %v3074
        %4092 = vmatpush.bf16.msra.mxu0 %v3066
        %4093 = vmatpush.bf16.msra.mxu0 %v3058
        %4094 = vmatpush.bf16.msra.mxu0 %v3050
        %4095 = vmatpush.bf16.msra.mxu0 %v3042
        %4096 = vmatmul.bf16.gmra.mxu0 %v714
        %v4097 = vpop.f32.mrf.mxu0
        %v4098 = vadd.f32 %v4084, %v4097
        %v4099 = vpop.f32.mrf.mxu0
        %v4100 = vadd.f32 %v4086, %v4099
        %4101 = vdwg.mxu0
        %4102 = vmatpush.bf16.msra.mxu0 %v3162
        %4103 = vmatpush.bf16.msra.mxu0 %v3154
        %4104 = vmatpush.bf16.msra.mxu0 %v3146
        %4105 = vmatpush.bf16.msra.mxu0 %v3138
        %4106 = vmatpush.bf16.msra.mxu0 %v3130
        %4107 = vmatpush.bf16.msra.mxu0 %v3122
        %4108 = vmatpush.bf16.msra.mxu0 %v3114
        %4109 = vmatpush.bf16.msra.mxu0 %v3106
        %4110 = vmatmul.bf16.gmra.mxu0 %v715
        %v4111 = vpop.f32.mrf.mxu0
        %v4112 = vadd.f32 %v4098, %v4111
        %v4113 = vpop.f32.mrf.mxu0
        %v4114 = vadd.f32 %v4100, %v4113
        %4115 = vdwg.mxu0
        %4116 = vmatpush.bf16.msra.mxu0 %v3226
        %4117 = vmatpush.bf16.msra.mxu0 %v3218
        %4118 = vmatpush.bf16.msra.mxu0 %v3210
        %4119 = vmatpush.bf16.msra.mxu0 %v3202
        %4120 = vmatpush.bf16.msra.mxu0 %v3194
        %4121 = vmatpush.bf16.msra.mxu0 %v3186
        %4122 = vmatpush.bf16.msra.mxu0 %v3178
        %4123 = vmatpush.bf16.msra.mxu0 %v3170
        %4124 = vmatmul.bf16.gmra.mxu0 %v716
        %v4125 = vpop.f32.mrf.mxu0
        %v4126 = vadd.f32 %v4112, %v4125
        %v4127 = vpop.f32.mrf.mxu0
        %v4128 = vadd.f32 %v4114, %v4127
        %4129 = vdwg.mxu0
        %4130 = vmatpush.bf16.msra.mxu0 %v3290
        %4131 = vmatpush.bf16.msra.mxu0 %v3282
        %4132 = vmatpush.bf16.msra.mxu0 %v3274
        %4133 = vmatpush.bf16.msra.mxu0 %v3266
        %4134 = vmatpush.bf16.msra.mxu0 %v3258
        %4135 = vmatpush.bf16.msra.mxu0 %v3250
        %4136 = vmatpush.bf16.msra.mxu0 %v3242
        %4137 = vmatpush.bf16.msra.mxu0 %v3234
        %4138 = vmatmul.bf16.gmra.mxu0 %v717
        %v4139 = vpop.f32.mrf.mxu0
        %v4140 = vadd.f32 %v4126, %v4139
        %v4141 = vpop.f32.mrf.mxu0
        %v4142 = vadd.f32 %v4128, %v4141
        %4143 = vdwg.mxu0
        %4144 = vmatpush.bf16.msra.mxu0 %v2843
        %4145 = vmatpush.bf16.msra.mxu0 %v2835
        %4146 = vmatpush.bf16.msra.mxu0 %v2827
        %4147 = vmatpush.bf16.msra.mxu0 %v2819
        %4148 = vmatpush.bf16.msra.mxu0 %v2811
        %4149 = vmatpush.bf16.msra.mxu0 %v2803
        %4150 = vmatpush.bf16.msra.mxu0 %v2795
        %4151 = vmatpush.bf16.msra.mxu0 %v2787
        %4152 = vmatmul.bf16.gmra.mxu0 %v710
        %v4153 = vpop.f32.mrf.mxu0
        %v4154 = vadd.f32 %v1235, %v4153
        %v4155 = vpop.f32.mrf.mxu0
        %v4156 = vadd.f32 %v1235, %v4155
        %4157 = vdwg.mxu0
        %4158 = vmatpush.bf16.msra.mxu0 %v2907
        %4159 = vmatpush.bf16.msra.mxu0 %v2899
        %4160 = vmatpush.bf16.msra.mxu0 %v2891
        %4161 = vmatpush.bf16.msra.mxu0 %v2883
        %4162 = vmatpush.bf16.msra.mxu0 %v2875
        %4163 = vmatpush.bf16.msra.mxu0 %v2867
        %4164 = vmatpush.bf16.msra.mxu0 %v2859
        %4165 = vmatpush.bf16.msra.mxu0 %v2851
        %4166 = vmatmul.bf16.gmra.mxu0 %v711
        %v4167 = vpop.f32.mrf.mxu0
        %v4168 = vadd.f32 %v4154, %v4167
        %v4169 = vpop.f32.mrf.mxu0
        %v4170 = vadd.f32 %v4156, %v4169
        %4171 = vdwg.mxu0
        %4172 = vmatpush.bf16.msra.mxu0 %v2971
        %4173 = vmatpush.bf16.msra.mxu0 %v2963
        %4174 = vmatpush.bf16.msra.mxu0 %v2955
        %4175 = vmatpush.bf16.msra.mxu0 %v2947
        %4176 = vmatpush.bf16.msra.mxu0 %v2939
        %4177 = vmatpush.bf16.msra.mxu0 %v2931
        %4178 = vmatpush.bf16.msra.mxu0 %v2923
        %4179 = vmatpush.bf16.msra.mxu0 %v2915
        %4180 = vmatmul.bf16.gmra.mxu0 %v712
        %v4181 = vpop.f32.mrf.mxu0
        %v4182 = vadd.f32 %v4168, %v4181
        %v4183 = vpop.f32.mrf.mxu0
        %v4184 = vadd.f32 %v4170, %v4183
        %4185 = vdwg.mxu0
        %4186 = vmatpush.bf16.msra.mxu0 %v3035
        %4187 = vmatpush.bf16.msra.mxu0 %v3027
        %4188 = vmatpush.bf16.msra.mxu0 %v3019
        %4189 = vmatpush.bf16.msra.mxu0 %v3011
        %4190 = vmatpush.bf16.msra.mxu0 %v3003
        %4191 = vmatpush.bf16.msra.mxu0 %v2995
        %4192 = vmatpush.bf16.msra.mxu0 %v2987
        %4193 = vmatpush.bf16.msra.mxu0 %v2979
        %4194 = vmatmul.bf16.gmra.mxu0 %v713
        %v4195 = vpop.f32.mrf.mxu0
        %v4196 = vadd.f32 %v4182, %v4195
        %v4197 = vpop.f32.mrf.mxu0
        %v4198 = vadd.f32 %v4184, %v4197
        %4199 = vdwg.mxu0
        %4200 = vmatpush.bf16.msra.mxu0 %v3099
        %4201 = vmatpush.bf16.msra.mxu0 %v3091
        %4202 = vmatpush.bf16.msra.mxu0 %v3083
        %4203 = vmatpush.bf16.msra.mxu0 %v3075
        %4204 = vmatpush.bf16.msra.mxu0 %v3067
        %4205 = vmatpush.bf16.msra.mxu0 %v3059
        %4206 = vmatpush.bf16.msra.mxu0 %v3051
        %4207 = vmatpush.bf16.msra.mxu0 %v3043
        %4208 = vmatmul.bf16.gmra.mxu0 %v714
        %v4209 = vpop.f32.mrf.mxu0
        %v4210 = vadd.f32 %v4196, %v4209
        %v4211 = vpop.f32.mrf.mxu0
        %v4212 = vadd.f32 %v4198, %v4211
        %4213 = vdwg.mxu0
        %4214 = vmatpush.bf16.msra.mxu0 %v3163
        %4215 = vmatpush.bf16.msra.mxu0 %v3155
        %4216 = vmatpush.bf16.msra.mxu0 %v3147
        %4217 = vmatpush.bf16.msra.mxu0 %v3139
        %4218 = vmatpush.bf16.msra.mxu0 %v3131
        %4219 = vmatpush.bf16.msra.mxu0 %v3123
        %4220 = vmatpush.bf16.msra.mxu0 %v3115
        %4221 = vmatpush.bf16.msra.mxu0 %v3107
        %4222 = vmatmul.bf16.gmra.mxu0 %v715
        %v4223 = vpop.f32.mrf.mxu0
        %v4224 = vadd.f32 %v4210, %v4223
        %v4225 = vpop.f32.mrf.mxu0
        %v4226 = vadd.f32 %v4212, %v4225
        %4227 = vdwg.mxu0
        %4228 = vmatpush.bf16.msra.mxu0 %v3227
        %4229 = vmatpush.bf16.msra.mxu0 %v3219
        %4230 = vmatpush.bf16.msra.mxu0 %v3211
        %4231 = vmatpush.bf16.msra.mxu0 %v3203
        %4232 = vmatpush.bf16.msra.mxu0 %v3195
        %4233 = vmatpush.bf16.msra.mxu0 %v3187
        %4234 = vmatpush.bf16.msra.mxu0 %v3179
        %4235 = vmatpush.bf16.msra.mxu0 %v3171
        %4236 = vmatmul.bf16.gmra.mxu0 %v716
        %v4237 = vpop.f32.mrf.mxu0
        %v4238 = vadd.f32 %v4224, %v4237
        %v4239 = vpop.f32.mrf.mxu0
        %v4240 = vadd.f32 %v4226, %v4239
        %4241 = vdwg.mxu0
        %4242 = vmatpush.bf16.msra.mxu0 %v3291
        %4243 = vmatpush.bf16.msra.mxu0 %v3283
        %4244 = vmatpush.bf16.msra.mxu0 %v3275
        %4245 = vmatpush.bf16.msra.mxu0 %v3267
        %4246 = vmatpush.bf16.msra.mxu0 %v3259
        %4247 = vmatpush.bf16.msra.mxu0 %v3251
        %4248 = vmatpush.bf16.msra.mxu0 %v3243
        %4249 = vmatpush.bf16.msra.mxu0 %v3235
        %4250 = vmatmul.bf16.gmra.mxu0 %v717
        %v4251 = vpop.f32.mrf.mxu0
        %v4252 = vadd.f32 %v4238, %v4251
        %v4253 = vpop.f32.mrf.mxu0
        %v4254 = vadd.f32 %v4240, %v4253
        %4255 = vdwg.mxu0
        %4256 = vmatpush.bf16.msra.mxu0 %v2844
        %4257 = vmatpush.bf16.msra.mxu0 %v2836
        %4258 = vmatpush.bf16.msra.mxu0 %v2828
        %4259 = vmatpush.bf16.msra.mxu0 %v2820
        %4260 = vmatpush.bf16.msra.mxu0 %v2812
        %4261 = vmatpush.bf16.msra.mxu0 %v2804
        %4262 = vmatpush.bf16.msra.mxu0 %v2796
        %4263 = vmatpush.bf16.msra.mxu0 %v2788
        %4264 = vmatmul.bf16.gmra.mxu0 %v710
        %v4265 = vpop.f32.mrf.mxu0
        %v4266 = vadd.f32 %v1236, %v4265
        %v4267 = vpop.f32.mrf.mxu0
        %v4268 = vadd.f32 %v1236, %v4267
        %4269 = vdwg.mxu0
        %4270 = vmatpush.bf16.msra.mxu0 %v2908
        %4271 = vmatpush.bf16.msra.mxu0 %v2900
        %4272 = vmatpush.bf16.msra.mxu0 %v2892
        %4273 = vmatpush.bf16.msra.mxu0 %v2884
        %4274 = vmatpush.bf16.msra.mxu0 %v2876
        %4275 = vmatpush.bf16.msra.mxu0 %v2868
        %4276 = vmatpush.bf16.msra.mxu0 %v2860
        %4277 = vmatpush.bf16.msra.mxu0 %v2852
        %4278 = vmatmul.bf16.gmra.mxu0 %v711
        %v4279 = vpop.f32.mrf.mxu0
        %v4280 = vadd.f32 %v4266, %v4279
        %v4281 = vpop.f32.mrf.mxu0
        %v4282 = vadd.f32 %v4268, %v4281
        %4283 = vdwg.mxu0
        %4284 = vmatpush.bf16.msra.mxu0 %v2972
        %4285 = vmatpush.bf16.msra.mxu0 %v2964
        %4286 = vmatpush.bf16.msra.mxu0 %v2956
        %4287 = vmatpush.bf16.msra.mxu0 %v2948
        %4288 = vmatpush.bf16.msra.mxu0 %v2940
        %4289 = vmatpush.bf16.msra.mxu0 %v2932
        %4290 = vmatpush.bf16.msra.mxu0 %v2924
        %4291 = vmatpush.bf16.msra.mxu0 %v2916
        %4292 = vmatmul.bf16.gmra.mxu0 %v712
        %v4293 = vpop.f32.mrf.mxu0
        %v4294 = vadd.f32 %v4280, %v4293
        %v4295 = vpop.f32.mrf.mxu0
        %v4296 = vadd.f32 %v4282, %v4295
        %4297 = vdwg.mxu0
        %4298 = vmatpush.bf16.msra.mxu0 %v3036
        %4299 = vmatpush.bf16.msra.mxu0 %v3028
        %4300 = vmatpush.bf16.msra.mxu0 %v3020
        %4301 = vmatpush.bf16.msra.mxu0 %v3012
        %4302 = vmatpush.bf16.msra.mxu0 %v3004
        %4303 = vmatpush.bf16.msra.mxu0 %v2996
        %4304 = vmatpush.bf16.msra.mxu0 %v2988
        %4305 = vmatpush.bf16.msra.mxu0 %v2980
        %4306 = vmatmul.bf16.gmra.mxu0 %v713
        %v4307 = vpop.f32.mrf.mxu0
        %v4308 = vadd.f32 %v4294, %v4307
        %v4309 = vpop.f32.mrf.mxu0
        %v4310 = vadd.f32 %v4296, %v4309
        %4311 = vdwg.mxu0
        %4312 = vmatpush.bf16.msra.mxu0 %v3100
        %4313 = vmatpush.bf16.msra.mxu0 %v3092
        %4314 = vmatpush.bf16.msra.mxu0 %v3084
        %4315 = vmatpush.bf16.msra.mxu0 %v3076
        %4316 = vmatpush.bf16.msra.mxu0 %v3068
        %4317 = vmatpush.bf16.msra.mxu0 %v3060
        %4318 = vmatpush.bf16.msra.mxu0 %v3052
        %4319 = vmatpush.bf16.msra.mxu0 %v3044
        %4320 = vmatmul.bf16.gmra.mxu0 %v714
        %v4321 = vpop.f32.mrf.mxu0
        %v4322 = vadd.f32 %v4308, %v4321
        %v4323 = vpop.f32.mrf.mxu0
        %v4324 = vadd.f32 %v4310, %v4323
        %4325 = vdwg.mxu0
        %4326 = vmatpush.bf16.msra.mxu0 %v3164
        %4327 = vmatpush.bf16.msra.mxu0 %v3156
        %4328 = vmatpush.bf16.msra.mxu0 %v3148
        %4329 = vmatpush.bf16.msra.mxu0 %v3140
        %4330 = vmatpush.bf16.msra.mxu0 %v3132
        %4331 = vmatpush.bf16.msra.mxu0 %v3124
        %4332 = vmatpush.bf16.msra.mxu0 %v3116
        %4333 = vmatpush.bf16.msra.mxu0 %v3108
        %4334 = vmatmul.bf16.gmra.mxu0 %v715
        %v4335 = vpop.f32.mrf.mxu0
        %v4336 = vadd.f32 %v4322, %v4335
        %v4337 = vpop.f32.mrf.mxu0
        %v4338 = vadd.f32 %v4324, %v4337
        %4339 = vdwg.mxu0
        %4340 = vmatpush.bf16.msra.mxu0 %v3228
        %4341 = vmatpush.bf16.msra.mxu0 %v3220
        %4342 = vmatpush.bf16.msra.mxu0 %v3212
        %4343 = vmatpush.bf16.msra.mxu0 %v3204
        %4344 = vmatpush.bf16.msra.mxu0 %v3196
        %4345 = vmatpush.bf16.msra.mxu0 %v3188
        %4346 = vmatpush.bf16.msra.mxu0 %v3180
        %4347 = vmatpush.bf16.msra.mxu0 %v3172
        %4348 = vmatmul.bf16.gmra.mxu0 %v716
        %v4349 = vpop.f32.mrf.mxu0
        %v4350 = vadd.f32 %v4336, %v4349
        %v4351 = vpop.f32.mrf.mxu0
        %v4352 = vadd.f32 %v4338, %v4351
        %4353 = vdwg.mxu0
        %4354 = vmatpush.bf16.msra.mxu0 %v3292
        %4355 = vmatpush.bf16.msra.mxu0 %v3284
        %4356 = vmatpush.bf16.msra.mxu0 %v3276
        %4357 = vmatpush.bf16.msra.mxu0 %v3268
        %4358 = vmatpush.bf16.msra.mxu0 %v3260
        %4359 = vmatpush.bf16.msra.mxu0 %v3252
        %4360 = vmatpush.bf16.msra.mxu0 %v3244
        %4361 = vmatpush.bf16.msra.mxu0 %v3236
        %4362 = vmatmul.bf16.gmra.mxu0 %v717
        %v4363 = vpop.f32.mrf.mxu0
        %v4364 = vadd.f32 %v4350, %v4363
        %v4365 = vpop.f32.mrf.mxu0
        %v4366 = vadd.f32 %v4352, %v4365
        %4367 = vdwg.mxu0
        %4368 = vmatpush.bf16.msra.mxu0 %v2845
        %4369 = vmatpush.bf16.msra.mxu0 %v2837
        %4370 = vmatpush.bf16.msra.mxu0 %v2829
        %4371 = vmatpush.bf16.msra.mxu0 %v2821
        %4372 = vmatpush.bf16.msra.mxu0 %v2813
        %4373 = vmatpush.bf16.msra.mxu0 %v2805
        %4374 = vmatpush.bf16.msra.mxu0 %v2797
        %4375 = vmatpush.bf16.msra.mxu0 %v2789
        %4376 = vmatmul.bf16.gmra.mxu0 %v710
        %v4377 = vpop.f32.mrf.mxu0
        %v4378 = vadd.f32 %v1237, %v4377
        %v4379 = vpop.f32.mrf.mxu0
        %v4380 = vadd.f32 %v1237, %v4379
        %4381 = vdwg.mxu0
        %4382 = vmatpush.bf16.msra.mxu0 %v2909
        %4383 = vmatpush.bf16.msra.mxu0 %v2901
        %4384 = vmatpush.bf16.msra.mxu0 %v2893
        %4385 = vmatpush.bf16.msra.mxu0 %v2885
        %4386 = vmatpush.bf16.msra.mxu0 %v2877
        %4387 = vmatpush.bf16.msra.mxu0 %v2869
        %4388 = vmatpush.bf16.msra.mxu0 %v2861
        %4389 = vmatpush.bf16.msra.mxu0 %v2853
        %4390 = vmatmul.bf16.gmra.mxu0 %v711
        %v4391 = vpop.f32.mrf.mxu0
        %v4392 = vadd.f32 %v4378, %v4391
        %v4393 = vpop.f32.mrf.mxu0
        %v4394 = vadd.f32 %v4380, %v4393
        %4395 = vdwg.mxu0
        %4396 = vmatpush.bf16.msra.mxu0 %v2973
        %4397 = vmatpush.bf16.msra.mxu0 %v2965
        %4398 = vmatpush.bf16.msra.mxu0 %v2957
        %4399 = vmatpush.bf16.msra.mxu0 %v2949
        %4400 = vmatpush.bf16.msra.mxu0 %v2941
        %4401 = vmatpush.bf16.msra.mxu0 %v2933
        %4402 = vmatpush.bf16.msra.mxu0 %v2925
        %4403 = vmatpush.bf16.msra.mxu0 %v2917
        %4404 = vmatmul.bf16.gmra.mxu0 %v712
        %v4405 = vpop.f32.mrf.mxu0
        %v4406 = vadd.f32 %v4392, %v4405
        %v4407 = vpop.f32.mrf.mxu0
        %v4408 = vadd.f32 %v4394, %v4407
        %4409 = vdwg.mxu0
        %4410 = vmatpush.bf16.msra.mxu0 %v3037
        %4411 = vmatpush.bf16.msra.mxu0 %v3029
        %4412 = vmatpush.bf16.msra.mxu0 %v3021
        %4413 = vmatpush.bf16.msra.mxu0 %v3013
        %4414 = vmatpush.bf16.msra.mxu0 %v3005
        %4415 = vmatpush.bf16.msra.mxu0 %v2997
        %4416 = vmatpush.bf16.msra.mxu0 %v2989
        %4417 = vmatpush.bf16.msra.mxu0 %v2981
        %4418 = vmatmul.bf16.gmra.mxu0 %v713
        %v4419 = vpop.f32.mrf.mxu0
        %v4420 = vadd.f32 %v4406, %v4419
        %v4421 = vpop.f32.mrf.mxu0
        %v4422 = vadd.f32 %v4408, %v4421
        %4423 = vdwg.mxu0
        %4424 = vmatpush.bf16.msra.mxu0 %v3101
        %4425 = vmatpush.bf16.msra.mxu0 %v3093
        %4426 = vmatpush.bf16.msra.mxu0 %v3085
        %4427 = vmatpush.bf16.msra.mxu0 %v3077
        %4428 = vmatpush.bf16.msra.mxu0 %v3069
        %4429 = vmatpush.bf16.msra.mxu0 %v3061
        %4430 = vmatpush.bf16.msra.mxu0 %v3053
        %4431 = vmatpush.bf16.msra.mxu0 %v3045
        %4432 = vmatmul.bf16.gmra.mxu0 %v714
        %v4433 = vpop.f32.mrf.mxu0
        %v4434 = vadd.f32 %v4420, %v4433
        %v4435 = vpop.f32.mrf.mxu0
        %v4436 = vadd.f32 %v4422, %v4435
        %4437 = vdwg.mxu0
        %4438 = vmatpush.bf16.msra.mxu0 %v3165
        %4439 = vmatpush.bf16.msra.mxu0 %v3157
        %4440 = vmatpush.bf16.msra.mxu0 %v3149
        %4441 = vmatpush.bf16.msra.mxu0 %v3141
        %4442 = vmatpush.bf16.msra.mxu0 %v3133
        %4443 = vmatpush.bf16.msra.mxu0 %v3125
        %4444 = vmatpush.bf16.msra.mxu0 %v3117
        %4445 = vmatpush.bf16.msra.mxu0 %v3109
        %4446 = vmatmul.bf16.gmra.mxu0 %v715
        %v4447 = vpop.f32.mrf.mxu0
        %v4448 = vadd.f32 %v4434, %v4447
        %v4449 = vpop.f32.mrf.mxu0
        %v4450 = vadd.f32 %v4436, %v4449
        %4451 = vdwg.mxu0
        %4452 = vmatpush.bf16.msra.mxu0 %v3229
        %4453 = vmatpush.bf16.msra.mxu0 %v3221
        %4454 = vmatpush.bf16.msra.mxu0 %v3213
        %4455 = vmatpush.bf16.msra.mxu0 %v3205
        %4456 = vmatpush.bf16.msra.mxu0 %v3197
        %4457 = vmatpush.bf16.msra.mxu0 %v3189
        %4458 = vmatpush.bf16.msra.mxu0 %v3181
        %4459 = vmatpush.bf16.msra.mxu0 %v3173
        %4460 = vmatmul.bf16.gmra.mxu0 %v716
        %v4461 = vpop.f32.mrf.mxu0
        %v4462 = vadd.f32 %v4448, %v4461
        %v4463 = vpop.f32.mrf.mxu0
        %v4464 = vadd.f32 %v4450, %v4463
        %4465 = vdwg.mxu0
        %4466 = vmatpush.bf16.msra.mxu0 %v3293
        %4467 = vmatpush.bf16.msra.mxu0 %v3285
        %4468 = vmatpush.bf16.msra.mxu0 %v3277
        %4469 = vmatpush.bf16.msra.mxu0 %v3269
        %4470 = vmatpush.bf16.msra.mxu0 %v3261
        %4471 = vmatpush.bf16.msra.mxu0 %v3253
        %4472 = vmatpush.bf16.msra.mxu0 %v3245
        %4473 = vmatpush.bf16.msra.mxu0 %v3237
        %4474 = vmatmul.bf16.gmra.mxu0 %v717
        %v4475 = vpop.f32.mrf.mxu0
        %v4476 = vadd.f32 %v4462, %v4475
        %v4477 = vpop.f32.mrf.mxu0
        %v4478 = vadd.f32 %v4464, %v4477
        %4479 = vdwg.mxu0
        %4480 = vmatpush.bf16.msra.mxu0 %v2846
        %4481 = vmatpush.bf16.msra.mxu0 %v2838
        %4482 = vmatpush.bf16.msra.mxu0 %v2830
        %4483 = vmatpush.bf16.msra.mxu0 %v2822
        %4484 = vmatpush.bf16.msra.mxu0 %v2814
        %4485 = vmatpush.bf16.msra.mxu0 %v2806
        %4486 = vmatpush.bf16.msra.mxu0 %v2798
        %4487 = vmatpush.bf16.msra.mxu0 %v2790
        %4488 = vmatmul.bf16.gmra.mxu0 %v710
        %v4489 = vpop.f32.mrf.mxu0
        %v4490 = vadd.f32 %v1238, %v4489
        %v4491 = vpop.f32.mrf.mxu0
        %v4492 = vadd.f32 %v1238, %v4491
        %4493 = vdwg.mxu0
        %4494 = vmatpush.bf16.msra.mxu0 %v2910
        %4495 = vmatpush.bf16.msra.mxu0 %v2902
        %4496 = vmatpush.bf16.msra.mxu0 %v2894
        %4497 = vmatpush.bf16.msra.mxu0 %v2886
        %4498 = vmatpush.bf16.msra.mxu0 %v2878
        %4499 = vmatpush.bf16.msra.mxu0 %v2870
        %4500 = vmatpush.bf16.msra.mxu0 %v2862
        %4501 = vmatpush.bf16.msra.mxu0 %v2854
        %4502 = vmatmul.bf16.gmra.mxu0 %v711
        %v4503 = vpop.f32.mrf.mxu0
        %v4504 = vadd.f32 %v4490, %v4503
        %v4505 = vpop.f32.mrf.mxu0
        %v4506 = vadd.f32 %v4492, %v4505
        %4507 = vdwg.mxu0
        %4508 = vmatpush.bf16.msra.mxu0 %v2974
        %4509 = vmatpush.bf16.msra.mxu0 %v2966
        %4510 = vmatpush.bf16.msra.mxu0 %v2958
        %4511 = vmatpush.bf16.msra.mxu0 %v2950
        %4512 = vmatpush.bf16.msra.mxu0 %v2942
        %4513 = vmatpush.bf16.msra.mxu0 %v2934
        %4514 = vmatpush.bf16.msra.mxu0 %v2926
        %4515 = vmatpush.bf16.msra.mxu0 %v2918
        %4516 = vmatmul.bf16.gmra.mxu0 %v712
        %v4517 = vpop.f32.mrf.mxu0
        %v4518 = vadd.f32 %v4504, %v4517
        %v4519 = vpop.f32.mrf.mxu0
        %v4520 = vadd.f32 %v4506, %v4519
        %4521 = vdwg.mxu0
        %4522 = vmatpush.bf16.msra.mxu0 %v3038
        %4523 = vmatpush.bf16.msra.mxu0 %v3030
        %4524 = vmatpush.bf16.msra.mxu0 %v3022
        %4525 = vmatpush.bf16.msra.mxu0 %v3014
        %4526 = vmatpush.bf16.msra.mxu0 %v3006
        %4527 = vmatpush.bf16.msra.mxu0 %v2998
        %4528 = vmatpush.bf16.msra.mxu0 %v2990
        %4529 = vmatpush.bf16.msra.mxu0 %v2982
        %4530 = vmatmul.bf16.gmra.mxu0 %v713
        %v4531 = vpop.f32.mrf.mxu0
        %v4532 = vadd.f32 %v4518, %v4531
        %v4533 = vpop.f32.mrf.mxu0
        %v4534 = vadd.f32 %v4520, %v4533
        %4535 = vdwg.mxu0
        %4536 = vmatpush.bf16.msra.mxu0 %v3102
        %4537 = vmatpush.bf16.msra.mxu0 %v3094
        %4538 = vmatpush.bf16.msra.mxu0 %v3086
        %4539 = vmatpush.bf16.msra.mxu0 %v3078
        %4540 = vmatpush.bf16.msra.mxu0 %v3070
        %4541 = vmatpush.bf16.msra.mxu0 %v3062
        %4542 = vmatpush.bf16.msra.mxu0 %v3054
        %4543 = vmatpush.bf16.msra.mxu0 %v3046
        %4544 = vmatmul.bf16.gmra.mxu0 %v714
        %v4545 = vpop.f32.mrf.mxu0
        %v4546 = vadd.f32 %v4532, %v4545
        %v4547 = vpop.f32.mrf.mxu0
        %v4548 = vadd.f32 %v4534, %v4547
        %4549 = vdwg.mxu0
        %4550 = vmatpush.bf16.msra.mxu0 %v3166
        %4551 = vmatpush.bf16.msra.mxu0 %v3158
        %4552 = vmatpush.bf16.msra.mxu0 %v3150
        %4553 = vmatpush.bf16.msra.mxu0 %v3142
        %4554 = vmatpush.bf16.msra.mxu0 %v3134
        %4555 = vmatpush.bf16.msra.mxu0 %v3126
        %4556 = vmatpush.bf16.msra.mxu0 %v3118
        %4557 = vmatpush.bf16.msra.mxu0 %v3110
        %4558 = vmatmul.bf16.gmra.mxu0 %v715
        %v4559 = vpop.f32.mrf.mxu0
        %v4560 = vadd.f32 %v4546, %v4559
        %v4561 = vpop.f32.mrf.mxu0
        %v4562 = vadd.f32 %v4548, %v4561
        %4563 = vdwg.mxu0
        %4564 = vmatpush.bf16.msra.mxu0 %v3230
        %4565 = vmatpush.bf16.msra.mxu0 %v3222
        %4566 = vmatpush.bf16.msra.mxu0 %v3214
        %4567 = vmatpush.bf16.msra.mxu0 %v3206
        %4568 = vmatpush.bf16.msra.mxu0 %v3198
        %4569 = vmatpush.bf16.msra.mxu0 %v3190
        %4570 = vmatpush.bf16.msra.mxu0 %v3182
        %4571 = vmatpush.bf16.msra.mxu0 %v3174
        %4572 = vmatmul.bf16.gmra.mxu0 %v716
        %v4573 = vpop.f32.mrf.mxu0
        %v4574 = vadd.f32 %v4560, %v4573
        %v4575 = vpop.f32.mrf.mxu0
        %v4576 = vadd.f32 %v4562, %v4575
        %4577 = vdwg.mxu0
        %4578 = vmatpush.bf16.msra.mxu0 %v3294
        %4579 = vmatpush.bf16.msra.mxu0 %v3286
        %4580 = vmatpush.bf16.msra.mxu0 %v3278
        %4581 = vmatpush.bf16.msra.mxu0 %v3270
        %4582 = vmatpush.bf16.msra.mxu0 %v3262
        %4583 = vmatpush.bf16.msra.mxu0 %v3254
        %4584 = vmatpush.bf16.msra.mxu0 %v3246
        %4585 = vmatpush.bf16.msra.mxu0 %v3238
        %4586 = vmatmul.bf16.gmra.mxu0 %v717
        %v4587 = vpop.f32.mrf.mxu0
        %v4588 = vadd.f32 %v4574, %v4587
        %v4589 = vpop.f32.mrf.mxu0
        %v4590 = vadd.f32 %v4576, %v4589
        %4591 = vdwg.mxu0
        %4592 = vmatpush.bf16.msra.mxu0 %v2847
        %4593 = vmatpush.bf16.msra.mxu0 %v2839
        %4594 = vmatpush.bf16.msra.mxu0 %v2831
        %4595 = vmatpush.bf16.msra.mxu0 %v2823
        %4596 = vmatpush.bf16.msra.mxu0 %v2815
        %4597 = vmatpush.bf16.msra.mxu0 %v2807
        %4598 = vmatpush.bf16.msra.mxu0 %v2799
        %4599 = vmatpush.bf16.msra.mxu0 %v2791
        %4600 = vmatmul.bf16.gmra.mxu0 %v710
        %v4601 = vpop.f32.mrf.mxu0
        %v4602 = vadd.f32 %v1239, %v4601
        %v4603 = vpop.f32.mrf.mxu0
        %v4604 = vadd.f32 %v1239, %v4603
        %4605 = vdwg.mxu0
        %4606 = vmatpush.bf16.msra.mxu0 %v2911
        %4607 = vmatpush.bf16.msra.mxu0 %v2903
        %4608 = vmatpush.bf16.msra.mxu0 %v2895
        %4609 = vmatpush.bf16.msra.mxu0 %v2887
        %4610 = vmatpush.bf16.msra.mxu0 %v2879
        %4611 = vmatpush.bf16.msra.mxu0 %v2871
        %4612 = vmatpush.bf16.msra.mxu0 %v2863
        %4613 = vmatpush.bf16.msra.mxu0 %v2855
        %4614 = vmatmul.bf16.gmra.mxu0 %v711
        %v4615 = vpop.f32.mrf.mxu0
        %v4616 = vadd.f32 %v4602, %v4615
        %v4617 = vpop.f32.mrf.mxu0
        %v4618 = vadd.f32 %v4604, %v4617
        %4619 = vdwg.mxu0
        %4620 = vmatpush.bf16.msra.mxu0 %v2975
        %4621 = vmatpush.bf16.msra.mxu0 %v2967
        %4622 = vmatpush.bf16.msra.mxu0 %v2959
        %4623 = vmatpush.bf16.msra.mxu0 %v2951
        %4624 = vmatpush.bf16.msra.mxu0 %v2943
        %4625 = vmatpush.bf16.msra.mxu0 %v2935
        %4626 = vmatpush.bf16.msra.mxu0 %v2927
        %4627 = vmatpush.bf16.msra.mxu0 %v2919
        %4628 = vmatmul.bf16.gmra.mxu0 %v712
        %v4629 = vpop.f32.mrf.mxu0
        %v4630 = vadd.f32 %v4616, %v4629
        %v4631 = vpop.f32.mrf.mxu0
        %v4632 = vadd.f32 %v4618, %v4631
        %4633 = vdwg.mxu0
        %4634 = vmatpush.bf16.msra.mxu0 %v3039
        %4635 = vmatpush.bf16.msra.mxu0 %v3031
        %4636 = vmatpush.bf16.msra.mxu0 %v3023
        %4637 = vmatpush.bf16.msra.mxu0 %v3015
        %4638 = vmatpush.bf16.msra.mxu0 %v3007
        %4639 = vmatpush.bf16.msra.mxu0 %v2999
        %4640 = vmatpush.bf16.msra.mxu0 %v2991
        %4641 = vmatpush.bf16.msra.mxu0 %v2983
        %4642 = vmatmul.bf16.gmra.mxu0 %v713
        %v4643 = vpop.f32.mrf.mxu0
        %v4644 = vadd.f32 %v4630, %v4643
        %v4645 = vpop.f32.mrf.mxu0
        %v4646 = vadd.f32 %v4632, %v4645
        %4647 = vdwg.mxu0
        %4648 = vmatpush.bf16.msra.mxu0 %v3103
        %4649 = vmatpush.bf16.msra.mxu0 %v3095
        %4650 = vmatpush.bf16.msra.mxu0 %v3087
        %4651 = vmatpush.bf16.msra.mxu0 %v3079
        %4652 = vmatpush.bf16.msra.mxu0 %v3071
        %4653 = vmatpush.bf16.msra.mxu0 %v3063
        %4654 = vmatpush.bf16.msra.mxu0 %v3055
        %4655 = vmatpush.bf16.msra.mxu0 %v3047
        %4656 = vmatmul.bf16.gmra.mxu0 %v714
        %v4657 = vpop.f32.mrf.mxu0
        %v4658 = vadd.f32 %v4644, %v4657
        %v4659 = vpop.f32.mrf.mxu0
        %v4660 = vadd.f32 %v4646, %v4659
        %4661 = vdwg.mxu0
        %4662 = vmatpush.bf16.msra.mxu0 %v3167
        %4663 = vmatpush.bf16.msra.mxu0 %v3159
        %4664 = vmatpush.bf16.msra.mxu0 %v3151
        %4665 = vmatpush.bf16.msra.mxu0 %v3143
        %4666 = vmatpush.bf16.msra.mxu0 %v3135
        %4667 = vmatpush.bf16.msra.mxu0 %v3127
        %4668 = vmatpush.bf16.msra.mxu0 %v3119
        %4669 = vmatpush.bf16.msra.mxu0 %v3111
        %4670 = vmatmul.bf16.gmra.mxu0 %v715
        %v4671 = vpop.f32.mrf.mxu0
        %v4672 = vadd.f32 %v4658, %v4671
        %v4673 = vpop.f32.mrf.mxu0
        %v4674 = vadd.f32 %v4660, %v4673
        %4675 = vdwg.mxu0
        %4676 = vmatpush.bf16.msra.mxu0 %v3231
        %4677 = vmatpush.bf16.msra.mxu0 %v3223
        %4678 = vmatpush.bf16.msra.mxu0 %v3215
        %4679 = vmatpush.bf16.msra.mxu0 %v3207
        %4680 = vmatpush.bf16.msra.mxu0 %v3199
        %4681 = vmatpush.bf16.msra.mxu0 %v3191
        %4682 = vmatpush.bf16.msra.mxu0 %v3183
        %4683 = vmatpush.bf16.msra.mxu0 %v3175
        %4684 = vmatmul.bf16.gmra.mxu0 %v716
        %v4685 = vpop.f32.mrf.mxu0
        %v4686 = vadd.f32 %v4672, %v4685
        %v4687 = vpop.f32.mrf.mxu0
        %v4688 = vadd.f32 %v4674, %v4687
        %4689 = vdwg.mxu0
        %4690 = vmatpush.bf16.msra.mxu0 %v3295
        %4691 = vmatpush.bf16.msra.mxu0 %v3287
        %4692 = vmatpush.bf16.msra.mxu0 %v3279
        %4693 = vmatpush.bf16.msra.mxu0 %v3271
        %4694 = vmatpush.bf16.msra.mxu0 %v3263
        %4695 = vmatpush.bf16.msra.mxu0 %v3255
        %4696 = vmatpush.bf16.msra.mxu0 %v3247
        %4697 = vmatpush.bf16.msra.mxu0 %v3239
        %4698 = vmatmul.bf16.gmra.mxu0 %v717
        %v4699 = vpop.f32.mrf.mxu0
        %v4700 = vadd.f32 %v4686, %v4699
        %v4701 = vpop.f32.mrf.mxu0
        %v4702 = vadd.f32 %v4688, %v4701
        %4703 = vdwg.mxu0
        %vm4704 = vcmp.gt.f32.partialorder %v3916, 0.0
        %vm4705 = vcmp.gt.f32.partialorder %v4028, 0.0
        %vm4706 = vcmp.gt.f32.partialorder %v4140, 0.0
        %vm4707 = vcmp.gt.f32.partialorder %v4252, 0.0
        %vm4708 = vcmp.gt.f32.partialorder %v4364, 0.0
        %vm4709 = vcmp.gt.f32.partialorder %v4476, 0.0
        %vm4710 = vcmp.gt.f32.partialorder %v4588, 0.0
        %vm4711 = vcmp.gt.f32.partialorder %v4700, 0.0
        %vm4712 = vcmp.gt.f32.partialorder %v3918, 0.0
        %vm4713 = vcmp.gt.f32.partialorder %v4030, 0.0
        %vm4714 = vcmp.gt.f32.partialorder %v4142, 0.0
        %vm4715 = vcmp.gt.f32.partialorder %v4254, 0.0
        %vm4716 = vcmp.gt.f32.partialorder %v4366, 0.0
        %vm4717 = vcmp.gt.f32.partialorder %v4478, 0.0
        %vm4718 = vcmp.gt.f32.partialorder %v4590, 0.0
        %vm4719 = vcmp.gt.f32.partialorder %v4702, 0.0
        %v4720 = vmin.f32 %v3916, 0.0
        %v4721 = vmin.f32 %v4028, 0.0
        %v4722 = vmin.f32 %v4140, 0.0
        %v4723 = vmin.f32 %v4252, 0.0
        %v4724 = vmin.f32 %v4364, 0.0
        %v4725 = vmin.f32 %v4476, 0.0
        %v4726 = vmin.f32 %v4588, 0.0
        %v4727 = vmin.f32 %v4700, 0.0
        %v4728 = vmin.f32 %v3918, 0.0
        %v4729 = vmin.f32 %v4030, 0.0
        %v4730 = vmin.f32 %v4142, 0.0
        %v4731 = vmin.f32 %v4254, 0.0
        %v4732 = vmin.f32 %v4366, 0.0
        %v4733 = vmin.f32 %v4478, 0.0
        %v4734 = vmin.f32 %v4590, 0.0
        %v4735 = vmin.f32 %v4702, 0.0
        %v4736 = vmul.f32 %v4720, 1.442695
        %v4737 = vpow.pop %v4736
        %v4738 = vmul.f32 %v4721, 1.442695
        %v4739 = vpow.pop %v4738
        %v4740 = vmul.f32 %v4722, 1.442695
        %v4741 = vpow.pop %v4740
        %v4742 = vmul.f32 %v4723, 1.442695
        %v4743 = vpow.pop %v4742
        %v4744 = vmul.f32 %v4724, 1.442695
        %v4745 = vpow.pop %v4744
        %v4746 = vmul.f32 %v4725, 1.442695
        %v4747 = vpow.pop %v4746
        %v4748 = vmul.f32 %v4726, 1.442695
        %v4749 = vpow.pop %v4748
        %v4750 = vmul.f32 %v4727, 1.442695
        %v4751 = vpow.pop %v4750
        %v4752 = vmul.f32 %v4728, 1.442695
        %v4753 = vpow.pop %v4752
        %v4754 = vmul.f32 %v4729, 1.442695
        %v4755 = vpow.pop %v4754
        %v4756 = vmul.f32 %v4730, 1.442695
        %v4757 = vpow.pop %v4756
        %v4758 = vmul.f32 %v4731, 1.442695
        %v4759 = vpow.pop %v4758
        %v4760 = vmul.f32 %v4732, 1.442695
        %v4761 = vpow.pop %v4760
        %v4762 = vmul.f32 %v4733, 1.442695
        %v4763 = vpow.pop %v4762
        %v4764 = vmul.f32 %v4734, 1.442695
        %v4765 = vpow.pop %v4764
        %v4766 = vmul.f32 %v4735, 1.442695
        %v4767 = vpow.pop %v4766
        %v4768 = vsub.f32 %v4737, 1.0
        %v4769 = vsub.f32 %v4739, 1.0
        %v4770 = vsub.f32 %v4741, 1.0
        %v4771 = vsub.f32 %v4743, 1.0
        %v4772 = vsub.f32 %v4745, 1.0
        %v4773 = vsub.f32 %v4747, 1.0
        %v4774 = vsub.f32 %v4749, 1.0
        %v4775 = vsub.f32 %v4751, 1.0
        %v4776 = vsub.f32 %v4753, 1.0
        %v4777 = vsub.f32 %v4755, 1.0
        %v4778 = vsub.f32 %v4757, 1.0
        %v4779 = vsub.f32 %v4759, 1.0
        %v4780 = vsub.f32 %v4761, 1.0
        %v4781 = vsub.f32 %v4763, 1.0
        %v4782 = vsub.f32 %v4765, 1.0
        %v4783 = vsub.f32 %v4767, 1.0
        %v4784 = vsel %vm4704, %v3916, %v4768
        %v4785 = vsel %vm4705, %v4028, %v4769
        %v4786 = vsel %vm4706, %v4140, %v4770
        %v4787 = vsel %vm4707, %v4252, %v4771
        %v4788 = vsel %vm4708, %v4364, %v4772
        %v4789 = vsel %vm4709, %v4476, %v4773
        %v4790 = vsel %vm4710, %v4588, %v4774
        %v4791 = vsel %vm4711, %v4700, %v4775
        %v4792 = vsel %vm4712, %v3918, %v4776
        %v4793 = vsel %vm4713, %v4030, %v4777
        %v4794 = vsel %vm4714, %v4142, %v4778
        %v4795 = vsel %vm4715, %v4254, %v4779
        %v4796 = vsel %vm4716, %v4366, %v4780
        %v4797 = vsel %vm4717, %v4478, %v4781
        %v4798 = vsel %vm4718, %v4590, %v4782
        %v4799 = vsel %vm4719, %v4702, %v4783
        %v4800 = vpack.c.bf16 %v4792, %v4784
        %v4801 = vpack.c.bf16 %v4793, %v4785
        %v4802 = vpack.c.bf16 %v4794, %v4786
        %v4803 = vpack.c.bf16 %v4795, %v4787
        %v4804 = vpack.c.bf16 %v4796, %v4788
        %v4805 = vpack.c.bf16 %v4797, %v4789
        %v4806 = vpack.c.bf16 %v4798, %v4790
        %v4807 = vpack.c.bf16 %v4799, %v4791
        %v4808 = vld [vmem:[%s429] sm:$0xff]
        %v4809 = vld [vmem:[%s429 + $0x8] sm:$0xff]
        %v4810 = vld [vmem:[%s429 + $0x10] sm:$0xff]
        %v4811 = vld [vmem:[%s429 + $0x18] sm:$0xff]
        %v4812 = vld [vmem:[%s429 + $0x20] sm:$0xff]
        %v4813 = vld [vmem:[%s429 + $0x28] sm:$0xff]
        %v4814 = vld [vmem:[%s429 + $0x30] sm:$0xff]
        %v4815 = vld [vmem:[%s429 + $0x38] sm:$0xff]
        %v4816 = vld [vmem:[%s429 + $0x40] sm:$0xff]
        %v4817 = vld [vmem:[%s429 + $0x48] sm:$0xff]
        %v4818 = vld [vmem:[%s429 + $0x50] sm:$0xff]
        %v4819 = vld [vmem:[%s429 + $0x58] sm:$0xff]
        %v4820 = vld [vmem:[%s429 + $0x60] sm:$0xff]
        %v4821 = vld [vmem:[%s429 + $0x68] sm:$0xff]
        %v4822 = vld [vmem:[%s429 + $0x70] sm:$0xff]
        %v4823 = vld [vmem:[%s429 + $0x78] sm:$0xff]
        %v4824 = vld [vmem:[%s429 + $0x80] sm:$0xff]
        %v4825 = vld [vmem:[%s429 + $0x88] sm:$0xff]
        %v4826 = vld [vmem:[%s429 + $0x90] sm:$0xff]
        %v4827 = vld [vmem:[%s429 + $0x98] sm:$0xff]
        %v4828 = vld [vmem:[%s429 + $0xa0] sm:$0xff]
        %v4829 = vld [vmem:[%s429 + $0xa8] sm:$0xff]
        %v4830 = vld [vmem:[%s429 + $0xb0] sm:$0xff]
        %v4831 = vld [vmem:[%s429 + $0xb8] sm:$0xff]
        %v4832 = vld [vmem:[%s429 + $0xc0] sm:$0xff]
        %v4833 = vld [vmem:[%s429 + $0xc8] sm:$0xff]
        %v4834 = vld [vmem:[%s429 + $0xd0] sm:$0xff]
        %v4835 = vld [vmem:[%s429 + $0xd8] sm:$0xff]
        %v4836 = vld [vmem:[%s429 + $0xe0] sm:$0xff]
        %v4837 = vld [vmem:[%s429 + $0xe8] sm:$0xff]
        %v4838 = vld [vmem:[%s429 + $0xf0] sm:$0xff]
        %v4839 = vld [vmem:[%s429 + $0xf8] sm:$0xff]
        %v4840 = vld [vmem:[%s429 + $0x100] sm:$0xff]
        %v4841 = vld [vmem:[%s429 + $0x108] sm:$0xff]
        %v4842 = vld [vmem:[%s429 + $0x110] sm:$0xff]
        %v4843 = vld [vmem:[%s429 + $0x118] sm:$0xff]
        %v4844 = vld [vmem:[%s429 + $0x120] sm:$0xff]
        %v4845 = vld [vmem:[%s429 + $0x128] sm:$0xff]
        %v4846 = vld [vmem:[%s429 + $0x130] sm:$0xff]
        %v4847 = vld [vmem:[%s429 + $0x138] sm:$0xff]
        %v4848 = vld [vmem:[%s429 + $0x140] sm:$0xff]
        %v4849 = vld [vmem:[%s429 + $0x148] sm:$0xff]
        %v4850 = vld [vmem:[%s429 + $0x150] sm:$0xff]
        %v4851 = vld [vmem:[%s429 + $0x158] sm:$0xff]
        %v4852 = vld [vmem:[%s429 + $0x160] sm:$0xff]
        %v4853 = vld [vmem:[%s429 + $0x168] sm:$0xff]
        %v4854 = vld [vmem:[%s429 + $0x170] sm:$0xff]
        %v4855 = vld [vmem:[%s429 + $0x178] sm:$0xff]
        %v4856 = vld [vmem:[%s429 + $0x180] sm:$0xff]
        %v4857 = vld [vmem:[%s429 + $0x188] sm:$0xff]
        %v4858 = vld [vmem:[%s429 + $0x190] sm:$0xff]
        %v4859 = vld [vmem:[%s429 + $0x198] sm:$0xff]
        %v4860 = vld [vmem:[%s429 + $0x1a0] sm:$0xff]
        %v4861 = vld [vmem:[%s429 + $0x1a8] sm:$0xff]
        %v4862 = vld [vmem:[%s429 + $0x1b0] sm:$0xff]
        %v4863 = vld [vmem:[%s429 + $0x1b8] sm:$0xff]
        %v4864 = vld [vmem:[%s429 + $0x1c0] sm:$0xff]
        %v4865 = vld [vmem:[%s429 + $0x1c8] sm:$0xff]
        %v4866 = vld [vmem:[%s429 + $0x1d0] sm:$0xff]
        %v4867 = vld [vmem:[%s429 + $0x1d8] sm:$0xff]
        %v4868 = vld [vmem:[%s429 + $0x1e0] sm:$0xff]
        %v4869 = vld [vmem:[%s429 + $0x1e8] sm:$0xff]
        %v4870 = vld [vmem:[%s429 + $0x1f0] sm:$0xff]
        %v4871 = vld [vmem:[%s429 + $0x1f8] sm:$0xff]
        %v4872 = vld [vmem:[%s429 + $0x200] sm:$0xff]
        %v4873 = vld [vmem:[%s429 + $0x208] sm:$0xff]
        %v4874 = vld [vmem:[%s429 + $0x210] sm:$0xff]
        %v4875 = vld [vmem:[%s429 + $0x218] sm:$0xff]
        %v4876 = vld [vmem:[%s429 + $0x220] sm:$0xff]
        %v4877 = vld [vmem:[%s429 + $0x228] sm:$0xff]
        %v4878 = vld [vmem:[%s429 + $0x230] sm:$0xff]
        %v4879 = vld [vmem:[%s429 + $0x238] sm:$0xff]
        %v4880 = vld [vmem:[%s429 + $0x240] sm:$0xff]
        %v4881 = vld [vmem:[%s429 + $0x248] sm:$0xff]
        %v4882 = vld [vmem:[%s429 + $0x250] sm:$0xff]
        %v4883 = vld [vmem:[%s429 + $0x258] sm:$0xff]
        %v4884 = vld [vmem:[%s429 + $0x260] sm:$0xff]
        %v4885 = vld [vmem:[%s429 + $0x268] sm:$0xff]
        %v4886 = vld [vmem:[%s429 + $0x270] sm:$0xff]
        %v4887 = vld [vmem:[%s429 + $0x278] sm:$0xff]
        %v4888 = vld [vmem:[%s429 + $0x280] sm:$0xff]
        %v4889 = vld [vmem:[%s429 + $0x288] sm:$0xff]
        %v4890 = vld [vmem:[%s429 + $0x290] sm:$0xff]
        %v4891 = vld [vmem:[%s429 + $0x298] sm:$0xff]
        %v4892 = vld [vmem:[%s429 + $0x2a0] sm:$0xff]
        %v4893 = vld [vmem:[%s429 + $0x2a8] sm:$0xff]
        %v4894 = vld [vmem:[%s429 + $0x2b0] sm:$0xff]
        %v4895 = vld [vmem:[%s429 + $0x2b8] sm:$0xff]
        %v4896 = vld [vmem:[%s429 + $0x2c0] sm:$0xff]
        %v4897 = vld [vmem:[%s429 + $0x2c8] sm:$0xff]
        %v4898 = vld [vmem:[%s429 + $0x2d0] sm:$0xff]
        %v4899 = vld [vmem:[%s429 + $0x2d8] sm:$0xff]
        %v4900 = vld [vmem:[%s429 + $0x2e0] sm:$0xff]
        %v4901 = vld [vmem:[%s429 + $0x2e8] sm:$0xff]
        %v4902 = vld [vmem:[%s429 + $0x2f0] sm:$0xff]
        %v4903 = vld [vmem:[%s429 + $0x2f8] sm:$0xff]
        %v4904 = vld [vmem:[%s429 + $0x300] sm:$0xff]
        %v4905 = vld [vmem:[%s429 + $0x308] sm:$0xff]
        %v4906 = vld [vmem:[%s429 + $0x310] sm:$0xff]
        %v4907 = vld [vmem:[%s429 + $0x318] sm:$0xff]
        %v4908 = vld [vmem:[%s429 + $0x320] sm:$0xff]
        %v4909 = vld [vmem:[%s429 + $0x328] sm:$0xff]
        %v4910 = vld [vmem:[%s429 + $0x330] sm:$0xff]
        %v4911 = vld [vmem:[%s429 + $0x338] sm:$0xff]
        %v4912 = vld [vmem:[%s429 + $0x340] sm:$0xff]
        %v4913 = vld [vmem:[%s429 + $0x348] sm:$0xff]
        %v4914 = vld [vmem:[%s429 + $0x350] sm:$0xff]
        %v4915 = vld [vmem:[%s429 + $0x358] sm:$0xff]
        %v4916 = vld [vmem:[%s429 + $0x360] sm:$0xff]
        %v4917 = vld [vmem:[%s429 + $0x368] sm:$0xff]
        %v4918 = vld [vmem:[%s429 + $0x370] sm:$0xff]
        %v4919 = vld [vmem:[%s429 + $0x378] sm:$0xff]
        %v4920 = vld [vmem:[%s429 + $0x380] sm:$0xff]
        %v4921 = vld [vmem:[%s429 + $0x388] sm:$0xff]
        %v4922 = vld [vmem:[%s429 + $0x390] sm:$0xff]
        %v4923 = vld [vmem:[%s429 + $0x398] sm:$0xff]
        %v4924 = vld [vmem:[%s429 + $0x3a0] sm:$0xff]
        %v4925 = vld [vmem:[%s429 + $0x3a8] sm:$0xff]
        %v4926 = vld [vmem:[%s429 + $0x3b0] sm:$0xff]
        %v4927 = vld [vmem:[%s429 + $0x3b8] sm:$0xff]
        %v4928 = vld [vmem:[%s429 + $0x3c0] sm:$0xff]
        %v4929 = vld [vmem:[%s429 + $0x3c8] sm:$0xff]
        %v4930 = vld [vmem:[%s429 + $0x3d0] sm:$0xff]
        %v4931 = vld [vmem:[%s429 + $0x3d8] sm:$0xff]
        %v4932 = vld [vmem:[%s429 + $0x3e0] sm:$0xff]
        %v4933 = vld [vmem:[%s429 + $0x3e8] sm:$0xff]
        %v4934 = vld [vmem:[%s429 + $0x3f0] sm:$0xff]
        %v4935 = vld [vmem:[%s429 + $0x3f8] sm:$0xff]
        %v4936 = vld [vmem:[%s429 + $0x400] sm:$0xff]
        %v4937 = vld [vmem:[%s429 + $0x408] sm:$0xff]
        %v4938 = vld [vmem:[%s429 + $0x410] sm:$0xff]
        %v4939 = vld [vmem:[%s429 + $0x418] sm:$0xff]
        %v4940 = vld [vmem:[%s429 + $0x420] sm:$0xff]
        %v4941 = vld [vmem:[%s429 + $0x428] sm:$0xff]
        %v4942 = vld [vmem:[%s429 + $0x430] sm:$0xff]
        %v4943 = vld [vmem:[%s429 + $0x438] sm:$0xff]
        %v4944 = vld [vmem:[%s429 + $0x440] sm:$0xff]
        %v4945 = vld [vmem:[%s429 + $0x448] sm:$0xff]
        %v4946 = vld [vmem:[%s429 + $0x450] sm:$0xff]
        %v4947 = vld [vmem:[%s429 + $0x458] sm:$0xff]
        %v4948 = vld [vmem:[%s429 + $0x460] sm:$0xff]
        %v4949 = vld [vmem:[%s429 + $0x468] sm:$0xff]
        %v4950 = vld [vmem:[%s429 + $0x470] sm:$0xff]
        %v4951 = vld [vmem:[%s429 + $0x478] sm:$0xff]
        %v4952 = vld [vmem:[%s429 + $0x480] sm:$0xff]
        %v4953 = vld [vmem:[%s429 + $0x488] sm:$0xff]
        %v4954 = vld [vmem:[%s429 + $0x490] sm:$0xff]
        %v4955 = vld [vmem:[%s429 + $0x498] sm:$0xff]
        %v4956 = vld [vmem:[%s429 + $0x4a0] sm:$0xff]
        %v4957 = vld [vmem:[%s429 + $0x4a8] sm:$0xff]
        %v4958 = vld [vmem:[%s429 + $0x4b0] sm:$0xff]
        %v4959 = vld [vmem:[%s429 + $0x4b8] sm:$0xff]
        %v4960 = vld [vmem:[%s429 + $0x4c0] sm:$0xff]
        %v4961 = vld [vmem:[%s429 + $0x4c8] sm:$0xff]
        %v4962 = vld [vmem:[%s429 + $0x4d0] sm:$0xff]
        %v4963 = vld [vmem:[%s429 + $0x4d8] sm:$0xff]
        %v4964 = vld [vmem:[%s429 + $0x4e0] sm:$0xff]
        %v4965 = vld [vmem:[%s429 + $0x4e8] sm:$0xff]
        %v4966 = vld [vmem:[%s429 + $0x4f0] sm:$0xff]
        %v4967 = vld [vmem:[%s429 + $0x4f8] sm:$0xff]
        %v4968 = vld [vmem:[%s429 + $0x500] sm:$0xff]
        %v4969 = vld [vmem:[%s429 + $0x508] sm:$0xff]
        %v4970 = vld [vmem:[%s429 + $0x510] sm:$0xff]
        %v4971 = vld [vmem:[%s429 + $0x518] sm:$0xff]
        %v4972 = vld [vmem:[%s429 + $0x520] sm:$0xff]
        %v4973 = vld [vmem:[%s429 + $0x528] sm:$0xff]
        %v4974 = vld [vmem:[%s429 + $0x530] sm:$0xff]
        %v4975 = vld [vmem:[%s429 + $0x538] sm:$0xff]
        %v4976 = vld [vmem:[%s429 + $0x540] sm:$0xff]
        %v4977 = vld [vmem:[%s429 + $0x548] sm:$0xff]
        %v4978 = vld [vmem:[%s429 + $0x550] sm:$0xff]
        %v4979 = vld [vmem:[%s429 + $0x558] sm:$0xff]
        %v4980 = vld [vmem:[%s429 + $0x560] sm:$0xff]
        %v4981 = vld [vmem:[%s429 + $0x568] sm:$0xff]
        %v4982 = vld [vmem:[%s429 + $0x570] sm:$0xff]
        %v4983 = vld [vmem:[%s429 + $0x578] sm:$0xff]
        %v4984 = vld [vmem:[%s429 + $0x580] sm:$0xff]
        %v4985 = vld [vmem:[%s429 + $0x588] sm:$0xff]
        %v4986 = vld [vmem:[%s429 + $0x590] sm:$0xff]
        %v4987 = vld [vmem:[%s429 + $0x598] sm:$0xff]
        %v4988 = vld [vmem:[%s429 + $0x5a0] sm:$0xff]
        %v4989 = vld [vmem:[%s429 + $0x5a8] sm:$0xff]
        %v4990 = vld [vmem:[%s429 + $0x5b0] sm:$0xff]
        %v4991 = vld [vmem:[%s429 + $0x5b8] sm:$0xff]
        %v4992 = vld [vmem:[%s429 + $0x5c0] sm:$0xff]
        %v4993 = vld [vmem:[%s429 + $0x5c8] sm:$0xff]
        %v4994 = vld [vmem:[%s429 + $0x5d0] sm:$0xff]
        %v4995 = vld [vmem:[%s429 + $0x5d8] sm:$0xff]
        %v4996 = vld [vmem:[%s429 + $0x5e0] sm:$0xff]
        %v4997 = vld [vmem:[%s429 + $0x5e8] sm:$0xff]
        %v4998 = vld [vmem:[%s429 + $0x5f0] sm:$0xff]
        %v4999 = vld [vmem:[%s429 + $0x5f8] sm:$0xff]
        %v5000 = vld [vmem:[%s429 + $0x600] sm:$0xff]
        %v5001 = vld [vmem:[%s429 + $0x608] sm:$0xff]
        %v5002 = vld [vmem:[%s429 + $0x610] sm:$0xff]
        %v5003 = vld [vmem:[%s429 + $0x618] sm:$0xff]
        %v5004 = vld [vmem:[%s429 + $0x620] sm:$0xff]
        %v5005 = vld [vmem:[%s429 + $0x628] sm:$0xff]
        %v5006 = vld [vmem:[%s429 + $0x630] sm:$0xff]
        %v5007 = vld [vmem:[%s429 + $0x638] sm:$0xff]
        %v5008 = vld [vmem:[%s429 + $0x640] sm:$0xff]
        %v5009 = vld [vmem:[%s429 + $0x648] sm:$0xff]
        %v5010 = vld [vmem:[%s429 + $0x650] sm:$0xff]
        %v5011 = vld [vmem:[%s429 + $0x658] sm:$0xff]
        %v5012 = vld [vmem:[%s429 + $0x660] sm:$0xff]
        %v5013 = vld [vmem:[%s429 + $0x668] sm:$0xff]
        %v5014 = vld [vmem:[%s429 + $0x670] sm:$0xff]
        %v5015 = vld [vmem:[%s429 + $0x678] sm:$0xff]
        %v5016 = vld [vmem:[%s429 + $0x680] sm:$0xff]
        %v5017 = vld [vmem:[%s429 + $0x688] sm:$0xff]
        %v5018 = vld [vmem:[%s429 + $0x690] sm:$0xff]
        %v5019 = vld [vmem:[%s429 + $0x698] sm:$0xff]
        %v5020 = vld [vmem:[%s429 + $0x6a0] sm:$0xff]
        %v5021 = vld [vmem:[%s429 + $0x6a8] sm:$0xff]
        %v5022 = vld [vmem:[%s429 + $0x6b0] sm:$0xff]
        %v5023 = vld [vmem:[%s429 + $0x6b8] sm:$0xff]
        %v5024 = vld [vmem:[%s429 + $0x6c0] sm:$0xff]
        %v5025 = vld [vmem:[%s429 + $0x6c8] sm:$0xff]
        %v5026 = vld [vmem:[%s429 + $0x6d0] sm:$0xff]
        %v5027 = vld [vmem:[%s429 + $0x6d8] sm:$0xff]
        %v5028 = vld [vmem:[%s429 + $0x6e0] sm:$0xff]
        %v5029 = vld [vmem:[%s429 + $0x6e8] sm:$0xff]
        %v5030 = vld [vmem:[%s429 + $0x6f0] sm:$0xff]
        %v5031 = vld [vmem:[%s429 + $0x6f8] sm:$0xff]
        %v5032 = vld [vmem:[%s429 + $0x700] sm:$0xff]
        %v5033 = vld [vmem:[%s429 + $0x708] sm:$0xff]
        %v5034 = vld [vmem:[%s429 + $0x710] sm:$0xff]
        %v5035 = vld [vmem:[%s429 + $0x718] sm:$0xff]
        %v5036 = vld [vmem:[%s429 + $0x720] sm:$0xff]
        %v5037 = vld [vmem:[%s429 + $0x728] sm:$0xff]
        %v5038 = vld [vmem:[%s429 + $0x730] sm:$0xff]
        %v5039 = vld [vmem:[%s429 + $0x738] sm:$0xff]
        %v5040 = vld [vmem:[%s429 + $0x740] sm:$0xff]
        %v5041 = vld [vmem:[%s429 + $0x748] sm:$0xff]
        %v5042 = vld [vmem:[%s429 + $0x750] sm:$0xff]
        %v5043 = vld [vmem:[%s429 + $0x758] sm:$0xff]
        %v5044 = vld [vmem:[%s429 + $0x760] sm:$0xff]
        %v5045 = vld [vmem:[%s429 + $0x768] sm:$0xff]
        %v5046 = vld [vmem:[%s429 + $0x770] sm:$0xff]
        %v5047 = vld [vmem:[%s429 + $0x778] sm:$0xff]
        %v5048 = vld [vmem:[%s429 + $0x780] sm:$0xff]
        %v5049 = vld [vmem:[%s429 + $0x788] sm:$0xff]
        %v5050 = vld [vmem:[%s429 + $0x790] sm:$0xff]
        %v5051 = vld [vmem:[%s429 + $0x798] sm:$0xff]
        %v5052 = vld [vmem:[%s429 + $0x7a0] sm:$0xff]
        %v5053 = vld [vmem:[%s429 + $0x7a8] sm:$0xff]
        %v5054 = vld [vmem:[%s429 + $0x7b0] sm:$0xff]
        %v5055 = vld [vmem:[%s429 + $0x7b8] sm:$0xff]
        %v5056 = vld [vmem:[%s429 + $0x7c0] sm:$0xff]
        %v5057 = vld [vmem:[%s429 + $0x7c8] sm:$0xff]
        %v5058 = vld [vmem:[%s429 + $0x7d0] sm:$0xff]
        %v5059 = vld [vmem:[%s429 + $0x7d8] sm:$0xff]
        %v5060 = vld [vmem:[%s429 + $0x7e0] sm:$0xff]
        %v5061 = vld [vmem:[%s429 + $0x7e8] sm:$0xff]
        %v5062 = vld [vmem:[%s429 + $0x7f0] sm:$0xff]
        %v5063 = vld [vmem:[%s429 + $0x7f8] sm:$0xff]
        %v5064 = vld [vmem:[%s429 + $0x800] sm:$0xff]
        %v5065 = vld [vmem:[%s429 + $0x808] sm:$0xff]
        %v5066 = vld [vmem:[%s429 + $0x810] sm:$0xff]
        %v5067 = vld [vmem:[%s429 + $0x818] sm:$0xff]
        %v5068 = vld [vmem:[%s429 + $0x820] sm:$0xff]
        %v5069 = vld [vmem:[%s429 + $0x828] sm:$0xff]
        %v5070 = vld [vmem:[%s429 + $0x830] sm:$0xff]
        %v5071 = vld [vmem:[%s429 + $0x838] sm:$0xff]
        %v5072 = vld [vmem:[%s429 + $0x840] sm:$0xff]
        %v5073 = vld [vmem:[%s429 + $0x848] sm:$0xff]
        %v5074 = vld [vmem:[%s429 + $0x850] sm:$0xff]
        %v5075 = vld [vmem:[%s429 + $0x858] sm:$0xff]
        %v5076 = vld [vmem:[%s429 + $0x860] sm:$0xff]
        %v5077 = vld [vmem:[%s429 + $0x868] sm:$0xff]
        %v5078 = vld [vmem:[%s429 + $0x870] sm:$0xff]
        %v5079 = vld [vmem:[%s429 + $0x878] sm:$0xff]
        %v5080 = vld [vmem:[%s429 + $0x880] sm:$0xff]
        %v5081 = vld [vmem:[%s429 + $0x888] sm:$0xff]
        %v5082 = vld [vmem:[%s429 + $0x890] sm:$0xff]
        %v5083 = vld [vmem:[%s429 + $0x898] sm:$0xff]
        %v5084 = vld [vmem:[%s429 + $0x8a0] sm:$0xff]
        %v5085 = vld [vmem:[%s429 + $0x8a8] sm:$0xff]
        %v5086 = vld [vmem:[%s429 + $0x8b0] sm:$0xff]
        %v5087 = vld [vmem:[%s429 + $0x8b8] sm:$0xff]
        %v5088 = vld [vmem:[%s429 + $0x8c0] sm:$0xff]
        %v5089 = vld [vmem:[%s429 + $0x8c8] sm:$0xff]
        %v5090 = vld [vmem:[%s429 + $0x8d0] sm:$0xff]
        %v5091 = vld [vmem:[%s429 + $0x8d8] sm:$0xff]
        %v5092 = vld [vmem:[%s429 + $0x8e0] sm:$0xff]
        %v5093 = vld [vmem:[%s429 + $0x8e8] sm:$0xff]
        %v5094 = vld [vmem:[%s429 + $0x8f0] sm:$0xff]
        %v5095 = vld [vmem:[%s429 + $0x8f8] sm:$0xff]
        %v5096 = vld [vmem:[%s429 + $0x900] sm:$0xff]
        %v5097 = vld [vmem:[%s429 + $0x908] sm:$0xff]
        %v5098 = vld [vmem:[%s429 + $0x910] sm:$0xff]
        %v5099 = vld [vmem:[%s429 + $0x918] sm:$0xff]
        %v5100 = vld [vmem:[%s429 + $0x920] sm:$0xff]
        %v5101 = vld [vmem:[%s429 + $0x928] sm:$0xff]
        %v5102 = vld [vmem:[%s429 + $0x930] sm:$0xff]
        %v5103 = vld [vmem:[%s429 + $0x938] sm:$0xff]
        %v5104 = vld [vmem:[%s429 + $0x940] sm:$0xff]
        %v5105 = vld [vmem:[%s429 + $0x948] sm:$0xff]
        %v5106 = vld [vmem:[%s429 + $0x950] sm:$0xff]
        %v5107 = vld [vmem:[%s429 + $0x958] sm:$0xff]
        %v5108 = vld [vmem:[%s429 + $0x960] sm:$0xff]
        %v5109 = vld [vmem:[%s429 + $0x968] sm:$0xff]
        %v5110 = vld [vmem:[%s429 + $0x970] sm:$0xff]
        %v5111 = vld [vmem:[%s429 + $0x978] sm:$0xff]
        %v5112 = vld [vmem:[%s429 + $0x980] sm:$0xff]
        %v5113 = vld [vmem:[%s429 + $0x988] sm:$0xff]
        %v5114 = vld [vmem:[%s429 + $0x990] sm:$0xff]
        %v5115 = vld [vmem:[%s429 + $0x998] sm:$0xff]
        %v5116 = vld [vmem:[%s429 + $0x9a0] sm:$0xff]
        %v5117 = vld [vmem:[%s429 + $0x9a8] sm:$0xff]
        %v5118 = vld [vmem:[%s429 + $0x9b0] sm:$0xff]
        %v5119 = vld [vmem:[%s429 + $0x9b8] sm:$0xff]
        %v5120 = vld [vmem:[%s429 + $0x9c0] sm:$0xff]
        %v5121 = vld [vmem:[%s429 + $0x9c8] sm:$0xff]
        %v5122 = vld [vmem:[%s429 + $0x9d0] sm:$0xff]
        %v5123 = vld [vmem:[%s429 + $0x9d8] sm:$0xff]
        %v5124 = vld [vmem:[%s429 + $0x9e0] sm:$0xff]
        %v5125 = vld [vmem:[%s429 + $0x9e8] sm:$0xff]
        %v5126 = vld [vmem:[%s429 + $0x9f0] sm:$0xff]
        %v5127 = vld [vmem:[%s429 + $0x9f8] sm:$0xff]
        %v5128 = vld [vmem:[%s429 + $0xa00] sm:$0xff]
        %v5129 = vld [vmem:[%s429 + $0xa08] sm:$0xff]
        %v5130 = vld [vmem:[%s429 + $0xa10] sm:$0xff]
        %v5131 = vld [vmem:[%s429 + $0xa18] sm:$0xff]
        %v5132 = vld [vmem:[%s429 + $0xa20] sm:$0xff]
        %v5133 = vld [vmem:[%s429 + $0xa28] sm:$0xff]
        %v5134 = vld [vmem:[%s429 + $0xa30] sm:$0xff]
        %v5135 = vld [vmem:[%s429 + $0xa38] sm:$0xff]
        %v5136 = vld [vmem:[%s429 + $0xa40] sm:$0xff]
        %v5137 = vld [vmem:[%s429 + $0xa48] sm:$0xff]
        %v5138 = vld [vmem:[%s429 + $0xa50] sm:$0xff]
        %v5139 = vld [vmem:[%s429 + $0xa58] sm:$0xff]
        %v5140 = vld [vmem:[%s429 + $0xa60] sm:$0xff]
        %v5141 = vld [vmem:[%s429 + $0xa68] sm:$0xff]
        %v5142 = vld [vmem:[%s429 + $0xa70] sm:$0xff]
        %v5143 = vld [vmem:[%s429 + $0xa78] sm:$0xff]
        %v5144 = vld [vmem:[%s429 + $0xa80] sm:$0xff]
        %v5145 = vld [vmem:[%s429 + $0xa88] sm:$0xff]
        %v5146 = vld [vmem:[%s429 + $0xa90] sm:$0xff]
        %v5147 = vld [vmem:[%s429 + $0xa98] sm:$0xff]
        %v5148 = vld [vmem:[%s429 + $0xaa0] sm:$0xff]
        %v5149 = vld [vmem:[%s429 + $0xaa8] sm:$0xff]
        %v5150 = vld [vmem:[%s429 + $0xab0] sm:$0xff]
        %v5151 = vld [vmem:[%s429 + $0xab8] sm:$0xff]
        %v5152 = vld [vmem:[%s429 + $0xac0] sm:$0xff]
        %v5153 = vld [vmem:[%s429 + $0xac8] sm:$0xff]
        %v5154 = vld [vmem:[%s429 + $0xad0] sm:$0xff]
        %v5155 = vld [vmem:[%s429 + $0xad8] sm:$0xff]
        %v5156 = vld [vmem:[%s429 + $0xae0] sm:$0xff]
        %v5157 = vld [vmem:[%s429 + $0xae8] sm:$0xff]
        %v5158 = vld [vmem:[%s429 + $0xaf0] sm:$0xff]
        %v5159 = vld [vmem:[%s429 + $0xaf8] sm:$0xff]
        %v5160 = vld [vmem:[%s429 + $0xb00] sm:$0xff]
        %v5161 = vld [vmem:[%s429 + $0xb08] sm:$0xff]
        %v5162 = vld [vmem:[%s429 + $0xb10] sm:$0xff]
        %v5163 = vld [vmem:[%s429 + $0xb18] sm:$0xff]
        %v5164 = vld [vmem:[%s429 + $0xb20] sm:$0xff]
        %v5165 = vld [vmem:[%s429 + $0xb28] sm:$0xff]
        %v5166 = vld [vmem:[%s429 + $0xb30] sm:$0xff]
        %v5167 = vld [vmem:[%s429 + $0xb38] sm:$0xff]
        %v5168 = vld [vmem:[%s429 + $0xb40] sm:$0xff]
        %v5169 = vld [vmem:[%s429 + $0xb48] sm:$0xff]
        %v5170 = vld [vmem:[%s429 + $0xb50] sm:$0xff]
        %v5171 = vld [vmem:[%s429 + $0xb58] sm:$0xff]
        %v5172 = vld [vmem:[%s429 + $0xb60] sm:$0xff]
        %v5173 = vld [vmem:[%s429 + $0xb68] sm:$0xff]
        %v5174 = vld [vmem:[%s429 + $0xb70] sm:$0xff]
        %v5175 = vld [vmem:[%s429 + $0xb78] sm:$0xff]
        %v5176 = vld [vmem:[%s429 + $0xb80] sm:$0xff]
        %v5177 = vld [vmem:[%s429 + $0xb88] sm:$0xff]
        %v5178 = vld [vmem:[%s429 + $0xb90] sm:$0xff]
        %v5179 = vld [vmem:[%s429 + $0xb98] sm:$0xff]
        %v5180 = vld [vmem:[%s429 + $0xba0] sm:$0xff]
        %v5181 = vld [vmem:[%s429 + $0xba8] sm:$0xff]
        %v5182 = vld [vmem:[%s429 + $0xbb0] sm:$0xff]
        %v5183 = vld [vmem:[%s429 + $0xbb8] sm:$0xff]
        %v5184 = vld [vmem:[%s429 + $0xbc0] sm:$0xff]
        %v5185 = vld [vmem:[%s429 + $0xbc8] sm:$0xff]
        %v5186 = vld [vmem:[%s429 + $0xbd0] sm:$0xff]
        %v5187 = vld [vmem:[%s429 + $0xbd8] sm:$0xff]
        %v5188 = vld [vmem:[%s429 + $0xbe0] sm:$0xff]
        %v5189 = vld [vmem:[%s429 + $0xbe8] sm:$0xff]
        %v5190 = vld [vmem:[%s429 + $0xbf0] sm:$0xff]
        %v5191 = vld [vmem:[%s429 + $0xbf8] sm:$0xff]
        %v5192 = vld [vmem:[%s429 + $0xc00] sm:$0xff]
        %v5193 = vld [vmem:[%s429 + $0xc08] sm:$0xff]
        %v5194 = vld [vmem:[%s429 + $0xc10] sm:$0xff]
        %v5195 = vld [vmem:[%s429 + $0xc18] sm:$0xff]
        %v5196 = vld [vmem:[%s429 + $0xc20] sm:$0xff]
        %v5197 = vld [vmem:[%s429 + $0xc28] sm:$0xff]
        %v5198 = vld [vmem:[%s429 + $0xc30] sm:$0xff]
        %v5199 = vld [vmem:[%s429 + $0xc38] sm:$0xff]
        %v5200 = vld [vmem:[%s429 + $0xc40] sm:$0xff]
        %v5201 = vld [vmem:[%s429 + $0xc48] sm:$0xff]
        %v5202 = vld [vmem:[%s429 + $0xc50] sm:$0xff]
        %v5203 = vld [vmem:[%s429 + $0xc58] sm:$0xff]
        %v5204 = vld [vmem:[%s429 + $0xc60] sm:$0xff]
        %v5205 = vld [vmem:[%s429 + $0xc68] sm:$0xff]
        %v5206 = vld [vmem:[%s429 + $0xc70] sm:$0xff]
        %v5207 = vld [vmem:[%s429 + $0xc78] sm:$0xff]
        %v5208 = vld [vmem:[%s429 + $0xc80] sm:$0xff]
        %v5209 = vld [vmem:[%s429 + $0xc88] sm:$0xff]
        %v5210 = vld [vmem:[%s429 + $0xc90] sm:$0xff]
        %v5211 = vld [vmem:[%s429 + $0xc98] sm:$0xff]
        %v5212 = vld [vmem:[%s429 + $0xca0] sm:$0xff]
        %v5213 = vld [vmem:[%s429 + $0xca8] sm:$0xff]
        %v5214 = vld [vmem:[%s429 + $0xcb0] sm:$0xff]
        %v5215 = vld [vmem:[%s429 + $0xcb8] sm:$0xff]
        %v5216 = vld [vmem:[%s429 + $0xcc0] sm:$0xff]
        %v5217 = vld [vmem:[%s429 + $0xcc8] sm:$0xff]
        %v5218 = vld [vmem:[%s429 + $0xcd0] sm:$0xff]
        %v5219 = vld [vmem:[%s429 + $0xcd8] sm:$0xff]
        %v5220 = vld [vmem:[%s429 + $0xce0] sm:$0xff]
        %v5221 = vld [vmem:[%s429 + $0xce8] sm:$0xff]
        %v5222 = vld [vmem:[%s429 + $0xcf0] sm:$0xff]
        %v5223 = vld [vmem:[%s429 + $0xcf8] sm:$0xff]
        %v5224 = vld [vmem:[%s429 + $0xd00] sm:$0xff]
        %v5225 = vld [vmem:[%s429 + $0xd08] sm:$0xff]
        %v5226 = vld [vmem:[%s429 + $0xd10] sm:$0xff]
        %v5227 = vld [vmem:[%s429 + $0xd18] sm:$0xff]
        %v5228 = vld [vmem:[%s429 + $0xd20] sm:$0xff]
        %v5229 = vld [vmem:[%s429 + $0xd28] sm:$0xff]
        %v5230 = vld [vmem:[%s429 + $0xd30] sm:$0xff]
        %v5231 = vld [vmem:[%s429 + $0xd38] sm:$0xff]
        %v5232 = vld [vmem:[%s429 + $0xd40] sm:$0xff]
        %v5233 = vld [vmem:[%s429 + $0xd48] sm:$0xff]
        %v5234 = vld [vmem:[%s429 + $0xd50] sm:$0xff]
        %v5235 = vld [vmem:[%s429 + $0xd58] sm:$0xff]
        %v5236 = vld [vmem:[%s429 + $0xd60] sm:$0xff]
        %v5237 = vld [vmem:[%s429 + $0xd68] sm:$0xff]
        %v5238 = vld [vmem:[%s429 + $0xd70] sm:$0xff]
        %v5239 = vld [vmem:[%s429 + $0xd78] sm:$0xff]
        %v5240 = vld [vmem:[%s429 + $0xd80] sm:$0xff]
        %v5241 = vld [vmem:[%s429 + $0xd88] sm:$0xff]
        %v5242 = vld [vmem:[%s429 + $0xd90] sm:$0xff]
        %v5243 = vld [vmem:[%s429 + $0xd98] sm:$0xff]
        %v5244 = vld [vmem:[%s429 + $0xda0] sm:$0xff]
        %v5245 = vld [vmem:[%s429 + $0xda8] sm:$0xff]
        %v5246 = vld [vmem:[%s429 + $0xdb0] sm:$0xff]
        %v5247 = vld [vmem:[%s429 + $0xdb8] sm:$0xff]
        %v5248 = vld [vmem:[%s429 + $0xdc0] sm:$0xff]
        %v5249 = vld [vmem:[%s429 + $0xdc8] sm:$0xff]
        %v5250 = vld [vmem:[%s429 + $0xdd0] sm:$0xff]
        %v5251 = vld [vmem:[%s429 + $0xdd8] sm:$0xff]
        %v5252 = vld [vmem:[%s429 + $0xde0] sm:$0xff]
        %v5253 = vld [vmem:[%s429 + $0xde8] sm:$0xff]
        %v5254 = vld [vmem:[%s429 + $0xdf0] sm:$0xff]
        %v5255 = vld [vmem:[%s429 + $0xdf8] sm:$0xff]
        %v5256 = vld [vmem:[%s429 + $0xe00] sm:$0xff]
        %v5257 = vld [vmem:[%s429 + $0xe08] sm:$0xff]
        %v5258 = vld [vmem:[%s429 + $0xe10] sm:$0xff]
        %v5259 = vld [vmem:[%s429 + $0xe18] sm:$0xff]
        %v5260 = vld [vmem:[%s429 + $0xe20] sm:$0xff]
        %v5261 = vld [vmem:[%s429 + $0xe28] sm:$0xff]
        %v5262 = vld [vmem:[%s429 + $0xe30] sm:$0xff]
        %v5263 = vld [vmem:[%s429 + $0xe38] sm:$0xff]
        %v5264 = vld [vmem:[%s429 + $0xe40] sm:$0xff]
        %v5265 = vld [vmem:[%s429 + $0xe48] sm:$0xff]
        %v5266 = vld [vmem:[%s429 + $0xe50] sm:$0xff]
        %v5267 = vld [vmem:[%s429 + $0xe58] sm:$0xff]
        %v5268 = vld [vmem:[%s429 + $0xe60] sm:$0xff]
        %v5269 = vld [vmem:[%s429 + $0xe68] sm:$0xff]
        %v5270 = vld [vmem:[%s429 + $0xe70] sm:$0xff]
        %v5271 = vld [vmem:[%s429 + $0xe78] sm:$0xff]
        %v5272 = vld [vmem:[%s429 + $0xe80] sm:$0xff]
        %v5273 = vld [vmem:[%s429 + $0xe88] sm:$0xff]
        %v5274 = vld [vmem:[%s429 + $0xe90] sm:$0xff]
        %v5275 = vld [vmem:[%s429 + $0xe98] sm:$0xff]
        %v5276 = vld [vmem:[%s429 + $0xea0] sm:$0xff]
        %v5277 = vld [vmem:[%s429 + $0xea8] sm:$0xff]
        %v5278 = vld [vmem:[%s429 + $0xeb0] sm:$0xff]
        %v5279 = vld [vmem:[%s429 + $0xeb8] sm:$0xff]
        %v5280 = vld [vmem:[%s429 + $0xec0] sm:$0xff]
        %v5281 = vld [vmem:[%s429 + $0xec8] sm:$0xff]
        %v5282 = vld [vmem:[%s429 + $0xed0] sm:$0xff]
        %v5283 = vld [vmem:[%s429 + $0xed8] sm:$0xff]
        %v5284 = vld [vmem:[%s429 + $0xee0] sm:$0xff]
        %v5285 = vld [vmem:[%s429 + $0xee8] sm:$0xff]
        %v5286 = vld [vmem:[%s429 + $0xef0] sm:$0xff]
        %v5287 = vld [vmem:[%s429 + $0xef8] sm:$0xff]
        %v5288 = vld [vmem:[%s429 + $0xf00] sm:$0xff]
        %v5289 = vld [vmem:[%s429 + $0xf08] sm:$0xff]
        %v5290 = vld [vmem:[%s429 + $0xf10] sm:$0xff]
        %v5291 = vld [vmem:[%s429 + $0xf18] sm:$0xff]
        %v5292 = vld [vmem:[%s429 + $0xf20] sm:$0xff]
        %v5293 = vld [vmem:[%s429 + $0xf28] sm:$0xff]
        %v5294 = vld [vmem:[%s429 + $0xf30] sm:$0xff]
        %v5295 = vld [vmem:[%s429 + $0xf38] sm:$0xff]
        %v5296 = vld [vmem:[%s429 + $0xf40] sm:$0xff]
        %v5297 = vld [vmem:[%s429 + $0xf48] sm:$0xff]
        %v5298 = vld [vmem:[%s429 + $0xf50] sm:$0xff]
        %v5299 = vld [vmem:[%s429 + $0xf58] sm:$0xff]
        %v5300 = vld [vmem:[%s429 + $0xf60] sm:$0xff]
        %v5301 = vld [vmem:[%s429 + $0xf68] sm:$0xff]
        %v5302 = vld [vmem:[%s429 + $0xf70] sm:$0xff]
        %v5303 = vld [vmem:[%s429 + $0xf78] sm:$0xff]
        %v5304 = vld [vmem:[%s429 + $0xf80] sm:$0xff]
        %v5305 = vld [vmem:[%s429 + $0xf88] sm:$0xff]
        %v5306 = vld [vmem:[%s429 + $0xf90] sm:$0xff]
        %v5307 = vld [vmem:[%s429 + $0xf98] sm:$0xff]
        %v5308 = vld [vmem:[%s429 + $0xfa0] sm:$0xff]
        %v5309 = vld [vmem:[%s429 + $0xfa8] sm:$0xff]
        %v5310 = vld [vmem:[%s429 + $0xfb0] sm:$0xff]
        %v5311 = vld [vmem:[%s429 + $0xfb8] sm:$0xff]
        %v5312 = vld [vmem:[%s429 + $0xfc0] sm:$0xff]
        %v5313 = vld [vmem:[%s429 + $0xfc8] sm:$0xff]
        %v5314 = vld [vmem:[%s429 + $0xfd0] sm:$0xff]
        %v5315 = vld [vmem:[%s429 + $0xfd8] sm:$0xff]
        %v5316 = vld [vmem:[%s429 + $0xfe0] sm:$0xff]
        %v5317 = vld [vmem:[%s429 + $0xfe8] sm:$0xff]
        %v5318 = vld [vmem:[%s429 + $0xff0] sm:$0xff]
        %v5319 = vld [vmem:[%s429 + $0xff8] sm:$0xff]
        %v5832 = vunpack.c.l.b16 %v4808
        %v5833 = vunpack.c.h.b16 %v4808
        %v5834 = vunpack.c.l.b16 %v4809
        %v5835 = vunpack.c.h.b16 %v4809
        %v5836 = vunpack.c.l.b16 %v4810
        %v5837 = vunpack.c.h.b16 %v4810
        %v5838 = vunpack.c.l.b16 %v4811
        %v5839 = vunpack.c.h.b16 %v4811
        %v5840 = vunpack.c.l.b16 %v4812
        %v5841 = vunpack.c.h.b16 %v4812
        %v5842 = vunpack.c.l.b16 %v4813
        %v5843 = vunpack.c.h.b16 %v4813
        %v5844 = vunpack.c.l.b16 %v4814
        %v5845 = vunpack.c.h.b16 %v4814
        %v5846 = vunpack.c.l.b16 %v4815
        %v5847 = vunpack.c.h.b16 %v4815
        %v5848 = vunpack.c.l.b16 %v4816
        %v5849 = vunpack.c.h.b16 %v4816
        %v5850 = vunpack.c.l.b16 %v4817
        %v5851 = vunpack.c.h.b16 %v4817
        %v5852 = vunpack.c.l.b16 %v4818
        %v5853 = vunpack.c.h.b16 %v4818
        %v5854 = vunpack.c.l.b16 %v4819
        %v5855 = vunpack.c.h.b16 %v4819
        %v5856 = vunpack.c.l.b16 %v4820
        %v5857 = vunpack.c.h.b16 %v4820
        %v5858 = vunpack.c.l.b16 %v4821
        %v5859 = vunpack.c.h.b16 %v4821
        %v5860 = vunpack.c.l.b16 %v4822
        %v5861 = vunpack.c.h.b16 %v4822
        %v5862 = vunpack.c.l.b16 %v4823
        %v5863 = vunpack.c.h.b16 %v4823
        %v5864 = vunpack.c.l.b16 %v4824
        %v5865 = vunpack.c.h.b16 %v4824
        %v5866 = vunpack.c.l.b16 %v4825
        %v5867 = vunpack.c.h.b16 %v4825
        %v5868 = vunpack.c.l.b16 %v4826
        %v5869 = vunpack.c.h.b16 %v4826
        %v5870 = vunpack.c.l.b16 %v4827
        %v5871 = vunpack.c.h.b16 %v4827
        %v5872 = vunpack.c.l.b16 %v4828
        %v5873 = vunpack.c.h.b16 %v4828
        %v5874 = vunpack.c.l.b16 %v4829
        %v5875 = vunpack.c.h.b16 %v4829
        %v5876 = vunpack.c.l.b16 %v4830
        %v5877 = vunpack.c.h.b16 %v4830
        %v5878 = vunpack.c.l.b16 %v4831
        %v5879 = vunpack.c.h.b16 %v4831
        %v5880 = vunpack.c.l.b16 %v4832
        %v5881 = vunpack.c.h.b16 %v4832
        %v5882 = vunpack.c.l.b16 %v4833
        %v5883 = vunpack.c.h.b16 %v4833
        %v5884 = vunpack.c.l.b16 %v4834
        %v5885 = vunpack.c.h.b16 %v4834
        %v5886 = vunpack.c.l.b16 %v4835
        %v5887 = vunpack.c.h.b16 %v4835
        %v5888 = vunpack.c.l.b16 %v4836
        %v5889 = vunpack.c.h.b16 %v4836
        %v5890 = vunpack.c.l.b16 %v4837
        %v5891 = vunpack.c.h.b16 %v4837
        %v5892 = vunpack.c.l.b16 %v4838
        %v5893 = vunpack.c.h.b16 %v4838
        %v5894 = vunpack.c.l.b16 %v4839
        %v5895 = vunpack.c.h.b16 %v4839
        %v5896 = vunpack.c.l.b16 %v4840
        %v5897 = vunpack.c.h.b16 %v4840
        %v5898 = vunpack.c.l.b16 %v4841
        %v5899 = vunpack.c.h.b16 %v4841
        %v5900 = vunpack.c.l.b16 %v4842
        %v5901 = vunpack.c.h.b16 %v4842
        %v5902 = vunpack.c.l.b16 %v4843
        %v5903 = vunpack.c.h.b16 %v4843
        %v5904 = vunpack.c.l.b16 %v4844
        %v5905 = vunpack.c.h.b16 %v4844
        %v5906 = vunpack.c.l.b16 %v4845
        %v5907 = vunpack.c.h.b16 %v4845
        %v5908 = vunpack.c.l.b16 %v4846
        %v5909 = vunpack.c.h.b16 %v4846
        %v5910 = vunpack.c.l.b16 %v4847
        %v5911 = vunpack.c.h.b16 %v4847
        %v5912 = vunpack.c.l.b16 %v4848
        %v5913 = vunpack.c.h.b16 %v4848
        %v5914 = vunpack.c.l.b16 %v4849
        %v5915 = vunpack.c.h.b16 %v4849
        %v5916 = vunpack.c.l.b16 %v4850
        %v5917 = vunpack.c.h.b16 %v4850
        %v5918 = vunpack.c.l.b16 %v4851
        %v5919 = vunpack.c.h.b16 %v4851
        %v5920 = vunpack.c.l.b16 %v4852
        %v5921 = vunpack.c.h.b16 %v4852
        %v5922 = vunpack.c.l.b16 %v4853
        %v5923 = vunpack.c.h.b16 %v4853
        %v5924 = vunpack.c.l.b16 %v4854
        %v5925 = vunpack.c.h.b16 %v4854
        %v5926 = vunpack.c.l.b16 %v4855
        %v5927 = vunpack.c.h.b16 %v4855
        %v5928 = vunpack.c.l.b16 %v4856
        %v5929 = vunpack.c.h.b16 %v4856
        %v5930 = vunpack.c.l.b16 %v4857
        %v5931 = vunpack.c.h.b16 %v4857
        %v5932 = vunpack.c.l.b16 %v4858
        %v5933 = vunpack.c.h.b16 %v4858
        %v5934 = vunpack.c.l.b16 %v4859
        %v5935 = vunpack.c.h.b16 %v4859
        %v5936 = vunpack.c.l.b16 %v4860
        %v5937 = vunpack.c.h.b16 %v4860
        %v5938 = vunpack.c.l.b16 %v4861
        %v5939 = vunpack.c.h.b16 %v4861
        %v5940 = vunpack.c.l.b16 %v4862
        %v5941 = vunpack.c.h.b16 %v4862
        %v5942 = vunpack.c.l.b16 %v4863
        %v5943 = vunpack.c.h.b16 %v4863
        %v5944 = vunpack.c.l.b16 %v4864
        %v5945 = vunpack.c.h.b16 %v4864
        %v5946 = vunpack.c.l.b16 %v4865
        %v5947 = vunpack.c.h.b16 %v4865
        %v5948 = vunpack.c.l.b16 %v4866
        %v5949 = vunpack.c.h.b16 %v4866
        %v5950 = vunpack.c.l.b16 %v4867
        %v5951 = vunpack.c.h.b16 %v4867
        %v5952 = vunpack.c.l.b16 %v4868
        %v5953 = vunpack.c.h.b16 %v4868
        %v5954 = vunpack.c.l.b16 %v4869
        %v5955 = vunpack.c.h.b16 %v4869
        %v5956 = vunpack.c.l.b16 %v4870
        %v5957 = vunpack.c.h.b16 %v4870
        %v5958 = vunpack.c.l.b16 %v4871
        %v5959 = vunpack.c.h.b16 %v4871
        %v5960 = vunpack.c.l.b16 %v4872
        %v5961 = vunpack.c.h.b16 %v4872
        %v5962 = vunpack.c.l.b16 %v4873
        %v5963 = vunpack.c.h.b16 %v4873
        %v5964 = vunpack.c.l.b16 %v4874
        %v5965 = vunpack.c.h.b16 %v4874
        %v5966 = vunpack.c.l.b16 %v4875
        %v5967 = vunpack.c.h.b16 %v4875
        %v5968 = vunpack.c.l.b16 %v4876
        %v5969 = vunpack.c.h.b16 %v4876
        %v5970 = vunpack.c.l.b16 %v4877
        %v5971 = vunpack.c.h.b16 %v4877
        %v5972 = vunpack.c.l.b16 %v4878
        %v5973 = vunpack.c.h.b16 %v4878
        %v5974 = vunpack.c.l.b16 %v4879
        %v5975 = vunpack.c.h.b16 %v4879
        %v5976 = vunpack.c.l.b16 %v4880
        %v5977 = vunpack.c.h.b16 %v4880
        %v5978 = vunpack.c.l.b16 %v4881
        %v5979 = vunpack.c.h.b16 %v4881
        %v5980 = vunpack.c.l.b16 %v4882
        %v5981 = vunpack.c.h.b16 %v4882
        %v5982 = vunpack.c.l.b16 %v4883
        %v5983 = vunpack.c.h.b16 %v4883
        %v5984 = vunpack.c.l.b16 %v4884
        %v5985 = vunpack.c.h.b16 %v4884
        %v5986 = vunpack.c.l.b16 %v4885
        %v5987 = vunpack.c.h.b16 %v4885
        %v5988 = vunpack.c.l.b16 %v4886
        %v5989 = vunpack.c.h.b16 %v4886
        %v5990 = vunpack.c.l.b16 %v4887
        %v5991 = vunpack.c.h.b16 %v4887
        %v5992 = vunpack.c.l.b16 %v4888
        %v5993 = vunpack.c.h.b16 %v4888
        %v5994 = vunpack.c.l.b16 %v4889
        %v5995 = vunpack.c.h.b16 %v4889
        %v5996 = vunpack.c.l.b16 %v4890
        %v5997 = vunpack.c.h.b16 %v4890
        %v5998 = vunpack.c.l.b16 %v4891
        %v5999 = vunpack.c.h.b16 %v4891
        %v6000 = vunpack.c.l.b16 %v4892
        %v6001 = vunpack.c.h.b16 %v4892
        %v6002 = vunpack.c.l.b16 %v4893
        %v6003 = vunpack.c.h.b16 %v4893
        %v6004 = vunpack.c.l.b16 %v4894
        %v6005 = vunpack.c.h.b16 %v4894
        %v6006 = vunpack.c.l.b16 %v4895
        %v6007 = vunpack.c.h.b16 %v4895
        %v6008 = vunpack.c.l.b16 %v4896
        %v6009 = vunpack.c.h.b16 %v4896
        %v6010 = vunpack.c.l.b16 %v4897
        %v6011 = vunpack.c.h.b16 %v4897
        %v6012 = vunpack.c.l.b16 %v4898
        %v6013 = vunpack.c.h.b16 %v4898
        %v6014 = vunpack.c.l.b16 %v4899
        %v6015 = vunpack.c.h.b16 %v4899
        %v6016 = vunpack.c.l.b16 %v4900
        %v6017 = vunpack.c.h.b16 %v4900
        %v6018 = vunpack.c.l.b16 %v4901
        %v6019 = vunpack.c.h.b16 %v4901
        %v6020 = vunpack.c.l.b16 %v4902
        %v6021 = vunpack.c.h.b16 %v4902
        %v6022 = vunpack.c.l.b16 %v4903
        %v6023 = vunpack.c.h.b16 %v4903
        %v6024 = vunpack.c.l.b16 %v4904
        %v6025 = vunpack.c.h.b16 %v4904
        %v6026 = vunpack.c.l.b16 %v4905
        %v6027 = vunpack.c.h.b16 %v4905
        %v6028 = vunpack.c.l.b16 %v4906
        %v6029 = vunpack.c.h.b16 %v4906
        %v6030 = vunpack.c.l.b16 %v4907
        %v6031 = vunpack.c.h.b16 %v4907
        %v6032 = vunpack.c.l.b16 %v4908
        %v6033 = vunpack.c.h.b16 %v4908
        %v6034 = vunpack.c.l.b16 %v4909
        %v6035 = vunpack.c.h.b16 %v4909
        %v6036 = vunpack.c.l.b16 %v4910
        %v6037 = vunpack.c.h.b16 %v4910
        %v6038 = vunpack.c.l.b16 %v4911
        %v6039 = vunpack.c.h.b16 %v4911
        %v6040 = vunpack.c.l.b16 %v4912
        %v6041 = vunpack.c.h.b16 %v4912
        %v6042 = vunpack.c.l.b16 %v4913
        %v6043 = vunpack.c.h.b16 %v4913
        %v6044 = vunpack.c.l.b16 %v4914
        %v6045 = vunpack.c.h.b16 %v4914
        %v6046 = vunpack.c.l.b16 %v4915
        %v6047 = vunpack.c.h.b16 %v4915
        %v6048 = vunpack.c.l.b16 %v4916
        %v6049 = vunpack.c.h.b16 %v4916
        %v6050 = vunpack.c.l.b16 %v4917
        %v6051 = vunpack.c.h.b16 %v4917
        %v6052 = vunpack.c.l.b16 %v4918
        %v6053 = vunpack.c.h.b16 %v4918
        %v6054 = vunpack.c.l.b16 %v4919
        %v6055 = vunpack.c.h.b16 %v4919
        %v6056 = vunpack.c.l.b16 %v4920
        %v6057 = vunpack.c.h.b16 %v4920
        %v6058 = vunpack.c.l.b16 %v4921
        %v6059 = vunpack.c.h.b16 %v4921
        %v6060 = vunpack.c.l.b16 %v4922
        %v6061 = vunpack.c.h.b16 %v4922
        %v6062 = vunpack.c.l.b16 %v4923
        %v6063 = vunpack.c.h.b16 %v4923
        %v6064 = vunpack.c.l.b16 %v4924
        %v6065 = vunpack.c.h.b16 %v4924
        %v6066 = vunpack.c.l.b16 %v4925
        %v6067 = vunpack.c.h.b16 %v4925
        %v6068 = vunpack.c.l.b16 %v4926
        %v6069 = vunpack.c.h.b16 %v4926
        %v6070 = vunpack.c.l.b16 %v4927
        %v6071 = vunpack.c.h.b16 %v4927
        %v6072 = vunpack.c.l.b16 %v4928
        %v6073 = vunpack.c.h.b16 %v4928
        %v6074 = vunpack.c.l.b16 %v4929
        %v6075 = vunpack.c.h.b16 %v4929
        %v6076 = vunpack.c.l.b16 %v4930
        %v6077 = vunpack.c.h.b16 %v4930
        %v6078 = vunpack.c.l.b16 %v4931
        %v6079 = vunpack.c.h.b16 %v4931
        %v6080 = vunpack.c.l.b16 %v4932
        %v6081 = vunpack.c.h.b16 %v4932
        %v6082 = vunpack.c.l.b16 %v4933
        %v6083 = vunpack.c.h.b16 %v4933
        %v6084 = vunpack.c.l.b16 %v4934
        %v6085 = vunpack.c.h.b16 %v4934
        %v6086 = vunpack.c.l.b16 %v4935
        %v6087 = vunpack.c.h.b16 %v4935
        %v6088 = vunpack.c.l.b16 %v4936
        %v6089 = vunpack.c.h.b16 %v4936
        %v6090 = vunpack.c.l.b16 %v4937
        %v6091 = vunpack.c.h.b16 %v4937
        %v6092 = vunpack.c.l.b16 %v4938
        %v6093 = vunpack.c.h.b16 %v4938
        %v6094 = vunpack.c.l.b16 %v4939
        %v6095 = vunpack.c.h.b16 %v4939
        %v6096 = vunpack.c.l.b16 %v4940
        %v6097 = vunpack.c.h.b16 %v4940
        %v6098 = vunpack.c.l.b16 %v4941
        %v6099 = vunpack.c.h.b16 %v4941
        %v6100 = vunpack.c.l.b16 %v4942
        %v6101 = vunpack.c.h.b16 %v4942
        %v6102 = vunpack.c.l.b16 %v4943
        %v6103 = vunpack.c.h.b16 %v4943
        %v6104 = vunpack.c.l.b16 %v4944
        %v6105 = vunpack.c.h.b16 %v4944
        %v6106 = vunpack.c.l.b16 %v4945
        %v6107 = vunpack.c.h.b16 %v4945
        %v6108 = vunpack.c.l.b16 %v4946
        %v6109 = vunpack.c.h.b16 %v4946
        %v6110 = vunpack.c.l.b16 %v4947
        %v6111 = vunpack.c.h.b16 %v4947
        %v6112 = vunpack.c.l.b16 %v4948
        %v6113 = vunpack.c.h.b16 %v4948
        %v6114 = vunpack.c.l.b16 %v4949
        %v6115 = vunpack.c.h.b16 %v4949
        %v6116 = vunpack.c.l.b16 %v4950
        %v6117 = vunpack.c.h.b16 %v4950
        %v6118 = vunpack.c.l.b16 %v4951
        %v6119 = vunpack.c.h.b16 %v4951
        %v6120 = vunpack.c.l.b16 %v4952
        %v6121 = vunpack.c.h.b16 %v4952
        %v6122 = vunpack.c.l.b16 %v4953
        %v6123 = vunpack.c.h.b16 %v4953
        %v6124 = vunpack.c.l.b16 %v4954
        %v6125 = vunpack.c.h.b16 %v4954
        %v6126 = vunpack.c.l.b16 %v4955
        %v6127 = vunpack.c.h.b16 %v4955
        %v6128 = vunpack.c.l.b16 %v4956
        %v6129 = vunpack.c.h.b16 %v4956
        %v6130 = vunpack.c.l.b16 %v4957
        %v6131 = vunpack.c.h.b16 %v4957
        %v6132 = vunpack.c.l.b16 %v4958
        %v6133 = vunpack.c.h.b16 %v4958
        %v6134 = vunpack.c.l.b16 %v4959
        %v6135 = vunpack.c.h.b16 %v4959
        %v6136 = vunpack.c.l.b16 %v4960
        %v6137 = vunpack.c.h.b16 %v4960
        %v6138 = vunpack.c.l.b16 %v4961
        %v6139 = vunpack.c.h.b16 %v4961
        %v6140 = vunpack.c.l.b16 %v4962
        %v6141 = vunpack.c.h.b16 %v4962
        %v6142 = vunpack.c.l.b16 %v4963
        %v6143 = vunpack.c.h.b16 %v4963
        %v6144 = vunpack.c.l.b16 %v4964
        %v6145 = vunpack.c.h.b16 %v4964
        %v6146 = vunpack.c.l.b16 %v4965
        %v6147 = vunpack.c.h.b16 %v4965
        %v6148 = vunpack.c.l.b16 %v4966
        %v6149 = vunpack.c.h.b16 %v4966
        %v6150 = vunpack.c.l.b16 %v4967
        %v6151 = vunpack.c.h.b16 %v4967
        %v6152 = vunpack.c.l.b16 %v4968
        %v6153 = vunpack.c.h.b16 %v4968
        %v6154 = vunpack.c.l.b16 %v4969
        %v6155 = vunpack.c.h.b16 %v4969
        %v6156 = vunpack.c.l.b16 %v4970
        %v6157 = vunpack.c.h.b16 %v4970
        %v6158 = vunpack.c.l.b16 %v4971
        %v6159 = vunpack.c.h.b16 %v4971
        %v6160 = vunpack.c.l.b16 %v4972
        %v6161 = vunpack.c.h.b16 %v4972
        %v6162 = vunpack.c.l.b16 %v4973
        %v6163 = vunpack.c.h.b16 %v4973
        %v6164 = vunpack.c.l.b16 %v4974
        %v6165 = vunpack.c.h.b16 %v4974
        %v6166 = vunpack.c.l.b16 %v4975
        %v6167 = vunpack.c.h.b16 %v4975
        %v6168 = vunpack.c.l.b16 %v4976
        %v6169 = vunpack.c.h.b16 %v4976
        %v6170 = vunpack.c.l.b16 %v4977
        %v6171 = vunpack.c.h.b16 %v4977
        %v6172 = vunpack.c.l.b16 %v4978
        %v6173 = vunpack.c.h.b16 %v4978
        %v6174 = vunpack.c.l.b16 %v4979
        %v6175 = vunpack.c.h.b16 %v4979
        %v6176 = vunpack.c.l.b16 %v4980
        %v6177 = vunpack.c.h.b16 %v4980
        %v6178 = vunpack.c.l.b16 %v4981
        %v6179 = vunpack.c.h.b16 %v4981
        %v6180 = vunpack.c.l.b16 %v4982
        %v6181 = vunpack.c.h.b16 %v4982
        %v6182 = vunpack.c.l.b16 %v4983
        %v6183 = vunpack.c.h.b16 %v4983
        %v6184 = vunpack.c.l.b16 %v4984
        %v6185 = vunpack.c.h.b16 %v4984
        %v6186 = vunpack.c.l.b16 %v4985
        %v6187 = vunpack.c.h.b16 %v4985
        %v6188 = vunpack.c.l.b16 %v4986
        %v6189 = vunpack.c.h.b16 %v4986
        %v6190 = vunpack.c.l.b16 %v4987
        %v6191 = vunpack.c.h.b16 %v4987
        %v6192 = vunpack.c.l.b16 %v4988
        %v6193 = vunpack.c.h.b16 %v4988
        %v6194 = vunpack.c.l.b16 %v4989
        %v6195 = vunpack.c.h.b16 %v4989
        %v6196 = vunpack.c.l.b16 %v4990
        %v6197 = vunpack.c.h.b16 %v4990
        %v6198 = vunpack.c.l.b16 %v4991
        %v6199 = vunpack.c.h.b16 %v4991
        %v6200 = vunpack.c.l.b16 %v4992
        %v6201 = vunpack.c.h.b16 %v4992
        %v6202 = vunpack.c.l.b16 %v4993
        %v6203 = vunpack.c.h.b16 %v4993
        %v6204 = vunpack.c.l.b16 %v4994
        %v6205 = vunpack.c.h.b16 %v4994
        %v6206 = vunpack.c.l.b16 %v4995
        %v6207 = vunpack.c.h.b16 %v4995
        %v6208 = vunpack.c.l.b16 %v4996
        %v6209 = vunpack.c.h.b16 %v4996
        %v6210 = vunpack.c.l.b16 %v4997
        %v6211 = vunpack.c.h.b16 %v4997
        %v6212 = vunpack.c.l.b16 %v4998
        %v6213 = vunpack.c.h.b16 %v4998
        %v6214 = vunpack.c.l.b16 %v4999
        %v6215 = vunpack.c.h.b16 %v4999
        %v6216 = vunpack.c.l.b16 %v5000
        %v6217 = vunpack.c.h.b16 %v5000
        %v6218 = vunpack.c.l.b16 %v5001
        %v6219 = vunpack.c.h.b16 %v5001
        %v6220 = vunpack.c.l.b16 %v5002
        %v6221 = vunpack.c.h.b16 %v5002
        %v6222 = vunpack.c.l.b16 %v5003
        %v6223 = vunpack.c.h.b16 %v5003
        %v6224 = vunpack.c.l.b16 %v5004
        %v6225 = vunpack.c.h.b16 %v5004
        %v6226 = vunpack.c.l.b16 %v5005
        %v6227 = vunpack.c.h.b16 %v5005
        %v6228 = vunpack.c.l.b16 %v5006
        %v6229 = vunpack.c.h.b16 %v5006
        %v6230 = vunpack.c.l.b16 %v5007
        %v6231 = vunpack.c.h.b16 %v5007
        %v6232 = vunpack.c.l.b16 %v5008
        %v6233 = vunpack.c.h.b16 %v5008
        %v6234 = vunpack.c.l.b16 %v5009
        %v6235 = vunpack.c.h.b16 %v5009
        %v6236 = vunpack.c.l.b16 %v5010
        %v6237 = vunpack.c.h.b16 %v5010
        %v6238 = vunpack.c.l.b16 %v5011
        %v6239 = vunpack.c.h.b16 %v5011
        %v6240 = vunpack.c.l.b16 %v5012
        %v6241 = vunpack.c.h.b16 %v5012
        %v6242 = vunpack.c.l.b16 %v5013
        %v6243 = vunpack.c.h.b16 %v5013
        %v6244 = vunpack.c.l.b16 %v5014
        %v6245 = vunpack.c.h.b16 %v5014
        %v6246 = vunpack.c.l.b16 %v5015
        %v6247 = vunpack.c.h.b16 %v5015
        %v6248 = vunpack.c.l.b16 %v5016
        %v6249 = vunpack.c.h.b16 %v5016
        %v6250 = vunpack.c.l.b16 %v5017
        %v6251 = vunpack.c.h.b16 %v5017
        %v6252 = vunpack.c.l.b16 %v5018
        %v6253 = vunpack.c.h.b16 %v5018
        %v6254 = vunpack.c.l.b16 %v5019
        %v6255 = vunpack.c.h.b16 %v5019
        %v6256 = vunpack.c.l.b16 %v5020
        %v6257 = vunpack.c.h.b16 %v5020
        %v6258 = vunpack.c.l.b16 %v5021
        %v6259 = vunpack.c.h.b16 %v5021
        %v6260 = vunpack.c.l.b16 %v5022
        %v6261 = vunpack.c.h.b16 %v5022
        %v6262 = vunpack.c.l.b16 %v5023
        %v6263 = vunpack.c.h.b16 %v5023
        %v6264 = vunpack.c.l.b16 %v5024
        %v6265 = vunpack.c.h.b16 %v5024
        %v6266 = vunpack.c.l.b16 %v5025
        %v6267 = vunpack.c.h.b16 %v5025
        %v6268 = vunpack.c.l.b16 %v5026
        %v6269 = vunpack.c.h.b16 %v5026
        %v6270 = vunpack.c.l.b16 %v5027
        %v6271 = vunpack.c.h.b16 %v5027
        %v6272 = vunpack.c.l.b16 %v5028
        %v6273 = vunpack.c.h.b16 %v5028
        %v6274 = vunpack.c.l.b16 %v5029
        %v6275 = vunpack.c.h.b16 %v5029
        %v6276 = vunpack.c.l.b16 %v5030
        %v6277 = vunpack.c.h.b16 %v5030
        %v6278 = vunpack.c.l.b16 %v5031
        %v6279 = vunpack.c.h.b16 %v5031
        %v6280 = vunpack.c.l.b16 %v5032
        %v6281 = vunpack.c.h.b16 %v5032
        %v6282 = vunpack.c.l.b16 %v5033
        %v6283 = vunpack.c.h.b16 %v5033
        %v6284 = vunpack.c.l.b16 %v5034
        %v6285 = vunpack.c.h.b16 %v5034
        %v6286 = vunpack.c.l.b16 %v5035
        %v6287 = vunpack.c.h.b16 %v5035
        %v6288 = vunpack.c.l.b16 %v5036
        %v6289 = vunpack.c.h.b16 %v5036
        %v6290 = vunpack.c.l.b16 %v5037
        %v6291 = vunpack.c.h.b16 %v5037
        %v6292 = vunpack.c.l.b16 %v5038
        %v6293 = vunpack.c.h.b16 %v5038
        %v6294 = vunpack.c.l.b16 %v5039
        %v6295 = vunpack.c.h.b16 %v5039
        %v6296 = vunpack.c.l.b16 %v5040
        %v6297 = vunpack.c.h.b16 %v5040
        %v6298 = vunpack.c.l.b16 %v5041
        %v6299 = vunpack.c.h.b16 %v5041
        %v6300 = vunpack.c.l.b16 %v5042
        %v6301 = vunpack.c.h.b16 %v5042
        %v6302 = vunpack.c.l.b16 %v5043
        %v6303 = vunpack.c.h.b16 %v5043
        %v6304 = vunpack.c.l.b16 %v5044
        %v6305 = vunpack.c.h.b16 %v5044
        %v6306 = vunpack.c.l.b16 %v5045
        %v6307 = vunpack.c.h.b16 %v5045
        %v6308 = vunpack.c.l.b16 %v5046
        %v6309 = vunpack.c.h.b16 %v5046
        %v6310 = vunpack.c.l.b16 %v5047
        %v6311 = vunpack.c.h.b16 %v5047
        %v6312 = vunpack.c.l.b16 %v5048
        %v6313 = vunpack.c.h.b16 %v5048
        %v6314 = vunpack.c.l.b16 %v5049
        %v6315 = vunpack.c.h.b16 %v5049
        %v6316 = vunpack.c.l.b16 %v5050
        %v6317 = vunpack.c.h.b16 %v5050
        %v6318 = vunpack.c.l.b16 %v5051
        %v6319 = vunpack.c.h.b16 %v5051
        %v6320 = vunpack.c.l.b16 %v5052
        %v6321 = vunpack.c.h.b16 %v5052
        %v6322 = vunpack.c.l.b16 %v5053
        %v6323 = vunpack.c.h.b16 %v5053
        %v6324 = vunpack.c.l.b16 %v5054
        %v6325 = vunpack.c.h.b16 %v5054
        %v6326 = vunpack.c.l.b16 %v5055
        %v6327 = vunpack.c.h.b16 %v5055
        %v6328 = vunpack.c.l.b16 %v5056
        %v6329 = vunpack.c.h.b16 %v5056
        %v6330 = vunpack.c.l.b16 %v5057
        %v6331 = vunpack.c.h.b16 %v5057
        %v6332 = vunpack.c.l.b16 %v5058
        %v6333 = vunpack.c.h.b16 %v5058
        %v6334 = vunpack.c.l.b16 %v5059
        %v6335 = vunpack.c.h.b16 %v5059
        %v6336 = vunpack.c.l.b16 %v5060
        %v6337 = vunpack.c.h.b16 %v5060
        %v6338 = vunpack.c.l.b16 %v5061
        %v6339 = vunpack.c.h.b16 %v5061
        %v6340 = vunpack.c.l.b16 %v5062
        %v6341 = vunpack.c.h.b16 %v5062
        %v6342 = vunpack.c.l.b16 %v5063
        %v6343 = vunpack.c.h.b16 %v5063
        %v6344 = vunpack.c.l.b16 %v5064
        %v6345 = vunpack.c.h.b16 %v5064
        %v6346 = vunpack.c.l.b16 %v5065
        %v6347 = vunpack.c.h.b16 %v5065
        %v6348 = vunpack.c.l.b16 %v5066
        %v6349 = vunpack.c.h.b16 %v5066
        %v6350 = vunpack.c.l.b16 %v5067
        %v6351 = vunpack.c.h.b16 %v5067
        %v6352 = vunpack.c.l.b16 %v5068
        %v6353 = vunpack.c.h.b16 %v5068
        %v6354 = vunpack.c.l.b16 %v5069
        %v6355 = vunpack.c.h.b16 %v5069
        %v6356 = vunpack.c.l.b16 %v5070
        %v6357 = vunpack.c.h.b16 %v5070
        %v6358 = vunpack.c.l.b16 %v5071
        %v6359 = vunpack.c.h.b16 %v5071
        %v6360 = vunpack.c.l.b16 %v5072
        %v6361 = vunpack.c.h.b16 %v5072
        %v6362 = vunpack.c.l.b16 %v5073
        %v6363 = vunpack.c.h.b16 %v5073
        %v6364 = vunpack.c.l.b16 %v5074
        %v6365 = vunpack.c.h.b16 %v5074
        %v6366 = vunpack.c.l.b16 %v5075
        %v6367 = vunpack.c.h.b16 %v5075
        %v6368 = vunpack.c.l.b16 %v5076
        %v6369 = vunpack.c.h.b16 %v5076
        %v6370 = vunpack.c.l.b16 %v5077
        %v6371 = vunpack.c.h.b16 %v5077
        %v6372 = vunpack.c.l.b16 %v5078
        %v6373 = vunpack.c.h.b16 %v5078
        %v6374 = vunpack.c.l.b16 %v5079
        %v6375 = vunpack.c.h.b16 %v5079
        %v6376 = vunpack.c.l.b16 %v5080
        %v6377 = vunpack.c.h.b16 %v5080
        %v6378 = vunpack.c.l.b16 %v5081
        %v6379 = vunpack.c.h.b16 %v5081
        %v6380 = vunpack.c.l.b16 %v5082
        %v6381 = vunpack.c.h.b16 %v5082
        %v6382 = vunpack.c.l.b16 %v5083
        %v6383 = vunpack.c.h.b16 %v5083
        %v6384 = vunpack.c.l.b16 %v5084
        %v6385 = vunpack.c.h.b16 %v5084
        %v6386 = vunpack.c.l.b16 %v5085
        %v6387 = vunpack.c.h.b16 %v5085
        %v6388 = vunpack.c.l.b16 %v5086
        %v6389 = vunpack.c.h.b16 %v5086
        %v6390 = vunpack.c.l.b16 %v5087
        %v6391 = vunpack.c.h.b16 %v5087
        %v6392 = vunpack.c.l.b16 %v5088
        %v6393 = vunpack.c.h.b16 %v5088
        %v6394 = vunpack.c.l.b16 %v5089
        %v6395 = vunpack.c.h.b16 %v5089
        %v6396 = vunpack.c.l.b16 %v5090
        %v6397 = vunpack.c.h.b16 %v5090
        %v6398 = vunpack.c.l.b16 %v5091
        %v6399 = vunpack.c.h.b16 %v5091
        %v6400 = vunpack.c.l.b16 %v5092
        %v6401 = vunpack.c.h.b16 %v5092
        %v6402 = vunpack.c.l.b16 %v5093
        %v6403 = vunpack.c.h.b16 %v5093
        %v6404 = vunpack.c.l.b16 %v5094
        %v6405 = vunpack.c.h.b16 %v5094
        %v6406 = vunpack.c.l.b16 %v5095
        %v6407 = vunpack.c.h.b16 %v5095
        %v6408 = vunpack.c.l.b16 %v5096
        %v6409 = vunpack.c.h.b16 %v5096
        %v6410 = vunpack.c.l.b16 %v5097
        %v6411 = vunpack.c.h.b16 %v5097
        %v6412 = vunpack.c.l.b16 %v5098
        %v6413 = vunpack.c.h.b16 %v5098
        %v6414 = vunpack.c.l.b16 %v5099
        %v6415 = vunpack.c.h.b16 %v5099
        %v6416 = vunpack.c.l.b16 %v5100
        %v6417 = vunpack.c.h.b16 %v5100
        %v6418 = vunpack.c.l.b16 %v5101
        %v6419 = vunpack.c.h.b16 %v5101
        %v6420 = vunpack.c.l.b16 %v5102
        %v6421 = vunpack.c.h.b16 %v5102
        %v6422 = vunpack.c.l.b16 %v5103
        %v6423 = vunpack.c.h.b16 %v5103
        %v6424 = vunpack.c.l.b16 %v5104
        %v6425 = vunpack.c.h.b16 %v5104
        %v6426 = vunpack.c.l.b16 %v5105
        %v6427 = vunpack.c.h.b16 %v5105
        %v6428 = vunpack.c.l.b16 %v5106
        %v6429 = vunpack.c.h.b16 %v5106
        %v6430 = vunpack.c.l.b16 %v5107
        %v6431 = vunpack.c.h.b16 %v5107
        %v6432 = vunpack.c.l.b16 %v5108
        %v6433 = vunpack.c.h.b16 %v5108
        %v6434 = vunpack.c.l.b16 %v5109
        %v6435 = vunpack.c.h.b16 %v5109
        %v6436 = vunpack.c.l.b16 %v5110
        %v6437 = vunpack.c.h.b16 %v5110
        %v6438 = vunpack.c.l.b16 %v5111
        %v6439 = vunpack.c.h.b16 %v5111
        %v6440 = vunpack.c.l.b16 %v5112
        %v6441 = vunpack.c.h.b16 %v5112
        %v6442 = vunpack.c.l.b16 %v5113
        %v6443 = vunpack.c.h.b16 %v5113
        %v6444 = vunpack.c.l.b16 %v5114
        %v6445 = vunpack.c.h.b16 %v5114
        %v6446 = vunpack.c.l.b16 %v5115
        %v6447 = vunpack.c.h.b16 %v5115
        %v6448 = vunpack.c.l.b16 %v5116
        %v6449 = vunpack.c.h.b16 %v5116
        %v6450 = vunpack.c.l.b16 %v5117
        %v6451 = vunpack.c.h.b16 %v5117
        %v6452 = vunpack.c.l.b16 %v5118
        %v6453 = vunpack.c.h.b16 %v5118
        %v6454 = vunpack.c.l.b16 %v5119
        %v6455 = vunpack.c.h.b16 %v5119
        %v6456 = vunpack.c.l.b16 %v5120
        %v6457 = vunpack.c.h.b16 %v5120
        %v6458 = vunpack.c.l.b16 %v5121
        %v6459 = vunpack.c.h.b16 %v5121
        %v6460 = vunpack.c.l.b16 %v5122
        %v6461 = vunpack.c.h.b16 %v5122
        %v6462 = vunpack.c.l.b16 %v5123
        %v6463 = vunpack.c.h.b16 %v5123
        %v6464 = vunpack.c.l.b16 %v5124
        %v6465 = vunpack.c.h.b16 %v5124
        %v6466 = vunpack.c.l.b16 %v5125
        %v6467 = vunpack.c.h.b16 %v5125
        %v6468 = vunpack.c.l.b16 %v5126
        %v6469 = vunpack.c.h.b16 %v5126
        %v6470 = vunpack.c.l.b16 %v5127
        %v6471 = vunpack.c.h.b16 %v5127
        %v6472 = vunpack.c.l.b16 %v5128
        %v6473 = vunpack.c.h.b16 %v5128
        %v6474 = vunpack.c.l.b16 %v5129
        %v6475 = vunpack.c.h.b16 %v5129
        %v6476 = vunpack.c.l.b16 %v5130
        %v6477 = vunpack.c.h.b16 %v5130
        %v6478 = vunpack.c.l.b16 %v5131
        %v6479 = vunpack.c.h.b16 %v5131
        %v6480 = vunpack.c.l.b16 %v5132
        %v6481 = vunpack.c.h.b16 %v5132
        %v6482 = vunpack.c.l.b16 %v5133
        %v6483 = vunpack.c.h.b16 %v5133
        %v6484 = vunpack.c.l.b16 %v5134
        %v6485 = vunpack.c.h.b16 %v5134
        %v6486 = vunpack.c.l.b16 %v5135
        %v6487 = vunpack.c.h.b16 %v5135
        %v6488 = vunpack.c.l.b16 %v5136
        %v6489 = vunpack.c.h.b16 %v5136
        %v6490 = vunpack.c.l.b16 %v5137
        %v6491 = vunpack.c.h.b16 %v5137
        %v6492 = vunpack.c.l.b16 %v5138
        %v6493 = vunpack.c.h.b16 %v5138
        %v6494 = vunpack.c.l.b16 %v5139
        %v6495 = vunpack.c.h.b16 %v5139
        %v6496 = vunpack.c.l.b16 %v5140
        %v6497 = vunpack.c.h.b16 %v5140
        %v6498 = vunpack.c.l.b16 %v5141
        %v6499 = vunpack.c.h.b16 %v5141
        %v6500 = vunpack.c.l.b16 %v5142
        %v6501 = vunpack.c.h.b16 %v5142
        %v6502 = vunpack.c.l.b16 %v5143
        %v6503 = vunpack.c.h.b16 %v5143
        %v6504 = vunpack.c.l.b16 %v5144
        %v6505 = vunpack.c.h.b16 %v5144
        %v6506 = vunpack.c.l.b16 %v5145
        %v6507 = vunpack.c.h.b16 %v5145
        %v6508 = vunpack.c.l.b16 %v5146
        %v6509 = vunpack.c.h.b16 %v5146
        %v6510 = vunpack.c.l.b16 %v5147
        %v6511 = vunpack.c.h.b16 %v5147
        %v6512 = vunpack.c.l.b16 %v5148
        %v6513 = vunpack.c.h.b16 %v5148
        %v6514 = vunpack.c.l.b16 %v5149
        %v6515 = vunpack.c.h.b16 %v5149
        %v6516 = vunpack.c.l.b16 %v5150
        %v6517 = vunpack.c.h.b16 %v5150
        %v6518 = vunpack.c.l.b16 %v5151
        %v6519 = vunpack.c.h.b16 %v5151
        %v6520 = vunpack.c.l.b16 %v5152
        %v6521 = vunpack.c.h.b16 %v5152
        %v6522 = vunpack.c.l.b16 %v5153
        %v6523 = vunpack.c.h.b16 %v5153
        %v6524 = vunpack.c.l.b16 %v5154
        %v6525 = vunpack.c.h.b16 %v5154
        %v6526 = vunpack.c.l.b16 %v5155
        %v6527 = vunpack.c.h.b16 %v5155
        %v6528 = vunpack.c.l.b16 %v5156
        %v6529 = vunpack.c.h.b16 %v5156
        %v6530 = vunpack.c.l.b16 %v5157
        %v6531 = vunpack.c.h.b16 %v5157
        %v6532 = vunpack.c.l.b16 %v5158
        %v6533 = vunpack.c.h.b16 %v5158
        %v6534 = vunpack.c.l.b16 %v5159
        %v6535 = vunpack.c.h.b16 %v5159
        %v6536 = vunpack.c.l.b16 %v5160
        %v6537 = vunpack.c.h.b16 %v5160
        %v6538 = vunpack.c.l.b16 %v5161
        %v6539 = vunpack.c.h.b16 %v5161
        %v6540 = vunpack.c.l.b16 %v5162
        %v6541 = vunpack.c.h.b16 %v5162
        %v6542 = vunpack.c.l.b16 %v5163
        %v6543 = vunpack.c.h.b16 %v5163
        %v6544 = vunpack.c.l.b16 %v5164
        %v6545 = vunpack.c.h.b16 %v5164
        %v6546 = vunpack.c.l.b16 %v5165
        %v6547 = vunpack.c.h.b16 %v5165
        %v6548 = vunpack.c.l.b16 %v5166
        %v6549 = vunpack.c.h.b16 %v5166
        %v6550 = vunpack.c.l.b16 %v5167
        %v6551 = vunpack.c.h.b16 %v5167
        %v6552 = vunpack.c.l.b16 %v5168
        %v6553 = vunpack.c.h.b16 %v5168
        %v6554 = vunpack.c.l.b16 %v5169
        %v6555 = vunpack.c.h.b16 %v5169
        %v6556 = vunpack.c.l.b16 %v5170
        %v6557 = vunpack.c.h.b16 %v5170
        %v6558 = vunpack.c.l.b16 %v5171
        %v6559 = vunpack.c.h.b16 %v5171
        %v6560 = vunpack.c.l.b16 %v5172
        %v6561 = vunpack.c.h.b16 %v5172
        %v6562 = vunpack.c.l.b16 %v5173
        %v6563 = vunpack.c.h.b16 %v5173
        %v6564 = vunpack.c.l.b16 %v5174
        %v6565 = vunpack.c.h.b16 %v5174
        %v6566 = vunpack.c.l.b16 %v5175
        %v6567 = vunpack.c.h.b16 %v5175
        %v6568 = vunpack.c.l.b16 %v5176
        %v6569 = vunpack.c.h.b16 %v5176
        %v6570 = vunpack.c.l.b16 %v5177
        %v6571 = vunpack.c.h.b16 %v5177
        %v6572 = vunpack.c.l.b16 %v5178
        %v6573 = vunpack.c.h.b16 %v5178
        %v6574 = vunpack.c.l.b16 %v5179
        %v6575 = vunpack.c.h.b16 %v5179
        %v6576 = vunpack.c.l.b16 %v5180
        %v6577 = vunpack.c.h.b16 %v5180
        %v6578 = vunpack.c.l.b16 %v5181
        %v6579 = vunpack.c.h.b16 %v5181
        %v6580 = vunpack.c.l.b16 %v5182
        %v6581 = vunpack.c.h.b16 %v5182
        %v6582 = vunpack.c.l.b16 %v5183
        %v6583 = vunpack.c.h.b16 %v5183
        %v6584 = vunpack.c.l.b16 %v5184
        %v6585 = vunpack.c.h.b16 %v5184
        %v6586 = vunpack.c.l.b16 %v5185
        %v6587 = vunpack.c.h.b16 %v5185
        %v6588 = vunpack.c.l.b16 %v5186
        %v6589 = vunpack.c.h.b16 %v5186
        %v6590 = vunpack.c.l.b16 %v5187
        %v6591 = vunpack.c.h.b16 %v5187
        %v6592 = vunpack.c.l.b16 %v5188
        %v6593 = vunpack.c.h.b16 %v5188
        %v6594 = vunpack.c.l.b16 %v5189
        %v6595 = vunpack.c.h.b16 %v5189
        %v6596 = vunpack.c.l.b16 %v5190
        %v6597 = vunpack.c.h.b16 %v5190
        %v6598 = vunpack.c.l.b16 %v5191
        %v6599 = vunpack.c.h.b16 %v5191
        %v6600 = vunpack.c.l.b16 %v5192
        %v6601 = vunpack.c.h.b16 %v5192
        %v6602 = vunpack.c.l.b16 %v5193
        %v6603 = vunpack.c.h.b16 %v5193
        %v6604 = vunpack.c.l.b16 %v5194
        %v6605 = vunpack.c.h.b16 %v5194
        %v6606 = vunpack.c.l.b16 %v5195
        %v6607 = vunpack.c.h.b16 %v5195
        %v6608 = vunpack.c.l.b16 %v5196
        %v6609 = vunpack.c.h.b16 %v5196
        %v6610 = vunpack.c.l.b16 %v5197
        %v6611 = vunpack.c.h.b16 %v5197
        %v6612 = vunpack.c.l.b16 %v5198
        %v6613 = vunpack.c.h.b16 %v5198
        %v6614 = vunpack.c.l.b16 %v5199
        %v6615 = vunpack.c.h.b16 %v5199
        %v6616 = vunpack.c.l.b16 %v5200
        %v6617 = vunpack.c.h.b16 %v5200
        %v6618 = vunpack.c.l.b16 %v5201
        %v6619 = vunpack.c.h.b16 %v5201
        %v6620 = vunpack.c.l.b16 %v5202
        %v6621 = vunpack.c.h.b16 %v5202
        %v6622 = vunpack.c.l.b16 %v5203
        %v6623 = vunpack.c.h.b16 %v5203
        %v6624 = vunpack.c.l.b16 %v5204
        %v6625 = vunpack.c.h.b16 %v5204
        %v6626 = vunpack.c.l.b16 %v5205
        %v6627 = vunpack.c.h.b16 %v5205
        %v6628 = vunpack.c.l.b16 %v5206
        %v6629 = vunpack.c.h.b16 %v5206
        %v6630 = vunpack.c.l.b16 %v5207
        %v6631 = vunpack.c.h.b16 %v5207
        %v6632 = vunpack.c.l.b16 %v5208
        %v6633 = vunpack.c.h.b16 %v5208
        %v6634 = vunpack.c.l.b16 %v5209
        %v6635 = vunpack.c.h.b16 %v5209
        %v6636 = vunpack.c.l.b16 %v5210
        %v6637 = vunpack.c.h.b16 %v5210
        %v6638 = vunpack.c.l.b16 %v5211
        %v6639 = vunpack.c.h.b16 %v5211
        %v6640 = vunpack.c.l.b16 %v5212
        %v6641 = vunpack.c.h.b16 %v5212
        %v6642 = vunpack.c.l.b16 %v5213
        %v6643 = vunpack.c.h.b16 %v5213
        %v6644 = vunpack.c.l.b16 %v5214
        %v6645 = vunpack.c.h.b16 %v5214
        %v6646 = vunpack.c.l.b16 %v5215
        %v6647 = vunpack.c.h.b16 %v5215
        %v6648 = vunpack.c.l.b16 %v5216
        %v6649 = vunpack.c.h.b16 %v5216
        %v6650 = vunpack.c.l.b16 %v5217
        %v6651 = vunpack.c.h.b16 %v5217
        %v6652 = vunpack.c.l.b16 %v5218
        %v6653 = vunpack.c.h.b16 %v5218
        %v6654 = vunpack.c.l.b16 %v5219
        %v6655 = vunpack.c.h.b16 %v5219
        %v6656 = vunpack.c.l.b16 %v5220
        %v6657 = vunpack.c.h.b16 %v5220
        %v6658 = vunpack.c.l.b16 %v5221
        %v6659 = vunpack.c.h.b16 %v5221
        %v6660 = vunpack.c.l.b16 %v5222
        %v6661 = vunpack.c.h.b16 %v5222
        %v6662 = vunpack.c.l.b16 %v5223
        %v6663 = vunpack.c.h.b16 %v5223
        %v6664 = vunpack.c.l.b16 %v5224
        %v6665 = vunpack.c.h.b16 %v5224
        %v6666 = vunpack.c.l.b16 %v5225
        %v6667 = vunpack.c.h.b16 %v5225
        %v6668 = vunpack.c.l.b16 %v5226
        %v6669 = vunpack.c.h.b16 %v5226
        %v6670 = vunpack.c.l.b16 %v5227
        %v6671 = vunpack.c.h.b16 %v5227
        %v6672 = vunpack.c.l.b16 %v5228
        %v6673 = vunpack.c.h.b16 %v5228
        %v6674 = vunpack.c.l.b16 %v5229
        %v6675 = vunpack.c.h.b16 %v5229
        %v6676 = vunpack.c.l.b16 %v5230
        %v6677 = vunpack.c.h.b16 %v5230
        %v6678 = vunpack.c.l.b16 %v5231
        %v6679 = vunpack.c.h.b16 %v5231
        %v6680 = vunpack.c.l.b16 %v5232
        %v6681 = vunpack.c.h.b16 %v5232
        %v6682 = vunpack.c.l.b16 %v5233
        %v6683 = vunpack.c.h.b16 %v5233
        %v6684 = vunpack.c.l.b16 %v5234
        %v6685 = vunpack.c.h.b16 %v5234
        %v6686 = vunpack.c.l.b16 %v5235
        %v6687 = vunpack.c.h.b16 %v5235
        %v6688 = vunpack.c.l.b16 %v5236
        %v6689 = vunpack.c.h.b16 %v5236
        %v6690 = vunpack.c.l.b16 %v5237
        %v6691 = vunpack.c.h.b16 %v5237
        %v6692 = vunpack.c.l.b16 %v5238
        %v6693 = vunpack.c.h.b16 %v5238
        %v6694 = vunpack.c.l.b16 %v5239
        %v6695 = vunpack.c.h.b16 %v5239
        %v6696 = vunpack.c.l.b16 %v5240
        %v6697 = vunpack.c.h.b16 %v5240
        %v6698 = vunpack.c.l.b16 %v5241
        %v6699 = vunpack.c.h.b16 %v5241
        %v6700 = vunpack.c.l.b16 %v5242
        %v6701 = vunpack.c.h.b16 %v5242
        %v6702 = vunpack.c.l.b16 %v5243
        %v6703 = vunpack.c.h.b16 %v5243
        %v6704 = vunpack.c.l.b16 %v5244
        %v6705 = vunpack.c.h.b16 %v5244
        %v6706 = vunpack.c.l.b16 %v5245
        %v6707 = vunpack.c.h.b16 %v5245
        %v6708 = vunpack.c.l.b16 %v5246
        %v6709 = vunpack.c.h.b16 %v5246
        %v6710 = vunpack.c.l.b16 %v5247
        %v6711 = vunpack.c.h.b16 %v5247
        %v6712 = vunpack.c.l.b16 %v5248
        %v6713 = vunpack.c.h.b16 %v5248
        %v6714 = vunpack.c.l.b16 %v5249
        %v6715 = vunpack.c.h.b16 %v5249
        %v6716 = vunpack.c.l.b16 %v5250
        %v6717 = vunpack.c.h.b16 %v5250
        %v6718 = vunpack.c.l.b16 %v5251
        %v6719 = vunpack.c.h.b16 %v5251
        %v6720 = vunpack.c.l.b16 %v5252
        %v6721 = vunpack.c.h.b16 %v5252
        %v6722 = vunpack.c.l.b16 %v5253
        %v6723 = vunpack.c.h.b16 %v5253
        %v6724 = vunpack.c.l.b16 %v5254
        %v6725 = vunpack.c.h.b16 %v5254
        %v6726 = vunpack.c.l.b16 %v5255
        %v6727 = vunpack.c.h.b16 %v5255
        %v6728 = vunpack.c.l.b16 %v5256
        %v6729 = vunpack.c.h.b16 %v5256
        %v6730 = vunpack.c.l.b16 %v5257
        %v6731 = vunpack.c.h.b16 %v5257
        %v6732 = vunpack.c.l.b16 %v5258
        %v6733 = vunpack.c.h.b16 %v5258
        %v6734 = vunpack.c.l.b16 %v5259
        %v6735 = vunpack.c.h.b16 %v5259
        %v6736 = vunpack.c.l.b16 %v5260
        %v6737 = vunpack.c.h.b16 %v5260
        %v6738 = vunpack.c.l.b16 %v5261
        %v6739 = vunpack.c.h.b16 %v5261
        %v6740 = vunpack.c.l.b16 %v5262
        %v6741 = vunpack.c.h.b16 %v5262
        %v6742 = vunpack.c.l.b16 %v5263
        %v6743 = vunpack.c.h.b16 %v5263
        %v6744 = vunpack.c.l.b16 %v5264
        %v6745 = vunpack.c.h.b16 %v5264
        %v6746 = vunpack.c.l.b16 %v5265
        %v6747 = vunpack.c.h.b16 %v5265
        %v6748 = vunpack.c.l.b16 %v5266
        %v6749 = vunpack.c.h.b16 %v5266
        %v6750 = vunpack.c.l.b16 %v5267
        %v6751 = vunpack.c.h.b16 %v5267
        %v6752 = vunpack.c.l.b16 %v5268
        %v6753 = vunpack.c.h.b16 %v5268
        %v6754 = vunpack.c.l.b16 %v5269
        %v6755 = vunpack.c.h.b16 %v5269
        %v6756 = vunpack.c.l.b16 %v5270
        %v6757 = vunpack.c.h.b16 %v5270
        %v6758 = vunpack.c.l.b16 %v5271
        %v6759 = vunpack.c.h.b16 %v5271
        %v6760 = vunpack.c.l.b16 %v5272
        %v6761 = vunpack.c.h.b16 %v5272
        %v6762 = vunpack.c.l.b16 %v5273
        %v6763 = vunpack.c.h.b16 %v5273
        %v6764 = vunpack.c.l.b16 %v5274
        %v6765 = vunpack.c.h.b16 %v5274
        %v6766 = vunpack.c.l.b16 %v5275
        %v6767 = vunpack.c.h.b16 %v5275
        %v6768 = vunpack.c.l.b16 %v5276
        %v6769 = vunpack.c.h.b16 %v5276
        %v6770 = vunpack.c.l.b16 %v5277
        %v6771 = vunpack.c.h.b16 %v5277
        %v6772 = vunpack.c.l.b16 %v5278
        %v6773 = vunpack.c.h.b16 %v5278
        %v6774 = vunpack.c.l.b16 %v5279
        %v6775 = vunpack.c.h.b16 %v5279
        %v6776 = vunpack.c.l.b16 %v5280
        %v6777 = vunpack.c.h.b16 %v5280
        %v6778 = vunpack.c.l.b16 %v5281
        %v6779 = vunpack.c.h.b16 %v5281
        %v6780 = vunpack.c.l.b16 %v5282
        %v6781 = vunpack.c.h.b16 %v5282
        %v6782 = vunpack.c.l.b16 %v5283
        %v6783 = vunpack.c.h.b16 %v5283
        %v6784 = vunpack.c.l.b16 %v5284
        %v6785 = vunpack.c.h.b16 %v5284
        %v6786 = vunpack.c.l.b16 %v5285
        %v6787 = vunpack.c.h.b16 %v5285
        %v6788 = vunpack.c.l.b16 %v5286
        %v6789 = vunpack.c.h.b16 %v5286
        %v6790 = vunpack.c.l.b16 %v5287
        %v6791 = vunpack.c.h.b16 %v5287
        %v6792 = vunpack.c.l.b16 %v5288
        %v6793 = vunpack.c.h.b16 %v5288
        %v6794 = vunpack.c.l.b16 %v5289
        %v6795 = vunpack.c.h.b16 %v5289
        %v6796 = vunpack.c.l.b16 %v5290
        %v6797 = vunpack.c.h.b16 %v5290
        %v6798 = vunpack.c.l.b16 %v5291
        %v6799 = vunpack.c.h.b16 %v5291
        %v6800 = vunpack.c.l.b16 %v5292
        %v6801 = vunpack.c.h.b16 %v5292
        %v6802 = vunpack.c.l.b16 %v5293
        %v6803 = vunpack.c.h.b16 %v5293
        %v6804 = vunpack.c.l.b16 %v5294
        %v6805 = vunpack.c.h.b16 %v5294
        %v6806 = vunpack.c.l.b16 %v5295
        %v6807 = vunpack.c.h.b16 %v5295
        %v6808 = vunpack.c.l.b16 %v5296
        %v6809 = vunpack.c.h.b16 %v5296
        %v6810 = vunpack.c.l.b16 %v5297
        %v6811 = vunpack.c.h.b16 %v5297
        %v6812 = vunpack.c.l.b16 %v5298
        %v6813 = vunpack.c.h.b16 %v5298
        %v6814 = vunpack.c.l.b16 %v5299
        %v6815 = vunpack.c.h.b16 %v5299
        %v6816 = vunpack.c.l.b16 %v5300
        %v6817 = vunpack.c.h.b16 %v5300
        %v6818 = vunpack.c.l.b16 %v5301
        %v6819 = vunpack.c.h.b16 %v5301
        %v6820 = vunpack.c.l.b16 %v5302
        %v6821 = vunpack.c.h.b16 %v5302
        %v6822 = vunpack.c.l.b16 %v5303
        %v6823 = vunpack.c.h.b16 %v5303
        %v6824 = vunpack.c.l.b16 %v5304
        %v6825 = vunpack.c.h.b16 %v5304
        %v6826 = vunpack.c.l.b16 %v5305
        %v6827 = vunpack.c.h.b16 %v5305
        %v6828 = vunpack.c.l.b16 %v5306
        %v6829 = vunpack.c.h.b16 %v5306
        %v6830 = vunpack.c.l.b16 %v5307
        %v6831 = vunpack.c.h.b16 %v5307
        %v6832 = vunpack.c.l.b16 %v5308
        %v6833 = vunpack.c.h.b16 %v5308
        %v6834 = vunpack.c.l.b16 %v5309
        %v6835 = vunpack.c.h.b16 %v5309
        %v6836 = vunpack.c.l.b16 %v5310
        %v6837 = vunpack.c.h.b16 %v5310
        %v6838 = vunpack.c.l.b16 %v5311
        %v6839 = vunpack.c.h.b16 %v5311
        %v6840 = vunpack.c.l.b16 %v5312
        %v6841 = vunpack.c.h.b16 %v5312
        %v6842 = vunpack.c.l.b16 %v5313
        %v6843 = vunpack.c.h.b16 %v5313
        %v6844 = vunpack.c.l.b16 %v5314
        %v6845 = vunpack.c.h.b16 %v5314
        %v6846 = vunpack.c.l.b16 %v5315
        %v6847 = vunpack.c.h.b16 %v5315
        %v6848 = vunpack.c.l.b16 %v5316
        %v6849 = vunpack.c.h.b16 %v5316
        %v6850 = vunpack.c.l.b16 %v5317
        %v6851 = vunpack.c.h.b16 %v5317
        %v6852 = vunpack.c.l.b16 %v5318
        %v6853 = vunpack.c.h.b16 %v5318
        %v6854 = vunpack.c.l.b16 %v5319
        %v6855 = vunpack.c.h.b16 %v5319
        %v6856 = vpack.c.b16 %v5840, %v5832
        %v6857 = vpack.c.b16 %v5841, %v5833
        %v6858 = vpack.c.b16 %v5842, %v5834
        %v6859 = vpack.c.b16 %v5843, %v5835
        %v6860 = vpack.c.b16 %v5844, %v5836
        %v6861 = vpack.c.b16 %v5845, %v5837
        %v6862 = vpack.c.b16 %v5846, %v5838
        %v6863 = vpack.c.b16 %v5847, %v5839
        %v6864 = vpack.c.b16 %v5856, %v5848
        %v6865 = vpack.c.b16 %v5857, %v5849
        %v6866 = vpack.c.b16 %v5858, %v5850
        %v6867 = vpack.c.b16 %v5859, %v5851
        %v6868 = vpack.c.b16 %v5860, %v5852
        %v6869 = vpack.c.b16 %v5861, %v5853
        %v6870 = vpack.c.b16 %v5862, %v5854
        %v6871 = vpack.c.b16 %v5863, %v5855
        %v6872 = vpack.c.b16 %v5872, %v5864
        %v6873 = vpack.c.b16 %v5873, %v5865
        %v6874 = vpack.c.b16 %v5874, %v5866
        %v6875 = vpack.c.b16 %v5875, %v5867
        %v6876 = vpack.c.b16 %v5876, %v5868
        %v6877 = vpack.c.b16 %v5877, %v5869
        %v6878 = vpack.c.b16 %v5878, %v5870
        %v6879 = vpack.c.b16 %v5879, %v5871
        %v6880 = vpack.c.b16 %v5888, %v5880
        %v6881 = vpack.c.b16 %v5889, %v5881
        %v6882 = vpack.c.b16 %v5890, %v5882
        %v6883 = vpack.c.b16 %v5891, %v5883
        %v6884 = vpack.c.b16 %v5892, %v5884
        %v6885 = vpack.c.b16 %v5893, %v5885
        %v6886 = vpack.c.b16 %v5894, %v5886
        %v6887 = vpack.c.b16 %v5895, %v5887
        %v6888 = vpack.c.b16 %v5904, %v5896
        %v6889 = vpack.c.b16 %v5905, %v5897
        %v6890 = vpack.c.b16 %v5906, %v5898
        %v6891 = vpack.c.b16 %v5907, %v5899
        %v6892 = vpack.c.b16 %v5908, %v5900
        %v6893 = vpack.c.b16 %v5909, %v5901
        %v6894 = vpack.c.b16 %v5910, %v5902
        %v6895 = vpack.c.b16 %v5911, %v5903
        %v6896 = vpack.c.b16 %v5920, %v5912
        %v6897 = vpack.c.b16 %v5921, %v5913
        %v6898 = vpack.c.b16 %v5922, %v5914
        %v6899 = vpack.c.b16 %v5923, %v5915
        %v6900 = vpack.c.b16 %v5924, %v5916
        %v6901 = vpack.c.b16 %v5925, %v5917
        %v6902 = vpack.c.b16 %v5926, %v5918
        %v6903 = vpack.c.b16 %v5927, %v5919
        %v6904 = vpack.c.b16 %v5936, %v5928
        %v6905 = vpack.c.b16 %v5937, %v5929
        %v6906 = vpack.c.b16 %v5938, %v5930
        %v6907 = vpack.c.b16 %v5939, %v5931
        %v6908 = vpack.c.b16 %v5940, %v5932
        %v6909 = vpack.c.b16 %v5941, %v5933
        %v6910 = vpack.c.b16 %v5942, %v5934
        %v6911 = vpack.c.b16 %v5943, %v5935
        %v6912 = vpack.c.b16 %v5952, %v5944
        %v6913 = vpack.c.b16 %v5953, %v5945
        %v6914 = vpack.c.b16 %v5954, %v5946
        %v6915 = vpack.c.b16 %v5955, %v5947
        %v6916 = vpack.c.b16 %v5956, %v5948
        %v6917 = vpack.c.b16 %v5957, %v5949
        %v6918 = vpack.c.b16 %v5958, %v5950
        %v6919 = vpack.c.b16 %v5959, %v5951
        %v6920 = vpack.c.b16 %v5968, %v5960
        %v6921 = vpack.c.b16 %v5969, %v5961
        %v6922 = vpack.c.b16 %v5970, %v5962
        %v6923 = vpack.c.b16 %v5971, %v5963
        %v6924 = vpack.c.b16 %v5972, %v5964
        %v6925 = vpack.c.b16 %v5973, %v5965
        %v6926 = vpack.c.b16 %v5974, %v5966
        %v6927 = vpack.c.b16 %v5975, %v5967
        %v6928 = vpack.c.b16 %v5984, %v5976
        %v6929 = vpack.c.b16 %v5985, %v5977
        %v6930 = vpack.c.b16 %v5986, %v5978
        %v6931 = vpack.c.b16 %v5987, %v5979
        %v6932 = vpack.c.b16 %v5988, %v5980
        %v6933 = vpack.c.b16 %v5989, %v5981
        %v6934 = vpack.c.b16 %v5990, %v5982
        %v6935 = vpack.c.b16 %v5991, %v5983
        %v6936 = vpack.c.b16 %v6000, %v5992
        %v6937 = vpack.c.b16 %v6001, %v5993
        %v6938 = vpack.c.b16 %v6002, %v5994
        %v6939 = vpack.c.b16 %v6003, %v5995
        %v6940 = vpack.c.b16 %v6004, %v5996
        %v6941 = vpack.c.b16 %v6005, %v5997
        %v6942 = vpack.c.b16 %v6006, %v5998
        %v6943 = vpack.c.b16 %v6007, %v5999
        %v6944 = vpack.c.b16 %v6016, %v6008
        %v6945 = vpack.c.b16 %v6017, %v6009
        %v6946 = vpack.c.b16 %v6018, %v6010
        %v6947 = vpack.c.b16 %v6019, %v6011
        %v6948 = vpack.c.b16 %v6020, %v6012
        %v6949 = vpack.c.b16 %v6021, %v6013
        %v6950 = vpack.c.b16 %v6022, %v6014
        %v6951 = vpack.c.b16 %v6023, %v6015
        %v6952 = vpack.c.b16 %v6032, %v6024
        %v6953 = vpack.c.b16 %v6033, %v6025
        %v6954 = vpack.c.b16 %v6034, %v6026
        %v6955 = vpack.c.b16 %v6035, %v6027
        %v6956 = vpack.c.b16 %v6036, %v6028
        %v6957 = vpack.c.b16 %v6037, %v6029
        %v6958 = vpack.c.b16 %v6038, %v6030
        %v6959 = vpack.c.b16 %v6039, %v6031
        %v6960 = vpack.c.b16 %v6048, %v6040
        %v6961 = vpack.c.b16 %v6049, %v6041
        %v6962 = vpack.c.b16 %v6050, %v6042
        %v6963 = vpack.c.b16 %v6051, %v6043
        %v6964 = vpack.c.b16 %v6052, %v6044
        %v6965 = vpack.c.b16 %v6053, %v6045
        %v6966 = vpack.c.b16 %v6054, %v6046
        %v6967 = vpack.c.b16 %v6055, %v6047
        %v6968 = vpack.c.b16 %v6064, %v6056
        %v6969 = vpack.c.b16 %v6065, %v6057
        %v6970 = vpack.c.b16 %v6066, %v6058
        %v6971 = vpack.c.b16 %v6067, %v6059
        %v6972 = vpack.c.b16 %v6068, %v6060
        %v6973 = vpack.c.b16 %v6069, %v6061
        %v6974 = vpack.c.b16 %v6070, %v6062
        %v6975 = vpack.c.b16 %v6071, %v6063
        %v6976 = vpack.c.b16 %v6080, %v6072
        %v6977 = vpack.c.b16 %v6081, %v6073
        %v6978 = vpack.c.b16 %v6082, %v6074
        %v6979 = vpack.c.b16 %v6083, %v6075
        %v6980 = vpack.c.b16 %v6084, %v6076
        %v6981 = vpack.c.b16 %v6085, %v6077
        %v6982 = vpack.c.b16 %v6086, %v6078
        %v6983 = vpack.c.b16 %v6087, %v6079
        %v6984 = vpack.c.b16 %v6096, %v6088
        %v6985 = vpack.c.b16 %v6097, %v6089
        %v6986 = vpack.c.b16 %v6098, %v6090
        %v6987 = vpack.c.b16 %v6099, %v6091
        %v6988 = vpack.c.b16 %v6100, %v6092
        %v6989 = vpack.c.b16 %v6101, %v6093
        %v6990 = vpack.c.b16 %v6102, %v6094
        %v6991 = vpack.c.b16 %v6103, %v6095
        %v6992 = vpack.c.b16 %v6112, %v6104
        %v6993 = vpack.c.b16 %v6113, %v6105
        %v6994 = vpack.c.b16 %v6114, %v6106
        %v6995 = vpack.c.b16 %v6115, %v6107
        %v6996 = vpack.c.b16 %v6116, %v6108
        %v6997 = vpack.c.b16 %v6117, %v6109
        %v6998 = vpack.c.b16 %v6118, %v6110
        %v6999 = vpack.c.b16 %v6119, %v6111
        %v7000 = vpack.c.b16 %v6128, %v6120
        %v7001 = vpack.c.b16 %v6129, %v6121
        %v7002 = vpack.c.b16 %v6130, %v6122
        %v7003 = vpack.c.b16 %v6131, %v6123
        %v7004 = vpack.c.b16 %v6132, %v6124
        %v7005 = vpack.c.b16 %v6133, %v6125
        %v7006 = vpack.c.b16 %v6134, %v6126
        %v7007 = vpack.c.b16 %v6135, %v6127
        %v7008 = vpack.c.b16 %v6144, %v6136
        %v7009 = vpack.c.b16 %v6145, %v6137
        %v7010 = vpack.c.b16 %v6146, %v6138
        %v7011 = vpack.c.b16 %v6147, %v6139
        %v7012 = vpack.c.b16 %v6148, %v6140
        %v7013 = vpack.c.b16 %v6149, %v6141
        %v7014 = vpack.c.b16 %v6150, %v6142
        %v7015 = vpack.c.b16 %v6151, %v6143
        %v7016 = vpack.c.b16 %v6160, %v6152
        %v7017 = vpack.c.b16 %v6161, %v6153
        %v7018 = vpack.c.b16 %v6162, %v6154
        %v7019 = vpack.c.b16 %v6163, %v6155
        %v7020 = vpack.c.b16 %v6164, %v6156
        %v7021 = vpack.c.b16 %v6165, %v6157
        %v7022 = vpack.c.b16 %v6166, %v6158
        %v7023 = vpack.c.b16 %v6167, %v6159
        %v7024 = vpack.c.b16 %v6176, %v6168
        %v7025 = vpack.c.b16 %v6177, %v6169
        %v7026 = vpack.c.b16 %v6178, %v6170
        %v7027 = vpack.c.b16 %v6179, %v6171
        %v7028 = vpack.c.b16 %v6180, %v6172
        %v7029 = vpack.c.b16 %v6181, %v6173
        %v7030 = vpack.c.b16 %v6182, %v6174
        %v7031 = vpack.c.b16 %v6183, %v6175
        %v7032 = vpack.c.b16 %v6192, %v6184
        %v7033 = vpack.c.b16 %v6193, %v6185
        %v7034 = vpack.c.b16 %v6194, %v6186
        %v7035 = vpack.c.b16 %v6195, %v6187
        %v7036 = vpack.c.b16 %v6196, %v6188
        %v7037 = vpack.c.b16 %v6197, %v6189
        %v7038 = vpack.c.b16 %v6198, %v6190
        %v7039 = vpack.c.b16 %v6199, %v6191
        %v7040 = vpack.c.b16 %v6208, %v6200
        %v7041 = vpack.c.b16 %v6209, %v6201
        %v7042 = vpack.c.b16 %v6210, %v6202
        %v7043 = vpack.c.b16 %v6211, %v6203
        %v7044 = vpack.c.b16 %v6212, %v6204
        %v7045 = vpack.c.b16 %v6213, %v6205
        %v7046 = vpack.c.b16 %v6214, %v6206
        %v7047 = vpack.c.b16 %v6215, %v6207
        %v7048 = vpack.c.b16 %v6224, %v6216
        %v7049 = vpack.c.b16 %v6225, %v6217
        %v7050 = vpack.c.b16 %v6226, %v6218
        %v7051 = vpack.c.b16 %v6227, %v6219
        %v7052 = vpack.c.b16 %v6228, %v6220
        %v7053 = vpack.c.b16 %v6229, %v6221
        %v7054 = vpack.c.b16 %v6230, %v6222
        %v7055 = vpack.c.b16 %v6231, %v6223
        %v7056 = vpack.c.b16 %v6240, %v6232
        %v7057 = vpack.c.b16 %v6241, %v6233
        %v7058 = vpack.c.b16 %v6242, %v6234
        %v7059 = vpack.c.b16 %v6243, %v6235
        %v7060 = vpack.c.b16 %v6244, %v6236
        %v7061 = vpack.c.b16 %v6245, %v6237
        %v7062 = vpack.c.b16 %v6246, %v6238
        %v7063 = vpack.c.b16 %v6247, %v6239
        %v7064 = vpack.c.b16 %v6256, %v6248
        %v7065 = vpack.c.b16 %v6257, %v6249
        %v7066 = vpack.c.b16 %v6258, %v6250
        %v7067 = vpack.c.b16 %v6259, %v6251
        %v7068 = vpack.c.b16 %v6260, %v6252
        %v7069 = vpack.c.b16 %v6261, %v6253
        %v7070 = vpack.c.b16 %v6262, %v6254
        %v7071 = vpack.c.b16 %v6263, %v6255
        %v7072 = vpack.c.b16 %v6272, %v6264
        %v7073 = vpack.c.b16 %v6273, %v6265
        %v7074 = vpack.c.b16 %v6274, %v6266
        %v7075 = vpack.c.b16 %v6275, %v6267
        %v7076 = vpack.c.b16 %v6276, %v6268
        %v7077 = vpack.c.b16 %v6277, %v6269
        %v7078 = vpack.c.b16 %v6278, %v6270
        %v7079 = vpack.c.b16 %v6279, %v6271
        %v7080 = vpack.c.b16 %v6288, %v6280
        %v7081 = vpack.c.b16 %v6289, %v6281
        %v7082 = vpack.c.b16 %v6290, %v6282
        %v7083 = vpack.c.b16 %v6291, %v6283
        %v7084 = vpack.c.b16 %v6292, %v6284
        %v7085 = vpack.c.b16 %v6293, %v6285
        %v7086 = vpack.c.b16 %v6294, %v6286
        %v7087 = vpack.c.b16 %v6295, %v6287
        %v7088 = vpack.c.b16 %v6304, %v6296
        %v7089 = vpack.c.b16 %v6305, %v6297
        %v7090 = vpack.c.b16 %v6306, %v6298
        %v7091 = vpack.c.b16 %v6307, %v6299
        %v7092 = vpack.c.b16 %v6308, %v6300
        %v7093 = vpack.c.b16 %v6309, %v6301
        %v7094 = vpack.c.b16 %v6310, %v6302
        %v7095 = vpack.c.b16 %v6311, %v6303
        %v7096 = vpack.c.b16 %v6320, %v6312
        %v7097 = vpack.c.b16 %v6321, %v6313
        %v7098 = vpack.c.b16 %v6322, %v6314
        %v7099 = vpack.c.b16 %v6323, %v6315
        %v7100 = vpack.c.b16 %v6324, %v6316
        %v7101 = vpack.c.b16 %v6325, %v6317
        %v7102 = vpack.c.b16 %v6326, %v6318
        %v7103 = vpack.c.b16 %v6327, %v6319
        %v7104 = vpack.c.b16 %v6336, %v6328
        %v7105 = vpack.c.b16 %v6337, %v6329
        %v7106 = vpack.c.b16 %v6338, %v6330
        %v7107 = vpack.c.b16 %v6339, %v6331
        %v7108 = vpack.c.b16 %v6340, %v6332
        %v7109 = vpack.c.b16 %v6341, %v6333
        %v7110 = vpack.c.b16 %v6342, %v6334
        %v7111 = vpack.c.b16 %v6343, %v6335
        %v7112 = vpack.c.b16 %v6352, %v6344
        %v7113 = vpack.c.b16 %v6353, %v6345
        %v7114 = vpack.c.b16 %v6354, %v6346
        %v7115 = vpack.c.b16 %v6355, %v6347
        %v7116 = vpack.c.b16 %v6356, %v6348
        %v7117 = vpack.c.b16 %v6357, %v6349
        %v7118 = vpack.c.b16 %v6358, %v6350
        %v7119 = vpack.c.b16 %v6359, %v6351
        %v7120 = vpack.c.b16 %v6368, %v6360
        %v7121 = vpack.c.b16 %v6369, %v6361
        %v7122 = vpack.c.b16 %v6370, %v6362
        %v7123 = vpack.c.b16 %v6371, %v6363
        %v7124 = vpack.c.b16 %v6372, %v6364
        %v7125 = vpack.c.b16 %v6373, %v6365
        %v7126 = vpack.c.b16 %v6374, %v6366
        %v7127 = vpack.c.b16 %v6375, %v6367
        %v7128 = vpack.c.b16 %v6384, %v6376
        %v7129 = vpack.c.b16 %v6385, %v6377
        %v7130 = vpack.c.b16 %v6386, %v6378
        %v7131 = vpack.c.b16 %v6387, %v6379
        %v7132 = vpack.c.b16 %v6388, %v6380
        %v7133 = vpack.c.b16 %v6389, %v6381
        %v7134 = vpack.c.b16 %v6390, %v6382
        %v7135 = vpack.c.b16 %v6391, %v6383
        %v7136 = vpack.c.b16 %v6400, %v6392
        %v7137 = vpack.c.b16 %v6401, %v6393
        %v7138 = vpack.c.b16 %v6402, %v6394
        %v7139 = vpack.c.b16 %v6403, %v6395
        %v7140 = vpack.c.b16 %v6404, %v6396
        %v7141 = vpack.c.b16 %v6405, %v6397
        %v7142 = vpack.c.b16 %v6406, %v6398
        %v7143 = vpack.c.b16 %v6407, %v6399
        %v7144 = vpack.c.b16 %v6416, %v6408
        %v7145 = vpack.c.b16 %v6417, %v6409
        %v7146 = vpack.c.b16 %v6418, %v6410
        %v7147 = vpack.c.b16 %v6419, %v6411
        %v7148 = vpack.c.b16 %v6420, %v6412
        %v7149 = vpack.c.b16 %v6421, %v6413
        %v7150 = vpack.c.b16 %v6422, %v6414
        %v7151 = vpack.c.b16 %v6423, %v6415
        %v7152 = vpack.c.b16 %v6432, %v6424
        %v7153 = vpack.c.b16 %v6433, %v6425
        %v7154 = vpack.c.b16 %v6434, %v6426
        %v7155 = vpack.c.b16 %v6435, %v6427
        %v7156 = vpack.c.b16 %v6436, %v6428
        %v7157 = vpack.c.b16 %v6437, %v6429
        %v7158 = vpack.c.b16 %v6438, %v6430
        %v7159 = vpack.c.b16 %v6439, %v6431
        %v7160 = vpack.c.b16 %v6448, %v6440
        %v7161 = vpack.c.b16 %v6449, %v6441
        %v7162 = vpack.c.b16 %v6450, %v6442
        %v7163 = vpack.c.b16 %v6451, %v6443
        %v7164 = vpack.c.b16 %v6452, %v6444
        %v7165 = vpack.c.b16 %v6453, %v6445
        %v7166 = vpack.c.b16 %v6454, %v6446
        %v7167 = vpack.c.b16 %v6455, %v6447
        %v7168 = vpack.c.b16 %v6464, %v6456
        %v7169 = vpack.c.b16 %v6465, %v6457
        %v7170 = vpack.c.b16 %v6466, %v6458
        %v7171 = vpack.c.b16 %v6467, %v6459
        %v7172 = vpack.c.b16 %v6468, %v6460
        %v7173 = vpack.c.b16 %v6469, %v6461
        %v7174 = vpack.c.b16 %v6470, %v6462
        %v7175 = vpack.c.b16 %v6471, %v6463
        %v7176 = vpack.c.b16 %v6480, %v6472
        %v7177 = vpack.c.b16 %v6481, %v6473
        %v7178 = vpack.c.b16 %v6482, %v6474
        %v7179 = vpack.c.b16 %v6483, %v6475
        %v7180 = vpack.c.b16 %v6484, %v6476
        %v7181 = vpack.c.b16 %v6485, %v6477
        %v7182 = vpack.c.b16 %v6486, %v6478
        %v7183 = vpack.c.b16 %v6487, %v6479
        %v7184 = vpack.c.b16 %v6496, %v6488
        %v7185 = vpack.c.b16 %v6497, %v6489
        %v7186 = vpack.c.b16 %v6498, %v6490
        %v7187 = vpack.c.b16 %v6499, %v6491
        %v7188 = vpack.c.b16 %v6500, %v6492
        %v7189 = vpack.c.b16 %v6501, %v6493
        %v7190 = vpack.c.b16 %v6502, %v6494
        %v7191 = vpack.c.b16 %v6503, %v6495
        %v7192 = vpack.c.b16 %v6512, %v6504
        %v7193 = vpack.c.b16 %v6513, %v6505
        %v7194 = vpack.c.b16 %v6514, %v6506
        %v7195 = vpack.c.b16 %v6515, %v6507
        %v7196 = vpack.c.b16 %v6516, %v6508
        %v7197 = vpack.c.b16 %v6517, %v6509
        %v7198 = vpack.c.b16 %v6518, %v6510
        %v7199 = vpack.c.b16 %v6519, %v6511
        %v7200 = vpack.c.b16 %v6528, %v6520
        %v7201 = vpack.c.b16 %v6529, %v6521
        %v7202 = vpack.c.b16 %v6530, %v6522
        %v7203 = vpack.c.b16 %v6531, %v6523
        %v7204 = vpack.c.b16 %v6532, %v6524
        %v7205 = vpack.c.b16 %v6533, %v6525
        %v7206 = vpack.c.b16 %v6534, %v6526
        %v7207 = vpack.c.b16 %v6535, %v6527
        %v7208 = vpack.c.b16 %v6544, %v6536
        %v7209 = vpack.c.b16 %v6545, %v6537
        %v7210 = vpack.c.b16 %v6546, %v6538
        %v7211 = vpack.c.b16 %v6547, %v6539
        %v7212 = vpack.c.b16 %v6548, %v6540
        %v7213 = vpack.c.b16 %v6549, %v6541
        %v7214 = vpack.c.b16 %v6550, %v6542
        %v7215 = vpack.c.b16 %v6551, %v6543
        %v7216 = vpack.c.b16 %v6560, %v6552
        %v7217 = vpack.c.b16 %v6561, %v6553
        %v7218 = vpack.c.b16 %v6562, %v6554
        %v7219 = vpack.c.b16 %v6563, %v6555
        %v7220 = vpack.c.b16 %v6564, %v6556
        %v7221 = vpack.c.b16 %v6565, %v6557
        %v7222 = vpack.c.b16 %v6566, %v6558
        %v7223 = vpack.c.b16 %v6567, %v6559
        %v7224 = vpack.c.b16 %v6576, %v6568
        %v7225 = vpack.c.b16 %v6577, %v6569
        %v7226 = vpack.c.b16 %v6578, %v6570
        %v7227 = vpack.c.b16 %v6579, %v6571
        %v7228 = vpack.c.b16 %v6580, %v6572
        %v7229 = vpack.c.b16 %v6581, %v6573
        %v7230 = vpack.c.b16 %v6582, %v6574
        %v7231 = vpack.c.b16 %v6583, %v6575
        %v7232 = vpack.c.b16 %v6592, %v6584
        %v7233 = vpack.c.b16 %v6593, %v6585
        %v7234 = vpack.c.b16 %v6594, %v6586
        %v7235 = vpack.c.b16 %v6595, %v6587
        %v7236 = vpack.c.b16 %v6596, %v6588
        %v7237 = vpack.c.b16 %v6597, %v6589
        %v7238 = vpack.c.b16 %v6598, %v6590
        %v7239 = vpack.c.b16 %v6599, %v6591
        %v7240 = vpack.c.b16 %v6608, %v6600
        %v7241 = vpack.c.b16 %v6609, %v6601
        %v7242 = vpack.c.b16 %v6610, %v6602
        %v7243 = vpack.c.b16 %v6611, %v6603
        %v7244 = vpack.c.b16 %v6612, %v6604
        %v7245 = vpack.c.b16 %v6613, %v6605
        %v7246 = vpack.c.b16 %v6614, %v6606
        %v7247 = vpack.c.b16 %v6615, %v6607
        %v7248 = vpack.c.b16 %v6624, %v6616
        %v7249 = vpack.c.b16 %v6625, %v6617
        %v7250 = vpack.c.b16 %v6626, %v6618
        %v7251 = vpack.c.b16 %v6627, %v6619
        %v7252 = vpack.c.b16 %v6628, %v6620
        %v7253 = vpack.c.b16 %v6629, %v6621
        %v7254 = vpack.c.b16 %v6630, %v6622
        %v7255 = vpack.c.b16 %v6631, %v6623
        %v7256 = vpack.c.b16 %v6640, %v6632
        %v7257 = vpack.c.b16 %v6641, %v6633
        %v7258 = vpack.c.b16 %v6642, %v6634
        %v7259 = vpack.c.b16 %v6643, %v6635
        %v7260 = vpack.c.b16 %v6644, %v6636
        %v7261 = vpack.c.b16 %v6645, %v6637
        %v7262 = vpack.c.b16 %v6646, %v6638
        %v7263 = vpack.c.b16 %v6647, %v6639
        %v7264 = vpack.c.b16 %v6656, %v6648
        %v7265 = vpack.c.b16 %v6657, %v6649
        %v7266 = vpack.c.b16 %v6658, %v6650
        %v7267 = vpack.c.b16 %v6659, %v6651
        %v7268 = vpack.c.b16 %v6660, %v6652
        %v7269 = vpack.c.b16 %v6661, %v6653
        %v7270 = vpack.c.b16 %v6662, %v6654
        %v7271 = vpack.c.b16 %v6663, %v6655
        %v7272 = vpack.c.b16 %v6672, %v6664
        %v7273 = vpack.c.b16 %v6673, %v6665
        %v7274 = vpack.c.b16 %v6674, %v6666
        %v7275 = vpack.c.b16 %v6675, %v6667
        %v7276 = vpack.c.b16 %v6676, %v6668
        %v7277 = vpack.c.b16 %v6677, %v6669
        %v7278 = vpack.c.b16 %v6678, %v6670
        %v7279 = vpack.c.b16 %v6679, %v6671
        %v7280 = vpack.c.b16 %v6688, %v6680
        %v7281 = vpack.c.b16 %v6689, %v6681
        %v7282 = vpack.c.b16 %v6690, %v6682
        %v7283 = vpack.c.b16 %v6691, %v6683
        %v7284 = vpack.c.b16 %v6692, %v6684
        %v7285 = vpack.c.b16 %v6693, %v6685
        %v7286 = vpack.c.b16 %v6694, %v6686
        %v7287 = vpack.c.b16 %v6695, %v6687
        %v7288 = vpack.c.b16 %v6704, %v6696
        %v7289 = vpack.c.b16 %v6705, %v6697
        %v7290 = vpack.c.b16 %v6706, %v6698
        %v7291 = vpack.c.b16 %v6707, %v6699
        %v7292 = vpack.c.b16 %v6708, %v6700
        %v7293 = vpack.c.b16 %v6709, %v6701
        %v7294 = vpack.c.b16 %v6710, %v6702
        %v7295 = vpack.c.b16 %v6711, %v6703
        %v7296 = vpack.c.b16 %v6720, %v6712
        %v7297 = vpack.c.b16 %v6721, %v6713
        %v7298 = vpack.c.b16 %v6722, %v6714
        %v7299 = vpack.c.b16 %v6723, %v6715
        %v7300 = vpack.c.b16 %v6724, %v6716
        %v7301 = vpack.c.b16 %v6725, %v6717
        %v7302 = vpack.c.b16 %v6726, %v6718
        %v7303 = vpack.c.b16 %v6727, %v6719
        %v7304 = vpack.c.b16 %v6736, %v6728
        %v7305 = vpack.c.b16 %v6737, %v6729
        %v7306 = vpack.c.b16 %v6738, %v6730
        %v7307 = vpack.c.b16 %v6739, %v6731
        %v7308 = vpack.c.b16 %v6740, %v6732
        %v7309 = vpack.c.b16 %v6741, %v6733
        %v7310 = vpack.c.b16 %v6742, %v6734
        %v7311 = vpack.c.b16 %v6743, %v6735
        %v7312 = vpack.c.b16 %v6752, %v6744
        %v7313 = vpack.c.b16 %v6753, %v6745
        %v7314 = vpack.c.b16 %v6754, %v6746
        %v7315 = vpack.c.b16 %v6755, %v6747
        %v7316 = vpack.c.b16 %v6756, %v6748
        %v7317 = vpack.c.b16 %v6757, %v6749
        %v7318 = vpack.c.b16 %v6758, %v6750
        %v7319 = vpack.c.b16 %v6759, %v6751
        %v7320 = vpack.c.b16 %v6768, %v6760
        %v7321 = vpack.c.b16 %v6769, %v6761
        %v7322 = vpack.c.b16 %v6770, %v6762
        %v7323 = vpack.c.b16 %v6771, %v6763
        %v7324 = vpack.c.b16 %v6772, %v6764
        %v7325 = vpack.c.b16 %v6773, %v6765
        %v7326 = vpack.c.b16 %v6774, %v6766
        %v7327 = vpack.c.b16 %v6775, %v6767
        %v7328 = vpack.c.b16 %v6784, %v6776
        %v7329 = vpack.c.b16 %v6785, %v6777
        %v7330 = vpack.c.b16 %v6786, %v6778
        %v7331 = vpack.c.b16 %v6787, %v6779
        %v7332 = vpack.c.b16 %v6788, %v6780
        %v7333 = vpack.c.b16 %v6789, %v6781
        %v7334 = vpack.c.b16 %v6790, %v6782
        %v7335 = vpack.c.b16 %v6791, %v6783
        %v7336 = vpack.c.b16 %v6800, %v6792
        %v7337 = vpack.c.b16 %v6801, %v6793
        %v7338 = vpack.c.b16 %v6802, %v6794
        %v7339 = vpack.c.b16 %v6803, %v6795
        %v7340 = vpack.c.b16 %v6804, %v6796
        %v7341 = vpack.c.b16 %v6805, %v6797
        %v7342 = vpack.c.b16 %v6806, %v6798
        %v7343 = vpack.c.b16 %v6807, %v6799
        %v7344 = vpack.c.b16 %v6816, %v6808
        %v7345 = vpack.c.b16 %v6817, %v6809
        %v7346 = vpack.c.b16 %v6818, %v6810
        %v7347 = vpack.c.b16 %v6819, %v6811
        %v7348 = vpack.c.b16 %v6820, %v6812
        %v7349 = vpack.c.b16 %v6821, %v6813
        %v7350 = vpack.c.b16 %v6822, %v6814
        %v7351 = vpack.c.b16 %v6823, %v6815
        %v7352 = vpack.c.b16 %v6832, %v6824
        %v7353 = vpack.c.b16 %v6833, %v6825
        %v7354 = vpack.c.b16 %v6834, %v6826
        %v7355 = vpack.c.b16 %v6835, %v6827
        %v7356 = vpack.c.b16 %v6836, %v6828
        %v7357 = vpack.c.b16 %v6837, %v6829
        %v7358 = vpack.c.b16 %v6838, %v6830
        %v7359 = vpack.c.b16 %v6839, %v6831
        %v7360 = vpack.c.b16 %v6848, %v6840
        %v7361 = vpack.c.b16 %v6849, %v6841
        %v7362 = vpack.c.b16 %v6850, %v6842
        %v7363 = vpack.c.b16 %v6851, %v6843
        %v7364 = vpack.c.b16 %v6852, %v6844
        %v7365 = vpack.c.b16 %v6853, %v6845
        %v7366 = vpack.c.b16 %v6854, %v6846
        %v7367 = vpack.c.b16 %v6855, %v6847
        %7880 = vmatpush.bf16.msra.mxu0 %v6912
        %7881 = vmatpush.bf16.msra.mxu0 %v6904
        %7882 = vmatpush.bf16.msra.mxu0 %v6896
        %7883 = vmatpush.bf16.msra.mxu0 %v6888
        %7884 = vmatpush.bf16.msra.mxu0 %v6880
        %7885 = vmatpush.bf16.msra.mxu0 %v6872
        %7886 = vmatpush.bf16.msra.mxu0 %v6864
        %7887 = vmatpush.bf16.msra.mxu0 %v6856
        %7888 = vmatmul.bf16.gmra.mxu0 %v4800
        %v7889 = vpop.f32.mrf.mxu0
        %v7890 = vadd.f32 0.0, %v7889
        %v7891 = vpop.f32.mrf.mxu0
        %v7892 = vadd.f32 0.0, %v7891
        %7893 = vdwg.mxu0
        %7894 = vmatpush.bf16.msra.mxu0 %v6976
        %7895 = vmatpush.bf16.msra.mxu0 %v6968
        %7896 = vmatpush.bf16.msra.mxu0 %v6960
        %7897 = vmatpush.bf16.msra.mxu0 %v6952
        %7898 = vmatpush.bf16.msra.mxu0 %v6944
        %7899 = vmatpush.bf16.msra.mxu0 %v6936
        %7900 = vmatpush.bf16.msra.mxu0 %v6928
        %7901 = vmatpush.bf16.msra.mxu0 %v6920
        %7902 = vmatmul.bf16.gmra.mxu0 %v4801
        %v7903 = vpop.f32.mrf.mxu0
        %v7904 = vadd.f32 %v7890, %v7903
        %v7905 = vpop.f32.mrf.mxu0
        %v7906 = vadd.f32 %v7892, %v7905
        %7907 = vdwg.mxu0
        %7908 = vmatpush.bf16.msra.mxu0 %v7040
        %7909 = vmatpush.bf16.msra.mxu0 %v7032
        %7910 = vmatpush.bf16.msra.mxu0 %v7024
        %7911 = vmatpush.bf16.msra.mxu0 %v7016
        %7912 = vmatpush.bf16.msra.mxu0 %v7008
        %7913 = vmatpush.bf16.msra.mxu0 %v7000
        %7914 = vmatpush.bf16.msra.mxu0 %v6992
        %7915 = vmatpush.bf16.msra.mxu0 %v6984
        %7916 = vmatmul.bf16.gmra.mxu0 %v4802
        %v7917 = vpop.f32.mrf.mxu0
        %v7918 = vadd.f32 %v7904, %v7917
        %v7919 = vpop.f32.mrf.mxu0
        %v7920 = vadd.f32 %v7906, %v7919
        %7921 = vdwg.mxu0
        %7922 = vmatpush.bf16.msra.mxu0 %v7104
        %7923 = vmatpush.bf16.msra.mxu0 %v7096
        %7924 = vmatpush.bf16.msra.mxu0 %v7088
        %7925 = vmatpush.bf16.msra.mxu0 %v7080
        %7926 = vmatpush.bf16.msra.mxu0 %v7072
        %7927 = vmatpush.bf16.msra.mxu0 %v7064
        %7928 = vmatpush.bf16.msra.mxu0 %v7056
        %7929 = vmatpush.bf16.msra.mxu0 %v7048
        %7930 = vmatmul.bf16.gmra.mxu0 %v4803
        %v7931 = vpop.f32.mrf.mxu0
        %v7932 = vadd.f32 %v7918, %v7931
        %v7933 = vpop.f32.mrf.mxu0
        %v7934 = vadd.f32 %v7920, %v7933
        %7935 = vdwg.mxu0
        %7936 = vmatpush.bf16.msra.mxu0 %v7168
        %7937 = vmatpush.bf16.msra.mxu0 %v7160
        %7938 = vmatpush.bf16.msra.mxu0 %v7152
        %7939 = vmatpush.bf16.msra.mxu0 %v7144
        %7940 = vmatpush.bf16.msra.mxu0 %v7136
        %7941 = vmatpush.bf16.msra.mxu0 %v7128
        %7942 = vmatpush.bf16.msra.mxu0 %v7120
        %7943 = vmatpush.bf16.msra.mxu0 %v7112
        %7944 = vmatmul.bf16.gmra.mxu0 %v4804
        %v7945 = vpop.f32.mrf.mxu0
        %v7946 = vadd.f32 %v7932, %v7945
        %v7947 = vpop.f32.mrf.mxu0
        %v7948 = vadd.f32 %v7934, %v7947
        %7949 = vdwg.mxu0
        %7950 = vmatpush.bf16.msra.mxu0 %v7232
        %7951 = vmatpush.bf16.msra.mxu0 %v7224
        %7952 = vmatpush.bf16.msra.mxu0 %v7216
        %7953 = vmatpush.bf16.msra.mxu0 %v7208
        %7954 = vmatpush.bf16.msra.mxu0 %v7200
        %7955 = vmatpush.bf16.msra.mxu0 %v7192
        %7956 = vmatpush.bf16.msra.mxu0 %v7184
        %7957 = vmatpush.bf16.msra.mxu0 %v7176
        %7958 = vmatmul.bf16.gmra.mxu0 %v4805
        %v7959 = vpop.f32.mrf.mxu0
        %v7960 = vadd.f32 %v7946, %v7959
        %v7961 = vpop.f32.mrf.mxu0
        %v7962 = vadd.f32 %v7948, %v7961
        %7963 = vdwg.mxu0
        %7964 = vmatpush.bf16.msra.mxu0 %v7296
        %7965 = vmatpush.bf16.msra.mxu0 %v7288
        %7966 = vmatpush.bf16.msra.mxu0 %v7280
        %7967 = vmatpush.bf16.msra.mxu0 %v7272
        %7968 = vmatpush.bf16.msra.mxu0 %v7264
        %7969 = vmatpush.bf16.msra.mxu0 %v7256
        %7970 = vmatpush.bf16.msra.mxu0 %v7248
        %7971 = vmatpush.bf16.msra.mxu0 %v7240
        %7972 = vmatmul.bf16.gmra.mxu0 %v4806
        %v7973 = vpop.f32.mrf.mxu0
        %v7974 = vadd.f32 %v7960, %v7973
        %v7975 = vpop.f32.mrf.mxu0
        %v7976 = vadd.f32 %v7962, %v7975
        %7977 = vdwg.mxu0
        %7978 = vmatpush.bf16.msra.mxu0 %v7360
        %7979 = vmatpush.bf16.msra.mxu0 %v7352
        %7980 = vmatpush.bf16.msra.mxu0 %v7344
        %7981 = vmatpush.bf16.msra.mxu0 %v7336
        %7982 = vmatpush.bf16.msra.mxu0 %v7328
        %7983 = vmatpush.bf16.msra.mxu0 %v7320
        %7984 = vmatpush.bf16.msra.mxu0 %v7312
        %7985 = vmatpush.bf16.msra.mxu0 %v7304
        %7986 = vmatmul.bf16.gmra.mxu0 %v4807
        %v7987 = vpop.f32.mrf.mxu0
        %v7988 = vadd.f32 %v7974, %v7987
        %v7989 = vpop.f32.mrf.mxu0
        %v7990 = vadd.f32 %v7976, %v7989
        %7991 = vdwg.mxu0
        %7992 = vmatpush.bf16.msra.mxu0 %v6913
        %7993 = vmatpush.bf16.msra.mxu0 %v6905
        %7994 = vmatpush.bf16.msra.mxu0 %v6897
        %7995 = vmatpush.bf16.msra.mxu0 %v6889
        %7996 = vmatpush.bf16.msra.mxu0 %v6881
        %7997 = vmatpush.bf16.msra.mxu0 %v6873
        %7998 = vmatpush.bf16.msra.mxu0 %v6865
        %7999 = vmatpush.bf16.msra.mxu0 %v6857
        %8000 = vmatmul.bf16.gmra.mxu0 %v4800
        %v8001 = vpop.f32.mrf.mxu0
        %v8002 = vadd.f32 0.0, %v8001
        %v8003 = vpop.f32.mrf.mxu0
        %v8004 = vadd.f32 0.0, %v8003
        %8005 = vdwg.mxu0
        %8006 = vmatpush.bf16.msra.mxu0 %v6977
        %8007 = vmatpush.bf16.msra.mxu0 %v6969
        %8008 = vmatpush.bf16.msra.mxu0 %v6961
        %8009 = vmatpush.bf16.msra.mxu0 %v6953
        %8010 = vmatpush.bf16.msra.mxu0 %v6945
        %8011 = vmatpush.bf16.msra.mxu0 %v6937
        %8012 = vmatpush.bf16.msra.mxu0 %v6929
        %8013 = vmatpush.bf16.msra.mxu0 %v6921
        %8014 = vmatmul.bf16.gmra.mxu0 %v4801
        %v8015 = vpop.f32.mrf.mxu0
        %v8016 = vadd.f32 %v8002, %v8015
        %v8017 = vpop.f32.mrf.mxu0
        %v8018 = vadd.f32 %v8004, %v8017
        %8019 = vdwg.mxu0
        %8020 = vmatpush.bf16.msra.mxu0 %v7041
        %8021 = vmatpush.bf16.msra.mxu0 %v7033
        %8022 = vmatpush.bf16.msra.mxu0 %v7025
        %8023 = vmatpush.bf16.msra.mxu0 %v7017
        %8024 = vmatpush.bf16.msra.mxu0 %v7009
        %8025 = vmatpush.bf16.msra.mxu0 %v7001
        %8026 = vmatpush.bf16.msra.mxu0 %v6993
        %8027 = vmatpush.bf16.msra.mxu0 %v6985
        %8028 = vmatmul.bf16.gmra.mxu0 %v4802
        %v8029 = vpop.f32.mrf.mxu0
        %v8030 = vadd.f32 %v8016, %v8029
        %v8031 = vpop.f32.mrf.mxu0
        %v8032 = vadd.f32 %v8018, %v8031
        %8033 = vdwg.mxu0
        %8034 = vmatpush.bf16.msra.mxu0 %v7105
        %8035 = vmatpush.bf16.msra.mxu0 %v7097
        %8036 = vmatpush.bf16.msra.mxu0 %v7089
        %8037 = vmatpush.bf16.msra.mxu0 %v7081
        %8038 = vmatpush.bf16.msra.mxu0 %v7073
        %8039 = vmatpush.bf16.msra.mxu0 %v7065
        %8040 = vmatpush.bf16.msra.mxu0 %v7057
        %8041 = vmatpush.bf16.msra.mxu0 %v7049
        %8042 = vmatmul.bf16.gmra.mxu0 %v4803
        %v8043 = vpop.f32.mrf.mxu0
        %v8044 = vadd.f32 %v8030, %v8043
        %v8045 = vpop.f32.mrf.mxu0
        %v8046 = vadd.f32 %v8032, %v8045
        %8047 = vdwg.mxu0
        %8048 = vmatpush.bf16.msra.mxu0 %v7169
        %8049 = vmatpush.bf16.msra.mxu0 %v7161
        %8050 = vmatpush.bf16.msra.mxu0 %v7153
        %8051 = vmatpush.bf16.msra.mxu0 %v7145
        %8052 = vmatpush.bf16.msra.mxu0 %v7137
        %8053 = vmatpush.bf16.msra.mxu0 %v7129
        %8054 = vmatpush.bf16.msra.mxu0 %v7121
        %8055 = vmatpush.bf16.msra.mxu0 %v7113
        %8056 = vmatmul.bf16.gmra.mxu0 %v4804
        %v8057 = vpop.f32.mrf.mxu0
        %v8058 = vadd.f32 %v8044, %v8057
        %v8059 = vpop.f32.mrf.mxu0
        %v8060 = vadd.f32 %v8046, %v8059
        %8061 = vdwg.mxu0
        %8062 = vmatpush.bf16.msra.mxu0 %v7233
        %8063 = vmatpush.bf16.msra.mxu0 %v7225
        %8064 = vmatpush.bf16.msra.mxu0 %v7217
        %8065 = vmatpush.bf16.msra.mxu0 %v7209
        %8066 = vmatpush.bf16.msra.mxu0 %v7201
        %8067 = vmatpush.bf16.msra.mxu0 %v7193
        %8068 = vmatpush.bf16.msra.mxu0 %v7185
        %8069 = vmatpush.bf16.msra.mxu0 %v7177
        %8070 = vmatmul.bf16.gmra.mxu0 %v4805
        %v8071 = vpop.f32.mrf.mxu0
        %v8072 = vadd.f32 %v8058, %v8071
        %v8073 = vpop.f32.mrf.mxu0
        %v8074 = vadd.f32 %v8060, %v8073
        %8075 = vdwg.mxu0
        %8076 = vmatpush.bf16.msra.mxu0 %v7297
        %8077 = vmatpush.bf16.msra.mxu0 %v7289
        %8078 = vmatpush.bf16.msra.mxu0 %v7281
        %8079 = vmatpush.bf16.msra.mxu0 %v7273
        %8080 = vmatpush.bf16.msra.mxu0 %v7265
        %8081 = vmatpush.bf16.msra.mxu0 %v7257
        %8082 = vmatpush.bf16.msra.mxu0 %v7249
        %8083 = vmatpush.bf16.msra.mxu0 %v7241
        %8084 = vmatmul.bf16.gmra.mxu0 %v4806
        %v8085 = vpop.f32.mrf.mxu0
        %v8086 = vadd.f32 %v8072, %v8085
        %v8087 = vpop.f32.mrf.mxu0
        %v8088 = vadd.f32 %v8074, %v8087
        %8089 = vdwg.mxu0
        %8090 = vmatpush.bf16.msra.mxu0 %v7361
        %8091 = vmatpush.bf16.msra.mxu0 %v7353
        %8092 = vmatpush.bf16.msra.mxu0 %v7345
        %8093 = vmatpush.bf16.msra.mxu0 %v7337
        %8094 = vmatpush.bf16.msra.mxu0 %v7329
        %8095 = vmatpush.bf16.msra.mxu0 %v7321
        %8096 = vmatpush.bf16.msra.mxu0 %v7313
        %8097 = vmatpush.bf16.msra.mxu0 %v7305
        %8098 = vmatmul.bf16.gmra.mxu0 %v4807
        %v8099 = vpop.f32.mrf.mxu0
        %v8100 = vadd.f32 %v8086, %v8099
        %v8101 = vpop.f32.mrf.mxu0
        %v8102 = vadd.f32 %v8088, %v8101
        %8103 = vdwg.mxu0
        %8104 = vmatpush.bf16.msra.mxu0 %v6914
        %8105 = vmatpush.bf16.msra.mxu0 %v6906
        %8106 = vmatpush.bf16.msra.mxu0 %v6898
        %8107 = vmatpush.bf16.msra.mxu0 %v6890
        %8108 = vmatpush.bf16.msra.mxu0 %v6882
        %8109 = vmatpush.bf16.msra.mxu0 %v6874
        %8110 = vmatpush.bf16.msra.mxu0 %v6866
        %8111 = vmatpush.bf16.msra.mxu0 %v6858
        %8112 = vmatmul.bf16.gmra.mxu0 %v4800
        %v8113 = vpop.f32.mrf.mxu0
        %v8114 = vadd.f32 0.0, %v8113
        %v8115 = vpop.f32.mrf.mxu0
        %v8116 = vadd.f32 0.0, %v8115
        %8117 = vdwg.mxu0
        %8118 = vmatpush.bf16.msra.mxu0 %v6978
        %8119 = vmatpush.bf16.msra.mxu0 %v6970
        %8120 = vmatpush.bf16.msra.mxu0 %v6962
        %8121 = vmatpush.bf16.msra.mxu0 %v6954
        %8122 = vmatpush.bf16.msra.mxu0 %v6946
        %8123 = vmatpush.bf16.msra.mxu0 %v6938
        %8124 = vmatpush.bf16.msra.mxu0 %v6930
        %8125 = vmatpush.bf16.msra.mxu0 %v6922
        %8126 = vmatmul.bf16.gmra.mxu0 %v4801
        %v8127 = vpop.f32.mrf.mxu0
        %v8128 = vadd.f32 %v8114, %v8127
        %v8129 = vpop.f32.mrf.mxu0
        %v8130 = vadd.f32 %v8116, %v8129
        %8131 = vdwg.mxu0
        %8132 = vmatpush.bf16.msra.mxu0 %v7042
        %8133 = vmatpush.bf16.msra.mxu0 %v7034
        %8134 = vmatpush.bf16.msra.mxu0 %v7026
        %8135 = vmatpush.bf16.msra.mxu0 %v7018
        %8136 = vmatpush.bf16.msra.mxu0 %v7010
        %8137 = vmatpush.bf16.msra.mxu0 %v7002
        %8138 = vmatpush.bf16.msra.mxu0 %v6994
        %8139 = vmatpush.bf16.msra.mxu0 %v6986
        %8140 = vmatmul.bf16.gmra.mxu0 %v4802
        %v8141 = vpop.f32.mrf.mxu0
        %v8142 = vadd.f32 %v8128, %v8141
        %v8143 = vpop.f32.mrf.mxu0
        %v8144 = vadd.f32 %v8130, %v8143
        %8145 = vdwg.mxu0
        %8146 = vmatpush.bf16.msra.mxu0 %v7106
        %8147 = vmatpush.bf16.msra.mxu0 %v7098
        %8148 = vmatpush.bf16.msra.mxu0 %v7090
        %8149 = vmatpush.bf16.msra.mxu0 %v7082
        %8150 = vmatpush.bf16.msra.mxu0 %v7074
        %8151 = vmatpush.bf16.msra.mxu0 %v7066
        %8152 = vmatpush.bf16.msra.mxu0 %v7058
        %8153 = vmatpush.bf16.msra.mxu0 %v7050
        %8154 = vmatmul.bf16.gmra.mxu0 %v4803
        %v8155 = vpop.f32.mrf.mxu0
        %v8156 = vadd.f32 %v8142, %v8155
        %v8157 = vpop.f32.mrf.mxu0
        %v8158 = vadd.f32 %v8144, %v8157
        %8159 = vdwg.mxu0
        %8160 = vmatpush.bf16.msra.mxu0 %v7170
        %8161 = vmatpush.bf16.msra.mxu0 %v7162
        %8162 = vmatpush.bf16.msra.mxu0 %v7154
        %8163 = vmatpush.bf16.msra.mxu0 %v7146
        %8164 = vmatpush.bf16.msra.mxu0 %v7138
        %8165 = vmatpush.bf16.msra.mxu0 %v7130
        %8166 = vmatpush.bf16.msra.mxu0 %v7122
        %8167 = vmatpush.bf16.msra.mxu0 %v7114
        %8168 = vmatmul.bf16.gmra.mxu0 %v4804
        %v8169 = vpop.f32.mrf.mxu0
        %v8170 = vadd.f32 %v8156, %v8169
        %v8171 = vpop.f32.mrf.mxu0
        %v8172 = vadd.f32 %v8158, %v8171
        %8173 = vdwg.mxu0
        %8174 = vmatpush.bf16.msra.mxu0 %v7234
        %8175 = vmatpush.bf16.msra.mxu0 %v7226
        %8176 = vmatpush.bf16.msra.mxu0 %v7218
        %8177 = vmatpush.bf16.msra.mxu0 %v7210
        %8178 = vmatpush.bf16.msra.mxu0 %v7202
        %8179 = vmatpush.bf16.msra.mxu0 %v7194
        %8180 = vmatpush.bf16.msra.mxu0 %v7186
        %8181 = vmatpush.bf16.msra.mxu0 %v7178
        %8182 = vmatmul.bf16.gmra.mxu0 %v4805
        %v8183 = vpop.f32.mrf.mxu0
        %v8184 = vadd.f32 %v8170, %v8183
        %v8185 = vpop.f32.mrf.mxu0
        %v8186 = vadd.f32 %v8172, %v8185
        %8187 = vdwg.mxu0
        %8188 = vmatpush.bf16.msra.mxu0 %v7298
        %8189 = vmatpush.bf16.msra.mxu0 %v7290
        %8190 = vmatpush.bf16.msra.mxu0 %v7282
        %8191 = vmatpush.bf16.msra.mxu0 %v7274
        %8192 = vmatpush.bf16.msra.mxu0 %v7266
        %8193 = vmatpush.bf16.msra.mxu0 %v7258
        %8194 = vmatpush.bf16.msra.mxu0 %v7250
        %8195 = vmatpush.bf16.msra.mxu0 %v7242
        %8196 = vmatmul.bf16.gmra.mxu0 %v4806
        %v8197 = vpop.f32.mrf.mxu0
        %v8198 = vadd.f32 %v8184, %v8197
        %v8199 = vpop.f32.mrf.mxu0
        %v8200 = vadd.f32 %v8186, %v8199
        %8201 = vdwg.mxu0
        %8202 = vmatpush.bf16.msra.mxu0 %v7362
        %8203 = vmatpush.bf16.msra.mxu0 %v7354
        %8204 = vmatpush.bf16.msra.mxu0 %v7346
        %8205 = vmatpush.bf16.msra.mxu0 %v7338
        %8206 = vmatpush.bf16.msra.mxu0 %v7330
        %8207 = vmatpush.bf16.msra.mxu0 %v7322
        %8208 = vmatpush.bf16.msra.mxu0 %v7314
        %8209 = vmatpush.bf16.msra.mxu0 %v7306
        %8210 = vmatmul.bf16.gmra.mxu0 %v4807
        %v8211 = vpop.f32.mrf.mxu0
        %v8212 = vadd.f32 %v8198, %v8211
        %v8213 = vpop.f32.mrf.mxu0
        %v8214 = vadd.f32 %v8200, %v8213
        %8215 = vdwg.mxu0
        %8216 = vmatpush.bf16.msra.mxu0 %v6915
        %8217 = vmatpush.bf16.msra.mxu0 %v6907
        %8218 = vmatpush.bf16.msra.mxu0 %v6899
        %8219 = vmatpush.bf16.msra.mxu0 %v6891
        %8220 = vmatpush.bf16.msra.mxu0 %v6883
        %8221 = vmatpush.bf16.msra.mxu0 %v6875
        %8222 = vmatpush.bf16.msra.mxu0 %v6867
        %8223 = vmatpush.bf16.msra.mxu0 %v6859
        %8224 = vmatmul.bf16.gmra.mxu0 %v4800
        %v8225 = vpop.f32.mrf.mxu0
        %v8226 = vadd.f32 0.0, %v8225
        %v8227 = vpop.f32.mrf.mxu0
        %v8228 = vadd.f32 0.0, %v8227
        %8229 = vdwg.mxu0
        %8230 = vmatpush.bf16.msra.mxu0 %v6979
        %8231 = vmatpush.bf16.msra.mxu0 %v6971
        %8232 = vmatpush.bf16.msra.mxu0 %v6963
        %8233 = vmatpush.bf16.msra.mxu0 %v6955
        %8234 = vmatpush.bf16.msra.mxu0 %v6947
        %8235 = vmatpush.bf16.msra.mxu0 %v6939
        %8236 = vmatpush.bf16.msra.mxu0 %v6931
        %8237 = vmatpush.bf16.msra.mxu0 %v6923
        %8238 = vmatmul.bf16.gmra.mxu0 %v4801
        %v8239 = vpop.f32.mrf.mxu0
        %v8240 = vadd.f32 %v8226, %v8239
        %v8241 = vpop.f32.mrf.mxu0
        %v8242 = vadd.f32 %v8228, %v8241
        %8243 = vdwg.mxu0
        %8244 = vmatpush.bf16.msra.mxu0 %v7043
        %8245 = vmatpush.bf16.msra.mxu0 %v7035
        %8246 = vmatpush.bf16.msra.mxu0 %v7027
        %8247 = vmatpush.bf16.msra.mxu0 %v7019
        %8248 = vmatpush.bf16.msra.mxu0 %v7011
        %8249 = vmatpush.bf16.msra.mxu0 %v7003
        %8250 = vmatpush.bf16.msra.mxu0 %v6995
        %8251 = vmatpush.bf16.msra.mxu0 %v6987
        %8252 = vmatmul.bf16.gmra.mxu0 %v4802
        %v8253 = vpop.f32.mrf.mxu0
        %v8254 = vadd.f32 %v8240, %v8253
        %v8255 = vpop.f32.mrf.mxu0
        %v8256 = vadd.f32 %v8242, %v8255
        %8257 = vdwg.mxu0
        %8258 = vmatpush.bf16.msra.mxu0 %v7107
        %8259 = vmatpush.bf16.msra.mxu0 %v7099
        %8260 = vmatpush.bf16.msra.mxu0 %v7091
        %8261 = vmatpush.bf16.msra.mxu0 %v7083
        %8262 = vmatpush.bf16.msra.mxu0 %v7075
        %8263 = vmatpush.bf16.msra.mxu0 %v7067
        %8264 = vmatpush.bf16.msra.mxu0 %v7059
        %8265 = vmatpush.bf16.msra.mxu0 %v7051
        %8266 = vmatmul.bf16.gmra.mxu0 %v4803
        %v8267 = vpop.f32.mrf.mxu0
        %v8268 = vadd.f32 %v8254, %v8267
        %v8269 = vpop.f32.mrf.mxu0
        %v8270 = vadd.f32 %v8256, %v8269
        %8271 = vdwg.mxu0
        %8272 = vmatpush.bf16.msra.mxu0 %v7171
        %8273 = vmatpush.bf16.msra.mxu0 %v7163
        %8274 = vmatpush.bf16.msra.mxu0 %v7155
        %8275 = vmatpush.bf16.msra.mxu0 %v7147
        %8276 = vmatpush.bf16.msra.mxu0 %v7139
        %8277 = vmatpush.bf16.msra.mxu0 %v7131
        %8278 = vmatpush.bf16.msra.mxu0 %v7123
        %8279 = vmatpush.bf16.msra.mxu0 %v7115
        %8280 = vmatmul.bf16.gmra.mxu0 %v4804
        %v8281 = vpop.f32.mrf.mxu0
        %v8282 = vadd.f32 %v8268, %v8281
        %v8283 = vpop.f32.mrf.mxu0
        %v8284 = vadd.f32 %v8270, %v8283
        %8285 = vdwg.mxu0
        %8286 = vmatpush.bf16.msra.mxu0 %v7235
        %8287 = vmatpush.bf16.msra.mxu0 %v7227
        %8288 = vmatpush.bf16.msra.mxu0 %v7219
        %8289 = vmatpush.bf16.msra.mxu0 %v7211
        %8290 = vmatpush.bf16.msra.mxu0 %v7203
        %8291 = vmatpush.bf16.msra.mxu0 %v7195
        %8292 = vmatpush.bf16.msra.mxu0 %v7187
        %8293 = vmatpush.bf16.msra.mxu0 %v7179
        %8294 = vmatmul.bf16.gmra.mxu0 %v4805
        %v8295 = vpop.f32.mrf.mxu0
        %v8296 = vadd.f32 %v8282, %v8295
        %v8297 = vpop.f32.mrf.mxu0
        %v8298 = vadd.f32 %v8284, %v8297
        %8299 = vdwg.mxu0
        %8300 = vmatpush.bf16.msra.mxu0 %v7299
        %8301 = vmatpush.bf16.msra.mxu0 %v7291
        %8302 = vmatpush.bf16.msra.mxu0 %v7283
        %8303 = vmatpush.bf16.msra.mxu0 %v7275
        %8304 = vmatpush.bf16.msra.mxu0 %v7267
        %8305 = vmatpush.bf16.msra.mxu0 %v7259
        %8306 = vmatpush.bf16.msra.mxu0 %v7251
        %8307 = vmatpush.bf16.msra.mxu0 %v7243
        %8308 = vmatmul.bf16.gmra.mxu0 %v4806
        %v8309 = vpop.f32.mrf.mxu0
        %v8310 = vadd.f32 %v8296, %v8309
        %v8311 = vpop.f32.mrf.mxu0
        %v8312 = vadd.f32 %v8298, %v8311
        %8313 = vdwg.mxu0
        %8314 = vmatpush.bf16.msra.mxu0 %v7363
        %8315 = vmatpush.bf16.msra.mxu0 %v7355
        %8316 = vmatpush.bf16.msra.mxu0 %v7347
        %8317 = vmatpush.bf16.msra.mxu0 %v7339
        %8318 = vmatpush.bf16.msra.mxu0 %v7331
        %8319 = vmatpush.bf16.msra.mxu0 %v7323
        %8320 = vmatpush.bf16.msra.mxu0 %v7315
        %8321 = vmatpush.bf16.msra.mxu0 %v7307
        %8322 = vmatmul.bf16.gmra.mxu0 %v4807
        %v8323 = vpop.f32.mrf.mxu0
        %v8324 = vadd.f32 %v8310, %v8323
        %v8325 = vpop.f32.mrf.mxu0
        %v8326 = vadd.f32 %v8312, %v8325
        %8327 = vdwg.mxu0
        %8328 = vmatpush.bf16.msra.mxu0 %v6916
        %8329 = vmatpush.bf16.msra.mxu0 %v6908
        %8330 = vmatpush.bf16.msra.mxu0 %v6900
        %8331 = vmatpush.bf16.msra.mxu0 %v6892
        %8332 = vmatpush.bf16.msra.mxu0 %v6884
        %8333 = vmatpush.bf16.msra.mxu0 %v6876
        %8334 = vmatpush.bf16.msra.mxu0 %v6868
        %8335 = vmatpush.bf16.msra.mxu0 %v6860
        %8336 = vmatmul.bf16.gmra.mxu0 %v4800
        %v8337 = vpop.f32.mrf.mxu0
        %v8338 = vadd.f32 0.0, %v8337
        %v8339 = vpop.f32.mrf.mxu0
        %v8340 = vadd.f32 0.0, %v8339
        %8341 = vdwg.mxu0
        %8342 = vmatpush.bf16.msra.mxu0 %v6980
        %8343 = vmatpush.bf16.msra.mxu0 %v6972
        %8344 = vmatpush.bf16.msra.mxu0 %v6964
        %8345 = vmatpush.bf16.msra.mxu0 %v6956
        %8346 = vmatpush.bf16.msra.mxu0 %v6948
        %8347 = vmatpush.bf16.msra.mxu0 %v6940
        %8348 = vmatpush.bf16.msra.mxu0 %v6932
        %8349 = vmatpush.bf16.msra.mxu0 %v6924
        %8350 = vmatmul.bf16.gmra.mxu0 %v4801
        %v8351 = vpop.f32.mrf.mxu0
        %v8352 = vadd.f32 %v8338, %v8351
        %v8353 = vpop.f32.mrf.mxu0
        %v8354 = vadd.f32 %v8340, %v8353
        %8355 = vdwg.mxu0
        %8356 = vmatpush.bf16.msra.mxu0 %v7044
        %8357 = vmatpush.bf16.msra.mxu0 %v7036
        %8358 = vmatpush.bf16.msra.mxu0 %v7028
        %8359 = vmatpush.bf16.msra.mxu0 %v7020
        %8360 = vmatpush.bf16.msra.mxu0 %v7012
        %8361 = vmatpush.bf16.msra.mxu0 %v7004
        %8362 = vmatpush.bf16.msra.mxu0 %v6996
        %8363 = vmatpush.bf16.msra.mxu0 %v6988
        %8364 = vmatmul.bf16.gmra.mxu0 %v4802
        %v8365 = vpop.f32.mrf.mxu0
        %v8366 = vadd.f32 %v8352, %v8365
        %v8367 = vpop.f32.mrf.mxu0
        %v8368 = vadd.f32 %v8354, %v8367
        %8369 = vdwg.mxu0
        %8370 = vmatpush.bf16.msra.mxu0 %v7108
        %8371 = vmatpush.bf16.msra.mxu0 %v7100
        %8372 = vmatpush.bf16.msra.mxu0 %v7092
        %8373 = vmatpush.bf16.msra.mxu0 %v7084
        %8374 = vmatpush.bf16.msra.mxu0 %v7076
        %8375 = vmatpush.bf16.msra.mxu0 %v7068
        %8376 = vmatpush.bf16.msra.mxu0 %v7060
        %8377 = vmatpush.bf16.msra.mxu0 %v7052
        %8378 = vmatmul.bf16.gmra.mxu0 %v4803
        %v8379 = vpop.f32.mrf.mxu0
        %v8380 = vadd.f32 %v8366, %v8379
        %v8381 = vpop.f32.mrf.mxu0
        %v8382 = vadd.f32 %v8368, %v8381
        %8383 = vdwg.mxu0
        %8384 = vmatpush.bf16.msra.mxu0 %v7172
        %8385 = vmatpush.bf16.msra.mxu0 %v7164
        %8386 = vmatpush.bf16.msra.mxu0 %v7156
        %8387 = vmatpush.bf16.msra.mxu0 %v7148
        %8388 = vmatpush.bf16.msra.mxu0 %v7140
        %8389 = vmatpush.bf16.msra.mxu0 %v7132
        %8390 = vmatpush.bf16.msra.mxu0 %v7124
        %8391 = vmatpush.bf16.msra.mxu0 %v7116
        %8392 = vmatmul.bf16.gmra.mxu0 %v4804
        %v8393 = vpop.f32.mrf.mxu0
        %v8394 = vadd.f32 %v8380, %v8393
        %v8395 = vpop.f32.mrf.mxu0
        %v8396 = vadd.f32 %v8382, %v8395
        %8397 = vdwg.mxu0
        %8398 = vmatpush.bf16.msra.mxu0 %v7236
        %8399 = vmatpush.bf16.msra.mxu0 %v7228
        %8400 = vmatpush.bf16.msra.mxu0 %v7220
        %8401 = vmatpush.bf16.msra.mxu0 %v7212
        %8402 = vmatpush.bf16.msra.mxu0 %v7204
        %8403 = vmatpush.bf16.msra.mxu0 %v7196
        %8404 = vmatpush.bf16.msra.mxu0 %v7188
        %8405 = vmatpush.bf16.msra.mxu0 %v7180
        %8406 = vmatmul.bf16.gmra.mxu0 %v4805
        %v8407 = vpop.f32.mrf.mxu0
        %v8408 = vadd.f32 %v8394, %v8407
        %v8409 = vpop.f32.mrf.mxu0
        %v8410 = vadd.f32 %v8396, %v8409
        %8411 = vdwg.mxu0
        %8412 = vmatpush.bf16.msra.mxu0 %v7300
        %8413 = vmatpush.bf16.msra.mxu0 %v7292
        %8414 = vmatpush.bf16.msra.mxu0 %v7284
        %8415 = vmatpush.bf16.msra.mxu0 %v7276
        %8416 = vmatpush.bf16.msra.mxu0 %v7268
        %8417 = vmatpush.bf16.msra.mxu0 %v7260
        %8418 = vmatpush.bf16.msra.mxu0 %v7252
        %8419 = vmatpush.bf16.msra.mxu0 %v7244
        %8420 = vmatmul.bf16.gmra.mxu0 %v4806
        %v8421 = vpop.f32.mrf.mxu0
        %v8422 = vadd.f32 %v8408, %v8421
        %v8423 = vpop.f32.mrf.mxu0
        %v8424 = vadd.f32 %v8410, %v8423
        %8425 = vdwg.mxu0
        %8426 = vmatpush.bf16.msra.mxu0 %v7364
        %8427 = vmatpush.bf16.msra.mxu0 %v7356
        %8428 = vmatpush.bf16.msra.mxu0 %v7348
        %8429 = vmatpush.bf16.msra.mxu0 %v7340
        %8430 = vmatpush.bf16.msra.mxu0 %v7332
        %8431 = vmatpush.bf16.msra.mxu0 %v7324
        %8432 = vmatpush.bf16.msra.mxu0 %v7316
        %8433 = vmatpush.bf16.msra.mxu0 %v7308
        %8434 = vmatmul.bf16.gmra.mxu0 %v4807
        %v8435 = vpop.f32.mrf.mxu0
        %v8436 = vadd.f32 %v8422, %v8435
        %v8437 = vpop.f32.mrf.mxu0
        %v8438 = vadd.f32 %v8424, %v8437
        %8439 = vdwg.mxu0
        %8440 = vmatpush.bf16.msra.mxu0 %v6917
        %8441 = vmatpush.bf16.msra.mxu0 %v6909
        %8442 = vmatpush.bf16.msra.mxu0 %v6901
        %8443 = vmatpush.bf16.msra.mxu0 %v6893
        %8444 = vmatpush.bf16.msra.mxu0 %v6885
        %8445 = vmatpush.bf16.msra.mxu0 %v6877
        %8446 = vmatpush.bf16.msra.mxu0 %v6869
        %8447 = vmatpush.bf16.msra.mxu0 %v6861
        %8448 = vmatmul.bf16.gmra.mxu0 %v4800
        %v8449 = vpop.f32.mrf.mxu0
        %v8450 = vadd.f32 0.0, %v8449
        %v8451 = vpop.f32.mrf.mxu0
        %v8452 = vadd.f32 0.0, %v8451
        %8453 = vdwg.mxu0
        %8454 = vmatpush.bf16.msra.mxu0 %v6981
        %8455 = vmatpush.bf16.msra.mxu0 %v6973
        %8456 = vmatpush.bf16.msra.mxu0 %v6965
        %8457 = vmatpush.bf16.msra.mxu0 %v6957
        %8458 = vmatpush.bf16.msra.mxu0 %v6949
        %8459 = vmatpush.bf16.msra.mxu0 %v6941
        %8460 = vmatpush.bf16.msra.mxu0 %v6933
        %8461 = vmatpush.bf16.msra.mxu0 %v6925
        %8462 = vmatmul.bf16.gmra.mxu0 %v4801
        %v8463 = vpop.f32.mrf.mxu0
        %v8464 = vadd.f32 %v8450, %v8463
        %v8465 = vpop.f32.mrf.mxu0
        %v8466 = vadd.f32 %v8452, %v8465
        %8467 = vdwg.mxu0
        %8468 = vmatpush.bf16.msra.mxu0 %v7045
        %8469 = vmatpush.bf16.msra.mxu0 %v7037
        %8470 = vmatpush.bf16.msra.mxu0 %v7029
        %8471 = vmatpush.bf16.msra.mxu0 %v7021
        %8472 = vmatpush.bf16.msra.mxu0 %v7013
        %8473 = vmatpush.bf16.msra.mxu0 %v7005
        %8474 = vmatpush.bf16.msra.mxu0 %v6997
        %8475 = vmatpush.bf16.msra.mxu0 %v6989
        %8476 = vmatmul.bf16.gmra.mxu0 %v4802
        %v8477 = vpop.f32.mrf.mxu0
        %v8478 = vadd.f32 %v8464, %v8477
        %v8479 = vpop.f32.mrf.mxu0
        %v8480 = vadd.f32 %v8466, %v8479
        %8481 = vdwg.mxu0
        %8482 = vmatpush.bf16.msra.mxu0 %v7109
        %8483 = vmatpush.bf16.msra.mxu0 %v7101
        %8484 = vmatpush.bf16.msra.mxu0 %v7093
        %8485 = vmatpush.bf16.msra.mxu0 %v7085
        %8486 = vmatpush.bf16.msra.mxu0 %v7077
        %8487 = vmatpush.bf16.msra.mxu0 %v7069
        %8488 = vmatpush.bf16.msra.mxu0 %v7061
        %8489 = vmatpush.bf16.msra.mxu0 %v7053
        %8490 = vmatmul.bf16.gmra.mxu0 %v4803
        %v8491 = vpop.f32.mrf.mxu0
        %v8492 = vadd.f32 %v8478, %v8491
        %v8493 = vpop.f32.mrf.mxu0
        %v8494 = vadd.f32 %v8480, %v8493
        %8495 = vdwg.mxu0
        %8496 = vmatpush.bf16.msra.mxu0 %v7173
        %8497 = vmatpush.bf16.msra.mxu0 %v7165
        %8498 = vmatpush.bf16.msra.mxu0 %v7157
        %8499 = vmatpush.bf16.msra.mxu0 %v7149
        %8500 = vmatpush.bf16.msra.mxu0 %v7141
        %8501 = vmatpush.bf16.msra.mxu0 %v7133
        %8502 = vmatpush.bf16.msra.mxu0 %v7125
        %8503 = vmatpush.bf16.msra.mxu0 %v7117
        %8504 = vmatmul.bf16.gmra.mxu0 %v4804
        %v8505 = vpop.f32.mrf.mxu0
        %v8506 = vadd.f32 %v8492, %v8505
        %v8507 = vpop.f32.mrf.mxu0
        %v8508 = vadd.f32 %v8494, %v8507
        %8509 = vdwg.mxu0
        %8510 = vmatpush.bf16.msra.mxu0 %v7237
        %8511 = vmatpush.bf16.msra.mxu0 %v7229
        %8512 = vmatpush.bf16.msra.mxu0 %v7221
        %8513 = vmatpush.bf16.msra.mxu0 %v7213
        %8514 = vmatpush.bf16.msra.mxu0 %v7205
        %8515 = vmatpush.bf16.msra.mxu0 %v7197
        %8516 = vmatpush.bf16.msra.mxu0 %v7189
        %8517 = vmatpush.bf16.msra.mxu0 %v7181
        %8518 = vmatmul.bf16.gmra.mxu0 %v4805
        %v8519 = vpop.f32.mrf.mxu0
        %v8520 = vadd.f32 %v8506, %v8519
        %v8521 = vpop.f32.mrf.mxu0
        %v8522 = vadd.f32 %v8508, %v8521
        %8523 = vdwg.mxu0
        %8524 = vmatpush.bf16.msra.mxu0 %v7301
        %8525 = vmatpush.bf16.msra.mxu0 %v7293
        %8526 = vmatpush.bf16.msra.mxu0 %v7285
        %8527 = vmatpush.bf16.msra.mxu0 %v7277
        %8528 = vmatpush.bf16.msra.mxu0 %v7269
        %8529 = vmatpush.bf16.msra.mxu0 %v7261
        %8530 = vmatpush.bf16.msra.mxu0 %v7253
        %8531 = vmatpush.bf16.msra.mxu0 %v7245
        %8532 = vmatmul.bf16.gmra.mxu0 %v4806
        %v8533 = vpop.f32.mrf.mxu0
        %v8534 = vadd.f32 %v8520, %v8533
        %v8535 = vpop.f32.mrf.mxu0
        %v8536 = vadd.f32 %v8522, %v8535
        %8537 = vdwg.mxu0
        %8538 = vmatpush.bf16.msra.mxu0 %v7365
        %8539 = vmatpush.bf16.msra.mxu0 %v7357
        %8540 = vmatpush.bf16.msra.mxu0 %v7349
        %8541 = vmatpush.bf16.msra.mxu0 %v7341
        %8542 = vmatpush.bf16.msra.mxu0 %v7333
        %8543 = vmatpush.bf16.msra.mxu0 %v7325
        %8544 = vmatpush.bf16.msra.mxu0 %v7317
        %8545 = vmatpush.bf16.msra.mxu0 %v7309
        %8546 = vmatmul.bf16.gmra.mxu0 %v4807
        %v8547 = vpop.f32.mrf.mxu0
        %v8548 = vadd.f32 %v8534, %v8547
        %v8549 = vpop.f32.mrf.mxu0
        %v8550 = vadd.f32 %v8536, %v8549
        %8551 = vdwg.mxu0
        %8552 = vmatpush.bf16.msra.mxu0 %v6918
        %8553 = vmatpush.bf16.msra.mxu0 %v6910
        %8554 = vmatpush.bf16.msra.mxu0 %v6902
        %8555 = vmatpush.bf16.msra.mxu0 %v6894
        %8556 = vmatpush.bf16.msra.mxu0 %v6886
        %8557 = vmatpush.bf16.msra.mxu0 %v6878
        %8558 = vmatpush.bf16.msra.mxu0 %v6870
        %8559 = vmatpush.bf16.msra.mxu0 %v6862
        %8560 = vmatmul.bf16.gmra.mxu0 %v4800
        %v8561 = vpop.f32.mrf.mxu0
        %v8562 = vadd.f32 0.0, %v8561
        %v8563 = vpop.f32.mrf.mxu0
        %v8564 = vadd.f32 0.0, %v8563
        %8565 = vdwg.mxu0
        %8566 = vmatpush.bf16.msra.mxu0 %v6982
        %8567 = vmatpush.bf16.msra.mxu0 %v6974
        %8568 = vmatpush.bf16.msra.mxu0 %v6966
        %8569 = vmatpush.bf16.msra.mxu0 %v6958
        %8570 = vmatpush.bf16.msra.mxu0 %v6950
        %8571 = vmatpush.bf16.msra.mxu0 %v6942
        %8572 = vmatpush.bf16.msra.mxu0 %v6934
        %8573 = vmatpush.bf16.msra.mxu0 %v6926
        %8574 = vmatmul.bf16.gmra.mxu0 %v4801
        %v8575 = vpop.f32.mrf.mxu0
        %v8576 = vadd.f32 %v8562, %v8575
        %v8577 = vpop.f32.mrf.mxu0
        %v8578 = vadd.f32 %v8564, %v8577
        %8579 = vdwg.mxu0
        %8580 = vmatpush.bf16.msra.mxu0 %v7046
        %8581 = vmatpush.bf16.msra.mxu0 %v7038
        %8582 = vmatpush.bf16.msra.mxu0 %v7030
        %8583 = vmatpush.bf16.msra.mxu0 %v7022
        %8584 = vmatpush.bf16.msra.mxu0 %v7014
        %8585 = vmatpush.bf16.msra.mxu0 %v7006
        %8586 = vmatpush.bf16.msra.mxu0 %v6998
        %8587 = vmatpush.bf16.msra.mxu0 %v6990
        %8588 = vmatmul.bf16.gmra.mxu0 %v4802
        %v8589 = vpop.f32.mrf.mxu0
        %v8590 = vadd.f32 %v8576, %v8589
        %v8591 = vpop.f32.mrf.mxu0
        %v8592 = vadd.f32 %v8578, %v8591
        %8593 = vdwg.mxu0
        %8594 = vmatpush.bf16.msra.mxu0 %v7110
        %8595 = vmatpush.bf16.msra.mxu0 %v7102
        %8596 = vmatpush.bf16.msra.mxu0 %v7094
        %8597 = vmatpush.bf16.msra.mxu0 %v7086
        %8598 = vmatpush.bf16.msra.mxu0 %v7078
        %8599 = vmatpush.bf16.msra.mxu0 %v7070
        %8600 = vmatpush.bf16.msra.mxu0 %v7062
        %8601 = vmatpush.bf16.msra.mxu0 %v7054
        %8602 = vmatmul.bf16.gmra.mxu0 %v4803
        %v8603 = vpop.f32.mrf.mxu0
        %v8604 = vadd.f32 %v8590, %v8603
        %v8605 = vpop.f32.mrf.mxu0
        %v8606 = vadd.f32 %v8592, %v8605
        %8607 = vdwg.mxu0
        %8608 = vmatpush.bf16.msra.mxu0 %v7174
        %8609 = vmatpush.bf16.msra.mxu0 %v7166
        %8610 = vmatpush.bf16.msra.mxu0 %v7158
        %8611 = vmatpush.bf16.msra.mxu0 %v7150
        %8612 = vmatpush.bf16.msra.mxu0 %v7142
        %8613 = vmatpush.bf16.msra.mxu0 %v7134
        %8614 = vmatpush.bf16.msra.mxu0 %v7126
        %8615 = vmatpush.bf16.msra.mxu0 %v7118
        %8616 = vmatmul.bf16.gmra.mxu0 %v4804
        %v8617 = vpop.f32.mrf.mxu0
        %v8618 = vadd.f32 %v8604, %v8617
        %v8619 = vpop.f32.mrf.mxu0
        %v8620 = vadd.f32 %v8606, %v8619
        %8621 = vdwg.mxu0
        %8622 = vmatpush.bf16.msra.mxu0 %v7238
        %8623 = vmatpush.bf16.msra.mxu0 %v7230
        %8624 = vmatpush.bf16.msra.mxu0 %v7222
        %8625 = vmatpush.bf16.msra.mxu0 %v7214
        %8626 = vmatpush.bf16.msra.mxu0 %v7206
        %8627 = vmatpush.bf16.msra.mxu0 %v7198
        %8628 = vmatpush.bf16.msra.mxu0 %v7190
        %8629 = vmatpush.bf16.msra.mxu0 %v7182
        %8630 = vmatmul.bf16.gmra.mxu0 %v4805
        %v8631 = vpop.f32.mrf.mxu0
        %v8632 = vadd.f32 %v8618, %v8631
        %v8633 = vpop.f32.mrf.mxu0
        %v8634 = vadd.f32 %v8620, %v8633
        %8635 = vdwg.mxu0
        %8636 = vmatpush.bf16.msra.mxu0 %v7302
        %8637 = vmatpush.bf16.msra.mxu0 %v7294
        %8638 = vmatpush.bf16.msra.mxu0 %v7286
        %8639 = vmatpush.bf16.msra.mxu0 %v7278
        %8640 = vmatpush.bf16.msra.mxu0 %v7270
        %8641 = vmatpush.bf16.msra.mxu0 %v7262
        %8642 = vmatpush.bf16.msra.mxu0 %v7254
        %8643 = vmatpush.bf16.msra.mxu0 %v7246
        %8644 = vmatmul.bf16.gmra.mxu0 %v4806
        %v8645 = vpop.f32.mrf.mxu0
        %v8646 = vadd.f32 %v8632, %v8645
        %v8647 = vpop.f32.mrf.mxu0
        %v8648 = vadd.f32 %v8634, %v8647
        %8649 = vdwg.mxu0
        %8650 = vmatpush.bf16.msra.mxu0 %v7366
        %8651 = vmatpush.bf16.msra.mxu0 %v7358
        %8652 = vmatpush.bf16.msra.mxu0 %v7350
        %8653 = vmatpush.bf16.msra.mxu0 %v7342
        %8654 = vmatpush.bf16.msra.mxu0 %v7334
        %8655 = vmatpush.bf16.msra.mxu0 %v7326
        %8656 = vmatpush.bf16.msra.mxu0 %v7318
        %8657 = vmatpush.bf16.msra.mxu0 %v7310
        %8658 = vmatmul.bf16.gmra.mxu0 %v4807
        %v8659 = vpop.f32.mrf.mxu0
        %v8660 = vadd.f32 %v8646, %v8659
        %v8661 = vpop.f32.mrf.mxu0
        %v8662 = vadd.f32 %v8648, %v8661
        %8663 = vdwg.mxu0
        %8664 = vmatpush.bf16.msra.mxu0 %v6919
        %8665 = vmatpush.bf16.msra.mxu0 %v6911
        %8666 = vmatpush.bf16.msra.mxu0 %v6903
        %8667 = vmatpush.bf16.msra.mxu0 %v6895
        %8668 = vmatpush.bf16.msra.mxu0 %v6887
        %8669 = vmatpush.bf16.msra.mxu0 %v6879
        %8670 = vmatpush.bf16.msra.mxu0 %v6871
        %8671 = vmatpush.bf16.msra.mxu0 %v6863
        %8672 = vmatmul.bf16.gmra.mxu0 %v4800
        %v8673 = vpop.f32.mrf.mxu0
        %v8674 = vadd.f32 0.0, %v8673
        %v8675 = vpop.f32.mrf.mxu0
        %v8676 = vadd.f32 0.0, %v8675
        %8677 = vdwg.mxu0
        %8678 = vmatpush.bf16.msra.mxu0 %v6983
        %8679 = vmatpush.bf16.msra.mxu0 %v6975
        %8680 = vmatpush.bf16.msra.mxu0 %v6967
        %8681 = vmatpush.bf16.msra.mxu0 %v6959
        %8682 = vmatpush.bf16.msra.mxu0 %v6951
        %8683 = vmatpush.bf16.msra.mxu0 %v6943
        %8684 = vmatpush.bf16.msra.mxu0 %v6935
        %8685 = vmatpush.bf16.msra.mxu0 %v6927
        %8686 = vmatmul.bf16.gmra.mxu0 %v4801
        %v8687 = vpop.f32.mrf.mxu0
        %v8688 = vadd.f32 %v8674, %v8687
        %v8689 = vpop.f32.mrf.mxu0
        %v8690 = vadd.f32 %v8676, %v8689
        %8691 = vdwg.mxu0
        %8692 = vmatpush.bf16.msra.mxu0 %v7047
        %8693 = vmatpush.bf16.msra.mxu0 %v7039
        %8694 = vmatpush.bf16.msra.mxu0 %v7031
        %8695 = vmatpush.bf16.msra.mxu0 %v7023
        %8696 = vmatpush.bf16.msra.mxu0 %v7015
        %8697 = vmatpush.bf16.msra.mxu0 %v7007
        %8698 = vmatpush.bf16.msra.mxu0 %v6999
        %8699 = vmatpush.bf16.msra.mxu0 %v6991
        %8700 = vmatmul.bf16.gmra.mxu0 %v4802
        %v8701 = vpop.f32.mrf.mxu0
        %v8702 = vadd.f32 %v8688, %v8701
        %v8703 = vpop.f32.mrf.mxu0
        %v8704 = vadd.f32 %v8690, %v8703
        %8705 = vdwg.mxu0
        %8706 = vmatpush.bf16.msra.mxu0 %v7111
        %8707 = vmatpush.bf16.msra.mxu0 %v7103
        %8708 = vmatpush.bf16.msra.mxu0 %v7095
        %8709 = vmatpush.bf16.msra.mxu0 %v7087
        %8710 = vmatpush.bf16.msra.mxu0 %v7079
        %8711 = vmatpush.bf16.msra.mxu0 %v7071
        %8712 = vmatpush.bf16.msra.mxu0 %v7063
        %8713 = vmatpush.bf16.msra.mxu0 %v7055
        %8714 = vmatmul.bf16.gmra.mxu0 %v4803
        %v8715 = vpop.f32.mrf.mxu0
        %v8716 = vadd.f32 %v8702, %v8715
        %v8717 = vpop.f32.mrf.mxu0
        %v8718 = vadd.f32 %v8704, %v8717
        %8719 = vdwg.mxu0
        %8720 = vmatpush.bf16.msra.mxu0 %v7175
        %8721 = vmatpush.bf16.msra.mxu0 %v7167
        %8722 = vmatpush.bf16.msra.mxu0 %v7159
        %8723 = vmatpush.bf16.msra.mxu0 %v7151
        %8724 = vmatpush.bf16.msra.mxu0 %v7143
        %8725 = vmatpush.bf16.msra.mxu0 %v7135
        %8726 = vmatpush.bf16.msra.mxu0 %v7127
        %8727 = vmatpush.bf16.msra.mxu0 %v7119
        %8728 = vmatmul.bf16.gmra.mxu0 %v4804
        %v8729 = vpop.f32.mrf.mxu0
        %v8730 = vadd.f32 %v8716, %v8729
        %v8731 = vpop.f32.mrf.mxu0
        %v8732 = vadd.f32 %v8718, %v8731
        %8733 = vdwg.mxu0
        %8734 = vmatpush.bf16.msra.mxu0 %v7239
        %8735 = vmatpush.bf16.msra.mxu0 %v7231
        %8736 = vmatpush.bf16.msra.mxu0 %v7223
        %8737 = vmatpush.bf16.msra.mxu0 %v7215
        %8738 = vmatpush.bf16.msra.mxu0 %v7207
        %8739 = vmatpush.bf16.msra.mxu0 %v7199
        %8740 = vmatpush.bf16.msra.mxu0 %v7191
        %8741 = vmatpush.bf16.msra.mxu0 %v7183
        %8742 = vmatmul.bf16.gmra.mxu0 %v4805
        %v8743 = vpop.f32.mrf.mxu0
        %v8744 = vadd.f32 %v8730, %v8743
        %v8745 = vpop.f32.mrf.mxu0
        %v8746 = vadd.f32 %v8732, %v8745
        %8747 = vdwg.mxu0
        %8748 = vmatpush.bf16.msra.mxu0 %v7303
        %8749 = vmatpush.bf16.msra.mxu0 %v7295
        %8750 = vmatpush.bf16.msra.mxu0 %v7287
        %8751 = vmatpush.bf16.msra.mxu0 %v7279
        %8752 = vmatpush.bf16.msra.mxu0 %v7271
        %8753 = vmatpush.bf16.msra.mxu0 %v7263
        %8754 = vmatpush.bf16.msra.mxu0 %v7255
        %8755 = vmatpush.bf16.msra.mxu0 %v7247
        %8756 = vmatmul.bf16.gmra.mxu0 %v4806
        %v8757 = vpop.f32.mrf.mxu0
        %v8758 = vadd.f32 %v8744, %v8757
        %v8759 = vpop.f32.mrf.mxu0
        %v8760 = vadd.f32 %v8746, %v8759
        %8761 = vdwg.mxu0
        %8762 = vmatpush.bf16.msra.mxu0 %v7367
        %8763 = vmatpush.bf16.msra.mxu0 %v7359
        %8764 = vmatpush.bf16.msra.mxu0 %v7351
        %8765 = vmatpush.bf16.msra.mxu0 %v7343
        %8766 = vmatpush.bf16.msra.mxu0 %v7335
        %8767 = vmatpush.bf16.msra.mxu0 %v7327
        %8768 = vmatpush.bf16.msra.mxu0 %v7319
        %8769 = vmatpush.bf16.msra.mxu0 %v7311
        %8770 = vmatmul.bf16.gmra.mxu0 %v4807
        %v8771 = vpop.f32.mrf.mxu0
        %v8772 = vadd.f32 %v8758, %v8771
        %v8773 = vpop.f32.mrf.mxu0
        %v8774 = vadd.f32 %v8760, %v8773
        %8775 = vdwg.mxu0
        %v8776 = vld [vmem:[%s439] sm:$0xff]
        %v8777 = vld [vmem:[%s449] sm:$0xff]
        %v8778 = vld [vmem:[#allocation12] sm:$0xff]
        %v8779 = vld [vmem:[#allocation12 + $0x8] sm:$0xff]
        %v8781 = vperm.slane %v8776, 0
        %v8782 = vperm.slane %v8776, 1
        %v8783 = vperm.slane %v8776, 2
        %v8784 = vperm.slane %v8776, 3
        %v8785 = vperm.slane %v8776, 4
        %v8786 = vperm.slane %v8776, 5
        %v8787 = vperm.slane %v8776, 6
        %v8788 = vperm.slane %v8776, 7
        %v8797 = vmul.f32 %v7988, %v8781
        %v8798 = vmul.f32 %v8100, %v8782
        %v8799 = vmul.f32 %v8212, %v8783
        %v8800 = vmul.f32 %v8324, %v8784
        %v8801 = vmul.f32 %v8436, %v8785
        %v8802 = vmul.f32 %v8548, %v8786
        %v8803 = vmul.f32 %v8660, %v8787
        %v8804 = vmul.f32 %v8772, %v8788
        %v8805 = vmul.f32 %v7990, %v8781
        %v8806 = vmul.f32 %v8102, %v8782
        %v8807 = vmul.f32 %v8214, %v8783
        %v8808 = vmul.f32 %v8326, %v8784
        %v8809 = vmul.f32 %v8438, %v8785
        %v8810 = vmul.f32 %v8550, %v8786
        %v8811 = vmul.f32 %v8662, %v8787
        %v8812 = vmul.f32 %v8774, %v8788
        %v8813 = vadd.f32 %v8797, %v8798
        %v8814 = vadd.f32 %v8813, %v8799
        %v8815 = vadd.f32 %v8814, %v8800
        %v8816 = vadd.f32 %v8815, %v8801
        %v8817 = vadd.f32 %v8816, %v8802
        %v8818 = vadd.f32 %v8817, %v8803
        %v8819 = vadd.f32 %v8818, %v8804
        %8820 = vadd.xlane.f32.xlu0 %v8819
        %v8821 = vpop.xlane.xlu0 %8820
        %v8822 = vadd.f32 %v8805, %v8806
        %v8823 = vadd.f32 %v8822, %v8807
        %v8824 = vadd.f32 %v8823, %v8808
        %v8825 = vadd.f32 %v8824, %v8809
        %v8826 = vadd.f32 %v8825, %v8810
        %v8827 = vadd.f32 %v8826, %v8811
        %v8828 = vadd.f32 %v8827, %v8812
        %8829 = vadd.xlane.f32.xlu0 %v8828
        %v8830 = vpop.xlane.xlu0 %8829
        %v8832 = vperm.slane %v8777, 0
        %v8833 = vperm.slane %v8777, 1
        %v8834 = vperm.slane %v8777, 2
        %v8835 = vperm.slane %v8777, 3
        %v8836 = vperm.slane %v8777, 4
        %v8837 = vperm.slane %v8777, 5
        %v8838 = vperm.slane %v8777, 6
        %v8839 = vperm.slane %v8777, 7
        %v8848 = vmul.f32 %v7988, %v8832
        %v8849 = vmul.f32 %v8100, %v8833
        %v8850 = vmul.f32 %v8212, %v8834
        %v8851 = vmul.f32 %v8324, %v8835
        %v8852 = vmul.f32 %v8436, %v8836
        %v8853 = vmul.f32 %v8548, %v8837
        %v8854 = vmul.f32 %v8660, %v8838
        %v8855 = vmul.f32 %v8772, %v8839
        %v8856 = vmul.f32 %v7990, %v8832
        %v8857 = vmul.f32 %v8102, %v8833
        %v8858 = vmul.f32 %v8214, %v8834
        %v8859 = vmul.f32 %v8326, %v8835
        %v8860 = vmul.f32 %v8438, %v8836
        %v8861 = vmul.f32 %v8550, %v8837
        %v8862 = vmul.f32 %v8662, %v8838
        %v8863 = vmul.f32 %v8774, %v8839
        %v8864 = vadd.f32 %v8848, %v8849
        %v8865 = vadd.f32 %v8864, %v8850
        %v8866 = vadd.f32 %v8865, %v8851
        %v8867 = vadd.f32 %v8866, %v8852
        %v8868 = vadd.f32 %v8867, %v8853
        %v8869 = vadd.f32 %v8868, %v8854
        %v8870 = vadd.f32 %v8869, %v8855
        %8871 = vadd.xlane.f32.xlu0 %v8870
        %v8872 = vpop.xlane.xlu0 %8871
        %v8873 = vadd.f32 %v8856, %v8857
        %v8874 = vadd.f32 %v8873, %v8858
        %v8875 = vadd.f32 %v8874, %v8859
        %v8876 = vadd.f32 %v8875, %v8860
        %v8877 = vadd.f32 %v8876, %v8861
        %v8878 = vadd.f32 %v8877, %v8862
        %v8879 = vadd.f32 %v8878, %v8863
        %8880 = vadd.xlane.f32.xlu0 %v8879
        %v8881 = vpop.xlane.xlu0 %8880
        %8882 = vxpose.xlu0.b32.start [1/16] %v8821, 128
        %8883 = vxpose.xlu0.b32.cont [2/16] %v8830, 128
        %8884 = vxpose.xlu0.b32.cont [3/16] 0.0, 128
        %8885 = vxpose.xlu0.b32.cont [4/16] 0.0, 128
        %8886 = vxpose.xlu0.b32.cont [5/16] 0.0, 128
        %8887 = vxpose.xlu0.b32.cont [6/16] 0.0, 128
        %8888 = vxpose.xlu0.b32.cont [7/16] 0.0, 128
        %8889 = vxpose.xlu0.b32.cont [8/16] 0.0, 128
        %8890 = vxpose.xlu0.b32.cont [9/16] 0.0, 128
        %8891 = vxpose.xlu0.b32.cont [10/16] 0.0, 128
        %8892 = vxpose.xlu0.b32.cont [11/16] 0.0, 128
        %8893 = vxpose.xlu0.b32.cont [12/16] 0.0, 128
        %8894 = vxpose.xlu0.b32.cont [13/16] 0.0, 128
        %8895 = vxpose.xlu0.b32.cont [14/16] 0.0, 128
        %8896 = vxpose.xlu0.b32.cont [15/16] 0.0, 128
        %8897 = vxpose.xlu0.b32.end [16/16] 0.0, 128
        %v8898 = vpop.trf.xlu0
        %v8899 = vpop.trf.xlu0
        %v8900 = vpop.trf.xlu0
        %v8901 = vpop.trf.xlu0
        %v8902 = vpop.trf.xlu0
        %v8903 = vpop.trf.xlu0
        %v8904 = vpop.trf.xlu0
        %v8905 = vpop.trf.xlu0
        %v8906 = vpop.trf.xlu0
        %v8907 = vpop.trf.xlu0
        %v8908 = vpop.trf.xlu0
        %v8909 = vpop.trf.xlu0
        %v8910 = vpop.trf.xlu0
        %v8911 = vpop.trf.xlu0
        %v8912 = vpop.trf.xlu0
        %v8913 = vpop.trf.xlu0
        %v8914 = vperm.slane %v8898, 0
        %v8915 = vadd.f32 %v8872, %v8914
        %v8916 = vadd.f32 %v8881, %v8914
        %vm8917 = vcmp.gt.f32.partialorder %v8915, 0.0
        %vm8918 = vcmp.gt.f32.partialorder %v8916, 0.0
        %v8919 = vmul.f32 %v8915, 0.2
        %v8920 = vmul.f32 %v8916, 0.2
        %v8921 = vsel %vm8917, %v8915, %v8919
        %v8922 = vsel %vm8918, %v8916, %v8920
        %vm8923 = vcmp.gt.f32.partialorder %v8778, 0.0
        %vm8924 = vcmp.gt.f32.partialorder %v8779, 0.0
        %v8925 = vsel %vm8923, %v8921, -1e+30
        %v8926 = vsel %vm8924, %v8922, -1e+30
        %vm8927 = vcmask 130048
        %v8928 = vsel %vm8927, %v8925, -inf
        %8929 = vmax.xlane.f32.xlu0 %v8928
        %v8930 = vpop.xlane.xlu0 %8929
        %v8931 = vsel %vm8927, %v8926, -inf
        %8932 = vmax.xlane.f32.xlu0 %v8931
        %v8933 = vpop.xlane.xlu0 %8932
        %v8934 = vsub.f32 %v8925, %v8930
        %v8935 = vsub.f32 %v8926, %v8933
        %v8936 = vmul.f32 %v8934, 1.442695
        %v8937 = vpow.pop %v8936
        %v8938 = vmul.f32 %v8935, 1.442695
        %v8939 = vpow.pop %v8938
        %v8940 = vsel %vm8923, %v8937, 0.0
        %v8941 = vsel %vm8924, %v8939, 0.0
        %v8942 = vsel %vm8927, %v8940, 0.0
        %8943 = vadd.xlane.f32.xlu0 %v8942
        %v8944 = vpop.xlane.xlu0 %8943
        %v8945 = vsel %vm8927, %v8941, 0.0
        %8946 = vadd.xlane.f32.xlu0 %v8945
        %v8947 = vpop.xlane.xlu0 %8946
        %v8948 = vrcp.pop %v8944
        %v8949 = vrcp.pop %v8947
        %v8950 = vmul.f32 %v8940, %v8948
        %v8951 = vmul.f32 %v8941, %v8949
        %v8953 = vsel %vm8927, %v8950, 0
        %v8956 = vsel %vm8927, %v8951, 0
        %8958 = vmatpush.msra.mxu0 0.0
        %8959 = vmatpush.msra.mxu0 0.0
        %8960 = vmatpush.msra.mxu0 0.0
        %8961 = vmatpush.msra.mxu0 0.0
        %8962 = vmatpush.msra.mxu0 0.0
        %8963 = vmatpush.msra.mxu0 0.0
        %8964 = vmatpush.msra.mxu0 0.0
        %8965 = vmatpush.msra.mxu0 0.0
        %8966 = vmatpush.msra.mxu0 0.0
        %8967 = vmatpush.msra.mxu0 0.0
        %8968 = vmatpush.msra.mxu0 0.0
        %8969 = vmatpush.msra.mxu0 0.0
        %8970 = vmatpush.msra.mxu0 0.0
        %8971 = vmatpush.msra.mxu0 0.0
        %8972 = vmatpush.msra.mxu0 %v7990
        %8973 = vmatpush.msra.mxu0 %v7988
        %8974 = vmatmul.f32.gmra.mxu0 %v8953
        %v8975 = vpop.f32.mrf.mxu0
        %v8976 = vadd.f32 0.0, %v8975
        %8977 = vmatmul.f32.gmra.mxu0 %v8956
        %v8978 = vpop.f32.mrf.mxu0
        %v8979 = vadd.f32 0.0, %v8978
        %8980 = vdwg.mxu0
        %8981 = vmatpush.msra.mxu0 0.0
        %8982 = vmatpush.msra.mxu0 0.0
        %8983 = vmatpush.msra.mxu0 0.0
        %8984 = vmatpush.msra.mxu0 0.0
        %8985 = vmatpush.msra.mxu0 0.0
        %8986 = vmatpush.msra.mxu0 0.0
        %8987 = vmatpush.msra.mxu0 0.0
        %8988 = vmatpush.msra.mxu0 0.0
        %8989 = vmatpush.msra.mxu0 0.0
        %8990 = vmatpush.msra.mxu0 0.0
        %8991 = vmatpush.msra.mxu0 0.0
        %8992 = vmatpush.msra.mxu0 0.0
        %8993 = vmatpush.msra.mxu0 0.0
        %8994 = vmatpush.msra.mxu0 0.0
        %8995 = vmatpush.msra.mxu0 %v8102
        %8996 = vmatpush.msra.mxu0 %v8100
        %8997 = vmatmul.f32.gmra.mxu0 %v8953
        %v8998 = vpop.f32.mrf.mxu0
        %v8999 = vadd.f32 0.0, %v8998
        %9000 = vmatmul.f32.gmra.mxu0 %v8956
        %v9001 = vpop.f32.mrf.mxu0
        %v9002 = vadd.f32 0.0, %v9001
        %9003 = vdwg.mxu0
        %9004 = vmatpush.msra.mxu0 0.0
        %9005 = vmatpush.msra.mxu0 0.0
        %9006 = vmatpush.msra.mxu0 0.0
        %9007 = vmatpush.msra.mxu0 0.0
        %9008 = vmatpush.msra.mxu0 0.0
        %9009 = vmatpush.msra.mxu0 0.0
        %9010 = vmatpush.msra.mxu0 0.0
        %9011 = vmatpush.msra.mxu0 0.0
        %9012 = vmatpush.msra.mxu0 0.0
        %9013 = vmatpush.msra.mxu0 0.0
        %9014 = vmatpush.msra.mxu0 0.0
        %9015 = vmatpush.msra.mxu0 0.0
        %9016 = vmatpush.msra.mxu0 0.0
        %9017 = vmatpush.msra.mxu0 0.0
        %9018 = vmatpush.msra.mxu0 %v8214
        %9019 = vmatpush.msra.mxu0 %v8212
        %9020 = vmatmul.f32.gmra.mxu0 %v8953
        %v9021 = vpop.f32.mrf.mxu0
        %v9022 = vadd.f32 0.0, %v9021
        %9023 = vmatmul.f32.gmra.mxu0 %v8956
        %v9024 = vpop.f32.mrf.mxu0
        %v9025 = vadd.f32 0.0, %v9024
        %9026 = vdwg.mxu0
        %9027 = vmatpush.msra.mxu0 0.0
        %9028 = vmatpush.msra.mxu0 0.0
        %9029 = vmatpush.msra.mxu0 0.0
        %9030 = vmatpush.msra.mxu0 0.0
        %9031 = vmatpush.msra.mxu0 0.0
        %9032 = vmatpush.msra.mxu0 0.0
        %9033 = vmatpush.msra.mxu0 0.0
        %9034 = vmatpush.msra.mxu0 0.0
        %9035 = vmatpush.msra.mxu0 0.0
        %9036 = vmatpush.msra.mxu0 0.0
        %9037 = vmatpush.msra.mxu0 0.0
        %9038 = vmatpush.msra.mxu0 0.0
        %9039 = vmatpush.msra.mxu0 0.0
        %9040 = vmatpush.msra.mxu0 0.0
        %9041 = vmatpush.msra.mxu0 %v8326
        %9042 = vmatpush.msra.mxu0 %v8324
        %9043 = vmatmul.f32.gmra.mxu0 %v8953
        %v9044 = vpop.f32.mrf.mxu0
        %v9045 = vadd.f32 0.0, %v9044
        %9046 = vmatmul.f32.gmra.mxu0 %v8956
        %v9047 = vpop.f32.mrf.mxu0
        %v9048 = vadd.f32 0.0, %v9047
        %9049 = vdwg.mxu0
        %9050 = vmatpush.msra.mxu0 0.0
        %9051 = vmatpush.msra.mxu0 0.0
        %9052 = vmatpush.msra.mxu0 0.0
        %9053 = vmatpush.msra.mxu0 0.0
        %9054 = vmatpush.msra.mxu0 0.0
        %9055 = vmatpush.msra.mxu0 0.0
        %9056 = vmatpush.msra.mxu0 0.0
        %9057 = vmatpush.msra.mxu0 0.0
        %9058 = vmatpush.msra.mxu0 0.0
        %9059 = vmatpush.msra.mxu0 0.0
        %9060 = vmatpush.msra.mxu0 0.0
        %9061 = vmatpush.msra.mxu0 0.0
        %9062 = vmatpush.msra.mxu0 0.0
        %9063 = vmatpush.msra.mxu0 0.0
        %9064 = vmatpush.msra.mxu0 %v8438
        %9065 = vmatpush.msra.mxu0 %v8436
        %9066 = vmatmul.f32.gmra.mxu0 %v8953
        %v9067 = vpop.f32.mrf.mxu0
        %v9068 = vadd.f32 0.0, %v9067
        %9069 = vmatmul.f32.gmra.mxu0 %v8956
        %v9070 = vpop.f32.mrf.mxu0
        %v9071 = vadd.f32 0.0, %v9070
        %9072 = vdwg.mxu0
        %9073 = vmatpush.msra.mxu0 0.0
        %9074 = vmatpush.msra.mxu0 0.0
        %9075 = vmatpush.msra.mxu0 0.0
        %9076 = vmatpush.msra.mxu0 0.0
        %9077 = vmatpush.msra.mxu0 0.0
        %9078 = vmatpush.msra.mxu0 0.0
        %9079 = vmatpush.msra.mxu0 0.0
        %9080 = vmatpush.msra.mxu0 0.0
        %9081 = vmatpush.msra.mxu0 0.0
        %9082 = vmatpush.msra.mxu0 0.0
        %9083 = vmatpush.msra.mxu0 0.0
        %9084 = vmatpush.msra.mxu0 0.0
        %9085 = vmatpush.msra.mxu0 0.0
        %9086 = vmatpush.msra.mxu0 0.0
        %9087 = vmatpush.msra.mxu0 %v8550
        %9088 = vmatpush.msra.mxu0 %v8548
        %9089 = vmatmul.f32.gmra.mxu0 %v8953
        %v9090 = vpop.f32.mrf.mxu0
        %v9091 = vadd.f32 0.0, %v9090
        %9092 = vmatmul.f32.gmra.mxu0 %v8956
        %v9093 = vpop.f32.mrf.mxu0
        %v9094 = vadd.f32 0.0, %v9093
        %9095 = vdwg.mxu0
        %9096 = vmatpush.msra.mxu0 0.0
        %9097 = vmatpush.msra.mxu0 0.0
        %9098 = vmatpush.msra.mxu0 0.0
        %9099 = vmatpush.msra.mxu0 0.0
        %9100 = vmatpush.msra.mxu0 0.0
        %9101 = vmatpush.msra.mxu0 0.0
        %9102 = vmatpush.msra.mxu0 0.0
        %9103 = vmatpush.msra.mxu0 0.0
        %9104 = vmatpush.msra.mxu0 0.0
        %9105 = vmatpush.msra.mxu0 0.0
        %9106 = vmatpush.msra.mxu0 0.0
        %9107 = vmatpush.msra.mxu0 0.0
        %9108 = vmatpush.msra.mxu0 0.0
        %9109 = vmatpush.msra.mxu0 0.0
        %9110 = vmatpush.msra.mxu0 %v8662
        %9111 = vmatpush.msra.mxu0 %v8660
        %9112 = vmatmul.f32.gmra.mxu0 %v8953
        %v9113 = vpop.f32.mrf.mxu0
        %v9114 = vadd.f32 0.0, %v9113
        %9115 = vmatmul.f32.gmra.mxu0 %v8956
        %v9116 = vpop.f32.mrf.mxu0
        %v9117 = vadd.f32 0.0, %v9116
        %9118 = vdwg.mxu0
        %9119 = vmatpush.msra.mxu0 0.0
        %9120 = vmatpush.msra.mxu0 0.0
        %9121 = vmatpush.msra.mxu0 0.0
        %9122 = vmatpush.msra.mxu0 0.0
        %9123 = vmatpush.msra.mxu0 0.0
        %9124 = vmatpush.msra.mxu0 0.0
        %9125 = vmatpush.msra.mxu0 0.0
        %9126 = vmatpush.msra.mxu0 0.0
        %9127 = vmatpush.msra.mxu0 0.0
        %9128 = vmatpush.msra.mxu0 0.0
        %9129 = vmatpush.msra.mxu0 0.0
        %9130 = vmatpush.msra.mxu0 0.0
        %9131 = vmatpush.msra.mxu0 0.0
        %9132 = vmatpush.msra.mxu0 0.0
        %9133 = vmatpush.msra.mxu0 %v8774
        %9134 = vmatpush.msra.mxu0 %v8772
        %9135 = vmatmul.f32.gmra.mxu0 %v8953
        %v9136 = vpop.f32.mrf.mxu0
        %v9137 = vadd.f32 0.0, %v9136
        %9138 = vmatmul.f32.gmra.mxu0 %v8956
        %v9139 = vpop.f32.mrf.mxu0
        %v9140 = vadd.f32 0.0, %v9139
        %9141 = vdwg.mxu0
        %9142 = vst [vmem:[%s498] sm:$0xff] %v8976
        %9143 = vst [vmem:[%s498 + $0x8] sm:$0xff] %v8999
        %9144 = vst [vmem:[%s498 + $0x10] sm:$0xff] %v9022
        %9145 = vst [vmem:[%s498 + $0x18] sm:$0xff] %v9045
        %9146 = vst [vmem:[%s498 + $0x20] sm:$0xff] %v9068
        %9147 = vst [vmem:[%s498 + $0x28] sm:$0xff] %v9091
        %9148 = vst [vmem:[%s498 + $0x30] sm:$0xff] %v9114
        %9149 = vst [vmem:[%s498 + $0x38] sm:$0xff] %v9137
        %9150 = vst [vmem:[%s498 + $0x40] sm:$0xff] %v8979
        %9151 = vst [vmem:[%s498 + $0x48] sm:$0xff] %v9002
        %9152 = vst [vmem:[%s498 + $0x50] sm:$0xff] %v9025
        %9153 = vst [vmem:[%s498 + $0x58] sm:$0xff] %v9048
        %9154 = vst [vmem:[%s498 + $0x60] sm:$0xff] %v9071
        %9155 = vst [vmem:[%s498 + $0x68] sm:$0xff] %v9094
        %9156 = vst [vmem:[%s498 + $0x70] sm:$0xff] %v9117
        %9157 = vst [vmem:[%s498 + $0x78] sm:$0xff] %v9140
        %s9158 = sand.u32 %s235, 1
        %s9159 = sand.u32 %s235, 1
        %s9160 = smul.addr %s9159, 128
        %s9161 = scalar_lea.vmem [#allocation13], %s9160
        // Predicated region
        $region89: #{gatsby_forward.4} parent=55 // pred_check
          %p9162 = pneg %p245
        $region90: #{gatsby_forward.4} parent=55 // pred_check_branch
          %9164 = sbr.rel (%p9162) target = $region92
        $region91: #{gatsby_forward.4} parent=55 // pred_region
          %s9165 = smul.u32 8, %s23
          %s9166 = smul.addr %s9165, 8
          %s9167 = scalar_lea.vmem %s9, %s9166
          // Predicated region
          $region93: #{gatsby_forward.4} parent=91 // pred_check
            _
          $region94: #{gatsby_forward.4} parent=91 // pred_check_branch
            %9169 = sbr.rel (0) target = $region96
          $region95: #{gatsby_forward.4} parent=91 // pred_region
            // Predicated region
            $region97: #{gatsby_forward.4} parent=95 // pred_check
              _
            $region98: #{gatsby_forward.4} parent=95 // pred_check_branch
              %9171 = sbr.rel (0) target = $region100
            $region99: #{gatsby_forward.4} parent=95 // pred_region
              loop: start=0, step=1, limit=1
              $region101: #{gatsby_forward.4} parent=99 // loop_pre_header
                _
              $region102: #{gatsby_forward.4} parent=99 // loop_header
                %s9173 = sphi 0, %s9177
                %p9174 = scmp.ge.s32.totalorder %s9173, 1
                %s9178 = sphi %s9161, %s9161
                %s9179 = sphi %s9167, %s9167
              $region103: #{gatsby_forward.4} parent=99 // loop_header_branch
                %9176 = sbr.rel (%p9174) target = $region107
              $region104: #{gatsby_forward.4} parent=99 // loop_body
                %v9180 = vld [vmem:[%s9178] sm:$0xff]
                %9181 = vst [vmem:[%s9179] sm:$0xff] %v9180
                %v9182 = vld [vmem:[%s9178 + $0x8] sm:$0xff]
                %9183 = vst [vmem:[%s9179 + $0x8] sm:$0xff] %v9182
                %v9184 = vld [vmem:[%s9178 + $0x10] sm:$0xff]
                %9185 = vst [vmem:[%s9179 + $0x10] sm:$0xff] %v9184
                %v9186 = vld [vmem:[%s9178 + $0x18] sm:$0xff]
                %9187 = vst [vmem:[%s9179 + $0x18] sm:$0xff] %v9186
                %v9188 = vld [vmem:[%s9178 + $0x20] sm:$0xff]
                %9189 = vst [vmem:[%s9179 + $0x20] sm:$0xff] %v9188
                %v9190 = vld [vmem:[%s9178 + $0x28] sm:$0xff]
                %9191 = vst [vmem:[%s9179 + $0x28] sm:$0xff] %v9190
                %v9192 = vld [vmem:[%s9178 + $0x30] sm:$0xff]
                %9193 = vst [vmem:[%s9179 + $0x30] sm:$0xff] %v9192
                %v9194 = vld [vmem:[%s9178 + $0x38] sm:$0xff]
                %9195 = vst [vmem:[%s9179 + $0x38] sm:$0xff] %v9194
                %v9196 = vld [vmem:[%s9178 + $0x40] sm:$0xff]
                %9197 = vst [vmem:[%s9179 + $0x80] sm:$0xff] %v9196
                %v9198 = vld [vmem:[%s9178 + $0x48] sm:$0xff]
                %9199 = vst [vmem:[%s9179 + $0x88] sm:$0xff] %v9198
                %v9200 = vld [vmem:[%s9178 + $0x50] sm:$0xff]
                %9201 = vst [vmem:[%s9179 + $0x90] sm:$0xff] %v9200
                %v9202 = vld [vmem:[%s9178 + $0x58] sm:$0xff]
                %9203 = vst [vmem:[%s9179 + $0x98] sm:$0xff] %v9202
                %v9204 = vld [vmem:[%s9178 + $0x60] sm:$0xff]
                %9205 = vst [vmem:[%s9179 + $0xa0] sm:$0xff] %v9204
                %v9206 = vld [vmem:[%s9178 + $0x68] sm:$0xff]
                %9207 = vst [vmem:[%s9179 + $0xa8] sm:$0xff] %v9206
                %v9208 = vld [vmem:[%s9178 + $0x70] sm:$0xff]
                %9209 = vst [vmem:[%s9179 + $0xb0] sm:$0xff] %v9208
                %v9210 = vld [vmem:[%s9178 + $0x78] sm:$0xff]
                %9211 = vst [vmem:[%s9179 + $0xb8] sm:$0xff] %v9210
              $region105: #{gatsby_forward.4} parent=99 // loop_footer
                %s9177 = sadd.s32 1, %s9173
              $region106: #{gatsby_forward.4} parent=99 // loop_footer_branch
                %9172 = sbr.rel target = $region102
              $region107: #{gatsby_forward.4} parent=99 // loop_exit
                _
            $region100: #{gatsby_forward.4} parent=95 // pred_fallthru
              _
            // Predicated region
            $region108: #{gatsby_forward.4} parent=95 // pred_check
              _
            $region109: #{gatsby_forward.4} parent=95 // pred_check_branch
              %9213 = sbr.rel target = $region111
            $region110: #{gatsby_forward.4} parent=95 // pred_region
              _
            $region111: #{gatsby_forward.4} parent=95 // pred_fallthru
              _
          $region96: #{gatsby_forward.4} parent=91 // pred_fallthru
            _
          %9214 = vnop
        $region92: #{gatsby_forward.4} parent=55 // pred_fallthru
          _
      $region56: #{gatsby_forward.4} parent=5 // pred_fallthru
        _
      %p9215 = scmp.le.s32.totalorder 2, %s18
      // Predicated region
      $region112: #{gatsby_forward.4} parent=5 // pred_check
        %p9216 = pneg %p9215
      $region113: #{gatsby_forward.4} parent=5 // pred_check_branch
        %9218 = sbr.rel (%p9216) target = $region115
      $region114: #{gatsby_forward.4} parent=5 // pred_region
        %s9219 = ssub.s32 %s18, 2
        // Predicated region
        $region116: #{gatsby_forward.4} parent=114 // pred_check
          %p9220 = pneg %p251
        $region117: #{gatsby_forward.4} parent=114 // pred_check_branch
          %9222 = sbr.rel (%p9220) target = $region119
        $region118: #{gatsby_forward.4} parent=114 // pred_region
          %s9223 = sand.u32 %s236, 1
          %s9224 = sand.u32 %s236, 1
          %s9225 = smul.addr %s9224, 128
          %s9226 = scalar_lea.vmem [#allocation13], %s9225
        $region119: #{gatsby_forward.4} parent=114 // pred_fallthru
          _
      $region115: #{gatsby_forward.4} parent=5 // pred_fallthru
        _
    $region6: #{gatsby_forward.4} parent=1 // loop_footer
      %s22 = sadd.s32 1, %s18
    $region7: #{gatsby_forward.4} parent=1 // loop_footer_branch
      %17 = sbr.rel target = $region3
    $region8: #{gatsby_forward.4} parent=1 // loop_exit
      _
    %9227 = vsyncpa [#allocation3], 1
    %s9228 = scalar_lea.sflag [#allocation3], 1
    %9229 = vsyncpa %s9228, 1
    %9230 = vsyncpa [#allocation5], 1
    %9231 = vsyncpa [#allocation8], 1

</llo_original>
